<compile_context>
chip_gen: v6e
topology: v6e:2x2x1
jax: 0.10.0
libtpu: 0.0.40
codegen_flags: <defaults>
</compile_context>

<pallas_src>
import jax
import jax.numpy as jnp
from jax import lax
from jax.experimental import pallas as pl
from jax.experimental.pallas import tpu as pltpu

# Module constants (from the PyTorch __init__).
_K1, _C1 = 7, 10          # Conv2d(in, 10, kernel_size=7)
_K2, _C2 = 5, 5           # Conv2d(10, 5, kernel_size=5)
_P1H, _P1W = 32, 32       # AdaptiveMaxPool2d((32, 32))
_P2H, _P2W = 8, 8         # AdaptiveMaxPool2d((8, 8))


# ----------------------------------------------------------------------------
# Small shared helpers (pure Python / traceable in- and outside the kernel)
# ----------------------------------------------------------------------------

def _adaptive_windows(in_size, out_size):
    """Static PyTorch AdaptiveMaxPool window boundaries: list of (start, size)."""
    wins = []
    for i in range(out_size):
        start = (i * in_size) // out_size
        end = -((-(i + 1) * in_size) // out_size)   # ceil((i+1)*in/out)
        wins.append((start, end - start))
    return wins


def _apply_sl3_constraints(t, transformation_type):
    """sl(3) constraint masking on a (..., 9) theta (flat index = row*3 + col).

    Mirrors LieHomographySTN.set_transformation_constrains_ (functional form).
    Used both inside the Pallas kernel (on (1, 9)) and by the XLA reference.
    """
    lane = lax.broadcasted_iota(jnp.int32, t.shape, t.ndim - 1)
    t00, t01 = t[..., 0:1], t[..., 1:2]
    t10, t11 = t[..., 3:4], t[..., 4:5]
    if transformation_type == "translation":
        return jnp.where((lane == 2) | (lane == 5), t, 0.0)
    if transformation_type == "rigid":
        avg12 = (t01 + t10) * 0.5
        out = jnp.where(lane == 1, t - avg12, t)
        out = jnp.where(lane == 3, t - avg12, out)
        return jnp.where((lane == 0) | (lane == 4) | (lane >= 6), 0.0, out)
    if transformation_type == "similarity":
        avg11 = (t00 + t11) * 0.5
        avg12 = (t01 + t10) * 0.5
        out = jnp.where((lane == 0) | (lane == 4), avg11, t)
        out = jnp.where(lane == 1, t - avg12, out)
        out = jnp.where(lane == 3, t - avg12, out)
        return jnp.where(lane >= 6, 0.0, out)
    if transformation_type == "affine":
        return jnp.where(lane >= 6, 0.0, t)
    if transformation_type == "homography":
        return jnp.where(lane == 8, -(t00 + t11), t)
    return t


def _pool_into(v, c, h_wins, w_wins, out_ref):
    """Adaptive max-pool of a lane-dense (Hin, Win*c) value into out_ref
    (Hout, Wout*c).  Unrolled shifted-slice maxima (windows are static); only
    the tiny pooled result is stored."""
    for wo, (ws, wsz) in enumerate(w_wins):
        col = v[:, ws * c:(ws + 1) * c]                        # (Hin, c)
        for k in range(1, wsz):
            col = jnp.maximum(col, v[:, (ws + k) * c:(ws + k + 1) * c])
        for ho, (hs, hsz) in enumerate(h_wins):
            m = col[hs:hs + 1, :]                              # (1, c)
            for kk in range(1, hsz):
                m = jnp.maximum(m, col[hs + kk:hs + kk + 1, :])
            out_ref[ho:ho + 1, wo * c:(wo + 1) * c] = m


# ----------------------------------------------------------------------------
# Fused per-image kernel
# ----------------------------------------------------------------------------

def _make_fused_kernel(H, W, C, transformation_type):
    """Builds the fused per-image kernel for a static input spatial size."""
    H1, W1 = H - _K1 + 1, W - _K1 + 1          # conv1 output spatial
    H2, W2 = _P1H - _K2 + 1, _P1W - _K2 + 1    # conv2 output spatial (28, 28)
    pool1_identity = (H1 == _P1H and W1 == _P1W)
    hw1, ww1 = _adaptive_windows(H1, _P1H), _adaptive_windows(W1, _P1W)
    hw2, ww2 = _adaptive_windows(H2, _P2H), _adaptive_windows(W2, _P2W)

    def kernel(x_ref, wb1_ref, b1_ref, wb2_ref, b2_ref,
               wf1_ref, bf1_ref, wf2_ref, bf2_ref, o_ref, *scratch):
        p2_ref = scratch[-1]                                   # (8, 40) VMEM

        # ---- Conv2d(C, 10, 7) as 7 banded MXU matmuls; ReLU fused ----------
        acc1 = jnp.dot(x_ref[0:H1, :], wb1_ref[0],
                       preferred_element_type=jnp.float32)
        for dy in range(1, _K1):
            acc1 = acc1 + jnp.dot(x_ref[dy:dy + H1, :], wb1_ref[dy],
                                  preferred_element_type=jnp.float32)
        y1 = jnp.maximum(acc1 + b1_ref[...], 0.0)              # (H1, W1*10)

        # ---- AdaptiveMaxPool2d((32, 32)) ------------------------------------
        if pool1_identity:
            p1 = y1                                            # 32x32 -> 32x32: identity
        else:
            p1_ref = scratch[0]
            _pool_into(y1, _C1, hw1, ww1, p1_ref)
            p1 = p1_ref[...]                                   # (32, 320)

        # ---- Conv2d(10, 5, 5) as 5 banded MXU matmuls; ReLU fused ----------
        acc2 = jnp.dot(p1[0:H2, :], wb2_ref[0],
                       preferred_element_type=jnp.float32)
        for dy in range(1, _K2):
            acc2 = acc2 + jnp.dot(p1[dy:dy + H2, :], wb2_ref[dy],
                                  preferred_element_type=jnp.float32)
        y2 = jnp.maximum(acc2 + b2_ref[...], 0.0)              # (28, 140)

        # ---- AdaptiveMaxPool2d((8, 8)) into the tiny VMEM scratch -----------
        _pool_into(y2, _C2, hw2, ww2, p2_ref)                  # (8, 40)

        # ---- fc_loc: Linear(320, 32) + ReLU + Linear(32, 9) -----------------
        # wf1 is pre-permuted to NHWC flatten order and stored as (8, 40, 32),
        # so the pooled (8, 40) scratch is consumed row by row (no transpose).
        acc = jnp.dot(p2_ref[0:1, :], wf1_ref[0],
                      preferred_element_type=jnp.float32)
        for h in range(1, _P2H):
            acc = acc + jnp.dot(p2_ref[h:h + 1, :], wf1_ref[h],
                                preferred_element_type=jnp.float32)
        hid = jnp.maximum(acc + bf1_ref[...], 0.0)             # (1, 32)
        t = jnp.dot(hid, wf2_ref[...],
                    preferred_element_type=jnp.float32) + bf2_ref[...]  # (1, 9)

        # ---- sl(3) constraint masking, single store --------------------------
        o_ref[...] = _apply_sl3_constraints(t, transformation_type)

    return kernel, pool1_identity, (H1, W1, H2, W2)


# ----------------------------------------------------------------------------
# Host-side parameter packing (im2col folded into the weights)
# ----------------------------------------------------------------------------

def _banded_conv_weights(w_oihw, in_width):
    """Fold the horizontal im2col gather into the weights.

    Returns Wb of shape (kh, in_width*Cin, out_width*Cout) such that for a
    lane-dense activation slab x2[h, w*Cin + ci]:
        conv2d_valid(x, w)[oy, ox, co] = sum_dy (x2[oy+dy, :] @ Wb[dy])[ox*Cout+co]
    i.e. Wb[dy, w*Cin+ci, ox*Cout+co] = w[co, ci, dy, w-ox] for 0 <= w-ox < kw.
    """
    c_out, c_in, kh, kw = w_oihw.shape
    out_width = in_width - kw + 1
    wt = jnp.transpose(w_oihw, (2, 3, 1, 0))            # (kh, kw, Cin, Cout)
    dx = jnp.arange(in_width)[:, None] - jnp.arange(out_width)[None, :]
    valid = (dx >= 0) & (dx < kw)
    g = wt[:, jnp.clip(dx, 0, kw - 1), :, :]            # (kh, in_w, out_w, Cin, Cout)
    g = jnp.where(valid[None, :, :, None, None], g, 0.0)
    g = jnp.transpose(g, (0, 1, 3, 2, 4))               # (kh, in_w, Cin, out_w, Cout)
    return g.reshape(kh, in_width * c_in, out_width * c_out)


def init_torch_params(key, in_channels):
    """Deterministic synthetic parameters in PyTorch layout (shapes from __init__).

    NOTE: the PyTorch module zero-inits fc_loc[-1]; small random values are used
    instead so the sl(3) constraint path is exercised non-trivially.
    """
    k = jax.random.split(key, 8)
    return {
        "w1": jax.random.normal(k[0], (_C1, in_channels, _K1, _K1), jnp.float32) * 0.05,
        "b1": jax.random.normal(k[1], (_C1,), jnp.float32) * 0.05,
        "w2": jax.random.normal(k[2], (_C2, _C1, _K2, _K2), jnp.float32) * 0.05,
        "b2": jax.random.normal(k[3], (_C2,), jnp.float32) * 0.05,
        "wf1": jax.random.normal(k[4], (32, _C2 * _P2H * _P2W), jnp.float32) * 0.05,
        "bf1": jax.random.normal(k[5], (32,), jnp.float32) * 0.05,
        "wf2": jax.random.normal(k[6], (9, 32), jnp.float32) * 0.05,
        "bf2": jax.random.normal(k[7], (9,), jnp.float32) * 0.05,
    }


def pack_params(tp, input_width):
    """Pack PyTorch-layout params for the fused kernel (one-time, host/XLA)."""
    w1_out = input_width - _K1 + 1
    return {
        "wb1": _banded_conv_weights(tp["w1"], input_width),       # (7, W*C, W1*10)
        "b1t": jnp.tile(tp["b1"], w1_out)[None, :],                # (1, W1*10)
        "wb2": _banded_conv_weights(tp["w2"], _P1W),               # (5, 320, 140)
        "b2t": jnp.tile(tp["b2"], _P1W - _K2 + 1)[None, :],        # (1, 140)
        # fc1 weights permuted from NCHW-flatten (c*64+h*8+w) to NHWC row order
        # (h, w*5+c) and split per pooled row h -> (8, 40, 32).
        "wf1": tp["wf1"].reshape(32, _C2, _P2H, _P2W)
                        .transpose(2, 3, 1, 0).reshape(_P2H, _P2W * _C2, 32),
        "bf1": tp["bf1"][None, :],                                 # (1, 32)
        "wf2": tp["wf2"].T,                                        # (32, 9)
        "bf2": tp["bf2"][None, :],                                 # (1, 9)
    }


# ----------------------------------------------------------------------------
# Forward wrapper
# ----------------------------------------------------------------------------

def lie_homography_stn_forward(x_nchw, packed, transformation_type="homography"):
    """Forward pass of LieHomographySTN.  x_nchw: (B, C, H, W) float32."""
    assert x_nchw.ndim == 4, "img must be of shape (N, C, H, W)"
    B, C, H, W = x_nchw.shape
    kernel, pool1_identity, (H1, W1, H2, W2) = _make_fused_kernel(
        H, W, C, transformation_type)

    # NCHW -> lane-dense (B, H, W*C); the only XLA-side data movement.
    x2 = jnp.transpose(x_nchw.astype(jnp.float32), (0, 2, 3, 1)).reshape(B, H, W * C)

    operands = (x2, packed["wb1"], packed["b1t"], packed["wb2"], packed["b2t"],
                packed["wf1"], packed["bf1"], packed["wf2"], packed["bf2"])

    def _const_spec(arr):
        rank = arr.ndim
        return pl.BlockSpec(arr.shape, lambda b, _r=rank: (0,) * _r)

    in_specs = [pl.BlockSpec((None, H, W * C), lambda b: (b, 0, 0))]
    in_specs += [_const_spec(a) for a in operands[1:]]

    scratch_shapes = []
    if not pool1_identity:
        # TODO(synk): general AdaptiveMaxPool2d((32,32)) path (input spatial not
        # giving a 32x32 conv1 output) is functional but un-tuned.
        scratch_shapes.append(pltpu.VMEM((_P1H, _P1W * _C1), jnp.float32))
    scratch_shapes.append(pltpu.VMEM((_P2H, _P2W * _C2), jnp.float32))

    flops = B * (2 * _K1 * H1 * (W * C) * (W1 * _C1)
                 + 2 * _K2 * H2 * (_P1W * _C1) * (W2 * _C2)
                 + 2 * _P2H * (_P2W * _C2) * 32 + 2 * 32 * 9)
    bytes_accessed = 4 * (x2.size + sum(a.size for a in operands[1:]) + B * 9)

    theta9 = pl.pallas_call(
        kernel,
        grid=(B,),
        in_specs=in_specs,
        out_specs=pl.BlockSpec((None, 1, 9), lambda b: (b, 0, 0)),
        out_shape=jax.ShapeDtypeStruct((B, 1, 9), jnp.float32),
        scratch_shapes=scratch_shapes,
        compiler_params=pltpu.CompilerParams(dimension_semantics=("parallel",)),
        cost_estimate=pl.CostEstimate(flops=flops, transcendentals=0,
                                      bytes_accessed=bytes_accessed),
    )(*operands)

    # TODO(synk): HomographyTransformer (matrix exponential of theta + grid
    # sampling) is not defined in the reference snippet; return constrained theta.
    return theta9.reshape(B, 3, 3)


# ----------------------------------------------------------------------------
# Pure-JAX/XLA reference (for correctness checking only)
# ----------------------------------------------------------------------------

def _adaptive_maxpool_ref(x, out_hw):
    _, _, h, w = x.shape
    ho, wo = out_hw
    rows = jnp.stack([jnp.max(x[:, :, s:s + sz, :], axis=2)
                      for s, sz in _adaptive_windows(h, ho)], axis=2)
    return jnp.stack([jnp.max(rows[:, :, :, s:s + sz], axis=3)
                      for s, sz in _adaptive_windows(w, wo)], axis=3)


def _reference_forward(x_nchw, tp, transformation_type):
    with jax.default_matmul_precision("highest"):
        dn = ("NCHW", "OIHW", "NCHW")
        y1 = lax.conv_general_dilated(x_nchw.astype(jnp.float32), tp["w1"], (1, 1),
                                      "VALID", dimension_numbers=dn)
        y1 = y1 + tp["b1"][None, :, None, None]
        p1 = jnp.maximum(_adaptive_maxpool_ref(y1, (_P1H, _P1W)), 0.0)
        y2 = lax.conv_general_dilated(p1, tp["w2"], (1, 1), "VALID",
                                      dimension_numbers=dn)
        y2 = y2 + tp["b2"][None, :, None, None]
        p2 = jnp.maximum(_adaptive_maxpool_ref(y2, (_P2H, _P2W)), 0.0)
        feat = p2.reshape(x_nchw.shape[0], -1)
        hid = jnp.maximum(feat @ tp["wf1"].T + tp["bf1"], 0.0)
        t = hid @ tp["wf2"].T + tp["bf2"]
        return _apply_sl3_constraints(t, transformation_type).reshape(-1, 3, 3)


# ----------------------------------------------------------------------------

if __name__ == "__main__":
    key = jax.random.PRNGKey(0)
    pkey, xkey = jax.random.split(key)

    # embedding_size = 4; spatial 38 -> 7x7 valid conv -> 32, so the first
    # AdaptiveMaxPool2d((32, 32)) is the identity (folded away in-kernel).
    B, C, H, W = 2, 4, 38, 38
    tp = init_torch_params(pkey, C)
    packed = pack_params(tp, W)
    x = jax.random.normal(xkey, (B, C, H, W), dtype=jnp.float32)

    fwd = jax.jit(lambda inp, pk: lie_homography_stn_forward(inp, pk, "homography"))
    theta = jax.block_until_ready(fwd(x, packed))

    assert theta.shape == (B, 3, 3)
    # homography constraint: trace-free sl(3) generator, theta[2,2] = -(t00+t11)
    assert jnp.allclose(theta[:, 2, 2], -(theta[:, 0, 0] + theta[:, 1, 1]), atol=1e-5)

    # Numerical cross-check against the pure-JAX reference of the PyTorch module.
    ref = _reference_forward(x, tp, "homography")
    err = float(jnp.max(jnp.abs(theta - ref)))
    if not jnp.allclose(theta, ref, rtol=5e-2, atol=5e-3):
        raise AssertionError(f"kernel vs reference mismatch, max|diff|={err}")

    print("KERNEL_OK")
</pallas_src>

<mosaic_0001>
module attributes {stable_mosaic.version = 11 : i64} {
  func.func @kernel(%arg0: i32, %arg1: memref<1x38x152xf32, #tpu.memory_space<vmem>>, %arg2: memref<7x152x320xf32, #tpu.memory_space<vmem>>, %arg3: memref<1x320xf32, #tpu.memory_space<vmem>>, %arg4: memref<5x320x140xf32, #tpu.memory_space<vmem>>, %arg5: memref<1x140xf32, #tpu.memory_space<vmem>>, %arg6: memref<8x40x32xf32, #tpu.memory_space<vmem>>, %arg7: memref<1x32xf32, #tpu.memory_space<vmem>>, %arg8: memref<32x9xf32, #tpu.memory_space<vmem>>, %arg9: memref<1x9xf32, #tpu.memory_space<vmem>>, %arg10: memref<1x1x9xf32, #tpu.memory_space<vmem>>, %arg11: memref<8x40xf32, #tpu.memory_space<vmem>>) attributes {dimension_semantics = [#tpu.dimension_semantics<parallel>], iteration_bounds = array<i64: 2>, scalar_prefetch = 0 : i64, scratch_operands = 1 : i64, tpu.core_type = #tpu.core_type<tc>, window_params = [{transform_indices = @transform_0, window_bounds = array<i64: 1, 38, 152>}, {pipeline_mode = #tpu.pipeline_mode<synchronous>, transform_indices = @transform_1, window_bounds = array<i64: 7, 152, 320>}, {pipeline_mode = #tpu.pipeline_mode<synchronous>, transform_indices = @transform_2, window_bounds = array<i64: 1, 320>}, {pipeline_mode = #tpu.pipeline_mode<synchronous>, transform_indices = @transform_3, window_bounds = array<i64: 5, 320, 140>}, {pipeline_mode = #tpu.pipeline_mode<synchronous>, transform_indices = @transform_4, window_bounds = array<i64: 1, 140>}, {pipeline_mode = #tpu.pipeline_mode<synchronous>, transform_indices = @transform_5, window_bounds = array<i64: 8, 40, 32>}, {pipeline_mode = #tpu.pipeline_mode<synchronous>, transform_indices = @transform_6, window_bounds = array<i64: 1, 32>}, {pipeline_mode = #tpu.pipeline_mode<synchronous>, transform_indices = @transform_7, window_bounds = array<i64: 32, 9>}, {pipeline_mode = #tpu.pipeline_mode<synchronous>, transform_indices = @transform_8, window_bounds = array<i64: 1, 9>}, {transform_indices = @transform_9, window_bounds = array<i64: 1, 1, 9>}]} {
    %c0 = arith.constant 0 : index
    %c0_0 = arith.constant 0 : index
    %c0_1 = arith.constant 0 : index
    %0 = vector.load %arg1[%c0, %c0_0, %c0_1] : memref<1x38x152xf32, #tpu.memory_space<vmem>>, vector<1x32x152xf32>
    %1 = vector.shape_cast %0 : vector<1x32x152xf32> to vector<32x152xf32>
    %c0_2 = arith.constant 0 : index
    %c0_3 = arith.constant 0 : index
    %c0_4 = arith.constant 0 : index
    %2 = vector.load %arg2[%c0_2, %c0_3, %c0_4] : memref<7x152x320xf32, #tpu.memory_space<vmem>>, vector<1x152x320xf32>
    %3 = vector.shape_cast %2 : vector<1x152x320xf32> to vector<152x320xf32>
    %cst = arith.constant dense<0.000000e+00> : vector<32x320xf32>
    %4 = tpu.matmul %1, %3, %cst {dimension_numbers = #tpu.dot_dimension_numbers<[1], [0], [0], [1], [0, 0, 1, 1], [], []>} : vector<32x152xf32>, vector<152x320xf32>, vector<32x320xf32> -> vector<32x320xf32>
    %c0_5 = arith.constant 0 : index
    %c1 = arith.constant 1 : index
    %c0_6 = arith.constant 0 : index
    %5 = vector.load %arg1[%c0_5, %c1, %c0_6] : memref<1x38x152xf32, #tpu.memory_space<vmem>>, vector<1x32x152xf32>
    %6 = vector.shape_cast %5 : vector<1x32x152xf32> to vector<32x152xf32>
    %c1_7 = arith.constant 1 : index
    %c0_8 = arith.constant 0 : index
    %c0_9 = arith.constant 0 : index
    %7 = vector.load %arg2[%c1_7, %c0_8, %c0_9] : memref<7x152x320xf32, #tpu.memory_space<vmem>>, vector<1x152x320xf32>
    %8 = vector.shape_cast %7 : vector<1x152x320xf32> to vector<152x320xf32>
    %cst_10 = arith.constant dense<0.000000e+00> : vector<32x320xf32>
    %9 = tpu.matmul %6, %8, %cst_10 {dimension_numbers = #tpu.dot_dimension_numbers<[1], [0], [0], [1], [0, 0, 1, 1], [], []>} : vector<32x152xf32>, vector<152x320xf32>, vector<32x320xf32> -> vector<32x320xf32>
    %10 = arith.addf %4, %9 : vector<32x320xf32>
    %c0_11 = arith.constant 0 : index
    %c2 = arith.constant 2 : index
    %c0_12 = arith.constant 0 : index
    %11 = vector.load %arg1[%c0_11, %c2, %c0_12] : memref<1x38x152xf32, #tpu.memory_space<vmem>>, vector<1x32x152xf32>
    %12 = vector.shape_cast %11 : vector<1x32x152xf32> to vector<32x152xf32>
    %c2_13 = arith.constant 2 : index
    %c0_14 = arith.constant 0 : index
    %c0_15 = arith.constant 0 : index
    %13 = vector.load %arg2[%c2_13, %c0_14, %c0_15] : memref<7x152x320xf32, #tpu.memory_space<vmem>>, vector<1x152x320xf32>
    %14 = vector.shape_cast %13 : vector<1x152x320xf32> to vector<152x320xf32>
    %cst_16 = arith.constant dense<0.000000e+00> : vector<32x320xf32>
    %15 = tpu.matmul %12, %14, %cst_16 {dimension_numbers = #tpu.dot_dimension_numbers<[1], [0], [0], [1], [0, 0, 1, 1], [], []>} : vector<32x152xf32>, vector<152x320xf32>, vector<32x320xf32> -> vector<32x320xf32>
    %16 = arith.addf %10, %15 : vector<32x320xf32>
    %c0_17 = arith.constant 0 : index
    %c3 = arith.constant 3 : index
    %c0_18 = arith.constant 0 : index
    %17 = vector.load %arg1[%c0_17, %c3, %c0_18] : memref<1x38x152xf32, #tpu.memory_space<vmem>>, vector<1x32x152xf32>
    %18 = vector.shape_cast %17 : vector<1x32x152xf32> to vector<32x152xf32>
    %c3_19 = arith.constant 3 : index
    %c0_20 = arith.constant 0 : index
    %c0_21 = arith.constant 0 : index
    %19 = vector.load %arg2[%c3_19, %c0_20, %c0_21] : memref<7x152x320xf32, #tpu.memory_space<vmem>>, vector<1x152x320xf32>
    %20 = vector.shape_cast %19 : vector<1x152x320xf32> to vector<152x320xf32>
    %cst_22 = arith.constant dense<0.000000e+00> : vector<32x320xf32>
    %21 = tpu.matmul %18, %20, %cst_22 {dimension_numbers = #tpu.dot_dimension_numbers<[1], [0], [0], [1], [0, 0, 1, 1], [], []>} : vector<32x152xf32>, vector<152x320xf32>, vector<32x320xf32> -> vector<32x320xf32>
    %22 = arith.addf %16, %21 : vector<32x320xf32>
    %c0_23 = arith.constant 0 : index
    %c4 = arith.constant 4 : index
    %c0_24 = arith.constant 0 : index
    %23 = vector.load %arg1[%c0_23, %c4, %c0_24] : memref<1x38x152xf32, #tpu.memory_space<vmem>>, vector<1x32x152xf32>
    %24 = vector.shape_cast %23 : vector<1x32x152xf32> to vector<32x152xf32>
    %c4_25 = arith.constant 4 : index
    %c0_26 = arith.constant 0 : index
    %c0_27 = arith.constant 0 : index
    %25 = vector.load %arg2[%c4_25, %c0_26, %c0_27] : memref<7x152x320xf32, #tpu.memory_space<vmem>>, vector<1x152x320xf32>
    %26 = vector.shape_cast %25 : vector<1x152x320xf32> to vector<152x320xf32>
    %cst_28 = arith.constant dense<0.000000e+00> : vector<32x320xf32>
    %27 = tpu.matmul %24, %26, %cst_28 {dimension_numbers = #tpu.dot_dimension_numbers<[1], [0], [0], [1], [0, 0, 1, 1], [], []>} : vector<32x152xf32>, vector<152x320xf32>, vector<32x320xf32> -> vector<32x320xf32>
    %28 = arith.addf %22, %27 : vector<32x320xf32>
    %c0_29 = arith.constant 0 : index
    %c5 = arith.constant 5 : index
    %c0_30 = arith.constant 0 : index
    %29 = vector.load %arg1[%c0_29, %c5, %c0_30] : memref<1x38x152xf32, #tpu.memory_space<vmem>>, vector<1x32x152xf32>
    %30 = vector.shape_cast %29 : vector<1x32x152xf32> to vector<32x152xf32>
    %c5_31 = arith.constant 5 : index
    %c0_32 = arith.constant 0 : index
    %c0_33 = arith.constant 0 : index
    %31 = vector.load %arg2[%c5_31, %c0_32, %c0_33] : memref<7x152x320xf32, #tpu.memory_space<vmem>>, vector<1x152x320xf32>
    %32 = vector.shape_cast %31 : vector<1x152x320xf32> to vector<152x320xf32>
    %cst_34 = arith.constant dense<0.000000e+00> : vector<32x320xf32>
    %33 = tpu.matmul %30, %32, %cst_34 {dimension_numbers = #tpu.dot_dimension_numbers<[1], [0], [0], [1], [0, 0, 1, 1], [], []>} : vector<32x152xf32>, vector<152x320xf32>, vector<32x320xf32> -> vector<32x320xf32>
    %34 = arith.addf %28, %33 : vector<32x320xf32>
    %c0_35 = arith.constant 0 : index
    %c6 = arith.constant 6 : index
    %c0_36 = arith.constant 0 : index
    %35 = vector.load %arg1[%c0_35, %c6, %c0_36] : memref<1x38x152xf32, #tpu.memory_space<vmem>>, vector<1x32x152xf32>
    %36 = vector.shape_cast %35 : vector<1x32x152xf32> to vector<32x152xf32>
    %c6_37 = arith.constant 6 : index
    %c0_38 = arith.constant 0 : index
    %c0_39 = arith.constant 0 : index
    %37 = vector.load %arg2[%c6_37, %c0_38, %c0_39] : memref<7x152x320xf32, #tpu.memory_space<vmem>>, vector<1x152x320xf32>
    %38 = vector.shape_cast %37 : vector<1x152x320xf32> to vector<152x320xf32>
    %cst_40 = arith.constant dense<0.000000e+00> : vector<32x320xf32>
    %39 = tpu.matmul %36, %38, %cst_40 {dimension_numbers = #tpu.dot_dimension_numbers<[1], [0], [0], [1], [0, 0, 1, 1], [], []>} : vector<32x152xf32>, vector<152x320xf32>, vector<32x320xf32> -> vector<32x320xf32>
    %40 = arith.addf %34, %39 : vector<32x320xf32>
    %c0_41 = arith.constant 0 : index
    %c0_42 = arith.constant 0 : index
    %41 = vector.load %arg3[%c0_41, %c0_42] : memref<1x320xf32, #tpu.memory_space<vmem>>, vector<1x320xf32>
    %42 = vector.broadcast %41 : vector<1x320xf32> to vector<32x320xf32>
    %43 = arith.addf %40, %42 : vector<32x320xf32>
    %cst_43 = arith.constant 0.000000e+00 : f32
    %44 = vector.broadcast %cst_43 : f32 to vector<32x320xf32>
    %45 = arith.maximumf %43, %44 : vector<32x320xf32>
    %46 = vector.extract_strided_slice %45 {offsets = [0, 0], sizes = [28, 320], strides = [1, 1]} : vector<32x320xf32> to vector<28x320xf32>
    %c0_44 = arith.constant 0 : index
    %c0_45 = arith.constant 0 : index
    %c0_46 = arith.constant 0 : index
    %47 = vector.load %arg4[%c0_44, %c0_45, %c0_46] : memref<5x320x140xf32, #tpu.memory_space<vmem>>, vector<1x320x140xf32>
    %48 = vector.shape_cast %47 : vector<1x320x140xf32> to vector<320x140xf32>
    %cst_47 = arith.constant dense<0.000000e+00> : vector<28x140xf32>
    %49 = tpu.matmul %46, %48, %cst_47 {dimension_numbers = #tpu.dot_dimension_numbers<[1], [0], [0], [1], [0, 0, 1, 1], [], []>} : vector<28x320xf32>, vector<320x140xf32>, vector<28x140xf32> -> vector<28x140xf32>
    %50 = vector.extract_strided_slice %45 {offsets = [1, 0], sizes = [28, 320], strides = [1, 1]} : vector<32x320xf32> to vector<28x320xf32>
    %c1_48 = arith.constant 1 : index
    %c0_49 = arith.constant 0 : index
    %c0_50 = arith.constant 0 : index
    %51 = vector.load %arg4[%c1_48, %c0_49, %c0_50] : memref<5x320x140xf32, #tpu.memory_space<vmem>>, vector<1x320x140xf32>
    %52 = vector.shape_cast %51 : vector<1x320x140xf32> to vector<320x140xf32>
    %cst_51 = arith.constant dense<0.000000e+00> : vector<28x140xf32>
    %53 = tpu.matmul %50, %52, %cst_51 {dimension_numbers = #tpu.dot_dimension_numbers<[1], [0], [0], [1], [0, 0, 1, 1], [], []>} : vector<28x320xf32>, vector<320x140xf32>, vector<28x140xf32> -> vector<28x140xf32>
    %54 = arith.addf %49, %53 : vector<28x140xf32>
    %55 = vector.extract_strided_slice %45 {offsets = [2, 0], sizes = [28, 320], strides = [1, 1]} : vector<32x320xf32> to vector<28x320xf32>
    %c2_52 = arith.constant 2 : index
    %c0_53 = arith.constant 0 : index
    %c0_54 = arith.constant 0 : index
    %56 = vector.load %arg4[%c2_52, %c0_53, %c0_54] : memref<5x320x140xf32, #tpu.memory_space<vmem>>, vector<1x320x140xf32>
    %57 = vector.shape_cast %56 : vector<1x320x140xf32> to vector<320x140xf32>
    %cst_55 = arith.constant dense<0.000000e+00> : vector<28x140xf32>
    %58 = tpu.matmul %55, %57, %cst_55 {dimension_numbers = #tpu.dot_dimension_numbers<[1], [0], [0], [1], [0, 0, 1, 1], [], []>} : vector<28x320xf32>, vector<320x140xf32>, vector<28x140xf32> -> vector<28x140xf32>
    %59 = arith.addf %54, %58 : vector<28x140xf32>
    %60 = vector.extract_strided_slice %45 {offsets = [3, 0], sizes = [28, 320], strides = [1, 1]} : vector<32x320xf32> to vector<28x320xf32>
    %c3_56 = arith.constant 3 : index
    %c0_57 = arith.constant 0 : index
    %c0_58 = arith.constant 0 : index
    %61 = vector.load %arg4[%c3_56, %c0_57, %c0_58] : memref<5x320x140xf32, #tpu.memory_space<vmem>>, vector<1x320x140xf32>
    %62 = vector.shape_cast %61 : vector<1x320x140xf32> to vector<320x140xf32>
    %cst_59 = arith.constant dense<0.000000e+00> : vector<28x140xf32>
    %63 = tpu.matmul %60, %62, %cst_59 {dimension_numbers = #tpu.dot_dimension_numbers<[1], [0], [0], [1], [0, 0, 1, 1], [], []>} : vector<28x320xf32>, vector<320x140xf32>, vector<28x140xf32> -> vector<28x140xf32>
    %64 = arith.addf %59, %63 : vector<28x140xf32>
    %65 = vector.extract_strided_slice %45 {offsets = [4, 0], sizes = [28, 320], strides = [1, 1]} : vector<32x320xf32> to vector<28x320xf32>
    %c4_60 = arith.constant 4 : index
    %c0_61 = arith.constant 0 : index
    %c0_62 = arith.constant 0 : index
    %66 = vector.load %arg4[%c4_60, %c0_61, %c0_62] : memref<5x320x140xf32, #tpu.memory_space<vmem>>, vector<1x320x140xf32>
    %67 = vector.shape_cast %66 : vector<1x320x140xf32> to vector<320x140xf32>
    %cst_63 = arith.constant dense<0.000000e+00> : vector<28x140xf32>
    %68 = tpu.matmul %65, %67, %cst_63 {dimension_numbers = #tpu.dot_dimension_numbers<[1], [0], [0], [1], [0, 0, 1, 1], [], []>} : vector<28x320xf32>, vector<320x140xf32>, vector<28x140xf32> -> vector<28x140xf32>
    %69 = arith.addf %64, %68 : vector<28x140xf32>
    %c0_64 = arith.constant 0 : index
    %c0_65 = arith.constant 0 : index
    %70 = vector.load %arg5[%c0_64, %c0_65] : memref<1x140xf32, #tpu.memory_space<vmem>>, vector<1x140xf32>
    %71 = vector.broadcast %70 : vector<1x140xf32> to vector<28x140xf32>
    %72 = arith.addf %69, %71 : vector<28x140xf32>
    %cst_66 = arith.constant 0.000000e+00 : f32
    %73 = vector.broadcast %cst_66 : f32 to vector<28x140xf32>
    %74 = arith.maximumf %72, %73 : vector<28x140xf32>
    %75 = vector.extract_strided_slice %74 {offsets = [0, 0], sizes = [28, 5], strides = [1, 1]} : vector<28x140xf32> to vector<28x5xf32>
    %76 = vector.extract_strided_slice %74 {offsets = [0, 5], sizes = [28, 5], strides = [1, 1]} : vector<28x140xf32> to vector<28x5xf32>
    %77 = arith.maximumf %75, %76 : vector<28x5xf32>
    %78 = vector.extract_strided_slice %74 {offsets = [0, 10], sizes = [28, 5], strides = [1, 1]} : vector<28x140xf32> to vector<28x5xf32>
    %79 = arith.maximumf %77, %78 : vector<28x5xf32>
    %80 = vector.extract_strided_slice %74 {offsets = [0, 15], sizes = [28, 5], strides = [1, 1]} : vector<28x140xf32> to vector<28x5xf32>
    %81 = arith.maximumf %79, %80 : vector<28x5xf32>
    %82 = vector.extract_strided_slice %81 {offsets = [0, 0], sizes = [1, 5], strides = [1, 1]} : vector<28x5xf32> to vector<1x5xf32>
    %83 = vector.extract_strided_slice %81 {offsets = [1, 0], sizes = [1, 5], strides = [1, 1]} : vector<28x5xf32> to vector<1x5xf32>
    %84 = arith.maximumf %82, %83 : vector<1x5xf32>
    %85 = vector.extract_strided_slice %81 {offsets = [2, 0], sizes = [1, 5], strides = [1, 1]} : vector<28x5xf32> to vector<1x5xf32>
    %86 = arith.maximumf %84, %85 : vector<1x5xf32>
    %87 = vector.extract_strided_slice %81 {offsets = [3, 0], sizes = [1, 5], strides = [1, 1]} : vector<28x5xf32> to vector<1x5xf32>
    %88 = arith.maximumf %86, %87 : vector<1x5xf32>
    %c0_67 = arith.constant 0 : index
    %c0_68 = arith.constant 0 : index
    %89 = vector.load %arg11[%c0_67, %c0_68] : memref<8x40xf32, #tpu.memory_space<vmem>>, vector<1x5xf32>
    tpu.vector_store %arg11[%c0_67, %c0_68], %88 {strides = array<i32>} : memref<8x40xf32, #tpu.memory_space<vmem>>, vector<1x5xf32>,
    %90 = vector.extract_strided_slice %81 {offsets = [3, 0], sizes = [1, 5], strides = [1, 1]} : vector<28x5xf32> to vector<1x5xf32>
    %91 = vector.extract_strided_slice %81 {offsets = [4, 0], sizes = [1, 5], strides = [1, 1]} : vector<28x5xf32> to vector<1x5xf32>
    %92 = arith.maximumf %90, %91 : vector<1x5xf32>
    %93 = vector.extract_strided_slice %81 {offsets = [5, 0], sizes = [1, 5], strides = [1, 1]} : vector<28x5xf32> to vector<1x5xf32>
    %94 = arith.maximumf %92, %93 : vector<1x5xf32>
    %95 = vector.extract_strided_slice %81 {offsets = [6, 0], sizes = [1, 5], strides = [1, 1]} : vector<28x5xf32> to vector<1x5xf32>
    %96 = arith.maximumf %94, %95 : vector<1x5xf32>
    %c1_69 = arith.constant 1 : index
    %c0_70 = arith.constant 0 : index
    %97 = vector.load %arg11[%c1_69, %c0_70] : memref<8x40xf32, #tpu.memory_space<vmem>>, vector<1x5xf32>
    tpu.vector_store %arg11[%c1_69, %c0_70], %96 {strides = array<i32>} : memref<8x40xf32, #tpu.memory_space<vmem>>, vector<1x5xf32>,
    %98 = vector.extract_strided_slice %81 {offsets = [7, 0], sizes = [1, 5], strides = [1, 1]} : vector<28x5xf32> to vector<1x5xf32>
    %99 = vector.extract_strided_slice %81 {offsets = [8, 0], sizes = [1, 5], strides = [1, 1]} : vector<28x5xf32> to vector<1x5xf32>
    %100 = arith.maximumf %98, %99 : vector<1x5xf32>
    %101 = vector.extract_strided_slice %81 {offsets = [9, 0], sizes = [1, 5], strides = [1, 1]} : vector<28x5xf32> to vector<1x5xf32>
    %102 = arith.maximumf %100, %101 : vector<1x5xf32>
    %103 = vector.extract_strided_slice %81 {offsets = [10, 0], sizes = [1, 5], strides = [1, 1]} : vector<28x5xf32> to vector<1x5xf32>
    %104 = arith.maximumf %102, %103 : vector<1x5xf32>
    %c2_71 = arith.constant 2 : index
    %c0_72 = arith.constant 0 : index
    %105 = vector.load %arg11[%c2_71, %c0_72] : memref<8x40xf32, #tpu.memory_space<vmem>>, vector<1x5xf32>
    tpu.vector_store %arg11[%c2_71, %c0_72], %104 {strides = array<i32>} : memref<8x40xf32, #tpu.memory_space<vmem>>, vector<1x5xf32>,
    %106 = vector.extract_strided_slice %81 {offsets = [10, 0], sizes = [1, 5], strides = [1, 1]} : vector<28x5xf32> to vector<1x5xf32>
    %107 = vector.extract_strided_slice %81 {offsets = [11, 0], sizes = [1, 5], strides = [1, 1]} : vector<28x5xf32> to vector<1x5xf32>
    %108 = arith.maximumf %106, %107 : vector<1x5xf32>
    %109 = vector.extract_strided_slice %81 {offsets = [12, 0], sizes = [1, 5], strides = [1, 1]} : vector<28x5xf32> to vector<1x5xf32>
    %110 = arith.maximumf %108, %109 : vector<1x5xf32>
    %111 = vector.extract_strided_slice %81 {offsets = [13, 0], sizes = [1, 5], strides = [1, 1]} : vector<28x5xf32> to vector<1x5xf32>
    %112 = arith.maximumf %110, %111 : vector<1x5xf32>
    %c3_73 = arith.constant 3 : index
    %c0_74 = arith.constant 0 : index
    %113 = vector.load %arg11[%c3_73, %c0_74] : memref<8x40xf32, #tpu.memory_space<vmem>>, vector<1x5xf32>
    tpu.vector_store %arg11[%c3_73, %c0_74], %112 {strides = array<i32>} : memref<8x40xf32, #tpu.memory_space<vmem>>, vector<1x5xf32>,
    %114 = vector.extract_strided_slice %81 {offsets = [14, 0], sizes = [1, 5], strides = [1, 1]} : vector<28x5xf32> to vector<1x5xf32>
    %115 = vector.extract_strided_slice %81 {offsets = [15, 0], sizes = [1, 5], strides = [1, 1]} : vector<28x5xf32> to vector<1x5xf32>
    %116 = arith.maximumf %114, %115 : vector<1x5xf32>
    %117 = vector.extract_strided_slice %81 {offsets = [16, 0], sizes = [1, 5], strides = [1, 1]} : vector<28x5xf32> to vector<1x5xf32>
    %118 = arith.maximumf %116, %117 : vector<1x5xf32>
    %119 = vector.extract_strided_slice %81 {offsets = [17, 0], sizes = [1, 5], strides = [1, 1]} : vector<28x5xf32> to vector<1x5xf32>
    %120 = arith.maximumf %118, %119 : vector<1x5xf32>
    %c4_75 = arith.constant 4 : index
    %c0_76 = arith.constant 0 : index
    %121 = vector.load %arg11[%c4_75, %c0_76] : memref<8x40xf32, #tpu.memory_space<vmem>>, vector<1x5xf32>
    tpu.vector_store %arg11[%c4_75, %c0_76], %120 {strides = array<i32>} : memref<8x40xf32, #tpu.memory_space<vmem>>, vector<1x5xf32>,
    %122 = vector.extract_strided_slice %81 {offsets = [17, 0], sizes = [1, 5], strides = [1, 1]} : vector<28x5xf32> to vector<1x5xf32>
    %123 = vector.extract_strided_slice %81 {offsets = [18, 0], sizes = [1, 5], strides = [1, 1]} : vector<28x5xf32> to vector<1x5xf32>
    %124 = arith.maximumf %122, %123 : vector<1x5xf32>
    %125 = vector.extract_strided_slice %81 {offsets = [19, 0], sizes = [1, 5], strides = [1, 1]} : vector<28x5xf32> to vector<1x5xf32>
    %126 = arith.maximumf %124, %125 : vector<1x5xf32>
    %127 = vector.extract_strided_slice %81 {offsets = [20, 0], sizes = [1, 5], strides = [1, 1]} : vector<28x5xf32> to vector<1x5xf32>
    %128 = arith.maximumf %126, %127 : vector<1x5xf32>
    %c5_77 = arith.constant 5 : index
    %c0_78 = arith.constant 0 : index
    %129 = vector.load %arg11[%c5_77, %c0_78] : memref<8x40xf32, #tpu.memory_space<vmem>>, vector<1x5xf32>
    tpu.vector_store %arg11[%c5_77, %c0_78], %128 {strides = array<i32>} : memref<8x40xf32, #tpu.memory_space<vmem>>, vector<1x5xf32>,
    %130 = vector.extract_strided_slice %81 {offsets = [21, 0], sizes = [1, 5], strides = [1, 1]} : vector<28x5xf32> to vector<1x5xf32>
    %131 = vector.extract_strided_slice %81 {offsets = [22, 0], sizes = [1, 5], strides = [1, 1]} : vector<28x5xf32> to vector<1x5xf32>
    %132 = arith.maximumf %130, %131 : vector<1x5xf32>
    %133 = vector.extract_strided_slice %81 {offsets = [23, 0], sizes = [1, 5], strides = [1, 1]} : vector<28x5xf32> to vector<1x5xf32>
    %134 = arith.maximumf %132, %133 : vector<1x5xf32>
    %135 = vector.extract_strided_slice %81 {offsets = [24, 0], sizes = [1, 5], strides = [1, 1]} : vector<28x5xf32> to vector<1x5xf32>
    %136 = arith.maximumf %134, %135 : vector<1x5xf32>
    %c6_79 = arith.constant 6 : index
    %c0_80 = arith.constant 0 : index
    %137 = vector.load %arg11[%c6_79, %c0_80] : memref<8x40xf32, #tpu.memory_space<vmem>>, vector<1x5xf32>
    tpu.vector_store %arg11[%c6_79, %c0_80], %136 {strides = array<i32>} : memref<8x40xf32, #tpu.memory_space<vmem>>, vector<1x5xf32>,
    %138 = vector.extract_strided_slice %81 {offsets = [24, 0], sizes = [1, 5], strides = [1, 1]} : vector<28x5xf32> to vector<1x5xf32>
    %139 = vector.extract_strided_slice %81 {offsets = [25, 0], sizes = [1, 5], strides = [1, 1]} : vector<28x5xf32> to vector<1x5xf32>
    %140 = arith.maximumf %138, %139 : vector<1x5xf32>
    %141 = vector.extract_strided_slice %81 {offsets = [26, 0], sizes = [1, 5], strides = [1, 1]} : vector<28x5xf32> to vector<1x5xf32>
    %142 = arith.maximumf %140, %141 : vector<1x5xf32>
    %143 = vector.extract_strided_slice %81 {offsets = [27, 0], sizes = [1, 5], strides = [1, 1]} : vector<28x5xf32> to vector<1x5xf32>
    %144 = arith.maximumf %142, %143 : vector<1x5xf32>
    %c7 = arith.constant 7 : index
    %c0_81 = arith.constant 0 : index
    %145 = vector.load %arg11[%c7, %c0_81] : memref<8x40xf32, #tpu.memory_space<vmem>>, vector<1x5xf32>
    tpu.vector_store %arg11[%c7, %c0_81], %144 {strides = array<i32>} : memref<8x40xf32, #tpu.memory_space<vmem>>, vector<1x5xf32>,
    %146 = vector.extract_strided_slice %74 {offsets = [0, 15], sizes = [28, 5], strides = [1, 1]} : vector<28x140xf32> to vector<28x5xf32>
    %147 = vector.extract_strided_slice %74 {offsets = [0, 20], sizes = [28, 5], strides = [1, 1]} : vector<28x140xf32> to vector<28x5xf32>
    %148 = arith.maximumf %146, %147 : vector<28x5xf32>
    %149 = vector.extract_strided_slice %74 {offsets = [0, 25], sizes = [28, 5], strides = [1, 1]} : vector<28x140xf32> to vector<28x5xf32>
    %150 = arith.maximumf %148, %149 : vector<28x5xf32>
    %151 = vector.extract_strided_slice %74 {offsets = [0, 30], sizes = [28, 5], strides = [1, 1]} : vector<28x140xf32> to vector<28x5xf32>
    %152 = arith.maximumf %150, %151 : vector<28x5xf32>
    %153 = vector.extract_strided_slice %152 {offsets = [0, 0], sizes = [1, 5], strides = [1, 1]} : vector<28x5xf32> to vector<1x5xf32>
    %154 = vector.extract_strided_slice %152 {offsets = [1, 0], sizes = [1, 5], strides = [1, 1]} : vector<28x5xf32> to vector<1x5xf32>
    %155 = arith.maximumf %153, %154 : vector<1x5xf32>
    %156 = vector.extract_strided_slice %152 {offsets = [2, 0], sizes = [1, 5], strides = [1, 1]} : vector<28x5xf32> to vector<1x5xf32>
    %157 = arith.maximumf %155, %156 : vector<1x5xf32>
    %158 = vector.extract_strided_slice %152 {offsets = [3, 0], sizes = [1, 5], strides = [1, 1]} : vector<28x5xf32> to vector<1x5xf32>
    %159 = arith.maximumf %157, %158 : vector<1x5xf32>
    %c0_82 = arith.constant 0 : index
    %c5_83 = arith.constant 5 : index
    %160 = vector.load %arg11[%c0_82, %c5_83] : memref<8x40xf32, #tpu.memory_space<vmem>>, vector<1x5xf32>
    tpu.vector_store %arg11[%c0_82, %c5_83], %159 {strides = array<i32>} : memref<8x40xf32, #tpu.memory_space<vmem>>, vector<1x5xf32>,
    %161 = vector.extract_strided_slice %152 {offsets = [3, 0], sizes = [1, 5], strides = [1, 1]} : vector<28x5xf32> to vector<1x5xf32>
    %162 = vector.extract_strided_slice %152 {offsets = [4, 0], sizes = [1, 5], strides = [1, 1]} : vector<28x5xf32> to vector<1x5xf32>
    %163 = arith.maximumf %161, %162 : vector<1x5xf32>
    %164 = vector.extract_strided_slice %152 {offsets = [5, 0], sizes = [1, 5], strides = [1, 1]} : vector<28x5xf32> to vector<1x5xf32>
    %165 = arith.maximumf %163, %164 : vector<1x5xf32>
    %166 = vector.extract_strided_slice %152 {offsets = [6, 0], sizes = [1, 5], strides = [1, 1]} : vector<28x5xf32> to vector<1x5xf32>
    %167 = arith.maximumf %165, %166 : vector<1x5xf32>
    %c1_84 = arith.constant 1 : index
    %c5_85 = arith.constant 5 : index
    %168 = vector.load %arg11[%c1_84, %c5_85] : memref<8x40xf32, #tpu.memory_space<vmem>>, vector<1x5xf32>
    tpu.vector_store %arg11[%c1_84, %c5_85], %167 {strides = array<i32>} : memref<8x40xf32, #tpu.memory_space<vmem>>, vector<1x5xf32>,
    %169 = vector.extract_strided_slice %152 {offsets = [7, 0], sizes = [1, 5], strides = [1, 1]} : vector<28x5xf32> to vector<1x5xf32>
    %170 = vector.extract_strided_slice %152 {offsets = [8, 0], sizes = [1, 5], strides = [1, 1]} : vector<28x5xf32> to vector<1x5xf32>
    %171 = arith.maximumf %169, %170 : vector<1x5xf32>
    %172 = vector.extract_strided_slice %152 {offsets = [9, 0], sizes = [1, 5], strides = [1, 1]} : vector<28x5xf32> to vector<1x5xf32>
    %173 = arith.maximumf %171, %172 : vector<1x5xf32>
    %174 = vector.extract_strided_slice %152 {offsets = [10, 0], sizes = [1, 5], strides = [1, 1]} : vector<28x5xf32> to vector<1x5xf32>
    %175 = arith.maximumf %173, %174 : vector<1x5xf32>
    %c2_86 = arith.constant 2 : index
    %c5_87 = arith.constant 5 : index
    %176 = vector.load %arg11[%c2_86, %c5_87] : memref<8x40xf32, #tpu.memory_space<vmem>>, vector<1x5xf32>
    tpu.vector_store %arg11[%c2_86, %c5_87], %175 {strides = array<i32>} : memref<8x40xf32, #tpu.memory_space<vmem>>, vector<1x5xf32>,
    %177 = vector.extract_strided_slice %152 {offsets = [10, 0], sizes = [1, 5], strides = [1, 1]} : vector<28x5xf32> to vector<1x5xf32>
    %178 = vector.extract_strided_slice %152 {offsets = [11, 0], sizes = [1, 5], strides = [1, 1]} : vector<28x5xf32> to vector<1x5xf32>
    %179 = arith.maximumf %177, %178 : vector<1x5xf32>
    %180 = vector.extract_strided_slice %152 {offsets = [12, 0], sizes = [1, 5], strides = [1, 1]} : vector<28x5xf32> to vector<1x5xf32>
    %181 = arith.maximumf %179, %180 : vector<1x5xf32>
    %182 = vector.extract_strided_slice %152 {offsets = [13, 0], sizes = [1, 5], strides = [1, 1]} : vector<28x5xf32> to vector<1x5xf32>
    %183 = arith.maximumf %181, %182 : vector<1x5xf32>
    %c3_88 = arith.constant 3 : index
    %c5_89 = arith.constant 5 : index
    %184 = vector.load %arg11[%c3_88, %c5_89] : memref<8x40xf32, #tpu.memory_space<vmem>>, vector<1x5xf32>
    tpu.vector_store %arg11[%c3_88, %c5_89], %183 {strides = array<i32>} : memref<8x40xf32, #tpu.memory_space<vmem>>, vector<1x5xf32>,
    %185 = vector.extract_strided_slice %152 {offsets = [14, 0], sizes = [1, 5], strides = [1, 1]} : vector<28x5xf32> to vector<1x5xf32>
    %186 = vector.extract_strided_slice %152 {offsets = [15, 0], sizes = [1, 5], strides = [1, 1]} : vector<28x5xf32> to vector<1x5xf32>
    %187 = arith.maximumf %185, %186 : vector<1x5xf32>
    %188 = vector.extract_strided_slice %152 {offsets = [16, 0], sizes = [1, 5], strides = [1, 1]} : vector<28x5xf32> to vector<1x5xf32>
    %189 = arith.maximumf %187, %188 : vector<1x5xf32>
    %190 = vector.extract_strided_slice %152 {offsets = [17, 0], sizes = [1, 5], strides = [1, 1]} : vector<28x5xf32> to vector<1x5xf32>
    %191 = arith.maximumf %189, %190 : vector<1x5xf32>
    %c4_90 = arith.constant 4 : index
    %c5_91 = arith.constant 5 : index
    %192 = vector.load %arg11[%c4_90, %c5_91] : memref<8x40xf32, #tpu.memory_space<vmem>>, vector<1x5xf32>
    tpu.vector_store %arg11[%c4_90, %c5_91], %191 {strides = array<i32>} : memref<8x40xf32, #tpu.memory_space<vmem>>, vector<1x5xf32>,
    %193 = vector.extract_strided_slice %152 {offsets = [17, 0], sizes = [1, 5], strides = [1, 1]} : vector<28x5xf32> to vector<1x5xf32>
    %194 = vector.extract_strided_slice %152 {offsets = [18, 0], sizes = [1, 5], strides = [1, 1]} : vector<28x5xf32> to vector<1x5xf32>
    %195 = arith.maximumf %193, %194 : vector<1x5xf32>
    %196 = vector.extract_strided_slice %152 {offsets = [19, 0], sizes = [1, 5], strides = [1, 1]} : vector<28x5xf32> to vector<1x5xf32>
    %197 = arith.maximumf %195, %196 : vector<1x5xf32>
    %198 = vector.extract_strided_slice %152 {offsets = [20, 0], sizes = [1, 5], strides = [1, 1]} : vector<28x5xf32> to vector<1x5xf32>
    %199 = arith.maximumf %197, %198 : vector<1x5xf32>
    %c5_92 = arith.constant 5 : index
    %c5_93 = arith.constant 5 : index
    %200 = vector.load %arg11[%c5_92, %c5_93] : memref<8x40xf32, #tpu.memory_space<vmem>>, vector<1x5xf32>
    tpu.vector_store %arg11[%c5_92, %c5_93], %199 {strides = array<i32>} : memref<8x40xf32, #tpu.memory_space<vmem>>, vector<1x5xf32>,
    %201 = vector.extract_strided_slice %152 {offsets = [21, 0], sizes = [1, 5], strides = [1, 1]} : vector<28x5xf32> to vector<1x5xf32>
    %202 = vector.extract_strided_slice %152 {offsets = [22, 0], sizes = [1, 5], strides = [1, 1]} : vector<28x5xf32> to vector<1x5xf32>
    %203 = arith.maximumf %201, %202 : vector<1x5xf32>
    %204 = vector.extract_strided_slice %152 {offsets = [23, 0], sizes = [1, 5], strides = [1, 1]} : vector<28x5xf32> to vector<1x5xf32>
    %205 = arith.maximumf %203, %204 : vector<1x5xf32>
    %206 = vector.extract_strided_slice %152 {offsets = [24, 0], sizes = [1, 5], strides = [1, 1]} : vector<28x5xf32> to vector<1x5xf32>
    %207 = arith.maximumf %205, %206 : vector<1x5xf32>
    %c6_94 = arith.constant 6 : index
    %c5_95 = arith.constant 5 : index
    %208 = vector.load %arg11[%c6_94, %c5_95] : memref<8x40xf32, #tpu.memory_space<vmem>>, vector<1x5xf32>
    tpu.vector_store %arg11[%c6_94, %c5_95], %207 {strides = array<i32>} : memref<8x40xf32, #tpu.memory_space<vmem>>, vector<1x5xf32>,
    %209 = vector.extract_strided_slice %152 {offsets = [24, 0], sizes = [1, 5], strides = [1, 1]} : vector<28x5xf32> to vector<1x5xf32>
    %210 = vector.extract_strided_slice %152 {offsets = [25, 0], sizes = [1, 5], strides = [1, 1]} : vector<28x5xf32> to vector<1x5xf32>
    %211 = arith.maximumf %209, %210 : vector<1x5xf32>
    %212 = vector.extract_strided_slice %152 {offsets = [26, 0], sizes = [1, 5], strides = [1, 1]} : vector<28x5xf32> to vector<1x5xf32>
    %213 = arith.maximumf %211, %212 : vector<1x5xf32>
    %214 = vector.extract_strided_slice %152 {offsets = [27, 0], sizes = [1, 5], strides = [1, 1]} : vector<28x5xf32> to vector<1x5xf32>
    %215 = arith.maximumf %213, %214 : vector<1x5xf32>
    %c7_96 = arith.constant 7 : index
    %c5_97 = arith.constant 5 : index
    %216 = vector.load %arg11[%c7_96, %c5_97] : memref<8x40xf32, #tpu.memory_space<vmem>>, vector<1x5xf32>
    tpu.vector_store %arg11[%c7_96, %c5_97], %215 {strides = array<i32>} : memref<8x40xf32, #tpu.memory_space<vmem>>, vector<1x5xf32>,
    %217 = vector.extract_strided_slice %74 {offsets = [0, 35], sizes = [28, 5], strides = [1, 1]} : vector<28x140xf32> to vector<28x5xf32>
    %218 = vector.extract_strided_slice %74 {offsets = [0, 40], sizes = [28, 5], strides = [1, 1]} : vector<28x140xf32> to vector<28x5xf32>
    %219 = arith.maximumf %217, %218 : vector<28x5xf32>
    %220 = vector.extract_strided_slice %74 {offsets = [0, 45], sizes = [28, 5], strides = [1, 1]} : vector<28x140xf32> to vector<28x5xf32>
    %221 = arith.maximumf %219, %220 : vector<28x5xf32>
    %222 = vector.extract_strided_slice %74 {offsets = [0, 50], sizes = [28, 5], strides = [1, 1]} : vector<28x140xf32> to vector<28x5xf32>
    %223 = arith.maximumf %221, %222 : vector<28x5xf32>
    %224 = vector.extract_strided_slice %223 {offsets = [0, 0], sizes = [1, 5], strides = [1, 1]} : vector<28x5xf32> to vector<1x5xf32>
    %225 = vector.extract_strided_slice %223 {offsets = [1, 0], sizes = [1, 5], strides = [1, 1]} : vector<28x5xf32> to vector<1x5xf32>
    %226 = arith.maximumf %224, %225 : vector<1x5xf32>
    %227 = vector.extract_strided_slice %223 {offsets = [2, 0], sizes = [1, 5], strides = [1, 1]} : vector<28x5xf32> to vector<1x5xf32>
    %228 = arith.maximumf %226, %227 : vector<1x5xf32>
    %229 = vector.extract_strided_slice %223 {offsets = [3, 0], sizes = [1, 5], strides = [1, 1]} : vector<28x5xf32> to vector<1x5xf32>
    %230 = arith.maximumf %228, %229 : vector<1x5xf32>
    %c0_98 = arith.constant 0 : index
    %c10 = arith.constant 10 : index
    %231 = vector.load %arg11[%c0_98, %c10] : memref<8x40xf32, #tpu.memory_space<vmem>>, vector<1x5xf32>
    tpu.vector_store %arg11[%c0_98, %c10], %230 {strides = array<i32>} : memref<8x40xf32, #tpu.memory_space<vmem>>, vector<1x5xf32>,
    %232 = vector.extract_strided_slice %223 {offsets = [3, 0], sizes = [1, 5], strides = [1, 1]} : vector<28x5xf32> to vector<1x5xf32>
    %233 = vector.extract_strided_slice %223 {offsets = [4, 0], sizes = [1, 5], strides = [1, 1]} : vector<28x5xf32> to vector<1x5xf32>
    %234 = arith.maximumf %232, %233 : vector<1x5xf32>
    %235 = vector.extract_strided_slice %223 {offsets = [5, 0], sizes = [1, 5], strides = [1, 1]} : vector<28x5xf32> to vector<1x5xf32>
    %236 = arith.maximumf %234, %235 : vector<1x5xf32>
    %237 = vector.extract_strided_slice %223 {offsets = [6, 0], sizes = [1, 5], strides = [1, 1]} : vector<28x5xf32> to vector<1x5xf32>
    %238 = arith.maximumf %236, %237 : vector<1x5xf32>
    %c1_99 = arith.constant 1 : index
    %c10_100 = arith.constant 10 : index
    %239 = vector.load %arg11[%c1_99, %c10_100] : memref<8x40xf32, #tpu.memory_space<vmem>>, vector<1x5xf32>
    tpu.vector_store %arg11[%c1_99, %c10_100], %238 {strides = array<i32>} : memref<8x40xf32, #tpu.memory_space<vmem>>, vector<1x5xf32>,
    %240 = vector.extract_strided_slice %223 {offsets = [7, 0], sizes = [1, 5], strides = [1, 1]} : vector<28x5xf32> to vector<1x5xf32>
    %241 = vector.extract_strided_slice %223 {offsets = [8, 0], sizes = [1, 5], strides = [1, 1]} : vector<28x5xf32> to vector<1x5xf32>
    %242 = arith.maximumf %240, %241 : vector<1x5xf32>
    %243 = vector.extract_strided_slice %223 {offsets = [9, 0], sizes = [1, 5], strides = [1, 1]} : vector<28x5xf32> to vector<1x5xf32>
    %244 = arith.maximumf %242, %243 : vector<1x5xf32>
    %245 = vector.extract_strided_slice %223 {offsets = [10, 0], sizes = [1, 5], strides = [1, 1]} : vector<28x5xf32> to vector<1x5xf32>
    %246 = arith.maximumf %244, %245 : vector<1x5xf32>
    %c2_101 = arith.constant 2 : index
    %c10_102 = arith.constant 10 : index
    %247 = vector.load %arg11[%c2_101, %c10_102] : memref<8x40xf32, #tpu.memory_space<vmem>>, vector<1x5xf32>
    tpu.vector_store %arg11[%c2_101, %c10_102], %246 {strides = array<i32>} : memref<8x40xf32, #tpu.memory_space<vmem>>, vector<1x5xf32>,
    %248 = vector.extract_strided_slice %223 {offsets = [10, 0], sizes = [1, 5], strides = [1, 1]} : vector<28x5xf32> to vector<1x5xf32>
    %249 = vector.extract_strided_slice %223 {offsets = [11, 0], sizes = [1, 5], strides = [1, 1]} : vector<28x5xf32> to vector<1x5xf32>
    %250 = arith.maximumf %248, %249 : vector<1x5xf32>
    %251 = vector.extract_strided_slice %223 {offsets = [12, 0], sizes = [1, 5], strides = [1, 1]} : vector<28x5xf32> to vector<1x5xf32>
    %252 = arith.maximumf %250, %251 : vector<1x5xf32>
    %253 = vector.extract_strided_slice %223 {offsets = [13, 0], sizes = [1, 5], strides = [1, 1]} : vector<28x5xf32> to vector<1x5xf32>
    %254 = arith.maximumf %252, %253 : vector<1x5xf32>
    %c3_103 = arith.constant 3 : index
    %c10_104 = arith.constant 10 : index
    %255 = vector.load %arg11[%c3_103, %c10_104] : memref<8x40xf32, #tpu.memory_space<vmem>>, vector<1x5xf32>
    tpu.vector_store %arg11[%c3_103, %c10_104], %254 {strides = array<i32>} : memref<8x40xf32, #tpu.memory_space<vmem>>, vector<1x5xf32>,
    %256 = vector.extract_strided_slice %223 {offsets = [14, 0], sizes = [1, 5], strides = [1, 1]} : vector<28x5xf32> to vector<1x5xf32>
    %257 = vector.extract_strided_slice %223 {offsets = [15, 0], sizes = [1, 5], strides = [1, 1]} : vector<28x5xf32> to vector<1x5xf32>
    %258 = arith.maximumf %256, %257 : vector<1x5xf32>
    %259 = vector.extract_strided_slice %223 {offsets = [16, 0], sizes = [1, 5], strides = [1, 1]} : vector<28x5xf32> to vector<1x5xf32>
    %260 = arith.maximumf %258, %259 : vector<1x5xf32>
    %261 = vector.extract_strided_slice %223 {offsets = [17, 0], sizes = [1, 5], strides = [1, 1]} : vector<28x5xf32> to vector<1x5xf32>
    %262 = arith.maximumf %260, %261 : vector<1x5xf32>
    %c4_105 = arith.constant 4 : index
    %c10_106 = arith.constant 10 : index
    %263 = vector.load %arg11[%c4_105, %c10_106] : memref<8x40xf32, #tpu.memory_space<vmem>>, vector<1x5xf32>
    tpu.vector_store %arg11[%c4_105, %c10_106], %262 {strides = array<i32>} : memref<8x40xf32, #tpu.memory_space<vmem>>, vector<1x5xf32>,
    %264 = vector.extract_strided_slice %223 {offsets = [17, 0], sizes = [1, 5], strides = [1, 1]} : vector<28x5xf32> to vector<1x5xf32>
    %265 = vector.extract_strided_slice %223 {offsets = [18, 0], sizes = [1, 5], strides = [1, 1]} : vector<28x5xf32> to vector<1x5xf32>
    %266 = arith.maximumf %264, %265 : vector<1x5xf32>
    %267 = vector.extract_strided_slice %223 {offsets = [19, 0], sizes = [1, 5], strides = [1, 1]} : vector<28x5xf32> to vector<1x5xf32>
    %268 = arith.maximumf %266, %267 : vector<1x5xf32>
    %269 = vector.extract_strided_slice %223 {offsets = [20, 0], sizes = [1, 5], strides = [1, 1]} : vector<28x5xf32> to vector<1x5xf32>
    %270 = arith.maximumf %268, %269 : vector<1x5xf32>
    %c5_107 = arith.constant 5 : index
    %c10_108 = arith.constant 10 : index
    %271 = vector.load %arg11[%c5_107, %c10_108] : memref<8x40xf32, #tpu.memory_space<vmem>>, vector<1x5xf32>
    tpu.vector_store %arg11[%c5_107, %c10_108], %270 {strides = array<i32>} : memref<8x40xf32, #tpu.memory_space<vmem>>, vector<1x5xf32>,
    %272 = vector.extract_strided_slice %223 {offsets = [21, 0], sizes = [1, 5], strides = [1, 1]} : vector<28x5xf32> to vector<1x5xf32>
    %273 = vector.extract_strided_slice %223 {offsets = [22, 0], sizes = [1, 5], strides = [1, 1]} : vector<28x5xf32> to vector<1x5xf32>
    %274 = arith.maximumf %272, %273 : vector<1x5xf32>
    %275 = vector.extract_strided_slice %223 {offsets = [23, 0], sizes = [1, 5], strides = [1, 1]} : vector<28x5xf32> to vector<1x5xf32>
    %276 = arith.maximumf %274, %275 : vector<1x5xf32>
    %277 = vector.extract_strided_slice %223 {offsets = [24, 0], sizes = [1, 5], strides = [1, 1]} : vector<28x5xf32> to vector<1x5xf32>
    %278 = arith.maximumf %276, %277 : vector<1x5xf32>
    %c6_109 = arith.constant 6 : index
    %c10_110 = arith.constant 10 : index
    %279 = vector.load %arg11[%c6_109, %c10_110] : memref<8x40xf32, #tpu.memory_space<vmem>>, vector<1x5xf32>
    tpu.vector_store %arg11[%c6_109, %c10_110], %278 {strides = array<i32>} : memref<8x40xf32, #tpu.memory_space<vmem>>, vector<1x5xf32>,
    %280 = vector.extract_strided_slice %223 {offsets = [24, 0], sizes = [1, 5], strides = [1, 1]} : vector<28x5xf32> to vector<1x5xf32>
    %281 = vector.extract_strided_slice %223 {offsets = [25, 0], sizes = [1, 5], strides = [1, 1]} : vector<28x5xf32> to vector<1x5xf32>
    %282 = arith.maximumf %280, %281 : vector<1x5xf32>
    %283 = vector.extract_strided_slice %223 {offsets = [26, 0], sizes = [1, 5], strides = [1, 1]} : vector<28x5xf32> to vector<1x5xf32>
    %284 = arith.maximumf %282, %283 : vector<1x5xf32>
    %285 = vector.extract_strided_slice %223 {offsets = [27, 0], sizes = [1, 5], strides = [1, 1]} : vector<28x5xf32> to vector<1x5xf32>
    %286 = arith.maximumf %284, %285 : vector<1x5xf32>
    %c7_111 = arith.constant 7 : index
    %c10_112 = arith.constant 10 : index
    %287 = vector.load %arg11[%c7_111, %c10_112] : memref<8x40xf32, #tpu.memory_space<vmem>>, vector<1x5xf32>
    tpu.vector_store %arg11[%c7_111, %c10_112], %286 {strides = array<i32>} : memref<8x40xf32, #tpu.memory_space<vmem>>, vector<1x5xf32>,
    %288 = vector.extract_strided_slice %74 {offsets = [0, 50], sizes = [28, 5], strides = [1, 1]} : vector<28x140xf32> to vector<28x5xf32>
    %289 = vector.extract_strided_slice %74 {offsets = [0, 55], sizes = [28, 5], strides = [1, 1]} : vector<28x140xf32> to vector<28x5xf32>
    %290 = arith.maximumf %288, %289 : vector<28x5xf32>
    %291 = vector.extract_strided_slice %74 {offsets = [0, 60], sizes = [28, 5], strides = [1, 1]} : vector<28x140xf32> to vector<28x5xf32>
    %292 = arith.maximumf %290, %291 : vector<28x5xf32>
    %293 = vector.extract_strided_slice %74 {offsets = [0, 65], sizes = [28, 5], strides = [1, 1]} : vector<28x140xf32> to vector<28x5xf32>
    %294 = arith.maximumf %292, %293 : vector<28x5xf32>
    %295 = vector.extract_strided_slice %294 {offsets = [0, 0], sizes = [1, 5], strides = [1, 1]} : vector<28x5xf32> to vector<1x5xf32>
    %296 = vector.extract_strided_slice %294 {offsets = [1, 0], sizes = [1, 5], strides = [1, 1]} : vector<28x5xf32> to vector<1x5xf32>
    %297 = arith.maximumf %295, %296 : vector<1x5xf32>
    %298 = vector.extract_strided_slice %294 {offsets = [2, 0], sizes = [1, 5], strides = [1, 1]} : vector<28x5xf32> to vector<1x5xf32>
    %299 = arith.maximumf %297, %298 : vector<1x5xf32>
    %300 = vector.extract_strided_slice %294 {offsets = [3, 0], sizes = [1, 5], strides = [1, 1]} : vector<28x5xf32> to vector<1x5xf32>
    %301 = arith.maximumf %299, %300 : vector<1x5xf32>
    %c0_113 = arith.constant 0 : index
    %c15 = arith.constant 15 : index
    %302 = vector.load %arg11[%c0_113, %c15] : memref<8x40xf32, #tpu.memory_space<vmem>>, vector<1x5xf32>
    tpu.vector_store %arg11[%c0_113, %c15], %301 {strides = array<i32>} : memref<8x40xf32, #tpu.memory_space<vmem>>, vector<1x5xf32>,
    %303 = vector.extract_strided_slice %294 {offsets = [3, 0], sizes = [1, 5], strides = [1, 1]} : vector<28x5xf32> to vector<1x5xf32>
    %304 = vector.extract_strided_slice %294 {offsets = [4, 0], sizes = [1, 5], strides = [1, 1]} : vector<28x5xf32> to vector<1x5xf32>
    %305 = arith.maximumf %303, %304 : vector<1x5xf32>
    %306 = vector.extract_strided_slice %294 {offsets = [5, 0], sizes = [1, 5], strides = [1, 1]} : vector<28x5xf32> to vector<1x5xf32>
    %307 = arith.maximumf %305, %306 : vector<1x5xf32>
    %308 = vector.extract_strided_slice %294 {offsets = [6, 0], sizes = [1, 5], strides = [1, 1]} : vector<28x5xf32> to vector<1x5xf32>
    %309 = arith.maximumf %307, %308 : vector<1x5xf32>
    %c1_114 = arith.constant 1 : index
    %c15_115 = arith.constant 15 : index
    %310 = vector.load %arg11[%c1_114, %c15_115] : memref<8x40xf32, #tpu.memory_space<vmem>>, vector<1x5xf32>
    tpu.vector_store %arg11[%c1_114, %c15_115], %309 {strides = array<i32>} : memref<8x40xf32, #tpu.memory_space<vmem>>, vector<1x5xf32>,
    %311 = vector.extract_strided_slice %294 {offsets = [7, 0], sizes = [1, 5], strides = [1, 1]} : vector<28x5xf32> to vector<1x5xf32>
    %312 = vector.extract_strided_slice %294 {offsets = [8, 0], sizes = [1, 5], strides = [1, 1]} : vector<28x5xf32> to vector<1x5xf32>
    %313 = arith.maximumf %311, %312 : vector<1x5xf32>
    %314 = vector.extract_strided_slice %294 {offsets = [9, 0], sizes = [1, 5], strides = [1, 1]} : vector<28x5xf32> to vector<1x5xf32>
    %315 = arith.maximumf %313, %314 : vector<1x5xf32>
    %316 = vector.extract_strided_slice %294 {offsets = [10, 0], sizes = [1, 5], strides = [1, 1]} : vector<28x5xf32> to vector<1x5xf32>
    %317 = arith.maximumf %315, %316 : vector<1x5xf32>
    %c2_116 = arith.constant 2 : index
    %c15_117 = arith.constant 15 : index
    %318 = vector.load %arg11[%c2_116, %c15_117] : memref<8x40xf32, #tpu.memory_space<vmem>>, vector<1x5xf32>
    tpu.vector_store %arg11[%c2_116, %c15_117], %317 {strides = array<i32>} : memref<8x40xf32, #tpu.memory_space<vmem>>, vector<1x5xf32>,
    %319 = vector.extract_strided_slice %294 {offsets = [10, 0], sizes = [1, 5], strides = [1, 1]} : vector<28x5xf32> to vector<1x5xf32>
    %320 = vector.extract_strided_slice %294 {offsets = [11, 0], sizes = [1, 5], strides = [1, 1]} : vector<28x5xf32> to vector<1x5xf32>
    %321 = arith.maximumf %319, %320 : vector<1x5xf32>
    %322 = vector.extract_strided_slice %294 {offsets = [12, 0], sizes = [1, 5], strides = [1, 1]} : vector<28x5xf32> to vector<1x5xf32>
    %323 = arith.maximumf %321, %322 : vector<1x5xf32>
    %324 = vector.extract_strided_slice %294 {offsets = [13, 0], sizes = [1, 5], strides = [1, 1]} : vector<28x5xf32> to vector<1x5xf32>
    %325 = arith.maximumf %323, %324 : vector<1x5xf32>
    %c3_118 = arith.constant 3 : index
    %c15_119 = arith.constant 15 : index
    %326 = vector.load %arg11[%c3_118, %c15_119] : memref<8x40xf32, #tpu.memory_space<vmem>>, vector<1x5xf32>
    tpu.vector_store %arg11[%c3_118, %c15_119], %325 {strides = array<i32>} : memref<8x40xf32, #tpu.memory_space<vmem>>, vector<1x5xf32>,
    %327 = vector.extract_strided_slice %294 {offsets = [14, 0], sizes = [1, 5], strides = [1, 1]} : vector<28x5xf32> to vector<1x5xf32>
    %328 = vector.extract_strided_slice %294 {offsets = [15, 0], sizes = [1, 5], strides = [1, 1]} : vector<28x5xf32> to vector<1x5xf32>
    %329 = arith.maximumf %327, %328 : vector<1x5xf32>
    %330 = vector.extract_strided_slice %294 {offsets = [16, 0], sizes = [1, 5], strides = [1, 1]} : vector<28x5xf32> to vector<1x5xf32>
    %331 = arith.maximumf %329, %330 : vector<1x5xf32>
    %332 = vector.extract_strided_slice %294 {offsets = [17, 0], sizes = [1, 5], strides = [1, 1]} : vector<28x5xf32> to vector<1x5xf32>
    %333 = arith.maximumf %331, %332 : vector<1x5xf32>
    %c4_120 = arith.constant 4 : index
    %c15_121 = arith.constant 15 : index
    %334 = vector.load %arg11[%c4_120, %c15_121] : memref<8x40xf32, #tpu.memory_space<vmem>>, vector<1x5xf32>
    tpu.vector_store %arg11[%c4_120, %c15_121], %333 {strides = array<i32>} : memref<8x40xf32, #tpu.memory_space<vmem>>, vector<1x5xf32>,
    %335 = vector.extract_strided_slice %294 {offsets = [17, 0], sizes = [1, 5], strides = [1, 1]} : vector<28x5xf32> to vector<1x5xf32>
    %336 = vector.extract_strided_slice %294 {offsets = [18, 0], sizes = [1, 5], strides = [1, 1]} : vector<28x5xf32> to vector<1x5xf32>
    %337 = arith.maximumf %335, %336 : vector<1x5xf32>
    %338 = vector.extract_strided_slice %294 {offsets = [19, 0], sizes = [1, 5], strides = [1, 1]} : vector<28x5xf32> to vector<1x5xf32>
    %339 = arith.maximumf %337, %338 : vector<1x5xf32>
    %340 = vector.extract_strided_slice %294 {offsets = [20, 0], sizes = [1, 5], strides = [1, 1]} : vector<28x5xf32> to vector<1x5xf32>
    %341 = arith.maximumf %339, %340 : vector<1x5xf32>
    %c5_122 = arith.constant 5 : index
    %c15_123 = arith.constant 15 : index
    %342 = vector.load %arg11[%c5_122, %c15_123] : memref<8x40xf32, #tpu.memory_space<vmem>>, vector<1x5xf32>
    tpu.vector_store %arg11[%c5_122, %c15_123], %341 {strides = array<i32>} : memref<8x40xf32, #tpu.memory_space<vmem>>, vector<1x5xf32>,
    %343 = vector.extract_strided_slice %294 {offsets = [21, 0], sizes = [1, 5], strides = [1, 1]} : vector<28x5xf32> to vector<1x5xf32>
    %344 = vector.extract_strided_slice %294 {offsets = [22, 0], sizes = [1, 5], strides = [1, 1]} : vector<28x5xf32> to vector<1x5xf32>
    %345 = arith.maximumf %343, %344 : vector<1x5xf32>
    %346 = vector.extract_strided_slice %294 {offsets = [23, 0], sizes = [1, 5], strides = [1, 1]} : vector<28x5xf32> to vector<1x5xf32>
    %347 = arith.maximumf %345, %346 : vector<1x5xf32>
    %348 = vector.extract_strided_slice %294 {offsets = [24, 0], sizes = [1, 5], strides = [1, 1]} : vector<28x5xf32> to vector<1x5xf32>
    %349 = arith.maximumf %347, %348 : vector<1x5xf32>
    %c6_124 = arith.constant 6 : index
    %c15_125 = arith.constant 15 : index
    %350 = vector.load %arg11[%c6_124, %c15_125] : memref<8x40xf32, #tpu.memory_space<vmem>>, vector<1x5xf32>
    tpu.vector_store %arg11[%c6_124, %c15_125], %349 {strides = array<i32>} : memref<8x40xf32, #tpu.memory_space<vmem>>, vector<1x5xf32>,
    %351 = vector.extract_strided_slice %294 {offsets = [24, 0], sizes = [1, 5], strides = [1, 1]} : vector<28x5xf32> to vector<1x5xf32>
    %352 = vector.extract_strided_slice %294 {offsets = [25, 0], sizes = [1, 5], strides = [1, 1]} : vector<28x5xf32> to vector<1x5xf32>
    %353 = arith.maximumf %351, %352 : vector<1x5xf32>
    %354 = vector.extract_strided_slice %294 {offsets = [26, 0], sizes = [1, 5], strides = [1, 1]} : vector<28x5xf32> to vector<1x5xf32>
    %355 = arith.maximumf %353, %354 : vector<1x5xf32>
    %356 = vector.extract_strided_slice %294 {offsets = [27, 0], sizes = [1, 5], strides = [1, 1]} : vector<28x5xf32> to vector<1x5xf32>
    %357 = arith.maximumf %355, %356 : vector<1x5xf32>
    %c7_126 = arith.constant 7 : index
    %c15_127 = arith.constant 15 : index
    %358 = vector.load %arg11[%c7_126, %c15_127] : memref<8x40xf32, #tpu.memory_space<vmem>>, vector<1x5xf32>
    tpu.vector_store %arg11[%c7_126, %c15_127], %357 {strides = array<i32>} : memref<8x40xf32, #tpu.memory_space<vmem>>, vector<1x5xf32>,
    %359 = vector.extract_strided_slice %74 {offsets = [0, 70], sizes = [28, 5], strides = [1, 1]} : vector<28x140xf32> to vector<28x5xf32>
    %360 = vector.extract_strided_slice %74 {offsets = [0, 75], sizes = [28, 5], strides = [1, 1]} : vector<28x140xf32> to vector<28x5xf32>
    %361 = arith.maximumf %359, %360 : vector<28x5xf32>
    %362 = vector.extract_strided_slice %74 {offsets = [0, 80], sizes = [28, 5], strides = [1, 1]} : vector<28x140xf32> to vector<28x5xf32>
    %363 = arith.maximumf %361, %362 : vector<28x5xf32>
    %364 = vector.extract_strided_slice %74 {offsets = [0, 85], sizes = [28, 5], strides = [1, 1]} : vector<28x140xf32> to vector<28x5xf32>
    %365 = arith.maximumf %363, %364 : vector<28x5xf32>
    %366 = vector.extract_strided_slice %365 {offsets = [0, 0], sizes = [1, 5], strides = [1, 1]} : vector<28x5xf32> to vector<1x5xf32>
    %367 = vector.extract_strided_slice %365 {offsets = [1, 0], sizes = [1, 5], strides = [1, 1]} : vector<28x5xf32> to vector<1x5xf32>
    %368 = arith.maximumf %366, %367 : vector<1x5xf32>
    %369 = vector.extract_strided_slice %365 {offsets = [2, 0], sizes = [1, 5], strides = [1, 1]} : vector<28x5xf32> to vector<1x5xf32>
    %370 = arith.maximumf %368, %369 : vector<1x5xf32>
    %371 = vector.extract_strided_slice %365 {offsets = [3, 0], sizes = [1, 5], strides = [1, 1]} : vector<28x5xf32> to vector<1x5xf32>
    %372 = arith.maximumf %370, %371 : vector<1x5xf32>
    %c0_128 = arith.constant 0 : index
    %c20 = arith.constant 20 : index
    %373 = vector.load %arg11[%c0_128, %c20] : memref<8x40xf32, #tpu.memory_space<vmem>>, vector<1x5xf32>
    tpu.vector_store %arg11[%c0_128, %c20], %372 {strides = array<i32>} : memref<8x40xf32, #tpu.memory_space<vmem>>, vector<1x5xf32>,
    %374 = vector.extract_strided_slice %365 {offsets = [3, 0], sizes = [1, 5], strides = [1, 1]} : vector<28x5xf32> to vector<1x5xf32>
    %375 = vector.extract_strided_slice %365 {offsets = [4, 0], sizes = [1, 5], strides = [1, 1]} : vector<28x5xf32> to vector<1x5xf32>
    %376 = arith.maximumf %374, %375 : vector<1x5xf32>
    %377 = vector.extract_strided_slice %365 {offsets = [5, 0], sizes = [1, 5], strides = [1, 1]} : vector<28x5xf32> to vector<1x5xf32>
    %378 = arith.maximumf %376, %377 : vector<1x5xf32>
    %379 = vector.extract_strided_slice %365 {offsets = [6, 0], sizes = [1, 5], strides = [1, 1]} : vector<28x5xf32> to vector<1x5xf32>
    %380 = arith.maximumf %378, %379 : vector<1x5xf32>
    %c1_129 = arith.constant 1 : index
    %c20_130 = arith.constant 20 : index
    %381 = vector.load %arg11[%c1_129, %c20_130] : memref<8x40xf32, #tpu.memory_space<vmem>>, vector<1x5xf32>
    tpu.vector_store %arg11[%c1_129, %c20_130], %380 {strides = array<i32>} : memref<8x40xf32, #tpu.memory_space<vmem>>, vector<1x5xf32>,
    %382 = vector.extract_strided_slice %365 {offsets = [7, 0], sizes = [1, 5], strides = [1, 1]} : vector<28x5xf32> to vector<1x5xf32>
    %383 = vector.extract_strided_slice %365 {offsets = [8, 0], sizes = [1, 5], strides = [1, 1]} : vector<28x5xf32> to vector<1x5xf32>
    %384 = arith.maximumf %382, %383 : vector<1x5xf32>
    %385 = vector.extract_strided_slice %365 {offsets = [9, 0], sizes = [1, 5], strides = [1, 1]} : vector<28x5xf32> to vector<1x5xf32>
    %386 = arith.maximumf %384, %385 : vector<1x5xf32>
    %387 = vector.extract_strided_slice %365 {offsets = [10, 0], sizes = [1, 5], strides = [1, 1]} : vector<28x5xf32> to vector<1x5xf32>
    %388 = arith.maximumf %386, %387 : vector<1x5xf32>
    %c2_131 = arith.constant 2 : index
    %c20_132 = arith.constant 20 : index
    %389 = vector.load %arg11[%c2_131, %c20_132] : memref<8x40xf32, #tpu.memory_space<vmem>>, vector<1x5xf32>
    tpu.vector_store %arg11[%c2_131, %c20_132], %388 {strides = array<i32>} : memref<8x40xf32, #tpu.memory_space<vmem>>, vector<1x5xf32>,
    %390 = vector.extract_strided_slice %365 {offsets = [10, 0], sizes = [1, 5], strides = [1, 1]} : vector<28x5xf32> to vector<1x5xf32>
    %391 = vector.extract_strided_slice %365 {offsets = [11, 0], sizes = [1, 5], strides = [1, 1]} : vector<28x5xf32> to vector<1x5xf32>
    %392 = arith.maximumf %390, %391 : vector<1x5xf32>
    %393 = vector.extract_strided_slice %365 {offsets = [12, 0], sizes = [1, 5], strides = [1, 1]} : vector<28x5xf32> to vector<1x5xf32>
    %394 = arith.maximumf %392, %393 : vector<1x5xf32>
    %395 = vector.extract_strided_slice %365 {offsets = [13, 0], sizes = [1, 5], strides = [1, 1]} : vector<28x5xf32> to vector<1x5xf32>
    %396 = arith.maximumf %394, %395 : vector<1x5xf32>
    %c3_133 = arith.constant 3 : index
    %c20_134 = arith.constant 20 : index
    %397 = vector.load %arg11[%c3_133, %c20_134] : memref<8x40xf32, #tpu.memory_space<vmem>>, vector<1x5xf32>
    tpu.vector_store %arg11[%c3_133, %c20_134], %396 {strides = array<i32>} : memref<8x40xf32, #tpu.memory_space<vmem>>, vector<1x5xf32>,
    %398 = vector.extract_strided_slice %365 {offsets = [14, 0], sizes = [1, 5], strides = [1, 1]} : vector<28x5xf32> to vector<1x5xf32>
    %399 = vector.extract_strided_slice %365 {offsets = [15, 0], sizes = [1, 5], strides = [1, 1]} : vector<28x5xf32> to vector<1x5xf32>
    %400 = arith.maximumf %398, %399 : vector<1x5xf32>
    %401 = vector.extract_strided_slice %365 {offsets = [16, 0], sizes = [1, 5], strides = [1, 1]} : vector<28x5xf32> to vector<1x5xf32>
    %402 = arith.maximumf %400, %401 : vector<1x5xf32>
    %403 = vector.extract_strided_slice %365 {offsets = [17, 0], sizes = [1, 5], strides = [1, 1]} : vector<28x5xf32> to vector<1x5xf32>
    %404 = arith.maximumf %402, %403 : vector<1x5xf32>
    %c4_135 = arith.constant 4 : index
    %c20_136 = arith.constant 20 : index
    %405 = vector.load %arg11[%c4_135, %c20_136] : memref<8x40xf32, #tpu.memory_space<vmem>>, vector<1x5xf32>
    tpu.vector_store %arg11[%c4_135, %c20_136], %404 {strides = array<i32>} : memref<8x40xf32, #tpu.memory_space<vmem>>, vector<1x5xf32>,
    %406 = vector.extract_strided_slice %365 {offsets = [17, 0], sizes = [1, 5], strides = [1, 1]} : vector<28x5xf32> to vector<1x5xf32>
    %407 = vector.extract_strided_slice %365 {offsets = [18, 0], sizes = [1, 5], strides = [1, 1]} : vector<28x5xf32> to vector<1x5xf32>
    %408 = arith.maximumf %406, %407 : vector<1x5xf32>
    %409 = vector.extract_strided_slice %365 {offsets = [19, 0], sizes = [1, 5], strides = [1, 1]} : vector<28x5xf32> to vector<1x5xf32>
    %410 = arith.maximumf %408, %409 : vector<1x5xf32>
    %411 = vector.extract_strided_slice %365 {offsets = [20, 0], sizes = [1, 5], strides = [1, 1]} : vector<28x5xf32> to vector<1x5xf32>
    %412 = arith.maximumf %410, %411 : vector<1x5xf32>
    %c5_137 = arith.constant 5 : index
    %c20_138 = arith.constant 20 : index
    %413 = vector.load %arg11[%c5_137, %c20_138] : memref<8x40xf32, #tpu.memory_space<vmem>>, vector<1x5xf32>
    tpu.vector_store %arg11[%c5_137, %c20_138], %412 {strides = array<i32>} : memref<8x40xf32, #tpu.memory_space<vmem>>, vector<1x5xf32>,
    %414 = vector.extract_strided_slice %365 {offsets = [21, 0], sizes = [1, 5], strides = [1, 1]} : vector<28x5xf32> to vector<1x5xf32>
    %415 = vector.extract_strided_slice %365 {offsets = [22, 0], sizes = [1, 5], strides = [1, 1]} : vector<28x5xf32> to vector<1x5xf32>
    %416 = arith.maximumf %414, %415 : vector<1x5xf32>
    %417 = vector.extract_strided_slice %365 {offsets = [23, 0], sizes = [1, 5], strides = [1, 1]} : vector<28x5xf32> to vector<1x5xf32>
    %418 = arith.maximumf %416, %417 : vector<1x5xf32>
    %419 = vector.extract_strided_slice %365 {offsets = [24, 0], sizes = [1, 5], strides = [1, 1]} : vector<28x5xf32> to vector<1x5xf32>
    %420 = arith.maximumf %418, %419 : vector<1x5xf32>
    %c6_139 = arith.constant 6 : index
    %c20_140 = arith.constant 20 : index
    %421 = vector.load %arg11[%c6_139, %c20_140] : memref<8x40xf32, #tpu.memory_space<vmem>>, vector<1x5xf32>
    tpu.vector_store %arg11[%c6_139, %c20_140], %420 {strides = array<i32>} : memref<8x40xf32, #tpu.memory_space<vmem>>, vector<1x5xf32>,
    %422 = vector.extract_strided_slice %365 {offsets = [24, 0], sizes = [1, 5], strides = [1, 1]} : vector<28x5xf32> to vector<1x5xf32>
    %423 = vector.extract_strided_slice %365 {offsets = [25, 0], sizes = [1, 5], strides = [1, 1]} : vector<28x5xf32> to vector<1x5xf32>
    %424 = arith.maximumf %422, %423 : vector<1x5xf32>
    %425 = vector.extract_strided_slice %365 {offsets = [26, 0], sizes = [1, 5], strides = [1, 1]} : vector<28x5xf32> to vector<1x5xf32>
    %426 = arith.maximumf %424, %425 : vector<1x5xf32>
    %427 = vector.extract_strided_slice %365 {offsets = [27, 0], sizes = [1, 5], strides = [1, 1]} : vector<28x5xf32> to vector<1x5xf32>
    %428 = arith.maximumf %426, %427 : vector<1x5xf32>
    %c7_141 = arith.constant 7 : index
    %c20_142 = arith.constant 20 : index
    %429 = vector.load %arg11[%c7_141, %c20_142] : memref<8x40xf32, #tpu.memory_space<vmem>>, vector<1x5xf32>
    tpu.vector_store %arg11[%c7_141, %c20_142], %428 {strides = array<i32>} : memref<8x40xf32, #tpu.memory_space<vmem>>, vector<1x5xf32>,
    %430 = vector.extract_strided_slice %74 {offsets = [0, 85], sizes = [28, 5], strides = [1, 1]} : vector<28x140xf32> to vector<28x5xf32>
    %431 = vector.extract_strided_slice %74 {offsets = [0, 90], sizes = [28, 5], strides = [1, 1]} : vector<28x140xf32> to vector<28x5xf32>
    %432 = arith.maximumf %430, %431 : vector<28x5xf32>
    %433 = vector.extract_strided_slice %74 {offsets = [0, 95], sizes = [28, 5], strides = [1, 1]} : vector<28x140xf32> to vector<28x5xf32>
    %434 = arith.maximumf %432, %433 : vector<28x5xf32>
    %435 = vector.extract_strided_slice %74 {offsets = [0, 100], sizes = [28, 5], strides = [1, 1]} : vector<28x140xf32> to vector<28x5xf32>
    %436 = arith.maximumf %434, %435 : vector<28x5xf32>
    %437 = vector.extract_strided_slice %436 {offsets = [0, 0], sizes = [1, 5], strides = [1, 1]} : vector<28x5xf32> to vector<1x5xf32>
    %438 = vector.extract_strided_slice %436 {offsets = [1, 0], sizes = [1, 5], strides = [1, 1]} : vector<28x5xf32> to vector<1x5xf32>
    %439 = arith.maximumf %437, %438 : vector<1x5xf32>
    %440 = vector.extract_strided_slice %436 {offsets = [2, 0], sizes = [1, 5], strides = [1, 1]} : vector<28x5xf32> to vector<1x5xf32>
    %441 = arith.maximumf %439, %440 : vector<1x5xf32>
    %442 = vector.extract_strided_slice %436 {offsets = [3, 0], sizes = [1, 5], strides = [1, 1]} : vector<28x5xf32> to vector<1x5xf32>
    %443 = arith.maximumf %441, %442 : vector<1x5xf32>
    %c0_143 = arith.constant 0 : index
    %c25 = arith.constant 25 : index
    %444 = vector.load %arg11[%c0_143, %c25] : memref<8x40xf32, #tpu.memory_space<vmem>>, vector<1x5xf32>
    tpu.vector_store %arg11[%c0_143, %c25], %443 {strides = array<i32>} : memref<8x40xf32, #tpu.memory_space<vmem>>, vector<1x5xf32>,
    %445 = vector.extract_strided_slice %436 {offsets = [3, 0], sizes = [1, 5], strides = [1, 1]} : vector<28x5xf32> to vector<1x5xf32>
    %446 = vector.extract_strided_slice %436 {offsets = [4, 0], sizes = [1, 5], strides = [1, 1]} : vector<28x5xf32> to vector<1x5xf32>
    %447 = arith.maximumf %445, %446 : vector<1x5xf32>
    %448 = vector.extract_strided_slice %436 {offsets = [5, 0], sizes = [1, 5], strides = [1, 1]} : vector<28x5xf32> to vector<1x5xf32>
    %449 = arith.maximumf %447, %448 : vector<1x5xf32>
    %450 = vector.extract_strided_slice %436 {offsets = [6, 0], sizes = [1, 5], strides = [1, 1]} : vector<28x5xf32> to vector<1x5xf32>
    %451 = arith.maximumf %449, %450 : vector<1x5xf32>
    %c1_144 = arith.constant 1 : index
    %c25_145 = arith.constant 25 : index
    %452 = vector.load %arg11[%c1_144, %c25_145] : memref<8x40xf32, #tpu.memory_space<vmem>>, vector<1x5xf32>
    tpu.vector_store %arg11[%c1_144, %c25_145], %451 {strides = array<i32>} : memref<8x40xf32, #tpu.memory_space<vmem>>, vector<1x5xf32>,
    %453 = vector.extract_strided_slice %436 {offsets = [7, 0], sizes = [1, 5], strides = [1, 1]} : vector<28x5xf32> to vector<1x5xf32>
    %454 = vector.extract_strided_slice %436 {offsets = [8, 0], sizes = [1, 5], strides = [1, 1]} : vector<28x5xf32> to vector<1x5xf32>
    %455 = arith.maximumf %453, %454 : vector<1x5xf32>
    %456 = vector.extract_strided_slice %436 {offsets = [9, 0], sizes = [1, 5], strides = [1, 1]} : vector<28x5xf32> to vector<1x5xf32>
    %457 = arith.maximumf %455, %456 : vector<1x5xf32>
    %458 = vector.extract_strided_slice %436 {offsets = [10, 0], sizes = [1, 5], strides = [1, 1]} : vector<28x5xf32> to vector<1x5xf32>
    %459 = arith.maximumf %457, %458 : vector<1x5xf32>
    %c2_146 = arith.constant 2 : index
    %c25_147 = arith.constant 25 : index
    %460 = vector.load %arg11[%c2_146, %c25_147] : memref<8x40xf32, #tpu.memory_space<vmem>>, vector<1x5xf32>
    tpu.vector_store %arg11[%c2_146, %c25_147], %459 {strides = array<i32>} : memref<8x40xf32, #tpu.memory_space<vmem>>, vector<1x5xf32>,
    %461 = vector.extract_strided_slice %436 {offsets = [10, 0], sizes = [1, 5], strides = [1, 1]} : vector<28x5xf32> to vector<1x5xf32>
    %462 = vector.extract_strided_slice %436 {offsets = [11, 0], sizes = [1, 5], strides = [1, 1]} : vector<28x5xf32> to vector<1x5xf32>
    %463 = arith.maximumf %461, %462 : vector<1x5xf32>
    %464 = vector.extract_strided_slice %436 {offsets = [12, 0], sizes = [1, 5], strides = [1, 1]} : vector<28x5xf32> to vector<1x5xf32>
    %465 = arith.maximumf %463, %464 : vector<1x5xf32>
    %466 = vector.extract_strided_slice %436 {offsets = [13, 0], sizes = [1, 5], strides = [1, 1]} : vector<28x5xf32> to vector<1x5xf32>
    %467 = arith.maximumf %465, %466 : vector<1x5xf32>
    %c3_148 = arith.constant 3 : index
    %c25_149 = arith.constant 25 : index
    %468 = vector.load %arg11[%c3_148, %c25_149] : memref<8x40xf32, #tpu.memory_space<vmem>>, vector<1x5xf32>
    tpu.vector_store %arg11[%c3_148, %c25_149], %467 {strides = array<i32>} : memref<8x40xf32, #tpu.memory_space<vmem>>, vector<1x5xf32>,
    %469 = vector.extract_strided_slice %436 {offsets = [14, 0], sizes = [1, 5], strides = [1, 1]} : vector<28x5xf32> to vector<1x5xf32>
    %470 = vector.extract_strided_slice %436 {offsets = [15, 0], sizes = [1, 5], strides = [1, 1]} : vector<28x5xf32> to vector<1x5xf32>
    %471 = arith.maximumf %469, %470 : vector<1x5xf32>
    %472 = vector.extract_strided_slice %436 {offsets = [16, 0], sizes = [1, 5], strides = [1, 1]} : vector<28x5xf32> to vector<1x5xf32>
    %473 = arith.maximumf %471, %472 : vector<1x5xf32>
    %474 = vector.extract_strided_slice %436 {offsets = [17, 0], sizes = [1, 5], strides = [1, 1]} : vector<28x5xf32> to vector<1x5xf32>
    %475 = arith.maximumf %473, %474 : vector<1x5xf32>
    %c4_150 = arith.constant 4 : index
    %c25_151 = arith.constant 25 : index
    %476 = vector.load %arg11[%c4_150, %c25_151] : memref<8x40xf32, #tpu.memory_space<vmem>>, vector<1x5xf32>
    tpu.vector_store %arg11[%c4_150, %c25_151], %475 {strides = array<i32>} : memref<8x40xf32, #tpu.memory_space<vmem>>, vector<1x5xf32>,
    %477 = vector.extract_strided_slice %436 {offsets = [17, 0], sizes = [1, 5], strides = [1, 1]} : vector<28x5xf32> to vector<1x5xf32>
    %478 = vector.extract_strided_slice %436 {offsets = [18, 0], sizes = [1, 5], strides = [1, 1]} : vector<28x5xf32> to vector<1x5xf32>
    %479 = arith.maximumf %477, %478 : vector<1x5xf32>
    %480 = vector.extract_strided_slice %436 {offsets = [19, 0], sizes = [1, 5], strides = [1, 1]} : vector<28x5xf32> to vector<1x5xf32>
    %481 = arith.maximumf %479, %480 : vector<1x5xf32>
    %482 = vector.extract_strided_slice %436 {offsets = [20, 0], sizes = [1, 5], strides = [1, 1]} : vector<28x5xf32> to vector<1x5xf32>
    %483 = arith.maximumf %481, %482 : vector<1x5xf32>
    %c5_152 = arith.constant 5 : index
    %c25_153 = arith.constant 25 : index
    %484 = vector.load %arg11[%c5_152, %c25_153] : memref<8x40xf32, #tpu.memory_space<vmem>>, vector<1x5xf32>
    tpu.vector_store %arg11[%c5_152, %c25_153], %483 {strides = array<i32>} : memref<8x40xf32, #tpu.memory_space<vmem>>, vector<1x5xf32>,
    %485 = vector.extract_strided_slice %436 {offsets = [21, 0], sizes = [1, 5], strides = [1, 1]} : vector<28x5xf32> to vector<1x5xf32>
    %486 = vector.extract_strided_slice %436 {offsets = [22, 0], sizes = [1, 5], strides = [1, 1]} : vector<28x5xf32> to vector<1x5xf32>
    %487 = arith.maximumf %485, %486 : vector<1x5xf32>
    %488 = vector.extract_strided_slice %436 {offsets = [23, 0], sizes = [1, 5], strides = [1, 1]} : vector<28x5xf32> to vector<1x5xf32>
    %489 = arith.maximumf %487, %488 : vector<1x5xf32>
    %490 = vector.extract_strided_slice %436 {offsets = [24, 0], sizes = [1, 5], strides = [1, 1]} : vector<28x5xf32> to vector<1x5xf32>
    %491 = arith.maximumf %489, %490 : vector<1x5xf32>
    %c6_154 = arith.constant 6 : index
    %c25_155 = arith.constant 25 : index
    %492 = vector.load %arg11[%c6_154, %c25_155] : memref<8x40xf32, #tpu.memory_space<vmem>>, vector<1x5xf32>
    tpu.vector_store %arg11[%c6_154, %c25_155], %491 {strides = array<i32>} : memref<8x40xf32, #tpu.memory_space<vmem>>, vector<1x5xf32>,
    %493 = vector.extract_strided_slice %436 {offsets = [24, 0], sizes = [1, 5], strides = [1, 1]} : vector<28x5xf32> to vector<1x5xf32>
    %494 = vector.extract_strided_slice %436 {offsets = [25, 0], sizes = [1, 5], strides = [1, 1]} : vector<28x5xf32> to vector<1x5xf32>
    %495 = arith.maximumf %493, %494 : vector<1x5xf32>
    %496 = vector.extract_strided_slice %436 {offsets = [26, 0], sizes = [1, 5], strides = [1, 1]} : vector<28x5xf32> to vector<1x5xf32>
    %497 = arith.maximumf %495, %496 : vector<1x5xf32>
    %498 = vector.extract_strided_slice %436 {offsets = [27, 0], sizes = [1, 5], strides = [1, 1]} : vector<28x5xf32> to vector<1x5xf32>
    %499 = arith.maximumf %497, %498 : vector<1x5xf32>
    %c7_156 = arith.constant 7 : index
    %c25_157 = arith.constant 25 : index
    %500 = vector.load %arg11[%c7_156, %c25_157] : memref<8x40xf32, #tpu.memory_space<vmem>>, vector<1x5xf32>
    tpu.vector_store %arg11[%c7_156, %c25_157], %499 {strides = array<i32>} : memref<8x40xf32, #tpu.memory_space<vmem>>, vector<1x5xf32>,
    %501 = vector.extract_strided_slice %74 {offsets = [0, 105], sizes = [28, 5], strides = [1, 1]} : vector<28x140xf32> to vector<28x5xf32>
    %502 = vector.extract_strided_slice %74 {offsets = [0, 110], sizes = [28, 5], strides = [1, 1]} : vector<28x140xf32> to vector<28x5xf32>
    %503 = arith.maximumf %501, %502 : vector<28x5xf32>
    %504 = vector.extract_strided_slice %74 {offsets = [0, 115], sizes = [28, 5], strides = [1, 1]} : vector<28x140xf32> to vector<28x5xf32>
    %505 = arith.maximumf %503, %504 : vector<28x5xf32>
    %506 = vector.extract_strided_slice %74 {offsets = [0, 120], sizes = [28, 5], strides = [1, 1]} : vector<28x140xf32> to vector<28x5xf32>
    %507 = arith.maximumf %505, %506 : vector<28x5xf32>
    %508 = vector.extract_strided_slice %507 {offsets = [0, 0], sizes = [1, 5], strides = [1, 1]} : vector<28x5xf32> to vector<1x5xf32>
    %509 = vector.extract_strided_slice %507 {offsets = [1, 0], sizes = [1, 5], strides = [1, 1]} : vector<28x5xf32> to vector<1x5xf32>
    %510 = arith.maximumf %508, %509 : vector<1x5xf32>
    %511 = vector.extract_strided_slice %507 {offsets = [2, 0], sizes = [1, 5], strides = [1, 1]} : vector<28x5xf32> to vector<1x5xf32>
    %512 = arith.maximumf %510, %511 : vector<1x5xf32>
    %513 = vector.extract_strided_slice %507 {offsets = [3, 0], sizes = [1, 5], strides = [1, 1]} : vector<28x5xf32> to vector<1x5xf32>
    %514 = arith.maximumf %512, %513 : vector<1x5xf32>
    %c0_158 = arith.constant 0 : index
    %c30 = arith.constant 30 : index
    %515 = vector.load %arg11[%c0_158, %c30] : memref<8x40xf32, #tpu.memory_space<vmem>>, vector<1x5xf32>
    tpu.vector_store %arg11[%c0_158, %c30], %514 {strides = array<i32>} : memref<8x40xf32, #tpu.memory_space<vmem>>, vector<1x5xf32>,
    %516 = vector.extract_strided_slice %507 {offsets = [3, 0], sizes = [1, 5], strides = [1, 1]} : vector<28x5xf32> to vector<1x5xf32>
    %517 = vector.extract_strided_slice %507 {offsets = [4, 0], sizes = [1, 5], strides = [1, 1]} : vector<28x5xf32> to vector<1x5xf32>
    %518 = arith.maximumf %516, %517 : vector<1x5xf32>
    %519 = vector.extract_strided_slice %507 {offsets = [5, 0], sizes = [1, 5], strides = [1, 1]} : vector<28x5xf32> to vector<1x5xf32>
    %520 = arith.maximumf %518, %519 : vector<1x5xf32>
    %521 = vector.extract_strided_slice %507 {offsets = [6, 0], sizes = [1, 5], strides = [1, 1]} : vector<28x5xf32> to vector<1x5xf32>
    %522 = arith.maximumf %520, %521 : vector<1x5xf32>
    %c1_159 = arith.constant 1 : index
    %c30_160 = arith.constant 30 : index
    %523 = vector.load %arg11[%c1_159, %c30_160] : memref<8x40xf32, #tpu.memory_space<vmem>>, vector<1x5xf32>
    tpu.vector_store %arg11[%c1_159, %c30_160], %522 {strides = array<i32>} : memref<8x40xf32, #tpu.memory_space<vmem>>, vector<1x5xf32>,
    %524 = vector.extract_strided_slice %507 {offsets = [7, 0], sizes = [1, 5], strides = [1, 1]} : vector<28x5xf32> to vector<1x5xf32>
    %525 = vector.extract_strided_slice %507 {offsets = [8, 0], sizes = [1, 5], strides = [1, 1]} : vector<28x5xf32> to vector<1x5xf32>
    %526 = arith.maximumf %524, %525 : vector<1x5xf32>
    %527 = vector.extract_strided_slice %507 {offsets = [9, 0], sizes = [1, 5], strides = [1, 1]} : vector<28x5xf32> to vector<1x5xf32>
    %528 = arith.maximumf %526, %527 : vector<1x5xf32>
    %529 = vector.extract_strided_slice %507 {offsets = [10, 0], sizes = [1, 5], strides = [1, 1]} : vector<28x5xf32> to vector<1x5xf32>
    %530 = arith.maximumf %528, %529 : vector<1x5xf32>
    %c2_161 = arith.constant 2 : index
    %c30_162 = arith.constant 30 : index
    %531 = vector.load %arg11[%c2_161, %c30_162] : memref<8x40xf32, #tpu.memory_space<vmem>>, vector<1x5xf32>
    tpu.vector_store %arg11[%c2_161, %c30_162], %530 {strides = array<i32>} : memref<8x40xf32, #tpu.memory_space<vmem>>, vector<1x5xf32>,
    %532 = vector.extract_strided_slice %507 {offsets = [10, 0], sizes = [1, 5], strides = [1, 1]} : vector<28x5xf32> to vector<1x5xf32>
    %533 = vector.extract_strided_slice %507 {offsets = [11, 0], sizes = [1, 5], strides = [1, 1]} : vector<28x5xf32> to vector<1x5xf32>
    %534 = arith.maximumf %532, %533 : vector<1x5xf32>
    %535 = vector.extract_strided_slice %507 {offsets = [12, 0], sizes = [1, 5], strides = [1, 1]} : vector<28x5xf32> to vector<1x5xf32>
    %536 = arith.maximumf %534, %535 : vector<1x5xf32>
    %537 = vector.extract_strided_slice %507 {offsets = [13, 0], sizes = [1, 5], strides = [1, 1]} : vector<28x5xf32> to vector<1x5xf32>
    %538 = arith.maximumf %536, %537 : vector<1x5xf32>
    %c3_163 = arith.constant 3 : index
    %c30_164 = arith.constant 30 : index
    %539 = vector.load %arg11[%c3_163, %c30_164] : memref<8x40xf32, #tpu.memory_space<vmem>>, vector<1x5xf32>
    tpu.vector_store %arg11[%c3_163, %c30_164], %538 {strides = array<i32>} : memref<8x40xf32, #tpu.memory_space<vmem>>, vector<1x5xf32>,
    %540 = vector.extract_strided_slice %507 {offsets = [14, 0], sizes = [1, 5], strides = [1, 1]} : vector<28x5xf32> to vector<1x5xf32>
    %541 = vector.extract_strided_slice %507 {offsets = [15, 0], sizes = [1, 5], strides = [1, 1]} : vector<28x5xf32> to vector<1x5xf32>
    %542 = arith.maximumf %540, %541 : vector<1x5xf32>
    %543 = vector.extract_strided_slice %507 {offsets = [16, 0], sizes = [1, 5], strides = [1, 1]} : vector<28x5xf32> to vector<1x5xf32>
    %544 = arith.maximumf %542, %543 : vector<1x5xf32>
    %545 = vector.extract_strided_slice %507 {offsets = [17, 0], sizes = [1, 5], strides = [1, 1]} : vector<28x5xf32> to vector<1x5xf32>
    %546 = arith.maximumf %544, %545 : vector<1x5xf32>
    %c4_165 = arith.constant 4 : index
    %c30_166 = arith.constant 30 : index
    %547 = vector.load %arg11[%c4_165, %c30_166] : memref<8x40xf32, #tpu.memory_space<vmem>>, vector<1x5xf32>
    tpu.vector_store %arg11[%c4_165, %c30_166], %546 {strides = array<i32>} : memref<8x40xf32, #tpu.memory_space<vmem>>, vector<1x5xf32>,
    %548 = vector.extract_strided_slice %507 {offsets = [17, 0], sizes = [1, 5], strides = [1, 1]} : vector<28x5xf32> to vector<1x5xf32>
    %549 = vector.extract_strided_slice %507 {offsets = [18, 0], sizes = [1, 5], strides = [1, 1]} : vector<28x5xf32> to vector<1x5xf32>
    %550 = arith.maximumf %548, %549 : vector<1x5xf32>
    %551 = vector.extract_strided_slice %507 {offsets = [19, 0], sizes = [1, 5], strides = [1, 1]} : vector<28x5xf32> to vector<1x5xf32>
    %552 = arith.maximumf %550, %551 : vector<1x5xf32>
    %553 = vector.extract_strided_slice %507 {offsets = [20, 0], sizes = [1, 5], strides = [1, 1]} : vector<28x5xf32> to vector<1x5xf32>
    %554 = arith.maximumf %552, %553 : vector<1x5xf32>
    %c5_167 = arith.constant 5 : index
    %c30_168 = arith.constant 30 : index
    %555 = vector.load %arg11[%c5_167, %c30_168] : memref<8x40xf32, #tpu.memory_space<vmem>>, vector<1x5xf32>
    tpu.vector_store %arg11[%c5_167, %c30_168], %554 {strides = array<i32>} : memref<8x40xf32, #tpu.memory_space<vmem>>, vector<1x5xf32>,
    %556 = vector.extract_strided_slice %507 {offsets = [21, 0], sizes = [1, 5], strides = [1, 1]} : vector<28x5xf32> to vector<1x5xf32>
    %557 = vector.extract_strided_slice %507 {offsets = [22, 0], sizes = [1, 5], strides = [1, 1]} : vector<28x5xf32> to vector<1x5xf32>
    %558 = arith.maximumf %556, %557 : vector<1x5xf32>
    %559 = vector.extract_strided_slice %507 {offsets = [23, 0], sizes = [1, 5], strides = [1, 1]} : vector<28x5xf32> to vector<1x5xf32>
    %560 = arith.maximumf %558, %559 : vector<1x5xf32>
    %561 = vector.extract_strided_slice %507 {offsets = [24, 0], sizes = [1, 5], strides = [1, 1]} : vector<28x5xf32> to vector<1x5xf32>
    %562 = arith.maximumf %560, %561 : vector<1x5xf32>
    %c6_169 = arith.constant 6 : index
    %c30_170 = arith.constant 30 : index
    %563 = vector.load %arg11[%c6_169, %c30_170] : memref<8x40xf32, #tpu.memory_space<vmem>>, vector<1x5xf32>
    tpu.vector_store %arg11[%c6_169, %c30_170], %562 {strides = array<i32>} : memref<8x40xf32, #tpu.memory_space<vmem>>, vector<1x5xf32>,
    %564 = vector.extract_strided_slice %507 {offsets = [24, 0], sizes = [1, 5], strides = [1, 1]} : vector<28x5xf32> to vector<1x5xf32>
    %565 = vector.extract_strided_slice %507 {offsets = [25, 0], sizes = [1, 5], strides = [1, 1]} : vector<28x5xf32> to vector<1x5xf32>
    %566 = arith.maximumf %564, %565 : vector<1x5xf32>
    %567 = vector.extract_strided_slice %507 {offsets = [26, 0], sizes = [1, 5], strides = [1, 1]} : vector<28x5xf32> to vector<1x5xf32>
    %568 = arith.maximumf %566, %567 : vector<1x5xf32>
    %569 = vector.extract_strided_slice %507 {offsets = [27, 0], sizes = [1, 5], strides = [1, 1]} : vector<28x5xf32> to vector<1x5xf32>
    %570 = arith.maximumf %568, %569 : vector<1x5xf32>
    %c7_171 = arith.constant 7 : index
    %c30_172 = arith.constant 30 : index
    %571 = vector.load %arg11[%c7_171, %c30_172] : memref<8x40xf32, #tpu.memory_space<vmem>>, vector<1x5xf32>
    tpu.vector_store %arg11[%c7_171, %c30_172], %570 {strides = array<i32>} : memref<8x40xf32, #tpu.memory_space<vmem>>, vector<1x5xf32>,
    %572 = vector.extract_strided_slice %74 {offsets = [0, 120], sizes = [28, 5], strides = [1, 1]} : vector<28x140xf32> to vector<28x5xf32>
    %573 = vector.extract_strided_slice %74 {offsets = [0, 125], sizes = [28, 5], strides = [1, 1]} : vector<28x140xf32> to vector<28x5xf32>
    %574 = arith.maximumf %572, %573 : vector<28x5xf32>
    %575 = vector.extract_strided_slice %74 {offsets = [0, 130], sizes = [28, 5], strides = [1, 1]} : vector<28x140xf32> to vector<28x5xf32>
    %576 = arith.maximumf %574, %575 : vector<28x5xf32>
    %577 = vector.extract_strided_slice %74 {offsets = [0, 135], sizes = [28, 5], strides = [1, 1]} : vector<28x140xf32> to vector<28x5xf32>
    %578 = arith.maximumf %576, %577 : vector<28x5xf32>
    %579 = vector.extract_strided_slice %578 {offsets = [0, 0], sizes = [1, 5], strides = [1, 1]} : vector<28x5xf32> to vector<1x5xf32>
    %580 = vector.extract_strided_slice %578 {offsets = [1, 0], sizes = [1, 5], strides = [1, 1]} : vector<28x5xf32> to vector<1x5xf32>
    %581 = arith.maximumf %579, %580 : vector<1x5xf32>
    %582 = vector.extract_strided_slice %578 {offsets = [2, 0], sizes = [1, 5], strides = [1, 1]} : vector<28x5xf32> to vector<1x5xf32>
    %583 = arith.maximumf %581, %582 : vector<1x5xf32>
    %584 = vector.extract_strided_slice %578 {offsets = [3, 0], sizes = [1, 5], strides = [1, 1]} : vector<28x5xf32> to vector<1x5xf32>
    %585 = arith.maximumf %583, %584 : vector<1x5xf32>
    %c0_173 = arith.constant 0 : index
    %c35 = arith.constant 35 : index
    %586 = vector.load %arg11[%c0_173, %c35] : memref<8x40xf32, #tpu.memory_space<vmem>>, vector<1x5xf32>
    tpu.vector_store %arg11[%c0_173, %c35], %585 {strides = array<i32>} : memref<8x40xf32, #tpu.memory_space<vmem>>, vector<1x5xf32>,
    %587 = vector.extract_strided_slice %578 {offsets = [3, 0], sizes = [1, 5], strides = [1, 1]} : vector<28x5xf32> to vector<1x5xf32>
    %588 = vector.extract_strided_slice %578 {offsets = [4, 0], sizes = [1, 5], strides = [1, 1]} : vector<28x5xf32> to vector<1x5xf32>
    %589 = arith.maximumf %587, %588 : vector<1x5xf32>
    %590 = vector.extract_strided_slice %578 {offsets = [5, 0], sizes = [1, 5], strides = [1, 1]} : vector<28x5xf32> to vector<1x5xf32>
    %591 = arith.maximumf %589, %590 : vector<1x5xf32>
    %592 = vector.extract_strided_slice %578 {offsets = [6, 0], sizes = [1, 5], strides = [1, 1]} : vector<28x5xf32> to vector<1x5xf32>
    %593 = arith.maximumf %591, %592 : vector<1x5xf32>
    %c1_174 = arith.constant 1 : index
    %c35_175 = arith.constant 35 : index
    %594 = vector.load %arg11[%c1_174, %c35_175] : memref<8x40xf32, #tpu.memory_space<vmem>>, vector<1x5xf32>
    tpu.vector_store %arg11[%c1_174, %c35_175], %593 {strides = array<i32>} : memref<8x40xf32, #tpu.memory_space<vmem>>, vector<1x5xf32>,
    %595 = vector.extract_strided_slice %578 {offsets = [7, 0], sizes = [1, 5], strides = [1, 1]} : vector<28x5xf32> to vector<1x5xf32>
    %596 = vector.extract_strided_slice %578 {offsets = [8, 0], sizes = [1, 5], strides = [1, 1]} : vector<28x5xf32> to vector<1x5xf32>
    %597 = arith.maximumf %595, %596 : vector<1x5xf32>
    %598 = vector.extract_strided_slice %578 {offsets = [9, 0], sizes = [1, 5], strides = [1, 1]} : vector<28x5xf32> to vector<1x5xf32>
    %599 = arith.maximumf %597, %598 : vector<1x5xf32>
    %600 = vector.extract_strided_slice %578 {offsets = [10, 0], sizes = [1, 5], strides = [1, 1]} : vector<28x5xf32> to vector<1x5xf32>
    %601 = arith.maximumf %599, %600 : vector<1x5xf32>
    %c2_176 = arith.constant 2 : index
    %c35_177 = arith.constant 35 : index
    %602 = vector.load %arg11[%c2_176, %c35_177] : memref<8x40xf32, #tpu.memory_space<vmem>>, vector<1x5xf32>
    tpu.vector_store %arg11[%c2_176, %c35_177], %601 {strides = array<i32>} : memref<8x40xf32, #tpu.memory_space<vmem>>, vector<1x5xf32>,
    %603 = vector.extract_strided_slice %578 {offsets = [10, 0], sizes = [1, 5], strides = [1, 1]} : vector<28x5xf32> to vector<1x5xf32>
    %604 = vector.extract_strided_slice %578 {offsets = [11, 0], sizes = [1, 5], strides = [1, 1]} : vector<28x5xf32> to vector<1x5xf32>
    %605 = arith.maximumf %603, %604 : vector<1x5xf32>
    %606 = vector.extract_strided_slice %578 {offsets = [12, 0], sizes = [1, 5], strides = [1, 1]} : vector<28x5xf32> to vector<1x5xf32>
    %607 = arith.maximumf %605, %606 : vector<1x5xf32>
    %608 = vector.extract_strided_slice %578 {offsets = [13, 0], sizes = [1, 5], strides = [1, 1]} : vector<28x5xf32> to vector<1x5xf32>
    %609 = arith.maximumf %607, %608 : vector<1x5xf32>
    %c3_178 = arith.constant 3 : index
    %c35_179 = arith.constant 35 : index
    %610 = vector.load %arg11[%c3_178, %c35_179] : memref<8x40xf32, #tpu.memory_space<vmem>>, vector<1x5xf32>
    tpu.vector_store %arg11[%c3_178, %c35_179], %609 {strides = array<i32>} : memref<8x40xf32, #tpu.memory_space<vmem>>, vector<1x5xf32>,
    %611 = vector.extract_strided_slice %578 {offsets = [14, 0], sizes = [1, 5], strides = [1, 1]} : vector<28x5xf32> to vector<1x5xf32>
    %612 = vector.extract_strided_slice %578 {offsets = [15, 0], sizes = [1, 5], strides = [1, 1]} : vector<28x5xf32> to vector<1x5xf32>
    %613 = arith.maximumf %611, %612 : vector<1x5xf32>
    %614 = vector.extract_strided_slice %578 {offsets = [16, 0], sizes = [1, 5], strides = [1, 1]} : vector<28x5xf32> to vector<1x5xf32>
    %615 = arith.maximumf %613, %614 : vector<1x5xf32>
    %616 = vector.extract_strided_slice %578 {offsets = [17, 0], sizes = [1, 5], strides = [1, 1]} : vector<28x5xf32> to vector<1x5xf32>
    %617 = arith.maximumf %615, %616 : vector<1x5xf32>
    %c4_180 = arith.constant 4 : index
    %c35_181 = arith.constant 35 : index
    %618 = vector.load %arg11[%c4_180, %c35_181] : memref<8x40xf32, #tpu.memory_space<vmem>>, vector<1x5xf32>
    tpu.vector_store %arg11[%c4_180, %c35_181], %617 {strides = array<i32>} : memref<8x40xf32, #tpu.memory_space<vmem>>, vector<1x5xf32>,
    %619 = vector.extract_strided_slice %578 {offsets = [17, 0], sizes = [1, 5], strides = [1, 1]} : vector<28x5xf32> to vector<1x5xf32>
    %620 = vector.extract_strided_slice %578 {offsets = [18, 0], sizes = [1, 5], strides = [1, 1]} : vector<28x5xf32> to vector<1x5xf32>
    %621 = arith.maximumf %619, %620 : vector<1x5xf32>
    %622 = vector.extract_strided_slice %578 {offsets = [19, 0], sizes = [1, 5], strides = [1, 1]} : vector<28x5xf32> to vector<1x5xf32>
    %623 = arith.maximumf %621, %622 : vector<1x5xf32>
    %624 = vector.extract_strided_slice %578 {offsets = [20, 0], sizes = [1, 5], strides = [1, 1]} : vector<28x5xf32> to vector<1x5xf32>
    %625 = arith.maximumf %623, %624 : vector<1x5xf32>
    %c5_182 = arith.constant 5 : index
    %c35_183 = arith.constant 35 : index
    %626 = vector.load %arg11[%c5_182, %c35_183] : memref<8x40xf32, #tpu.memory_space<vmem>>, vector<1x5xf32>
    tpu.vector_store %arg11[%c5_182, %c35_183], %625 {strides = array<i32>} : memref<8x40xf32, #tpu.memory_space<vmem>>, vector<1x5xf32>,
    %627 = vector.extract_strided_slice %578 {offsets = [21, 0], sizes = [1, 5], strides = [1, 1]} : vector<28x5xf32> to vector<1x5xf32>
    %628 = vector.extract_strided_slice %578 {offsets = [22, 0], sizes = [1, 5], strides = [1, 1]} : vector<28x5xf32> to vector<1x5xf32>
    %629 = arith.maximumf %627, %628 : vector<1x5xf32>
    %630 = vector.extract_strided_slice %578 {offsets = [23, 0], sizes = [1, 5], strides = [1, 1]} : vector<28x5xf32> to vector<1x5xf32>
    %631 = arith.maximumf %629, %630 : vector<1x5xf32>
    %632 = vector.extract_strided_slice %578 {offsets = [24, 0], sizes = [1, 5], strides = [1, 1]} : vector<28x5xf32> to vector<1x5xf32>
    %633 = arith.maximumf %631, %632 : vector<1x5xf32>
    %c6_184 = arith.constant 6 : index
    %c35_185 = arith.constant 35 : index
    %634 = vector.load %arg11[%c6_184, %c35_185] : memref<8x40xf32, #tpu.memory_space<vmem>>, vector<1x5xf32>
    tpu.vector_store %arg11[%c6_184, %c35_185], %633 {strides = array<i32>} : memref<8x40xf32, #tpu.memory_space<vmem>>, vector<1x5xf32>,
    %635 = vector.extract_strided_slice %578 {offsets = [24, 0], sizes = [1, 5], strides = [1, 1]} : vector<28x5xf32> to vector<1x5xf32>
    %636 = vector.extract_strided_slice %578 {offsets = [25, 0], sizes = [1, 5], strides = [1, 1]} : vector<28x5xf32> to vector<1x5xf32>
    %637 = arith.maximumf %635, %636 : vector<1x5xf32>
    %638 = vector.extract_strided_slice %578 {offsets = [26, 0], sizes = [1, 5], strides = [1, 1]} : vector<28x5xf32> to vector<1x5xf32>
    %639 = arith.maximumf %637, %638 : vector<1x5xf32>
    %640 = vector.extract_strided_slice %578 {offsets = [27, 0], sizes = [1, 5], strides = [1, 1]} : vector<28x5xf32> to vector<1x5xf32>
    %641 = arith.maximumf %639, %640 : vector<1x5xf32>
    %c7_186 = arith.constant 7 : index
    %c35_187 = arith.constant 35 : index
    %642 = vector.load %arg11[%c7_186, %c35_187] : memref<8x40xf32, #tpu.memory_space<vmem>>, vector<1x5xf32>
    tpu.vector_store %arg11[%c7_186, %c35_187], %641 {strides = array<i32>} : memref<8x40xf32, #tpu.memory_space<vmem>>, vector<1x5xf32>,
    %c0_188 = arith.constant 0 : index
    %c0_189 = arith.constant 0 : index
    %643 = vector.load %arg11[%c0_188, %c0_189] : memref<8x40xf32, #tpu.memory_space<vmem>>, vector<1x40xf32>
    %c0_190 = arith.constant 0 : index
    %c0_191 = arith.constant 0 : index
    %c0_192 = arith.constant 0 : index
    %644 = vector.load %arg6[%c0_190, %c0_191, %c0_192] : memref<8x40x32xf32, #tpu.memory_space<vmem>>, vector<1x40x32xf32>
    %645 = vector.shape_cast %644 : vector<1x40x32xf32> to vector<40x32xf32>
    %cst_193 = arith.constant dense<0.000000e+00> : vector<1x32xf32>
    %646 = tpu.matmul %643, %645, %cst_193 {dimension_numbers = #tpu.dot_dimension_numbers<[1], [0], [0], [1], [0, 0, 1, 1], [], []>} : vector<1x40xf32>, vector<40x32xf32>, vector<1x32xf32> -> vector<1x32xf32>
    %c1_194 = arith.constant 1 : index
    %c0_195 = arith.constant 0 : index
    %647 = vector.load %arg11[%c1_194, %c0_195] : memref<8x40xf32, #tpu.memory_space<vmem>>, vector<1x40xf32>
    %c1_196 = arith.constant 1 : index
    %c0_197 = arith.constant 0 : index
    %c0_198 = arith.constant 0 : index
    %648 = vector.load %arg6[%c1_196, %c0_197, %c0_198] : memref<8x40x32xf32, #tpu.memory_space<vmem>>, vector<1x40x32xf32>
    %649 = vector.shape_cast %648 : vector<1x40x32xf32> to vector<40x32xf32>
    %cst_199 = arith.constant dense<0.000000e+00> : vector<1x32xf32>
    %650 = tpu.matmul %647, %649, %cst_199 {dimension_numbers = #tpu.dot_dimension_numbers<[1], [0], [0], [1], [0, 0, 1, 1], [], []>} : vector<1x40xf32>, vector<40x32xf32>, vector<1x32xf32> -> vector<1x32xf32>
    %651 = arith.addf %646, %650 : vector<1x32xf32>
    %c2_200 = arith.constant 2 : index
    %c0_201 = arith.constant 0 : index
    %652 = vector.load %arg11[%c2_200, %c0_201] : memref<8x40xf32, #tpu.memory_space<vmem>>, vector<1x40xf32>
    %c2_202 = arith.constant 2 : index
    %c0_203 = arith.constant 0 : index
    %c0_204 = arith.constant 0 : index
    %653 = vector.load %arg6[%c2_202, %c0_203, %c0_204] : memref<8x40x32xf32, #tpu.memory_space<vmem>>, vector<1x40x32xf32>
    %654 = vector.shape_cast %653 : vector<1x40x32xf32> to vector<40x32xf32>
    %cst_205 = arith.constant dense<0.000000e+00> : vector<1x32xf32>
    %655 = tpu.matmul %652, %654, %cst_205 {dimension_numbers = #tpu.dot_dimension_numbers<[1], [0], [0], [1], [0, 0, 1, 1], [], []>} : vector<1x40xf32>, vector<40x32xf32>, vector<1x32xf32> -> vector<1x32xf32>
    %656 = arith.addf %651, %655 : vector<1x32xf32>
    %c3_206 = arith.constant 3 : index
    %c0_207 = arith.constant 0 : index
    %657 = vector.load %arg11[%c3_206, %c0_207] : memref<8x40xf32, #tpu.memory_space<vmem>>, vector<1x40xf32>
    %c3_208 = arith.constant 3 : index
    %c0_209 = arith.constant 0 : index
    %c0_210 = arith.constant 0 : index
    %658 = vector.load %arg6[%c3_208, %c0_209, %c0_210] : memref<8x40x32xf32, #tpu.memory_space<vmem>>, vector<1x40x32xf32>
    %659 = vector.shape_cast %658 : vector<1x40x32xf32> to vector<40x32xf32>
    %cst_211 = arith.constant dense<0.000000e+00> : vector<1x32xf32>
    %660 = tpu.matmul %657, %659, %cst_211 {dimension_numbers = #tpu.dot_dimension_numbers<[1], [0], [0], [1], [0, 0, 1, 1], [], []>} : vector<1x40xf32>, vector<40x32xf32>, vector<1x32xf32> -> vector<1x32xf32>
    %661 = arith.addf %656, %660 : vector<1x32xf32>
    %c4_212 = arith.constant 4 : index
    %c0_213 = arith.constant 0 : index
    %662 = vector.load %arg11[%c4_212, %c0_213] : memref<8x40xf32, #tpu.memory_space<vmem>>, vector<1x40xf32>
    %c4_214 = arith.constant 4 : index
    %c0_215 = arith.constant 0 : index
    %c0_216 = arith.constant 0 : index
    %663 = vector.load %arg6[%c4_214, %c0_215, %c0_216] : memref<8x40x32xf32, #tpu.memory_space<vmem>>, vector<1x40x32xf32>
    %664 = vector.shape_cast %663 : vector<1x40x32xf32> to vector<40x32xf32>
    %cst_217 = arith.constant dense<0.000000e+00> : vector<1x32xf32>
    %665 = tpu.matmul %662, %664, %cst_217 {dimension_numbers = #tpu.dot_dimension_numbers<[1], [0], [0], [1], [0, 0, 1, 1], [], []>} : vector<1x40xf32>, vector<40x32xf32>, vector<1x32xf32> -> vector<1x32xf32>
    %666 = arith.addf %661, %665 : vector<1x32xf32>
    %c5_218 = arith.constant 5 : index
    %c0_219 = arith.constant 0 : index
    %667 = vector.load %arg11[%c5_218, %c0_219] : memref<8x40xf32, #tpu.memory_space<vmem>>, vector<1x40xf32>
    %c5_220 = arith.constant 5 : index
    %c0_221 = arith.constant 0 : index
    %c0_222 = arith.constant 0 : index
    %668 = vector.load %arg6[%c5_220, %c0_221, %c0_222] : memref<8x40x32xf32, #tpu.memory_space<vmem>>, vector<1x40x32xf32>
    %669 = vector.shape_cast %668 : vector<1x40x32xf32> to vector<40x32xf32>
    %cst_223 = arith.constant dense<0.000000e+00> : vector<1x32xf32>
    %670 = tpu.matmul %667, %669, %cst_223 {dimension_numbers = #tpu.dot_dimension_numbers<[1], [0], [0], [1], [0, 0, 1, 1], [], []>} : vector<1x40xf32>, vector<40x32xf32>, vector<1x32xf32> -> vector<1x32xf32>
    %671 = arith.addf %666, %670 : vector<1x32xf32>
    %c6_224 = arith.constant 6 : index
    %c0_225 = arith.constant 0 : index
    %672 = vector.load %arg11[%c6_224, %c0_225] : memref<8x40xf32, #tpu.memory_space<vmem>>, vector<1x40xf32>
    %c6_226 = arith.constant 6 : index
    %c0_227 = arith.constant 0 : index
    %c0_228 = arith.constant 0 : index
    %673 = vector.load %arg6[%c6_226, %c0_227, %c0_228] : memref<8x40x32xf32, #tpu.memory_space<vmem>>, vector<1x40x32xf32>
    %674 = vector.shape_cast %673 : vector<1x40x32xf32> to vector<40x32xf32>
    %cst_229 = arith.constant dense<0.000000e+00> : vector<1x32xf32>
    %675 = tpu.matmul %672, %674, %cst_229 {dimension_numbers = #tpu.dot_dimension_numbers<[1], [0], [0], [1], [0, 0, 1, 1], [], []>} : vector<1x40xf32>, vector<40x32xf32>, vector<1x32xf32> -> vector<1x32xf32>
    %676 = arith.addf %671, %675 : vector<1x32xf32>
    %c7_230 = arith.constant 7 : index
    %c0_231 = arith.constant 0 : index
    %677 = vector.load %arg11[%c7_230, %c0_231] : memref<8x40xf32, #tpu.memory_space<vmem>>, vector<1x40xf32>
    %c7_232 = arith.constant 7 : index
    %c0_233 = arith.constant 0 : index
    %c0_234 = arith.constant 0 : index
    %678 = vector.load %arg6[%c7_232, %c0_233, %c0_234] : memref<8x40x32xf32, #tpu.memory_space<vmem>>, vector<1x40x32xf32>
    %679 = vector.shape_cast %678 : vector<1x40x32xf32> to vector<40x32xf32>
    %cst_235 = arith.constant dense<0.000000e+00> : vector<1x32xf32>
    %680 = tpu.matmul %677, %679, %cst_235 {dimension_numbers = #tpu.dot_dimension_numbers<[1], [0], [0], [1], [0, 0, 1, 1], [], []>} : vector<1x40xf32>, vector<40x32xf32>, vector<1x32xf32> -> vector<1x32xf32>
    %681 = arith.addf %676, %680 : vector<1x32xf32>
    %c0_236 = arith.constant 0 : index
    %c0_237 = arith.constant 0 : index
    %682 = vector.load %arg7[%c0_236, %c0_237] : memref<1x32xf32, #tpu.memory_space<vmem>>, vector<1x32xf32>
    %683 = arith.addf %681, %682 : vector<1x32xf32>
    %cst_238 = arith.constant 0.000000e+00 : f32
    %684 = vector.broadcast %cst_238 : f32 to vector<1x32xf32>
    %685 = arith.maximumf %683, %684 : vector<1x32xf32>
    %c0_239 = arith.constant 0 : index
    %c0_240 = arith.constant 0 : index
    %686 = vector.load %arg8[%c0_239, %c0_240] : memref<32x9xf32, #tpu.memory_space<vmem>>, vector<32x9xf32>
    %cst_241 = arith.constant dense<0.000000e+00> : vector<1x9xf32>
    %687 = tpu.matmul %685, %686, %cst_241 {dimension_numbers = #tpu.dot_dimension_numbers<[1], [0], [0], [1], [0, 0, 1, 1], [], []>} : vector<1x32xf32>, vector<32x9xf32>, vector<1x9xf32> -> vector<1x9xf32>
    %c0_242 = arith.constant 0 : index
    %c0_243 = arith.constant 0 : index
    %688 = vector.load %arg9[%c0_242, %c0_243] : memref<1x9xf32, #tpu.memory_space<vmem>>, vector<1x9xf32>
    %689 = arith.addf %687, %688 : vector<1x9xf32>
    %690 = tpu.iota {dimensions = array<i32: 1>} : vector<1x9xi32>
    %691 = vector.extract_strided_slice %689 {offsets = [0, 0], sizes = [1, 1], strides = [1, 1]} : vector<1x9xf32> to vector<1x1xf32>
    %692 = vector.extract_strided_slice %689 {offsets = [0, 4], sizes = [1, 1], strides = [1, 1]} : vector<1x9xf32> to vector<1x1xf32>
    %c8_i32 = arith.constant 8 : i32
    %693 = vector.broadcast %c8_i32 : i32 to vector<1x9xi32>
    %694 = arith.cmpi eq, %690, %693 : vector<1x9xi32>
    %695 = arith.addf %691, %692 : vector<1x1xf32>
    %cst_244 = arith.constant 0.000000e+00 : f32
    %696 = vector.broadcast %cst_244 : f32 to vector<1x1xf32>
    %697 = arith.subf %696, %695 : vector<1x1xf32>
    %698 = vector.shape_cast %697 : vector<1x1xf32> to vector<1x1xf32>
    %699 = vector.broadcast %698 : vector<1x1xf32> to vector<1x9xf32>
    %700 = arith.select %694, %699, %689 : vector<1x9xi1>, vector<1x9xf32>
    %c0_245 = arith.constant 0 : index
    %c0_246 = arith.constant 0 : index
    %c0_247 = arith.constant 0 : index
    %701 = vector.load %arg10[%c0_245, %c0_246, %c0_247] : memref<1x1x9xf32, #tpu.memory_space<vmem>>, vector<1x1x9xf32>
    %702 = vector.shape_cast %701 : vector<1x1x9xf32> to vector<1x9xf32>
    %703 = vector.shape_cast %700 : vector<1x9xf32> to vector<1x1x9xf32>
    tpu.vector_store %arg10[%c0_245, %c0_246, %c0_247], %703 {strides = array<i32>} : memref<1x1x9xf32, #tpu.memory_space<vmem>>, vector<1x1x9xf32>,
    return
  }
  func.func @transform_0(%arg0: i32) -> (i32, i32, i32) {
    %c0_i32 = arith.constant 0 : i32
    %c0_i32_0 = arith.constant 0 : i32
    %c0_i32_1 = arith.constant 0 : i32
    return %arg0, %c0_i32, %c0_i32_0 : i32, i32, i32
  }
  func.func @transform_1(%arg0: i32) -> (i32, i32, i32) {
    %c0_i32 = arith.constant 0 : i32
    %c0_i32_0 = arith.constant 0 : i32
    %c0_i32_1 = arith.constant 0 : i32
    %c0_i32_2 = arith.constant 0 : i32
    return %c0_i32, %c0_i32_0, %c0_i32_1 : i32, i32, i32
  }
  func.func @transform_2(%arg0: i32) -> (i32, i32) {
    %c0_i32 = arith.constant 0 : i32
    %c0_i32_0 = arith.constant 0 : i32
    %c0_i32_1 = arith.constant 0 : i32
    return %c0_i32, %c0_i32_0 : i32, i32
  }
  func.func @transform_3(%arg0: i32) -> (i32, i32, i32) {
    %c0_i32 = arith.constant 0 : i32
    %c0_i32_0 = arith.constant 0 : i32
    %c0_i32_1 = arith.constant 0 : i32
    %c0_i32_2 = arith.constant 0 : i32
    return %c0_i32, %c0_i32_0, %c0_i32_1 : i32, i32, i32
  }
  func.func @transform_4(%arg0: i32) -> (i32, i32) {
    %c0_i32 = arith.constant 0 : i32
    %c0_i32_0 = arith.constant 0 : i32
    %c0_i32_1 = arith.constant 0 : i32
    return %c0_i32, %c0_i32_0 : i32, i32
  }
  func.func @transform_5(%arg0: i32) -> (i32, i32, i32) {
    %c0_i32 = arith.constant 0 : i32
    %c0_i32_0 = arith.constant 0 : i32
    %c0_i32_1 = arith.constant 0 : i32
    %c0_i32_2 = arith.constant 0 : i32
    return %c0_i32, %c0_i32_0, %c0_i32_1 : i32, i32, i32
  }
  func.func @transform_6(%arg0: i32) -> (i32, i32) {
    %c0_i32 = arith.constant 0 : i32
    %c0_i32_0 = arith.constant 0 : i32
    %c0_i32_1 = arith.constant 0 : i32
    return %c0_i32, %c0_i32_0 : i32, i32
  }
  func.func @transform_7(%arg0: i32) -> (i32, i32) {
    %c0_i32 = arith.constant 0 : i32
    %c0_i32_0 = arith.constant 0 : i32
    %c0_i32_1 = arith.constant 0 : i32
    return %c0_i32, %c0_i32_0 : i32, i32
  }
  func.func @transform_8(%arg0: i32) -> (i32, i32) {
    %c0_i32 = arith.constant 0 : i32
    %c0_i32_0 = arith.constant 0 : i32
    %c0_i32_1 = arith.constant 0 : i32
    return %c0_i32, %c0_i32_0 : i32, i32
  }
  func.func @transform_9(%arg0: i32) -> (i32, i32, i32) {
    %c0_i32 = arith.constant 0 : i32
    %c0_i32_0 = arith.constant 0 : i32
    %c0_i32_1 = arith.constant 0 : i32
    return %arg0, %c0_i32, %c0_i32_0 : i32, i32, i32
  }
}

</mosaic_0001>

<llo_original>
// kernel: _lambda_.1
$region0: #{_lambda_.1}
  #allocation0 [shape = 'u32[]', space=smem, size = 0x4, offset = 0x4, fixed_abs, tag = 'smem constant byte address 0x4 - core index']
  #allocation1 [shape = 'u32[144,128]{1,0:T(1,128)}', space=vmem, size = 0x12000, scoped, tag = 'internal scratch']
  #allocation2 [shape = 'f32[8,40]{1,0:T(8,128)}', space=vmem, size = 0x1000, scoped, tag = 'scratch operand']
  %s0 = inlined_call_operand.vmem [shape: f32[2,38,152], index: 0, kind: input, shape index: {}]
  %s1 = inlined_call_operand.vmem [shape: f32[7,152,320], index: 1, kind: input, shape index: {}]
  %s2 = inlined_call_operand.vmem [shape: f32[1,320], index: 2, kind: input, shape index: {}]
  %s3 = inlined_call_operand.vmem [shape: f32[5,320,140], index: 3, kind: input, shape index: {}]
  %s4 = inlined_call_operand.vmem [shape: f32[1,140], index: 4, kind: input, shape index: {}]
  %s5 = inlined_call_operand.vmem [shape: f32[8,40,32], index: 5, kind: input, shape index: {}]
  %s6 = inlined_call_operand.vmem [shape: f32[1,32], index: 6, kind: input, shape index: {}]
  %s7 = inlined_call_operand.vmem [shape: f32[32,9], index: 7, kind: input, shape index: {}]
  %s8 = inlined_call_operand.vmem [shape: f32[1,9], index: 8, kind: input, shape index: {}]
  %s9 = inlined_call_operand.vmem [shape: f32[2,1,9], index: 9, kind: output, shape index: {}]
  %s10 = sld [smem:[#allocation0]]
  $region69: #{_lambda_.1} parent=0
    _
  %s12 = ssub.s32 1, %s10
  %s13 = scalar_select 0, %s12, %s10
  loop: start=0, step=1, limit=4
  $region2: #{_lambda_.1} parent=0 // loop_pre_header
    _
  $region3: #{_lambda_.1} parent=0 // loop_header
    %s15 = sphi 0, %s19
    %p16 = scmp.ge.s32.totalorder %s15, 4
    %s25 = sphi 0, %s27
    %s28 = sphi 0, %s25
    %s29 = sphi 0, %s28
    %s45 = sphi 0, %s29
    %s49 = sphi 0, %s49
    %s51 = sphi 0, %s49
    %s52 = sphi 0, %s51
    %s66 = sphi 0, %s52
    %s70 = sphi 0, %s70
    %s72 = sphi 0, %s70
    %s73 = sphi 0, %s72
    %s87 = sphi 0, %s73
    %s91 = sphi 0, %s91
    %s93 = sphi 0, %s91
    %s94 = sphi 0, %s93
    %s108 = sphi 0, %s94
    %s112 = sphi 0, %s112
    %s114 = sphi 0, %s112
    %s115 = sphi 0, %s114
    %s129 = sphi 0, %s115
    %s133 = sphi 0, %s133
    %s135 = sphi 0, %s133
    %s136 = sphi 0, %s135
    %s150 = sphi 0, %s136
    %s154 = sphi 0, %s154
    %s156 = sphi 0, %s154
    %s157 = sphi 0, %s156
    %s171 = sphi 0, %s157
    %s175 = sphi 0, %s175
    %s177 = sphi 0, %s175
    %s178 = sphi 0, %s177
    %s192 = sphi 0, %s178
    %s196 = sphi 0, %s196
    %s198 = sphi 0, %s196
    %s199 = sphi 0, %s198
    %s213 = sphi 0, %s199
    %s219 = sphi 0, %s221
    %s222 = sphi 0, %s219
    %s223 = sphi 0, %s222
    %s239 = sphi 0, %s223
  $region4: #{_lambda_.1} parent=0 // loop_header_branch
    %18 = sbr.rel (%p16) target = $region8
  $region5: #{_lambda_.1} parent=0 // loop_body
    %s20 = ssub.s32 %s15, 1
    %s21 = ssub.s32 %s15, 2
    %s22 = sadd.s32 %s15, 1
    %s23 = ssub.s32 %s15, %s22
    %p24 = scmp.eq.s32.totalorder %s23, 0
    %s26 = sadd.s32 %s25, 1
    %s27 = scalar_select %p24, %s25, %s26
    %p30 = pneg %p24
    %p31 = scmp.eq.s32.totalorder %s15, 1
    %p32 = por %p30, %p31
    %p33 = scmp.ne.s32.totalorder %s25, %s28
    %p34 = scmp.eq.s32.totalorder %s15, 0
    %p35 = por %p33, %p34
    %p36 = scmp.ne.s32.totalorder %s25, %s28
    %p37 = scmp.eq.s32.totalorder %s20, 1
    %p38 = por %p36, %p37
    %p39 = scmp.ne.s32.totalorder %s28, %s29
    %p40 = scmp.eq.s32.totalorder %s20, 0
    %p41 = por %p39, %p40
    %p42 = scmp.ne.s32.totalorder %s28, %s29
    %p43 = scmp.eq.s32.totalorder %s21, 1
    %p44 = por %p42, %p43
    %p46 = scmp.ne.s32.totalorder %s29, %s45
    %p47 = scmp.eq.s32.totalorder %s21, 0
    %p48 = por %p46, %p47
    %s50 = sadd.s32 %s49, 1
    %p53 = scmp.eq.s32.totalorder %s15, 1
    %p54 = scmp.ne.s32.totalorder %s49, %s51
    %p55 = scmp.eq.s32.totalorder %s15, 0
    %p56 = por %p54, %p55
    %p57 = scmp.ne.s32.totalorder %s49, %s51
    %p58 = scmp.eq.s32.totalorder %s20, 1
    %p59 = por %p57, %p58
    %p60 = scmp.ne.s32.totalorder %s51, %s52
    %p61 = scmp.eq.s32.totalorder %s20, 0
    %p62 = por %p60, %p61
    %p63 = scmp.ne.s32.totalorder %s51, %s52
    %p64 = scmp.eq.s32.totalorder %s21, 1
    %p65 = por %p63, %p64
    %p67 = scmp.ne.s32.totalorder %s52, %s66
    %p68 = scmp.eq.s32.totalorder %s21, 0
    %p69 = por %p67, %p68
    %s71 = sadd.s32 %s70, 1
    %p74 = scmp.eq.s32.totalorder %s15, 1
    %p75 = scmp.ne.s32.totalorder %s70, %s72
    %p76 = scmp.eq.s32.totalorder %s15, 0
    %p77 = por %p75, %p76
    %p78 = scmp.ne.s32.totalorder %s70, %s72
    %p79 = scmp.eq.s32.totalorder %s20, 1
    %p80 = por %p78, %p79
    %p81 = scmp.ne.s32.totalorder %s72, %s73
    %p82 = scmp.eq.s32.totalorder %s20, 0
    %p83 = por %p81, %p82
    %p84 = scmp.ne.s32.totalorder %s72, %s73
    %p85 = scmp.eq.s32.totalorder %s21, 1
    %p86 = por %p84, %p85
    %p88 = scmp.ne.s32.totalorder %s73, %s87
    %p89 = scmp.eq.s32.totalorder %s21, 0
    %p90 = por %p88, %p89
    %s92 = sadd.s32 %s91, 1
    %p95 = scmp.eq.s32.totalorder %s15, 1
    %p96 = scmp.ne.s32.totalorder %s91, %s93
    %p97 = scmp.eq.s32.totalorder %s15, 0
    %p98 = por %p96, %p97
    %p99 = scmp.ne.s32.totalorder %s91, %s93
    %p100 = scmp.eq.s32.totalorder %s20, 1
    %p101 = por %p99, %p100
    %p102 = scmp.ne.s32.totalorder %s93, %s94
    %p103 = scmp.eq.s32.totalorder %s20, 0
    %p104 = por %p102, %p103
    %p105 = scmp.ne.s32.totalorder %s93, %s94
    %p106 = scmp.eq.s32.totalorder %s21, 1
    %p107 = por %p105, %p106
    %p109 = scmp.ne.s32.totalorder %s94, %s108
    %p110 = scmp.eq.s32.totalorder %s21, 0
    %p111 = por %p109, %p110
    %s113 = sadd.s32 %s112, 1
    %p116 = scmp.eq.s32.totalorder %s15, 1
    %p117 = scmp.ne.s32.totalorder %s112, %s114
    %p118 = scmp.eq.s32.totalorder %s15, 0
    %p119 = por %p117, %p118
    %p120 = scmp.ne.s32.totalorder %s112, %s114
    %p121 = scmp.eq.s32.totalorder %s20, 1
    %p122 = por %p120, %p121
    %p123 = scmp.ne.s32.totalorder %s114, %s115
    %p124 = scmp.eq.s32.totalorder %s20, 0
    %p125 = por %p123, %p124
    %p126 = scmp.ne.s32.totalorder %s114, %s115
    %p127 = scmp.eq.s32.totalorder %s21, 1
    %p128 = por %p126, %p127
    %p130 = scmp.ne.s32.totalorder %s115, %s129
    %p131 = scmp.eq.s32.totalorder %s21, 0
    %p132 = por %p130, %p131
    %s134 = sadd.s32 %s133, 1
    %p137 = scmp.eq.s32.totalorder %s15, 1
    %p138 = scmp.ne.s32.totalorder %s133, %s135
    %p139 = scmp.eq.s32.totalorder %s15, 0
    %p140 = por %p138, %p139
    %p141 = scmp.ne.s32.totalorder %s133, %s135
    %p142 = scmp.eq.s32.totalorder %s20, 1
    %p143 = por %p141, %p142
    %p144 = scmp.ne.s32.totalorder %s135, %s136
    %p145 = scmp.eq.s32.totalorder %s20, 0
    %p146 = por %p144, %p145
    %p147 = scmp.ne.s32.totalorder %s135, %s136
    %p148 = scmp.eq.s32.totalorder %s21, 1
    %p149 = por %p147, %p148
    %p151 = scmp.ne.s32.totalorder %s136, %s150
    %p152 = scmp.eq.s32.totalorder %s21, 0
    %p153 = por %p151, %p152
    %s155 = sadd.s32 %s154, 1
    %p158 = scmp.eq.s32.totalorder %s15, 1
    %p159 = scmp.ne.s32.totalorder %s154, %s156
    %p160 = scmp.eq.s32.totalorder %s15, 0
    %p161 = por %p159, %p160
    %p162 = scmp.ne.s32.totalorder %s154, %s156
    %p163 = scmp.eq.s32.totalorder %s20, 1
    %p164 = por %p162, %p163
    %p165 = scmp.ne.s32.totalorder %s156, %s157
    %p166 = scmp.eq.s32.totalorder %s20, 0
    %p167 = por %p165, %p166
    %p168 = scmp.ne.s32.totalorder %s156, %s157
    %p169 = scmp.eq.s32.totalorder %s21, 1
    %p170 = por %p168, %p169
    %p172 = scmp.ne.s32.totalorder %s157, %s171
    %p173 = scmp.eq.s32.totalorder %s21, 0
    %p174 = por %p172, %p173
    %s176 = sadd.s32 %s175, 1
    %p179 = scmp.eq.s32.totalorder %s15, 1
    %p180 = scmp.ne.s32.totalorder %s175, %s177
    %p181 = scmp.eq.s32.totalorder %s15, 0
    %p182 = por %p180, %p181
    %p183 = scmp.ne.s32.totalorder %s175, %s177
    %p184 = scmp.eq.s32.totalorder %s20, 1
    %p185 = por %p183, %p184
    %p186 = scmp.ne.s32.totalorder %s177, %s178
    %p187 = scmp.eq.s32.totalorder %s20, 0
    %p188 = por %p186, %p187
    %p189 = scmp.ne.s32.totalorder %s177, %s178
    %p190 = scmp.eq.s32.totalorder %s21, 1
    %p191 = por %p189, %p190
    %p193 = scmp.ne.s32.totalorder %s178, %s192
    %p194 = scmp.eq.s32.totalorder %s21, 0
    %p195 = por %p193, %p194
    %s197 = sadd.s32 %s196, 1
    %p200 = scmp.eq.s32.totalorder %s15, 1
    %p201 = scmp.ne.s32.totalorder %s196, %s198
    %p202 = scmp.eq.s32.totalorder %s15, 0
    %p203 = por %p201, %p202
    %p204 = scmp.ne.s32.totalorder %s196, %s198
    %p205 = scmp.eq.s32.totalorder %s20, 1
    %p206 = por %p204, %p205
    %p207 = scmp.ne.s32.totalorder %s198, %s199
    %p208 = scmp.eq.s32.totalorder %s20, 0
    %p209 = por %p207, %p208
    %p210 = scmp.ne.s32.totalorder %s198, %s199
    %p211 = scmp.eq.s32.totalorder %s21, 1
    %p212 = por %p210, %p211
    %p214 = scmp.ne.s32.totalorder %s199, %s213
    %p215 = scmp.eq.s32.totalorder %s21, 0
    %p216 = por %p214, %p215
    %s217 = ssub.s32 %s15, %s22
    %p218 = scmp.eq.s32.totalorder %s217, 0
    %s220 = sadd.s32 %s219, 1
    %s221 = scalar_select %p218, %s219, %s220
    %p224 = pneg %p218
    %p225 = scmp.eq.s32.totalorder %s15, 1
    %p226 = por %p224, %p225
    %p227 = scmp.ne.s32.totalorder %s219, %s222
    %p228 = scmp.eq.s32.totalorder %s15, 0
    %p229 = por %p227, %p228
    %p230 = scmp.ne.s32.totalorder %s219, %s222
    %p231 = scmp.eq.s32.totalorder %s20, 1
    %p232 = por %p230, %p231
    %p233 = scmp.ne.s32.totalorder %s222, %s223
    %p234 = scmp.eq.s32.totalorder %s20, 0
    %p235 = por %p233, %p234
    %p236 = scmp.ne.s32.totalorder %s222, %s223
    %p237 = scmp.eq.s32.totalorder %s21, 1
    %p238 = por %p236, %p237
    %p240 = scmp.ne.s32.totalorder %s223, %s239
    %p241 = scmp.eq.s32.totalorder %s21, 0
    %p242 = por %p240, %p241
    %p243 = scmp.le.s32.totalorder 1, %s15
    %p244 = scmp.lt.s32.totalorder %s15, 3
    %p245 = pnand %p243, %p244
    %p246 = pneg %p245
    // Predicated region
    $region9: #{_lambda_.1} parent=5 // pred_check
      _
    $region10: #{_lambda_.1} parent=5 // pred_check_branch
      %248 = sbr.rel (%p245) target = $region12
    $region11: #{_lambda_.1} parent=5 // pred_region
      %s249 = ssub.s32 %s15, 1
      // Predicated region
      $region13: #{_lambda_.1} parent=11 // pred_check
        %p250 = pneg %p62
      $region14: #{_lambda_.1} parent=11 // pred_check_branch
        %252 = sbr.rel (%p250) target = $region16
      $region15: #{_lambda_.1} parent=11 // pred_region
        _
      $region16: #{_lambda_.1} parent=11 // pred_fallthru
        _
      // Predicated region
      $region17: #{_lambda_.1} parent=11 // pred_check
        %p253 = pneg %p83
      $region18: #{_lambda_.1} parent=11 // pred_check_branch
        %255 = sbr.rel (%p253) target = $region20
      $region19: #{_lambda_.1} parent=11 // pred_region
        _
      $region20: #{_lambda_.1} parent=11 // pred_fallthru
        _
      // Predicated region
      $region21: #{_lambda_.1} parent=11 // pred_check
        %p256 = pneg %p104
      $region22: #{_lambda_.1} parent=11 // pred_check_branch
        %258 = sbr.rel (%p256) target = $region24
      $region23: #{_lambda_.1} parent=11 // pred_region
        _
      $region24: #{_lambda_.1} parent=11 // pred_fallthru
        _
      // Predicated region
      $region25: #{_lambda_.1} parent=11 // pred_check
        %p259 = pneg %p125
      $region26: #{_lambda_.1} parent=11 // pred_check_branch
        %261 = sbr.rel (%p259) target = $region28
      $region27: #{_lambda_.1} parent=11 // pred_region
        _
      $region28: #{_lambda_.1} parent=11 // pred_fallthru
        _
      // Predicated region
      $region29: #{_lambda_.1} parent=11 // pred_check
        %p262 = pneg %p146
      $region30: #{_lambda_.1} parent=11 // pred_check_branch
        %264 = sbr.rel (%p262) target = $region32
      $region31: #{_lambda_.1} parent=11 // pred_region
        _
      $region32: #{_lambda_.1} parent=11 // pred_fallthru
        _
      // Predicated region
      $region33: #{_lambda_.1} parent=11 // pred_check
        %p265 = pneg %p167
      $region34: #{_lambda_.1} parent=11 // pred_check_branch
        %267 = sbr.rel (%p265) target = $region36
      $region35: #{_lambda_.1} parent=11 // pred_region
        _
      $region36: #{_lambda_.1} parent=11 // pred_fallthru
        _
      // Predicated region
      $region37: #{_lambda_.1} parent=11 // pred_check
        %p268 = pneg %p188
      $region38: #{_lambda_.1} parent=11 // pred_check_branch
        %270 = sbr.rel (%p268) target = $region40
      $region39: #{_lambda_.1} parent=11 // pred_region
        _
      $region40: #{_lambda_.1} parent=11 // pred_fallthru
        _
      // Predicated region
      $region41: #{_lambda_.1} parent=11 // pred_check
        %p271 = pneg %p209
      $region42: #{_lambda_.1} parent=11 // pred_check_branch
        %273 = sbr.rel (%p271) target = $region44
      $region43: #{_lambda_.1} parent=11 // pred_region
        _
      $region44: #{_lambda_.1} parent=11 // pred_fallthru
        _
    $region12: #{_lambda_.1} parent=5 // pred_fallthru
      _
    %p274 = scmp.lt.s32.totalorder %s15, 2
    // Predicated region
    $region45: #{_lambda_.1} parent=5 // pred_check
      %p275 = pneg %p274
    $region46: #{_lambda_.1} parent=5 // pred_check_branch
      %277 = sbr.rel (%p275) target = $region48
    $region47: #{_lambda_.1} parent=5 // pred_region
      // Predicated region
      $region49: #{_lambda_.1} parent=47 // pred_check
        %p278 = pneg %p35
      $region50: #{_lambda_.1} parent=47 // pred_check_branch
        %280 = sbr.rel (%p278) target = $region52
      $region51: #{_lambda_.1} parent=47 // pred_region
        %p281 = scmp.lt.s32.totalorder %s15, 1
        %s282 = scalar_select %p281, %s15, 1
        %s283 = smul.addr %s282, 10
        %s284 = smul.addr %s283, 8
        %s285 = scalar_lea.vmem %s0, %s284
      $region52: #{_lambda_.1} parent=47 // pred_fallthru
        _
    $region48: #{_lambda_.1} parent=5 // pred_fallthru
      _
    %p286 = scmp.le.s32.totalorder 1, %s15
    %p287 = scmp.lt.s32.totalorder %s15, 3
    %p288 = pnand %p286, %p287
    %p289 = pneg %p288
    // Predicated region
    $region53: #{_lambda_.1} parent=5 // pred_check
      _
    $region54: #{_lambda_.1} parent=5 // pred_check_branch
      %291 = sbr.rel (%p288) target = $region56
    $region55: #{_lambda_.1} parent=5 // pred_region
      %s292 = ssub.s32 %s15, 1
      %p293 = scmp.lt.s32.totalorder %s20, 1
      %s294 = scalar_select %p293, %s20, 1
      %s295 = smul.addr %s294, 10
      %s296 = smul.addr %s295, 8
      %s297 = scalar_lea.vmem %s0, %s296
      %p298 = pneg %p41
      %p299 = pneg %p38
      %p300 = pneg %p62
      %p301 = pneg %p59
      %p302 = pneg %p83
      %p303 = pneg %p80
      %p304 = pneg %p104
      %p305 = pneg %p101
      %p306 = pneg %p125
      %p307 = pneg %p122
      %p308 = pneg %p146
      %p309 = pneg %p143
      %p310 = pneg %p167
      %p311 = pneg %p164
      %p312 = pneg %p188
      %p313 = pneg %p185
      %p314 = pneg %p209
      %p315 = pneg %p206
      %p316 = pneg %p235
      %p317 = pneg %p232
      %p318 = scmp.lt.s32.totalorder %s20, 1
      %s319 = scalar_select %p318, %s20, 1
      %s320 = scalar_lea.vmem %s9, %s319
      %p321 = scmp.lt.s32.totalorder %s20, 1
      %s322 = scalar_select %p321, %s20, 1
      %s323 = smul.addr %s322, 10
      %s324 = smul.addr %s323, 8
      %s325 = scalar_lea.vmem %s0, %s324
      %p326 = scmp.lt.s32.totalorder %s20, 1
      %s327 = scalar_select %p326, %s20, 1
      %s328 = scalar_lea.vmem %s9, %s327
      %v329 = vld [vmem:[%s325] sm:$0xff]
      %v330 = vld [vmem:[%s325 + $0x8] sm:$0xff]
      %v331 = vld [vmem:[%s325 + $0x10] sm:$0xff]
      %v332 = vld [vmem:[%s325 + $0x18] sm:$0xff]
      %v333 = vld [vmem:[%s325 + $0x20] sm:$0xff]
      %v334 = vld [vmem:[%s325 + $0x28] sm:$0xff]
      %v335 = vld [vmem:[%s325 + $0x30] sm:$0xff]
      %v336 = vld [vmem:[%s325 + $0x38] sm:$0xff]
      %v337 = vld [vmem:[%s1] sm:$0xff]
      %v338 = vld [vmem:[%s1 + $0x8] sm:$0xff]
      %v339 = vld [vmem:[%s1 + $0x10] sm:$0xff]
      %v340 = vld [vmem:[%s1 + $0x18] sm:$0xff]
      %v341 = vld [vmem:[%s1 + $0x20] sm:$0xff]
      %v342 = vld [vmem:[%s1 + $0x28] sm:$0xff]
      %v343 = vld [vmem:[%s1 + $0x30] sm:$0xff]
      %v344 = vld [vmem:[%s1 + $0x38] sm:$0xff]
      %v345 = vld [vmem:[%s1 + $0x40] sm:$0xff]
      %v346 = vld [vmem:[%s1 + $0x48] sm:$0xff]
      %v347 = vld [vmem:[%s1 + $0x50] sm:$0xff]
      %v348 = vld [vmem:[%s1 + $0x58] sm:$0xff]
      %v349 = vld [vmem:[%s1 + $0x60] sm:$0xff]
      %v350 = vld [vmem:[%s1 + $0x68] sm:$0xff]
      %v351 = vld [vmem:[%s1 + $0x70] sm:$0xff]
      %v352 = vld [vmem:[%s1 + $0x78] sm:$0xff]
      %v353 = vld [vmem:[%s1 + $0x80] sm:$0xff]
      %v354 = vld [vmem:[%s1 + $0x88] sm:$0xff]
      %v355 = vld [vmem:[%s1 + $0x90] sm:$0xff]
      %v356 = vld [vmem:[%s1 + $0x98] sm:$0xff]
      %v357 = vld [vmem:[%s1 + $0xa0] sm:$0xff]
      %v358 = vld [vmem:[%s1 + $0xa8] sm:$0xff]
      %v359 = vld [vmem:[%s1 + $0xb0] sm:$0xff]
      %v360 = vld [vmem:[%s1 + $0xb8] sm:$0xff]
      %v361 = vld [vmem:[%s1 + $0xc0] sm:$0xff]
      %v362 = vld [vmem:[%s1 + $0xc8] sm:$0xff]
      %v363 = vld [vmem:[%s1 + $0xd0] sm:$0xff]
      %v364 = vld [vmem:[%s1 + $0xd8] sm:$0xff]
      %v365 = vld [vmem:[%s1 + $0xe0] sm:$0xff]
      %v366 = vld [vmem:[%s1 + $0xe8] sm:$0xff]
      %v367 = vld [vmem:[%s1 + $0xf0] sm:$0xff]
      %v368 = vld [vmem:[%s1 + $0xf8] sm:$0xff]
      %v369 = vld [vmem:[%s1 + $0x100] sm:$0xff]
      %v370 = vld [vmem:[%s1 + $0x108] sm:$0xff]
      %v371 = vld [vmem:[%s1 + $0x110] sm:$0xff]
      %v372 = vld [vmem:[%s1 + $0x118] sm:$0xff]
      %v373 = vld [vmem:[%s1 + $0x120] sm:$0xff]
      %v374 = vld [vmem:[%s1 + $0x128] sm:$0xff]
      %v375 = vld [vmem:[%s1 + $0x130] sm:$0xff]
      %v376 = vld [vmem:[%s1 + $0x138] sm:$0xff]
      %v377 = vld [vmem:[%s1 + $0x140] sm:$0xff]
      %v378 = vld [vmem:[%s1 + $0x148] sm:$0xff]
      %v379 = vld [vmem:[%s1 + $0x150] sm:$0xff]
      %v380 = vld [vmem:[%s1 + $0x158] sm:$0xff]
      %v381 = vld [vmem:[%s1 + $0x160] sm:$0xff]
      %v382 = vld [vmem:[%s1 + $0x168] sm:$0xff]
      %v383 = vld [vmem:[%s1 + $0x170] sm:$0xff]
      %v384 = vld [vmem:[%s1 + $0x178] sm:$0xff]
      %v385 = vld [vmem:[%s1 + $0x180] sm:$0xff]
      %v386 = vld [vmem:[%s1 + $0x188] sm:$0xff]
      %v387 = vld [vmem:[%s1 + $0x190] sm:$0xff]
      %v388 = vld [vmem:[%s1 + $0x198] sm:$0xff]
      %v389 = vld [vmem:[%s1 + $0x1a0] sm:$0xff]
      %v390 = vld [vmem:[%s1 + $0x1a8] sm:$0xff]
      %v391 = vld [vmem:[%s1 + $0x1b0] sm:$0xff]
      %v392 = vld [vmem:[%s1 + $0x1b8] sm:$0xff]
      %v393 = vld [vmem:[%s1 + $0x1c0] sm:$0xff]
      %v394 = vld [vmem:[%s325] sm:$0xfe]
      %v395 = vld [vmem:[%s325 + $0x8] sm:$0xfe]
      %v396 = vld [vmem:[%s325 + $0x40] sm:$0x1]
      %v397 = vld [vmem:[%s325 + $0x48] sm:$0x1]
      %s398 = scalar_lea.vmem %s1, 456
      %v399 = vld [vmem:[%s398] sm:$0xff]
      %v400 = vld [vmem:[%s398 + $0x8] sm:$0xff]
      %v401 = vld [vmem:[%s398 + $0x10] sm:$0xff]
      %v402 = vld [vmem:[%s398 + $0x18] sm:$0xff]
      %v403 = vld [vmem:[%s398 + $0x20] sm:$0xff]
      %v404 = vld [vmem:[%s398 + $0x28] sm:$0xff]
      %v405 = vld [vmem:[%s398 + $0x30] sm:$0xff]
      %v406 = vld [vmem:[%s398 + $0x38] sm:$0xff]
      %v407 = vld [vmem:[%s398 + $0x40] sm:$0xff]
      %v408 = vld [vmem:[%s398 + $0x48] sm:$0xff]
      %v409 = vld [vmem:[%s398 + $0x50] sm:$0xff]
      %v410 = vld [vmem:[%s398 + $0x58] sm:$0xff]
      %v411 = vld [vmem:[%s398 + $0x60] sm:$0xff]
      %v412 = vld [vmem:[%s398 + $0x68] sm:$0xff]
      %v413 = vld [vmem:[%s398 + $0x70] sm:$0xff]
      %v414 = vld [vmem:[%s398 + $0x78] sm:$0xff]
      %v415 = vld [vmem:[%s398 + $0x80] sm:$0xff]
      %v416 = vld [vmem:[%s398 + $0x88] sm:$0xff]
      %v417 = vld [vmem:[%s398 + $0x90] sm:$0xff]
      %v418 = vld [vmem:[%s398 + $0x98] sm:$0xff]
      %v419 = vld [vmem:[%s398 + $0xa0] sm:$0xff]
      %v420 = vld [vmem:[%s398 + $0xa8] sm:$0xff]
      %v421 = vld [vmem:[%s398 + $0xb0] sm:$0xff]
      %v422 = vld [vmem:[%s398 + $0xb8] sm:$0xff]
      %v423 = vld [vmem:[%s398 + $0xc0] sm:$0xff]
      %v424 = vld [vmem:[%s398 + $0xc8] sm:$0xff]
      %v425 = vld [vmem:[%s398 + $0xd0] sm:$0xff]
      %v426 = vld [vmem:[%s398 + $0xd8] sm:$0xff]
      %v427 = vld [vmem:[%s398 + $0xe0] sm:$0xff]
      %v428 = vld [vmem:[%s398 + $0xe8] sm:$0xff]
      %v429 = vld [vmem:[%s398 + $0xf0] sm:$0xff]
      %v430 = vld [vmem:[%s398 + $0xf8] sm:$0xff]
      %v431 = vld [vmem:[%s398 + $0x100] sm:$0xff]
      %v432 = vld [vmem:[%s398 + $0x108] sm:$0xff]
      %v433 = vld [vmem:[%s398 + $0x110] sm:$0xff]
      %v434 = vld [vmem:[%s398 + $0x118] sm:$0xff]
      %v435 = vld [vmem:[%s398 + $0x120] sm:$0xff]
      %v436 = vld [vmem:[%s398 + $0x128] sm:$0xff]
      %v437 = vld [vmem:[%s398 + $0x130] sm:$0xff]
      %v438 = vld [vmem:[%s398 + $0x138] sm:$0xff]
      %v439 = vld [vmem:[%s398 + $0x140] sm:$0xff]
      %v440 = vld [vmem:[%s398 + $0x148] sm:$0xff]
      %v441 = vld [vmem:[%s398 + $0x150] sm:$0xff]
      %v442 = vld [vmem:[%s398 + $0x158] sm:$0xff]
      %v443 = vld [vmem:[%s398 + $0x160] sm:$0xff]
      %v444 = vld [vmem:[%s398 + $0x168] sm:$0xff]
      %v445 = vld [vmem:[%s398 + $0x170] sm:$0xff]
      %v446 = vld [vmem:[%s398 + $0x178] sm:$0xff]
      %v447 = vld [vmem:[%s398 + $0x180] sm:$0xff]
      %v448 = vld [vmem:[%s398 + $0x188] sm:$0xff]
      %v449 = vld [vmem:[%s398 + $0x190] sm:$0xff]
      %v450 = vld [vmem:[%s398 + $0x198] sm:$0xff]
      %v451 = vld [vmem:[%s398 + $0x1a0] sm:$0xff]
      %v452 = vld [vmem:[%s398 + $0x1a8] sm:$0xff]
      %v453 = vld [vmem:[%s398 + $0x1b0] sm:$0xff]
      %v454 = vld [vmem:[%s398 + $0x1b8] sm:$0xff]
      %v455 = vld [vmem:[%s398 + $0x1c0] sm:$0xff]
      %vm466 = vcmask 1046528
      %v467 = vrot.slane %v394, 1
      %v468 = vrot.slane %v331, 1
      %v469 = vsel %vm466, %v467, %v468
      %v470 = vrot.slane %v395, 1
      %v471 = vrot.slane %v332, 1
      %v472 = vsel %vm466, %v470, %v471
      %v473 = vrot.slane %v333, 1
      %v474 = vsel %vm466, %v468, %v473
      %v475 = vrot.slane %v334, 1
      %v476 = vsel %vm466, %v471, %v475
      %v477 = vrot.slane %v335, 1
      %v478 = vsel %vm466, %v473, %v477
      %v479 = vrot.slane %v336, 1
      %v480 = vsel %vm466, %v475, %v479
      %v481 = vrot.slane %v396, 1
      %v482 = vsel %vm466, %v477, %v481
      %v483 = vrot.slane %v397, 1
      %v484 = vsel %vm466, %v479, %v483
      %vm489 = vcmask 195584
      %v490 = vsel %vm489, %v472, 0
      %v492 = vsel %vm489, %v476, 0
      %v494 = vsel %vm489, %v480, 0
      %v496 = vsel %vm489, %v484, 0
      %498 = vmatprep.subr.mxu0 %v445
      %499 = vmatpush1.msra.mxu0 %v444
      %500 = vmatprep.subr.mxu0 %v442
      %501 = vmatpush1.msra.mxu0 %v441
      %502 = vmatprep.subr.mxu0 %v439
      %503 = vmatpush1.msra.mxu0 %v438
      %504 = vmatprep.subr.mxu0 %v436
      %505 = vmatpush1.msra.mxu0 %v435
      %506 = vmatprep.subr.mxu0 %v433
      %507 = vmatpush1.msra.mxu0 %v432
      %508 = vmatprep.subr.mxu0 %v430
      %509 = vmatpush1.msra.mxu0 %v429
      %510 = vmatprep.subr.mxu0 %v427
      %511 = vmatpush1.msra.mxu0 %v426
      %512 = vmatprep.subr.mxu0 %v424
      %513 = vmatpush1.msra.mxu0 %v423
      %514 = vmatprep.subr.mxu0 %v421
      %515 = vmatpush1.msra.mxu0 %v420
      %516 = vmatprep.subr.mxu0 %v418
      %517 = vmatpush1.msra.mxu0 %v417
      %518 = vmatprep.subr.mxu0 %v415
      %519 = vmatpush1.msra.mxu0 %v414
      %520 = vmatprep.subr.mxu0 %v412
      %521 = vmatpush1.msra.mxu0 %v411
      %522 = vmatprep.subr.mxu0 %v409
      %523 = vmatpush1.msra.mxu0 %v408
      %524 = vmatprep.subr.mxu0 %v406
      %525 = vmatpush1.msra.mxu0 %v405
      %526 = vmatprep.subr.mxu0 %v403
      %527 = vmatpush1.msra.mxu0 %v402
      %528 = vmatprep.subr.mxu0 %v400
      %529 = vmatpush1.msra.mxu0 %v399
      %530 = vmatprep.subr.mxu0 0.0
      %531 = vmatpush2.msra.mxu0 0.0
      %532 = vmatprep.subr.mxu0 0.0
      %533 = vmatpush2.msra.mxu0 0.0
      %534 = vmatprep.subr.mxu0 0.0
      %535 = vmatpush2.msra.mxu0 0.0
      %536 = vmatprep.subr.mxu0 0.0
      %537 = vmatpush2.msra.mxu0 0.0
      %538 = vmatprep.subr.mxu0 0.0
      %539 = vmatpush2.msra.mxu0 0.0
      %540 = vmatprep.subr.mxu0 0.0
      %541 = vmatpush2.msra.mxu0 0.0
      %542 = vmatprep.subr.mxu0 0.0
      %543 = vmatpush2.msra.mxu0 0.0
      %544 = vmatprep.subr.mxu0 0.0
      %545 = vmatpush2.msra.mxu0 0.0
      %546 = vmatprep.subr.mxu0 0.0
      %547 = vmatpush2.msra.mxu0 0.0
      %548 = vmatprep.subr.mxu0 0.0
      %549 = vmatpush2.msra.mxu0 0.0
      %550 = vmatprep.subr.mxu0 0.0
      %551 = vmatpush2.msra.mxu0 0.0
      %552 = vmatprep.subr.mxu0 0.0
      %553 = vmatpush2.msra.mxu0 0.0
      %554 = vmatprep.subr.mxu0 0.0
      %555 = vmatpush2.msra.mxu0 0.0
      %556 = vmatprep.subr.mxu0 %v454
      %557 = vmatpush2.msra.mxu0 %v453
      %558 = vmatprep.subr.mxu0 %v451
      %559 = vmatpush2.msra.mxu0 %v450
      %560 = vmatprep.subr.mxu0 %v448
      %561 = vmatpush2.msra.mxu0 %v447
      %562 = vmatprep.mubr.f32.mxu0 %v490
      %563 = vmatmul.mubr.f32.gmra.mxu0 %v469
      %v564 = vpop.f32.mrf.mxu0
      %v565 = vadd.f32 0.0, %v564
      %v566 = vpop.f32.mrf.mxu0
      %v567 = vadd.f32 0.0, %v566
      %568 = vmatprep.mubr.f32.mxu0 %v492
      %569 = vmatmul.mubr.f32.gmra.mxu0 %v474
      %v570 = vpop.f32.mrf.mxu0
      %v571 = vadd.f32 0.0, %v570
      %v572 = vpop.f32.mrf.mxu0
      %v573 = vadd.f32 0.0, %v572
      %574 = vmatprep.mubr.f32.mxu0 %v494
      %575 = vmatmul.mubr.f32.gmra.mxu0 %v478
      %v576 = vpop.f32.mrf.mxu0
      %v577 = vadd.f32 0.0, %v576
      %v578 = vpop.f32.mrf.mxu0
      %v579 = vadd.f32 0.0, %v578
      %580 = vmatprep.mubr.f32.mxu0 %v496
      %581 = vmatmul.mubr.f32.gmra.mxu0 %v482
      %v582 = vpop.f32.mrf.mxu0
      %v583 = vadd.f32 0.0, %v582
      %v584 = vpop.f32.mrf.mxu0
      %v585 = vadd.f32 0.0, %v584
      %586 = vdwg.mxu0
      %587 = vmatprep.subr.mxu0 0.0
      %588 = vmatpush1.msra.mxu0 %v446
      %589 = vmatprep.subr.mxu0 0.0
      %590 = vmatpush1.msra.mxu0 %v443
      %591 = vmatprep.subr.mxu0 0.0
      %592 = vmatpush1.msra.mxu0 %v440
      %593 = vmatprep.subr.mxu0 0.0
      %594 = vmatpush1.msra.mxu0 %v437
      %595 = vmatprep.subr.mxu0 0.0
      %596 = vmatpush1.msra.mxu0 %v434
      %597 = vmatprep.subr.mxu0 0.0
      %598 = vmatpush1.msra.mxu0 %v431
      %599 = vmatprep.subr.mxu0 0.0
      %600 = vmatpush1.msra.mxu0 %v428
      %601 = vmatprep.subr.mxu0 0.0
      %602 = vmatpush1.msra.mxu0 %v425
      %603 = vmatprep.subr.mxu0 0.0
      %604 = vmatpush1.msra.mxu0 %v422
      %605 = vmatprep.subr.mxu0 0.0
      %606 = vmatpush1.msra.mxu0 %v419
      %607 = vmatprep.subr.mxu0 0.0
      %608 = vmatpush1.msra.mxu0 %v416
      %609 = vmatprep.subr.mxu0 0.0
      %610 = vmatpush1.msra.mxu0 %v413
      %611 = vmatprep.subr.mxu0 0.0
      %612 = vmatpush1.msra.mxu0 %v410
      %613 = vmatprep.subr.mxu0 0.0
      %614 = vmatpush1.msra.mxu0 %v407
      %615 = vmatprep.subr.mxu0 0.0
      %616 = vmatpush1.msra.mxu0 %v404
      %617 = vmatprep.subr.mxu0 0.0
      %618 = vmatpush1.msra.mxu0 %v401
      %619 = vmatprep.subr.mxu0 0.0
      %620 = vmatpush2.msra.mxu0 0.0
      %621 = vmatprep.subr.mxu0 0.0
      %622 = vmatpush2.msra.mxu0 0.0
      %623 = vmatprep.subr.mxu0 0.0
      %624 = vmatpush2.msra.mxu0 0.0
      %625 = vmatprep.subr.mxu0 0.0
      %626 = vmatpush2.msra.mxu0 0.0
      %627 = vmatprep.subr.mxu0 0.0
      %628 = vmatpush2.msra.mxu0 0.0
      %629 = vmatprep.subr.mxu0 0.0
      %630 = vmatpush2.msra.mxu0 0.0
      %631 = vmatprep.subr.mxu0 0.0
      %632 = vmatpush2.msra.mxu0 0.0
      %633 = vmatprep.subr.mxu0 0.0
      %634 = vmatpush2.msra.mxu0 0.0
      %635 = vmatprep.subr.mxu0 0.0
      %636 = vmatpush2.msra.mxu0 0.0
      %637 = vmatprep.subr.mxu0 0.0
      %638 = vmatpush2.msra.mxu0 0.0
      %639 = vmatprep.subr.mxu0 0.0
      %640 = vmatpush2.msra.mxu0 0.0
      %641 = vmatprep.subr.mxu0 0.0
      %642 = vmatpush2.msra.mxu0 0.0
      %643 = vmatprep.subr.mxu0 0.0
      %644 = vmatpush2.msra.mxu0 0.0
      %645 = vmatprep.subr.mxu0 0.0
      %646 = vmatpush2.msra.mxu0 %v455
      %647 = vmatprep.subr.mxu0 0.0
      %648 = vmatpush2.msra.mxu0 %v452
      %649 = vmatprep.subr.mxu0 0.0
      %650 = vmatpush2.msra.mxu0 %v449
      %651 = vmatprep.mubr.f32.mxu0 %v490
      %652 = vmatmul.mubr.f32.gmra.mxu0 %v469
      %v653 = vpop.f32.mrf.mxu0
      %v654 = vadd.f32 0.0, %v653
      %v655 = vpop.f32.mrf.mxu0
      %656 = vmatprep.mubr.f32.mxu0 %v492
      %657 = vmatmul.mubr.f32.gmra.mxu0 %v474
      %v658 = vpop.f32.mrf.mxu0
      %v659 = vadd.f32 0.0, %v658
      %v660 = vpop.f32.mrf.mxu0
      %661 = vmatprep.mubr.f32.mxu0 %v494
      %662 = vmatmul.mubr.f32.gmra.mxu0 %v478
      %v663 = vpop.f32.mrf.mxu0
      %v664 = vadd.f32 0.0, %v663
      %v665 = vpop.f32.mrf.mxu0
      %666 = vmatprep.mubr.f32.mxu0 %v496
      %667 = vmatmul.mubr.f32.gmra.mxu0 %v482
      %v668 = vpop.f32.mrf.mxu0
      %v669 = vadd.f32 0.0, %v668
      %v670 = vpop.f32.mrf.mxu0
      %671 = vdwg.mxu0
      %v673 = vsel %vm489, %v330, 0
      %v675 = vsel %vm489, %v332, 0
      %v677 = vsel %vm489, %v334, 0
      %v679 = vsel %vm489, %v336, 0
      %681 = vmatprep.subr.mxu0 %v383
      %682 = vmatpush1.msra.mxu0 %v382
      %683 = vmatprep.subr.mxu0 %v380
      %684 = vmatpush1.msra.mxu0 %v379
      %685 = vmatprep.subr.mxu0 %v377
      %686 = vmatpush1.msra.mxu0 %v376
      %687 = vmatprep.subr.mxu0 %v374
      %688 = vmatpush1.msra.mxu0 %v373
      %689 = vmatprep.subr.mxu0 %v371
      %690 = vmatpush1.msra.mxu0 %v370
      %691 = vmatprep.subr.mxu0 %v368
      %692 = vmatpush1.msra.mxu0 %v367
      %693 = vmatprep.subr.mxu0 %v365
      %694 = vmatpush1.msra.mxu0 %v364
      %695 = vmatprep.subr.mxu0 %v362
      %696 = vmatpush1.msra.mxu0 %v361
      %697 = vmatprep.subr.mxu0 %v359
      %698 = vmatpush1.msra.mxu0 %v358
      %699 = vmatprep.subr.mxu0 %v356
      %700 = vmatpush1.msra.mxu0 %v355
      %701 = vmatprep.subr.mxu0 %v353
      %702 = vmatpush1.msra.mxu0 %v352
      %703 = vmatprep.subr.mxu0 %v350
      %704 = vmatpush1.msra.mxu0 %v349
      %705 = vmatprep.subr.mxu0 %v347
      %706 = vmatpush1.msra.mxu0 %v346
      %707 = vmatprep.subr.mxu0 %v344
      %708 = vmatpush1.msra.mxu0 %v343
      %709 = vmatprep.subr.mxu0 %v341
      %710 = vmatpush1.msra.mxu0 %v340
      %711 = vmatprep.subr.mxu0 %v338
      %712 = vmatpush1.msra.mxu0 %v337
      %713 = vmatprep.subr.mxu0 0.0
      %714 = vmatpush2.msra.mxu0 0.0
      %715 = vmatprep.subr.mxu0 0.0
      %716 = vmatpush2.msra.mxu0 0.0
      %717 = vmatprep.subr.mxu0 0.0
      %718 = vmatpush2.msra.mxu0 0.0
      %719 = vmatprep.subr.mxu0 0.0
      %720 = vmatpush2.msra.mxu0 0.0
      %721 = vmatprep.subr.mxu0 0.0
      %722 = vmatpush2.msra.mxu0 0.0
      %723 = vmatprep.subr.mxu0 0.0
      %724 = vmatpush2.msra.mxu0 0.0
      %725 = vmatprep.subr.mxu0 0.0
      %726 = vmatpush2.msra.mxu0 0.0
      %727 = vmatprep.subr.mxu0 0.0
      %728 = vmatpush2.msra.mxu0 0.0
      %729 = vmatprep.subr.mxu0 0.0
      %730 = vmatpush2.msra.mxu0 0.0
      %731 = vmatprep.subr.mxu0 0.0
      %732 = vmatpush2.msra.mxu0 0.0
      %733 = vmatprep.subr.mxu0 0.0
      %734 = vmatpush2.msra.mxu0 0.0
      %735 = vmatprep.subr.mxu0 0.0
      %736 = vmatpush2.msra.mxu0 0.0
      %737 = vmatprep.subr.mxu0 0.0
      %738 = vmatpush2.msra.mxu0 0.0
      %739 = vmatprep.subr.mxu0 %v392
      %740 = vmatpush2.msra.mxu0 %v391
      %741 = vmatprep.subr.mxu0 %v389
      %742 = vmatpush2.msra.mxu0 %v388
      %743 = vmatprep.subr.mxu0 %v386
      %744 = vmatpush2.msra.mxu0 %v385
      %745 = vmatprep.mubr.f32.mxu0 %v673
      %746 = vmatmul.mubr.f32.gmra.mxu0 %v329
      %v747 = vpop.f32.mrf.mxu0
      %v748 = vadd.f32 %v565, %v747
      %v749 = vpop.f32.mrf.mxu0
      %v750 = vadd.f32 %v567, %v749
      %751 = vmatprep.mubr.f32.mxu0 %v675
      %752 = vmatmul.mubr.f32.gmra.mxu0 %v331
      %v753 = vpop.f32.mrf.mxu0
      %v754 = vadd.f32 %v571, %v753
      %v755 = vpop.f32.mrf.mxu0
      %v756 = vadd.f32 %v573, %v755
      %757 = vmatprep.mubr.f32.mxu0 %v677
      %758 = vmatmul.mubr.f32.gmra.mxu0 %v333
      %v759 = vpop.f32.mrf.mxu0
      %v760 = vadd.f32 %v577, %v759
      %v761 = vpop.f32.mrf.mxu0
      %v762 = vadd.f32 %v579, %v761
      %763 = vmatprep.mubr.f32.mxu0 %v679
      %764 = vmatmul.mubr.f32.gmra.mxu0 %v335
      %v765 = vpop.f32.mrf.mxu0
      %v766 = vadd.f32 %v583, %v765
      %v767 = vpop.f32.mrf.mxu0
      %v768 = vadd.f32 %v585, %v767
      %769 = vdwg.mxu0
      %770 = vmatprep.subr.mxu0 0.0
      %771 = vmatpush1.msra.mxu0 %v384
      %772 = vmatprep.subr.mxu0 0.0
      %773 = vmatpush1.msra.mxu0 %v381
      %774 = vmatprep.subr.mxu0 0.0
      %775 = vmatpush1.msra.mxu0 %v378
      %776 = vmatprep.subr.mxu0 0.0
      %777 = vmatpush1.msra.mxu0 %v375
      %778 = vmatprep.subr.mxu0 0.0
      %779 = vmatpush1.msra.mxu0 %v372
      %780 = vmatprep.subr.mxu0 0.0
      %781 = vmatpush1.msra.mxu0 %v369
      %782 = vmatprep.subr.mxu0 0.0
      %783 = vmatpush1.msra.mxu0 %v366
      %784 = vmatprep.subr.mxu0 0.0
      %785 = vmatpush1.msra.mxu0 %v363
      %786 = vmatprep.subr.mxu0 0.0
      %787 = vmatpush1.msra.mxu0 %v360
      %788 = vmatprep.subr.mxu0 0.0
      %789 = vmatpush1.msra.mxu0 %v357
      %790 = vmatprep.subr.mxu0 0.0
      %791 = vmatpush1.msra.mxu0 %v354
      %792 = vmatprep.subr.mxu0 0.0
      %793 = vmatpush1.msra.mxu0 %v351
      %794 = vmatprep.subr.mxu0 0.0
      %795 = vmatpush1.msra.mxu0 %v348
      %796 = vmatprep.subr.mxu0 0.0
      %797 = vmatpush1.msra.mxu0 %v345
      %798 = vmatprep.subr.mxu0 0.0
      %799 = vmatpush1.msra.mxu0 %v342
      %800 = vmatprep.subr.mxu0 0.0
      %801 = vmatpush1.msra.mxu0 %v339
      %802 = vmatprep.subr.mxu0 0.0
      %803 = vmatpush2.msra.mxu0 0.0
      %804 = vmatprep.subr.mxu0 0.0
      %805 = vmatpush2.msra.mxu0 0.0
      %806 = vmatprep.subr.mxu0 0.0
      %807 = vmatpush2.msra.mxu0 0.0
      %808 = vmatprep.subr.mxu0 0.0
      %809 = vmatpush2.msra.mxu0 0.0
      %810 = vmatprep.subr.mxu0 0.0
      %811 = vmatpush2.msra.mxu0 0.0
      %812 = vmatprep.subr.mxu0 0.0
      %813 = vmatpush2.msra.mxu0 0.0
      %814 = vmatprep.subr.mxu0 0.0
      %815 = vmatpush2.msra.mxu0 0.0
      %816 = vmatprep.subr.mxu0 0.0
      %817 = vmatpush2.msra.mxu0 0.0
      %818 = vmatprep.subr.mxu0 0.0
      %819 = vmatpush2.msra.mxu0 0.0
      %820 = vmatprep.subr.mxu0 0.0
      %821 = vmatpush2.msra.mxu0 0.0
      %822 = vmatprep.subr.mxu0 0.0
      %823 = vmatpush2.msra.mxu0 0.0
      %824 = vmatprep.subr.mxu0 0.0
      %825 = vmatpush2.msra.mxu0 0.0
      %826 = vmatprep.subr.mxu0 0.0
      %827 = vmatpush2.msra.mxu0 0.0
      %828 = vmatprep.subr.mxu0 0.0
      %829 = vmatpush2.msra.mxu0 %v393
      %830 = vmatprep.subr.mxu0 0.0
      %831 = vmatpush2.msra.mxu0 %v390
      %832 = vmatprep.subr.mxu0 0.0
      %833 = vmatpush2.msra.mxu0 %v387
      %834 = vmatprep.mubr.f32.mxu0 %v673
      %835 = vmatmul.mubr.f32.gmra.mxu0 %v329
      %v836 = vpop.f32.mrf.mxu0
      %v837 = vadd.f32 %v654, %v836
      %v838 = vpop.f32.mrf.mxu0
      %839 = vmatprep.mubr.f32.mxu0 %v675
      %840 = vmatmul.mubr.f32.gmra.mxu0 %v331
      %v841 = vpop.f32.mrf.mxu0
      %v842 = vadd.f32 %v659, %v841
      %v843 = vpop.f32.mrf.mxu0
      %844 = vmatprep.mubr.f32.mxu0 %v677
      %845 = vmatmul.mubr.f32.gmra.mxu0 %v333
      %v846 = vpop.f32.mrf.mxu0
      %v847 = vadd.f32 %v664, %v846
      %v848 = vpop.f32.mrf.mxu0
      %849 = vmatprep.mubr.f32.mxu0 %v679
      %850 = vmatmul.mubr.f32.gmra.mxu0 %v335
      %v851 = vpop.f32.mrf.mxu0
      %v852 = vadd.f32 %v669, %v851
      %v853 = vpop.f32.mrf.mxu0
      %854 = vdwg.mxu0
      %v855 = vld [vmem:[%s325] sm:$0xfc]
      %v856 = vld [vmem:[%s325 + $0x8] sm:$0xfc]
      %v857 = vld [vmem:[%s325 + $0x40] sm:$0x3]
      %v858 = vld [vmem:[%s325 + $0x48] sm:$0x3]
      %s859 = scalar_lea.vmem %s1, 912
      %v860 = vld [vmem:[%s859] sm:$0xff]
      %v861 = vld [vmem:[%s859 + $0x8] sm:$0xff]
      %v862 = vld [vmem:[%s859 + $0x10] sm:$0xff]
      %v863 = vld [vmem:[%s859 + $0x18] sm:$0xff]
      %v864 = vld [vmem:[%s859 + $0x20] sm:$0xff]
      %v865 = vld [vmem:[%s859 + $0x28] sm:$0xff]
      %v866 = vld [vmem:[%s859 + $0x30] sm:$0xff]
      %v867 = vld [vmem:[%s859 + $0x38] sm:$0xff]
      %v868 = vld [vmem:[%s859 + $0x40] sm:$0xff]
      %v869 = vld [vmem:[%s859 + $0x48] sm:$0xff]
      %v870 = vld [vmem:[%s859 + $0x50] sm:$0xff]
      %v871 = vld [vmem:[%s859 + $0x58] sm:$0xff]
      %v872 = vld [vmem:[%s859 + $0x60] sm:$0xff]
      %v873 = vld [vmem:[%s859 + $0x68] sm:$0xff]
      %v874 = vld [vmem:[%s859 + $0x70] sm:$0xff]
      %v875 = vld [vmem:[%s859 + $0x78] sm:$0xff]
      %v876 = vld [vmem:[%s859 + $0x80] sm:$0xff]
      %v877 = vld [vmem:[%s859 + $0x88] sm:$0xff]
      %v878 = vld [vmem:[%s859 + $0x90] sm:$0xff]
      %v879 = vld [vmem:[%s859 + $0x98] sm:$0xff]
      %v880 = vld [vmem:[%s859 + $0xa0] sm:$0xff]
      %v881 = vld [vmem:[%s859 + $0xa8] sm:$0xff]
      %v882 = vld [vmem:[%s859 + $0xb0] sm:$0xff]
      %v883 = vld [vmem:[%s859 + $0xb8] sm:$0xff]
      %v884 = vld [vmem:[%s859 + $0xc0] sm:$0xff]
      %v885 = vld [vmem:[%s859 + $0xc8] sm:$0xff]
      %v886 = vld [vmem:[%s859 + $0xd0] sm:$0xff]
      %v887 = vld [vmem:[%s859 + $0xd8] sm:$0xff]
      %v888 = vld [vmem:[%s859 + $0xe0] sm:$0xff]
      %v889 = vld [vmem:[%s859 + $0xe8] sm:$0xff]
      %v890 = vld [vmem:[%s859 + $0xf0] sm:$0xff]
      %v891 = vld [vmem:[%s859 + $0xf8] sm:$0xff]
      %v892 = vld [vmem:[%s859 + $0x100] sm:$0xff]
      %v893 = vld [vmem:[%s859 + $0x108] sm:$0xff]
      %v894 = vld [vmem:[%s859 + $0x110] sm:$0xff]
      %v895 = vld [vmem:[%s859 + $0x118] sm:$0xff]
      %v896 = vld [vmem:[%s859 + $0x120] sm:$0xff]
      %v897 = vld [vmem:[%s859 + $0x128] sm:$0xff]
      %v898 = vld [vmem:[%s859 + $0x130] sm:$0xff]
      %v899 = vld [vmem:[%s859 + $0x138] sm:$0xff]
      %v900 = vld [vmem:[%s859 + $0x140] sm:$0xff]
      %v901 = vld [vmem:[%s859 + $0x148] sm:$0xff]
      %v902 = vld [vmem:[%s859 + $0x150] sm:$0xff]
      %v903 = vld [vmem:[%s859 + $0x158] sm:$0xff]
      %v904 = vld [vmem:[%s859 + $0x160] sm:$0xff]
      %v905 = vld [vmem:[%s859 + $0x168] sm:$0xff]
      %v906 = vld [vmem:[%s859 + $0x170] sm:$0xff]
      %v907 = vld [vmem:[%s859 + $0x178] sm:$0xff]
      %v908 = vld [vmem:[%s859 + $0x180] sm:$0xff]
      %v909 = vld [vmem:[%s859 + $0x188] sm:$0xff]
      %v910 = vld [vmem:[%s859 + $0x190] sm:$0xff]
      %v911 = vld [vmem:[%s859 + $0x198] sm:$0xff]
      %v912 = vld [vmem:[%s859 + $0x1a0] sm:$0xff]
      %v913 = vld [vmem:[%s859 + $0x1a8] sm:$0xff]
      %v914 = vld [vmem:[%s859 + $0x1b0] sm:$0xff]
      %v915 = vld [vmem:[%s859 + $0x1b8] sm:$0xff]
      %v916 = vld [vmem:[%s859 + $0x1c0] sm:$0xff]
      %vm921 = vcmask 1045504
      %v922 = vrot.slane %v855, 2
      %v923 = vrot.slane %v331, 2
      %v924 = vsel %vm921, %v922, %v923
      %v925 = vrot.slane %v856, 2
      %v926 = vrot.slane %v332, 2
      %v927 = vsel %vm921, %v925, %v926
      %v928 = vrot.slane %v333, 2
      %v929 = vsel %vm921, %v923, %v928
      %v930 = vrot.slane %v334, 2
      %v931 = vsel %vm921, %v926, %v930
      %v932 = vrot.slane %v335, 2
      %v933 = vsel %vm921, %v928, %v932
      %v934 = vrot.slane %v336, 2
      %v935 = vsel %vm921, %v930, %v934
      %v936 = vrot.slane %v857, 2
      %v937 = vsel %vm921, %v932, %v936
      %v938 = vrot.slane %v858, 2
      %v939 = vsel %vm921, %v934, %v938
      %v944 = vsel %vm489, %v927, 0
      %v946 = vsel %vm489, %v931, 0
      %v948 = vsel %vm489, %v935, 0
      %v950 = vsel %vm489, %v939, 0
      %952 = vmatprep.subr.mxu0 %v906
      %953 = vmatpush1.msra.mxu0 %v905
      %954 = vmatprep.subr.mxu0 %v903
      %955 = vmatpush1.msra.mxu0 %v902
      %956 = vmatprep.subr.mxu0 %v900
      %957 = vmatpush1.msra.mxu0 %v899
      %958 = vmatprep.subr.mxu0 %v897
      %959 = vmatpush1.msra.mxu0 %v896
      %960 = vmatprep.subr.mxu0 %v894
      %961 = vmatpush1.msra.mxu0 %v893
      %962 = vmatprep.subr.mxu0 %v891
      %963 = vmatpush1.msra.mxu0 %v890
      %964 = vmatprep.subr.mxu0 %v888
      %965 = vmatpush1.msra.mxu0 %v887
      %966 = vmatprep.subr.mxu0 %v885
      %967 = vmatpush1.msra.mxu0 %v884
      %968 = vmatprep.subr.mxu0 %v882
      %969 = vmatpush1.msra.mxu0 %v881
      %970 = vmatprep.subr.mxu0 %v879
      %971 = vmatpush1.msra.mxu0 %v878
      %972 = vmatprep.subr.mxu0 %v876
      %973 = vmatpush1.msra.mxu0 %v875
      %974 = vmatprep.subr.mxu0 %v873
      %975 = vmatpush1.msra.mxu0 %v872
      %976 = vmatprep.subr.mxu0 %v870
      %977 = vmatpush1.msra.mxu0 %v869
      %978 = vmatprep.subr.mxu0 %v867
      %979 = vmatpush1.msra.mxu0 %v866
      %980 = vmatprep.subr.mxu0 %v864
      %981 = vmatpush1.msra.mxu0 %v863
      %982 = vmatprep.subr.mxu0 %v861
      %983 = vmatpush1.msra.mxu0 %v860
      %984 = vmatprep.subr.mxu0 0.0
      %985 = vmatpush2.msra.mxu0 0.0
      %986 = vmatprep.subr.mxu0 0.0
      %987 = vmatpush2.msra.mxu0 0.0
      %988 = vmatprep.subr.mxu0 0.0
      %989 = vmatpush2.msra.mxu0 0.0
      %990 = vmatprep.subr.mxu0 0.0
      %991 = vmatpush2.msra.mxu0 0.0
      %992 = vmatprep.subr.mxu0 0.0
      %993 = vmatpush2.msra.mxu0 0.0
      %994 = vmatprep.subr.mxu0 0.0
      %995 = vmatpush2.msra.mxu0 0.0
      %996 = vmatprep.subr.mxu0 0.0
      %997 = vmatpush2.msra.mxu0 0.0
      %998 = vmatprep.subr.mxu0 0.0
      %999 = vmatpush2.msra.mxu0 0.0
      %1000 = vmatprep.subr.mxu0 0.0
      %1001 = vmatpush2.msra.mxu0 0.0
      %1002 = vmatprep.subr.mxu0 0.0
      %1003 = vmatpush2.msra.mxu0 0.0
      %1004 = vmatprep.subr.mxu0 0.0
      %1005 = vmatpush2.msra.mxu0 0.0
      %1006 = vmatprep.subr.mxu0 0.0
      %1007 = vmatpush2.msra.mxu0 0.0
      %1008 = vmatprep.subr.mxu0 0.0
      %1009 = vmatpush2.msra.mxu0 0.0
      %1010 = vmatprep.subr.mxu0 %v915
      %1011 = vmatpush2.msra.mxu0 %v914
      %1012 = vmatprep.subr.mxu0 %v912
      %1013 = vmatpush2.msra.mxu0 %v911
      %1014 = vmatprep.subr.mxu0 %v909
      %1015 = vmatpush2.msra.mxu0 %v908
      %1016 = vmatprep.mubr.f32.mxu0 %v944
      %1017 = vmatmul.mubr.f32.gmra.mxu0 %v924
      %v1018 = vpop.f32.mrf.mxu0
      %v1019 = vadd.f32 0.0, %v1018
      %v1020 = vpop.f32.mrf.mxu0
      %v1021 = vadd.f32 0.0, %v1020
      %1022 = vmatprep.mubr.f32.mxu0 %v946
      %1023 = vmatmul.mubr.f32.gmra.mxu0 %v929
      %v1024 = vpop.f32.mrf.mxu0
      %v1025 = vadd.f32 0.0, %v1024
      %v1026 = vpop.f32.mrf.mxu0
      %v1027 = vadd.f32 0.0, %v1026
      %1028 = vmatprep.mubr.f32.mxu0 %v948
      %1029 = vmatmul.mubr.f32.gmra.mxu0 %v933
      %v1030 = vpop.f32.mrf.mxu0
      %v1031 = vadd.f32 0.0, %v1030
      %v1032 = vpop.f32.mrf.mxu0
      %v1033 = vadd.f32 0.0, %v1032
      %1034 = vmatprep.mubr.f32.mxu0 %v950
      %1035 = vmatmul.mubr.f32.gmra.mxu0 %v937
      %v1036 = vpop.f32.mrf.mxu0
      %v1037 = vadd.f32 0.0, %v1036
      %v1038 = vpop.f32.mrf.mxu0
      %v1039 = vadd.f32 0.0, %v1038
      %1040 = vdwg.mxu0
      %1041 = vmatprep.subr.mxu0 0.0
      %1042 = vmatpush1.msra.mxu0 %v907
      %1043 = vmatprep.subr.mxu0 0.0
      %1044 = vmatpush1.msra.mxu0 %v904
      %1045 = vmatprep.subr.mxu0 0.0
      %1046 = vmatpush1.msra.mxu0 %v901
      %1047 = vmatprep.subr.mxu0 0.0
      %1048 = vmatpush1.msra.mxu0 %v898
      %1049 = vmatprep.subr.mxu0 0.0
      %1050 = vmatpush1.msra.mxu0 %v895
      %1051 = vmatprep.subr.mxu0 0.0
      %1052 = vmatpush1.msra.mxu0 %v892
      %1053 = vmatprep.subr.mxu0 0.0
      %1054 = vmatpush1.msra.mxu0 %v889
      %1055 = vmatprep.subr.mxu0 0.0
      %1056 = vmatpush1.msra.mxu0 %v886
      %1057 = vmatprep.subr.mxu0 0.0
      %1058 = vmatpush1.msra.mxu0 %v883
      %1059 = vmatprep.subr.mxu0 0.0
      %1060 = vmatpush1.msra.mxu0 %v880
      %1061 = vmatprep.subr.mxu0 0.0
      %1062 = vmatpush1.msra.mxu0 %v877
      %1063 = vmatprep.subr.mxu0 0.0
      %1064 = vmatpush1.msra.mxu0 %v874
      %1065 = vmatprep.subr.mxu0 0.0
      %1066 = vmatpush1.msra.mxu0 %v871
      %1067 = vmatprep.subr.mxu0 0.0
      %1068 = vmatpush1.msra.mxu0 %v868
      %1069 = vmatprep.subr.mxu0 0.0
      %1070 = vmatpush1.msra.mxu0 %v865
      %1071 = vmatprep.subr.mxu0 0.0
      %1072 = vmatpush1.msra.mxu0 %v862
      %1073 = vmatprep.subr.mxu0 0.0
      %1074 = vmatpush2.msra.mxu0 0.0
      %1075 = vmatprep.subr.mxu0 0.0
      %1076 = vmatpush2.msra.mxu0 0.0
      %1077 = vmatprep.subr.mxu0 0.0
      %1078 = vmatpush2.msra.mxu0 0.0
      %1079 = vmatprep.subr.mxu0 0.0
      %1080 = vmatpush2.msra.mxu0 0.0
      %1081 = vmatprep.subr.mxu0 0.0
      %1082 = vmatpush2.msra.mxu0 0.0
      %1083 = vmatprep.subr.mxu0 0.0
      %1084 = vmatpush2.msra.mxu0 0.0
      %1085 = vmatprep.subr.mxu0 0.0
      %1086 = vmatpush2.msra.mxu0 0.0
      %1087 = vmatprep.subr.mxu0 0.0
      %1088 = vmatpush2.msra.mxu0 0.0
      %1089 = vmatprep.subr.mxu0 0.0
      %1090 = vmatpush2.msra.mxu0 0.0
      %1091 = vmatprep.subr.mxu0 0.0
      %1092 = vmatpush2.msra.mxu0 0.0
      %1093 = vmatprep.subr.mxu0 0.0
      %1094 = vmatpush2.msra.mxu0 0.0
      %1095 = vmatprep.subr.mxu0 0.0
      %1096 = vmatpush2.msra.mxu0 0.0
      %1097 = vmatprep.subr.mxu0 0.0
      %1098 = vmatpush2.msra.mxu0 0.0
      %1099 = vmatprep.subr.mxu0 0.0
      %1100 = vmatpush2.msra.mxu0 %v916
      %1101 = vmatprep.subr.mxu0 0.0
      %1102 = vmatpush2.msra.mxu0 %v913
      %1103 = vmatprep.subr.mxu0 0.0
      %1104 = vmatpush2.msra.mxu0 %v910
      %1105 = vmatprep.mubr.f32.mxu0 %v944
      %1106 = vmatmul.mubr.f32.gmra.mxu0 %v924
      %v1107 = vpop.f32.mrf.mxu0
      %v1108 = vadd.f32 0.0, %v1107
      %v1109 = vpop.f32.mrf.mxu0
      %1110 = vmatprep.mubr.f32.mxu0 %v946
      %1111 = vmatmul.mubr.f32.gmra.mxu0 %v929
      %v1112 = vpop.f32.mrf.mxu0
      %v1113 = vadd.f32 0.0, %v1112
      %v1114 = vpop.f32.mrf.mxu0
      %1115 = vmatprep.mubr.f32.mxu0 %v948
      %1116 = vmatmul.mubr.f32.gmra.mxu0 %v933
      %v1117 = vpop.f32.mrf.mxu0
      %v1118 = vadd.f32 0.0, %v1117
      %v1119 = vpop.f32.mrf.mxu0
      %1120 = vmatprep.mubr.f32.mxu0 %v950
      %1121 = vmatmul.mubr.f32.gmra.mxu0 %v937
      %v1122 = vpop.f32.mrf.mxu0
      %v1123 = vadd.f32 0.0, %v1122
      %v1124 = vpop.f32.mrf.mxu0
      %1125 = vdwg.mxu0
      %v1126 = vadd.f32 %v748, %v1019
      %v1127 = vadd.f32 %v750, %v1021
      %v1128 = vadd.f32 %v837, %v1108
      %v1129 = vadd.f32 %v754, %v1025
      %v1130 = vadd.f32 %v756, %v1027
      %v1131 = vadd.f32 %v842, %v1113
      %v1132 = vadd.f32 %v760, %v1031
      %v1133 = vadd.f32 %v762, %v1033
      %v1134 = vadd.f32 %v847, %v1118
      %v1135 = vadd.f32 %v766, %v1037
      %v1136 = vadd.f32 %v768, %v1039
      %v1137 = vadd.f32 %v852, %v1123
      %v1138 = vld [vmem:[%s325] sm:$0xf8]
      %v1139 = vld [vmem:[%s325 + $0x8] sm:$0xf8]
      %v1140 = vld [vmem:[%s325 + $0x40] sm:$0x7]
      %v1141 = vld [vmem:[%s325 + $0x48] sm:$0x7]
      %s1142 = scalar_lea.vmem %s1, 1368
      %v1143 = vld [vmem:[%s1142] sm:$0xff]
      %v1144 = vld [vmem:[%s1142 + $0x8] sm:$0xff]
      %v1145 = vld [vmem:[%s1142 + $0x10] sm:$0xff]
      %v1146 = vld [vmem:[%s1142 + $0x18] sm:$0xff]
      %v1147 = vld [vmem:[%s1142 + $0x20] sm:$0xff]
      %v1148 = vld [vmem:[%s1142 + $0x28] sm:$0xff]
      %v1149 = vld [vmem:[%s1142 + $0x30] sm:$0xff]
      %v1150 = vld [vmem:[%s1142 + $0x38] sm:$0xff]
      %v1151 = vld [vmem:[%s1142 + $0x40] sm:$0xff]
      %v1152 = vld [vmem:[%s1142 + $0x48] sm:$0xff]
      %v1153 = vld [vmem:[%s1142 + $0x50] sm:$0xff]
      %v1154 = vld [vmem:[%s1142 + $0x58] sm:$0xff]
      %v1155 = vld [vmem:[%s1142 + $0x60] sm:$0xff]
      %v1156 = vld [vmem:[%s1142 + $0x68] sm:$0xff]
      %v1157 = vld [vmem:[%s1142 + $0x70] sm:$0xff]
      %v1158 = vld [vmem:[%s1142 + $0x78] sm:$0xff]
      %v1159 = vld [vmem:[%s1142 + $0x80] sm:$0xff]
      %v1160 = vld [vmem:[%s1142 + $0x88] sm:$0xff]
      %v1161 = vld [vmem:[%s1142 + $0x90] sm:$0xff]
      %v1162 = vld [vmem:[%s1142 + $0x98] sm:$0xff]
      %v1163 = vld [vmem:[%s1142 + $0xa0] sm:$0xff]
      %v1164 = vld [vmem:[%s1142 + $0xa8] sm:$0xff]
      %v1165 = vld [vmem:[%s1142 + $0xb0] sm:$0xff]
      %v1166 = vld [vmem:[%s1142 + $0xb8] sm:$0xff]
      %v1167 = vld [vmem:[%s1142 + $0xc0] sm:$0xff]
      %v1168 = vld [vmem:[%s1142 + $0xc8] sm:$0xff]
      %v1169 = vld [vmem:[%s1142 + $0xd0] sm:$0xff]
      %v1170 = vld [vmem:[%s1142 + $0xd8] sm:$0xff]
      %v1171 = vld [vmem:[%s1142 + $0xe0] sm:$0xff]
      %v1172 = vld [vmem:[%s1142 + $0xe8] sm:$0xff]
      %v1173 = vld [vmem:[%s1142 + $0xf0] sm:$0xff]
      %v1174 = vld [vmem:[%s1142 + $0xf8] sm:$0xff]
      %v1175 = vld [vmem:[%s1142 + $0x100] sm:$0xff]
      %v1176 = vld [vmem:[%s1142 + $0x108] sm:$0xff]
      %v1177 = vld [vmem:[%s1142 + $0x110] sm:$0xff]
      %v1178 = vld [vmem:[%s1142 + $0x118] sm:$0xff]
      %v1179 = vld [vmem:[%s1142 + $0x120] sm:$0xff]
      %v1180 = vld [vmem:[%s1142 + $0x128] sm:$0xff]
      %v1181 = vld [vmem:[%s1142 + $0x130] sm:$0xff]
      %v1182 = vld [vmem:[%s1142 + $0x138] sm:$0xff]
      %v1183 = vld [vmem:[%s1142 + $0x140] sm:$0xff]
      %v1184 = vld [vmem:[%s1142 + $0x148] sm:$0xff]
      %v1185 = vld [vmem:[%s1142 + $0x150] sm:$0xff]
      %v1186 = vld [vmem:[%s1142 + $0x158] sm:$0xff]
      %v1187 = vld [vmem:[%s1142 + $0x160] sm:$0xff]
      %v1188 = vld [vmem:[%s1142 + $0x168] sm:$0xff]
      %v1189 = vld [vmem:[%s1142 + $0x170] sm:$0xff]
      %v1190 = vld [vmem:[%s1142 + $0x178] sm:$0xff]
      %v1191 = vld [vmem:[%s1142 + $0x180] sm:$0xff]
      %v1192 = vld [vmem:[%s1142 + $0x188] sm:$0xff]
      %v1193 = vld [vmem:[%s1142 + $0x190] sm:$0xff]
      %v1194 = vld [vmem:[%s1142 + $0x198] sm:$0xff]
      %v1195 = vld [vmem:[%s1142 + $0x1a0] sm:$0xff]
      %v1196 = vld [vmem:[%s1142 + $0x1a8] sm:$0xff]
      %v1197 = vld [vmem:[%s1142 + $0x1b0] sm:$0xff]
      %v1198 = vld [vmem:[%s1142 + $0x1b8] sm:$0xff]
      %v1199 = vld [vmem:[%s1142 + $0x1c0] sm:$0xff]
      %vm1204 = vcmask 1044480
      %v1205 = vrot.slane %v1138, 3
      %v1206 = vrot.slane %v331, 3
      %v1207 = vsel %vm1204, %v1205, %v1206
      %v1208 = vrot.slane %v1139, 3
      %v1209 = vrot.slane %v332, 3
      %v1210 = vsel %vm1204, %v1208, %v1209
      %v1211 = vrot.slane %v333, 3
      %v1212 = vsel %vm1204, %v1206, %v1211
      %v1213 = vrot.slane %v334, 3
      %v1214 = vsel %vm1204, %v1209, %v1213
      %v1215 = vrot.slane %v335, 3
      %v1216 = vsel %vm1204, %v1211, %v1215
      %v1217 = vrot.slane %v336, 3
      %v1218 = vsel %vm1204, %v1213, %v1217
      %v1219 = vrot.slane %v1140, 3
      %v1220 = vsel %vm1204, %v1215, %v1219
      %v1221 = vrot.slane %v1141, 3
      %v1222 = vsel %vm1204, %v1217, %v1221
      %v1227 = vsel %vm489, %v1210, 0
      %v1229 = vsel %vm489, %v1214, 0
      %v1231 = vsel %vm489, %v1218, 0
      %v1233 = vsel %vm489, %v1222, 0
      %1235 = vmatprep.subr.mxu0 %v1189
      %1236 = vmatpush1.msra.mxu0 %v1188
      %1237 = vmatprep.subr.mxu0 %v1186
      %1238 = vmatpush1.msra.mxu0 %v1185
      %1239 = vmatprep.subr.mxu0 %v1183
      %1240 = vmatpush1.msra.mxu0 %v1182
      %1241 = vmatprep.subr.mxu0 %v1180
      %1242 = vmatpush1.msra.mxu0 %v1179
      %1243 = vmatprep.subr.mxu0 %v1177
      %1244 = vmatpush1.msra.mxu0 %v1176
      %1245 = vmatprep.subr.mxu0 %v1174
      %1246 = vmatpush1.msra.mxu0 %v1173
      %1247 = vmatprep.subr.mxu0 %v1171
      %1248 = vmatpush1.msra.mxu0 %v1170
      %1249 = vmatprep.subr.mxu0 %v1168
      %1250 = vmatpush1.msra.mxu0 %v1167
      %1251 = vmatprep.subr.mxu0 %v1165
      %1252 = vmatpush1.msra.mxu0 %v1164
      %1253 = vmatprep.subr.mxu0 %v1162
      %1254 = vmatpush1.msra.mxu0 %v1161
      %1255 = vmatprep.subr.mxu0 %v1159
      %1256 = vmatpush1.msra.mxu0 %v1158
      %1257 = vmatprep.subr.mxu0 %v1156
      %1258 = vmatpush1.msra.mxu0 %v1155
      %1259 = vmatprep.subr.mxu0 %v1153
      %1260 = vmatpush1.msra.mxu0 %v1152
      %1261 = vmatprep.subr.mxu0 %v1150
      %1262 = vmatpush1.msra.mxu0 %v1149
      %1263 = vmatprep.subr.mxu0 %v1147
      %1264 = vmatpush1.msra.mxu0 %v1146
      %1265 = vmatprep.subr.mxu0 %v1144
      %1266 = vmatpush1.msra.mxu0 %v1143
      %1267 = vmatprep.subr.mxu0 0.0
      %1268 = vmatpush2.msra.mxu0 0.0
      %1269 = vmatprep.subr.mxu0 0.0
      %1270 = vmatpush2.msra.mxu0 0.0
      %1271 = vmatprep.subr.mxu0 0.0
      %1272 = vmatpush2.msra.mxu0 0.0
      %1273 = vmatprep.subr.mxu0 0.0
      %1274 = vmatpush2.msra.mxu0 0.0
      %1275 = vmatprep.subr.mxu0 0.0
      %1276 = vmatpush2.msra.mxu0 0.0
      %1277 = vmatprep.subr.mxu0 0.0
      %1278 = vmatpush2.msra.mxu0 0.0
      %1279 = vmatprep.subr.mxu0 0.0
      %1280 = vmatpush2.msra.mxu0 0.0
      %1281 = vmatprep.subr.mxu0 0.0
      %1282 = vmatpush2.msra.mxu0 0.0
      %1283 = vmatprep.subr.mxu0 0.0
      %1284 = vmatpush2.msra.mxu0 0.0
      %1285 = vmatprep.subr.mxu0 0.0
      %1286 = vmatpush2.msra.mxu0 0.0
      %1287 = vmatprep.subr.mxu0 0.0
      %1288 = vmatpush2.msra.mxu0 0.0
      %1289 = vmatprep.subr.mxu0 0.0
      %1290 = vmatpush2.msra.mxu0 0.0
      %1291 = vmatprep.subr.mxu0 0.0
      %1292 = vmatpush2.msra.mxu0 0.0
      %1293 = vmatprep.subr.mxu0 %v1198
      %1294 = vmatpush2.msra.mxu0 %v1197
      %1295 = vmatprep.subr.mxu0 %v1195
      %1296 = vmatpush2.msra.mxu0 %v1194
      %1297 = vmatprep.subr.mxu0 %v1192
      %1298 = vmatpush2.msra.mxu0 %v1191
      %1299 = vmatprep.mubr.f32.mxu0 %v1227
      %1300 = vmatmul.mubr.f32.gmra.mxu0 %v1207
      %v1301 = vpop.f32.mrf.mxu0
      %v1302 = vadd.f32 0.0, %v1301
      %v1303 = vpop.f32.mrf.mxu0
      %v1304 = vadd.f32 0.0, %v1303
      %1305 = vmatprep.mubr.f32.mxu0 %v1229
      %1306 = vmatmul.mubr.f32.gmra.mxu0 %v1212
      %v1307 = vpop.f32.mrf.mxu0
      %v1308 = vadd.f32 0.0, %v1307
      %v1309 = vpop.f32.mrf.mxu0
      %v1310 = vadd.f32 0.0, %v1309
      %1311 = vmatprep.mubr.f32.mxu0 %v1231
      %1312 = vmatmul.mubr.f32.gmra.mxu0 %v1216
      %v1313 = vpop.f32.mrf.mxu0
      %v1314 = vadd.f32 0.0, %v1313
      %v1315 = vpop.f32.mrf.mxu0
      %v1316 = vadd.f32 0.0, %v1315
      %1317 = vmatprep.mubr.f32.mxu0 %v1233
      %1318 = vmatmul.mubr.f32.gmra.mxu0 %v1220
      %v1319 = vpop.f32.mrf.mxu0
      %v1320 = vadd.f32 0.0, %v1319
      %v1321 = vpop.f32.mrf.mxu0
      %v1322 = vadd.f32 0.0, %v1321
      %1323 = vdwg.mxu0
      %1324 = vmatprep.subr.mxu0 0.0
      %1325 = vmatpush1.msra.mxu0 %v1190
      %1326 = vmatprep.subr.mxu0 0.0
      %1327 = vmatpush1.msra.mxu0 %v1187
      %1328 = vmatprep.subr.mxu0 0.0
      %1329 = vmatpush1.msra.mxu0 %v1184
      %1330 = vmatprep.subr.mxu0 0.0
      %1331 = vmatpush1.msra.mxu0 %v1181
      %1332 = vmatprep.subr.mxu0 0.0
      %1333 = vmatpush1.msra.mxu0 %v1178
      %1334 = vmatprep.subr.mxu0 0.0
      %1335 = vmatpush1.msra.mxu0 %v1175
      %1336 = vmatprep.subr.mxu0 0.0
      %1337 = vmatpush1.msra.mxu0 %v1172
      %1338 = vmatprep.subr.mxu0 0.0
      %1339 = vmatpush1.msra.mxu0 %v1169
      %1340 = vmatprep.subr.mxu0 0.0
      %1341 = vmatpush1.msra.mxu0 %v1166
      %1342 = vmatprep.subr.mxu0 0.0
      %1343 = vmatpush1.msra.mxu0 %v1163
      %1344 = vmatprep.subr.mxu0 0.0
      %1345 = vmatpush1.msra.mxu0 %v1160
      %1346 = vmatprep.subr.mxu0 0.0
      %1347 = vmatpush1.msra.mxu0 %v1157
      %1348 = vmatprep.subr.mxu0 0.0
      %1349 = vmatpush1.msra.mxu0 %v1154
      %1350 = vmatprep.subr.mxu0 0.0
      %1351 = vmatpush1.msra.mxu0 %v1151
      %1352 = vmatprep.subr.mxu0 0.0
      %1353 = vmatpush1.msra.mxu0 %v1148
      %1354 = vmatprep.subr.mxu0 0.0
      %1355 = vmatpush1.msra.mxu0 %v1145
      %1356 = vmatprep.subr.mxu0 0.0
      %1357 = vmatpush2.msra.mxu0 0.0
      %1358 = vmatprep.subr.mxu0 0.0
      %1359 = vmatpush2.msra.mxu0 0.0
      %1360 = vmatprep.subr.mxu0 0.0
      %1361 = vmatpush2.msra.mxu0 0.0
      %1362 = vmatprep.subr.mxu0 0.0
      %1363 = vmatpush2.msra.mxu0 0.0
      %1364 = vmatprep.subr.mxu0 0.0
      %1365 = vmatpush2.msra.mxu0 0.0
      %1366 = vmatprep.subr.mxu0 0.0
      %1367 = vmatpush2.msra.mxu0 0.0
      %1368 = vmatprep.subr.mxu0 0.0
      %1369 = vmatpush2.msra.mxu0 0.0
      %1370 = vmatprep.subr.mxu0 0.0
      %1371 = vmatpush2.msra.mxu0 0.0
      %1372 = vmatprep.subr.mxu0 0.0
      %1373 = vmatpush2.msra.mxu0 0.0
      %1374 = vmatprep.subr.mxu0 0.0
      %1375 = vmatpush2.msra.mxu0 0.0
      %1376 = vmatprep.subr.mxu0 0.0
      %1377 = vmatpush2.msra.mxu0 0.0
      %1378 = vmatprep.subr.mxu0 0.0
      %1379 = vmatpush2.msra.mxu0 0.0
      %1380 = vmatprep.subr.mxu0 0.0
      %1381 = vmatpush2.msra.mxu0 0.0
      %1382 = vmatprep.subr.mxu0 0.0
      %1383 = vmatpush2.msra.mxu0 %v1199
      %1384 = vmatprep.subr.mxu0 0.0
      %1385 = vmatpush2.msra.mxu0 %v1196
      %1386 = vmatprep.subr.mxu0 0.0
      %1387 = vmatpush2.msra.mxu0 %v1193
      %1388 = vmatprep.mubr.f32.mxu0 %v1227
      %1389 = vmatmul.mubr.f32.gmra.mxu0 %v1207
      %v1390 = vpop.f32.mrf.mxu0
      %v1391 = vadd.f32 0.0, %v1390
      %v1392 = vpop.f32.mrf.mxu0
      %1393 = vmatprep.mubr.f32.mxu0 %v1229
      %1394 = vmatmul.mubr.f32.gmra.mxu0 %v1212
      %v1395 = vpop.f32.mrf.mxu0
      %v1396 = vadd.f32 0.0, %v1395
      %v1397 = vpop.f32.mrf.mxu0
      %1398 = vmatprep.mubr.f32.mxu0 %v1231
      %1399 = vmatmul.mubr.f32.gmra.mxu0 %v1216
      %v1400 = vpop.f32.mrf.mxu0
      %v1401 = vadd.f32 0.0, %v1400
      %v1402 = vpop.f32.mrf.mxu0
      %1403 = vmatprep.mubr.f32.mxu0 %v1233
      %1404 = vmatmul.mubr.f32.gmra.mxu0 %v1220
      %v1405 = vpop.f32.mrf.mxu0
      %v1406 = vadd.f32 0.0, %v1405
      %v1407 = vpop.f32.mrf.mxu0
      %1408 = vdwg.mxu0
      %v1409 = vadd.f32 %v1126, %v1302
      %v1410 = vadd.f32 %v1127, %v1304
      %v1411 = vadd.f32 %v1128, %v1391
      %v1412 = vadd.f32 %v1129, %v1308
      %v1413 = vadd.f32 %v1130, %v1310
      %v1414 = vadd.f32 %v1131, %v1396
      %v1415 = vadd.f32 %v1132, %v1314
      %v1416 = vadd.f32 %v1133, %v1316
      %v1417 = vadd.f32 %v1134, %v1401
      %v1418 = vadd.f32 %v1135, %v1320
      %v1419 = vadd.f32 %v1136, %v1322
      %v1420 = vadd.f32 %v1137, %v1406
      %v1421 = vld [vmem:[%s325] sm:$0xf0]
      %v1422 = vld [vmem:[%s325 + $0x8] sm:$0xf0]
      %v1423 = vld [vmem:[%s325 + $0x40] sm:$0xf]
      %v1424 = vld [vmem:[%s325 + $0x48] sm:$0xf]
      %s1425 = scalar_lea.vmem %s1, 1824
      %v1426 = vld [vmem:[%s1425] sm:$0xff]
      %v1427 = vld [vmem:[%s1425 + $0x8] sm:$0xff]
      %v1428 = vld [vmem:[%s1425 + $0x10] sm:$0xff]
      %v1429 = vld [vmem:[%s1425 + $0x18] sm:$0xff]
      %v1430 = vld [vmem:[%s1425 + $0x20] sm:$0xff]
      %v1431 = vld [vmem:[%s1425 + $0x28] sm:$0xff]
      %v1432 = vld [vmem:[%s1425 + $0x30] sm:$0xff]
      %v1433 = vld [vmem:[%s1425 + $0x38] sm:$0xff]
      %v1434 = vld [vmem:[%s1425 + $0x40] sm:$0xff]
      %v1435 = vld [vmem:[%s1425 + $0x48] sm:$0xff]
      %v1436 = vld [vmem:[%s1425 + $0x50] sm:$0xff]
      %v1437 = vld [vmem:[%s1425 + $0x58] sm:$0xff]
      %v1438 = vld [vmem:[%s1425 + $0x60] sm:$0xff]
      %v1439 = vld [vmem:[%s1425 + $0x68] sm:$0xff]
      %v1440 = vld [vmem:[%s1425 + $0x70] sm:$0xff]
      %v1441 = vld [vmem:[%s1425 + $0x78] sm:$0xff]
      %v1442 = vld [vmem:[%s1425 + $0x80] sm:$0xff]
      %v1443 = vld [vmem:[%s1425 + $0x88] sm:$0xff]
      %v1444 = vld [vmem:[%s1425 + $0x90] sm:$0xff]
      %v1445 = vld [vmem:[%s1425 + $0x98] sm:$0xff]
      %v1446 = vld [vmem:[%s1425 + $0xa0] sm:$0xff]
      %v1447 = vld [vmem:[%s1425 + $0xa8] sm:$0xff]
      %v1448 = vld [vmem:[%s1425 + $0xb0] sm:$0xff]
      %v1449 = vld [vmem:[%s1425 + $0xb8] sm:$0xff]
      %v1450 = vld [vmem:[%s1425 + $0xc0] sm:$0xff]
      %v1451 = vld [vmem:[%s1425 + $0xc8] sm:$0xff]
      %v1452 = vld [vmem:[%s1425 + $0xd0] sm:$0xff]
      %v1453 = vld [vmem:[%s1425 + $0xd8] sm:$0xff]
      %v1454 = vld [vmem:[%s1425 + $0xe0] sm:$0xff]
      %v1455 = vld [vmem:[%s1425 + $0xe8] sm:$0xff]
      %v1456 = vld [vmem:[%s1425 + $0xf0] sm:$0xff]
      %v1457 = vld [vmem:[%s1425 + $0xf8] sm:$0xff]
      %v1458 = vld [vmem:[%s1425 + $0x100] sm:$0xff]
      %v1459 = vld [vmem:[%s1425 + $0x108] sm:$0xff]
      %v1460 = vld [vmem:[%s1425 + $0x110] sm:$0xff]
      %v1461 = vld [vmem:[%s1425 + $0x118] sm:$0xff]
      %v1462 = vld [vmem:[%s1425 + $0x120] sm:$0xff]
      %v1463 = vld [vmem:[%s1425 + $0x128] sm:$0xff]
      %v1464 = vld [vmem:[%s1425 + $0x130] sm:$0xff]
      %v1465 = vld [vmem:[%s1425 + $0x138] sm:$0xff]
      %v1466 = vld [vmem:[%s1425 + $0x140] sm:$0xff]
      %v1467 = vld [vmem:[%s1425 + $0x148] sm:$0xff]
      %v1468 = vld [vmem:[%s1425 + $0x150] sm:$0xff]
      %v1469 = vld [vmem:[%s1425 + $0x158] sm:$0xff]
      %v1470 = vld [vmem:[%s1425 + $0x160] sm:$0xff]
      %v1471 = vld [vmem:[%s1425 + $0x168] sm:$0xff]
      %v1472 = vld [vmem:[%s1425 + $0x170] sm:$0xff]
      %v1473 = vld [vmem:[%s1425 + $0x178] sm:$0xff]
      %v1474 = vld [vmem:[%s1425 + $0x180] sm:$0xff]
      %v1475 = vld [vmem:[%s1425 + $0x188] sm:$0xff]
      %v1476 = vld [vmem:[%s1425 + $0x190] sm:$0xff]
      %v1477 = vld [vmem:[%s1425 + $0x198] sm:$0xff]
      %v1478 = vld [vmem:[%s1425 + $0x1a0] sm:$0xff]
      %v1479 = vld [vmem:[%s1425 + $0x1a8] sm:$0xff]
      %v1480 = vld [vmem:[%s1425 + $0x1b0] sm:$0xff]
      %v1481 = vld [vmem:[%s1425 + $0x1b8] sm:$0xff]
      %v1482 = vld [vmem:[%s1425 + $0x1c0] sm:$0xff]
      %vm1487 = vcmask 1043456
      %v1488 = vrot.slane %v1421, 4
      %v1489 = vrot.slane %v331, 4
      %v1490 = vsel %vm1487, %v1488, %v1489
      %v1491 = vrot.slane %v1422, 4
      %v1492 = vrot.slane %v332, 4
      %v1493 = vsel %vm1487, %v1491, %v1492
      %v1494 = vrot.slane %v333, 4
      %v1495 = vsel %vm1487, %v1489, %v1494
      %v1496 = vrot.slane %v334, 4
      %v1497 = vsel %vm1487, %v1492, %v1496
      %v1498 = vrot.slane %v335, 4
      %v1499 = vsel %vm1487, %v1494, %v1498
      %v1500 = vrot.slane %v336, 4
      %v1501 = vsel %vm1487, %v1496, %v1500
      %v1502 = vrot.slane %v1423, 4
      %v1503 = vsel %vm1487, %v1498, %v1502
      %v1504 = vrot.slane %v1424, 4
      %v1505 = vsel %vm1487, %v1500, %v1504
      %v1510 = vsel %vm489, %v1493, 0
      %v1512 = vsel %vm489, %v1497, 0
      %v1514 = vsel %vm489, %v1501, 0
      %v1516 = vsel %vm489, %v1505, 0
      %1518 = vmatprep.subr.mxu0 %v1472
      %1519 = vmatpush1.msra.mxu0 %v1471
      %1520 = vmatprep.subr.mxu0 %v1469
      %1521 = vmatpush1.msra.mxu0 %v1468
      %1522 = vmatprep.subr.mxu0 %v1466
      %1523 = vmatpush1.msra.mxu0 %v1465
      %1524 = vmatprep.subr.mxu0 %v1463
      %1525 = vmatpush1.msra.mxu0 %v1462
      %1526 = vmatprep.subr.mxu0 %v1460
      %1527 = vmatpush1.msra.mxu0 %v1459
      %1528 = vmatprep.subr.mxu0 %v1457
      %1529 = vmatpush1.msra.mxu0 %v1456
      %1530 = vmatprep.subr.mxu0 %v1454
      %1531 = vmatpush1.msra.mxu0 %v1453
      %1532 = vmatprep.subr.mxu0 %v1451
      %1533 = vmatpush1.msra.mxu0 %v1450
      %1534 = vmatprep.subr.mxu0 %v1448
      %1535 = vmatpush1.msra.mxu0 %v1447
      %1536 = vmatprep.subr.mxu0 %v1445
      %1537 = vmatpush1.msra.mxu0 %v1444
      %1538 = vmatprep.subr.mxu0 %v1442
      %1539 = vmatpush1.msra.mxu0 %v1441
      %1540 = vmatprep.subr.mxu0 %v1439
      %1541 = vmatpush1.msra.mxu0 %v1438
      %1542 = vmatprep.subr.mxu0 %v1436
      %1543 = vmatpush1.msra.mxu0 %v1435
      %1544 = vmatprep.subr.mxu0 %v1433
      %1545 = vmatpush1.msra.mxu0 %v1432
      %1546 = vmatprep.subr.mxu0 %v1430
      %1547 = vmatpush1.msra.mxu0 %v1429
      %1548 = vmatprep.subr.mxu0 %v1427
      %1549 = vmatpush1.msra.mxu0 %v1426
      %1550 = vmatprep.subr.mxu0 0.0
      %1551 = vmatpush2.msra.mxu0 0.0
      %1552 = vmatprep.subr.mxu0 0.0
      %1553 = vmatpush2.msra.mxu0 0.0
      %1554 = vmatprep.subr.mxu0 0.0
      %1555 = vmatpush2.msra.mxu0 0.0
      %1556 = vmatprep.subr.mxu0 0.0
      %1557 = vmatpush2.msra.mxu0 0.0
      %1558 = vmatprep.subr.mxu0 0.0
      %1559 = vmatpush2.msra.mxu0 0.0
      %1560 = vmatprep.subr.mxu0 0.0
      %1561 = vmatpush2.msra.mxu0 0.0
      %1562 = vmatprep.subr.mxu0 0.0
      %1563 = vmatpush2.msra.mxu0 0.0
      %1564 = vmatprep.subr.mxu0 0.0
      %1565 = vmatpush2.msra.mxu0 0.0
      %1566 = vmatprep.subr.mxu0 0.0
      %1567 = vmatpush2.msra.mxu0 0.0
      %1568 = vmatprep.subr.mxu0 0.0
      %1569 = vmatpush2.msra.mxu0 0.0
      %1570 = vmatprep.subr.mxu0 0.0
      %1571 = vmatpush2.msra.mxu0 0.0
      %1572 = vmatprep.subr.mxu0 0.0
      %1573 = vmatpush2.msra.mxu0 0.0
      %1574 = vmatprep.subr.mxu0 0.0
      %1575 = vmatpush2.msra.mxu0 0.0
      %1576 = vmatprep.subr.mxu0 %v1481
      %1577 = vmatpush2.msra.mxu0 %v1480
      %1578 = vmatprep.subr.mxu0 %v1478
      %1579 = vmatpush2.msra.mxu0 %v1477
      %1580 = vmatprep.subr.mxu0 %v1475
      %1581 = vmatpush2.msra.mxu0 %v1474
      %1582 = vmatprep.mubr.f32.mxu0 %v1510
      %1583 = vmatmul.mubr.f32.gmra.mxu0 %v1490
      %v1584 = vpop.f32.mrf.mxu0
      %v1585 = vadd.f32 0.0, %v1584
      %v1586 = vpop.f32.mrf.mxu0
      %v1587 = vadd.f32 0.0, %v1586
      %1588 = vmatprep.mubr.f32.mxu0 %v1512
      %1589 = vmatmul.mubr.f32.gmra.mxu0 %v1495
      %v1590 = vpop.f32.mrf.mxu0
      %v1591 = vadd.f32 0.0, %v1590
      %v1592 = vpop.f32.mrf.mxu0
      %v1593 = vadd.f32 0.0, %v1592
      %1594 = vmatprep.mubr.f32.mxu0 %v1514
      %1595 = vmatmul.mubr.f32.gmra.mxu0 %v1499
      %v1596 = vpop.f32.mrf.mxu0
      %v1597 = vadd.f32 0.0, %v1596
      %v1598 = vpop.f32.mrf.mxu0
      %v1599 = vadd.f32 0.0, %v1598
      %1600 = vmatprep.mubr.f32.mxu0 %v1516
      %1601 = vmatmul.mubr.f32.gmra.mxu0 %v1503
      %v1602 = vpop.f32.mrf.mxu0
      %v1603 = vadd.f32 0.0, %v1602
      %v1604 = vpop.f32.mrf.mxu0
      %v1605 = vadd.f32 0.0, %v1604
      %1606 = vdwg.mxu0
      %1607 = vmatprep.subr.mxu0 0.0
      %1608 = vmatpush1.msra.mxu0 %v1473
      %1609 = vmatprep.subr.mxu0 0.0
      %1610 = vmatpush1.msra.mxu0 %v1470
      %1611 = vmatprep.subr.mxu0 0.0
      %1612 = vmatpush1.msra.mxu0 %v1467
      %1613 = vmatprep.subr.mxu0 0.0
      %1614 = vmatpush1.msra.mxu0 %v1464
      %1615 = vmatprep.subr.mxu0 0.0
      %1616 = vmatpush1.msra.mxu0 %v1461
      %1617 = vmatprep.subr.mxu0 0.0
      %1618 = vmatpush1.msra.mxu0 %v1458
      %1619 = vmatprep.subr.mxu0 0.0
      %1620 = vmatpush1.msra.mxu0 %v1455
      %1621 = vmatprep.subr.mxu0 0.0
      %1622 = vmatpush1.msra.mxu0 %v1452
      %1623 = vmatprep.subr.mxu0 0.0
      %1624 = vmatpush1.msra.mxu0 %v1449
      %1625 = vmatprep.subr.mxu0 0.0
      %1626 = vmatpush1.msra.mxu0 %v1446
      %1627 = vmatprep.subr.mxu0 0.0
      %1628 = vmatpush1.msra.mxu0 %v1443
      %1629 = vmatprep.subr.mxu0 0.0
      %1630 = vmatpush1.msra.mxu0 %v1440
      %1631 = vmatprep.subr.mxu0 0.0
      %1632 = vmatpush1.msra.mxu0 %v1437
      %1633 = vmatprep.subr.mxu0 0.0
      %1634 = vmatpush1.msra.mxu0 %v1434
      %1635 = vmatprep.subr.mxu0 0.0
      %1636 = vmatpush1.msra.mxu0 %v1431
      %1637 = vmatprep.subr.mxu0 0.0
      %1638 = vmatpush1.msra.mxu0 %v1428
      %1639 = vmatprep.subr.mxu0 0.0
      %1640 = vmatpush2.msra.mxu0 0.0
      %1641 = vmatprep.subr.mxu0 0.0
      %1642 = vmatpush2.msra.mxu0 0.0
      %1643 = vmatprep.subr.mxu0 0.0
      %1644 = vmatpush2.msra.mxu0 0.0
      %1645 = vmatprep.subr.mxu0 0.0
      %1646 = vmatpush2.msra.mxu0 0.0
      %1647 = vmatprep.subr.mxu0 0.0
      %1648 = vmatpush2.msra.mxu0 0.0
      %1649 = vmatprep.subr.mxu0 0.0
      %1650 = vmatpush2.msra.mxu0 0.0
      %1651 = vmatprep.subr.mxu0 0.0
      %1652 = vmatpush2.msra.mxu0 0.0
      %1653 = vmatprep.subr.mxu0 0.0
      %1654 = vmatpush2.msra.mxu0 0.0
      %1655 = vmatprep.subr.mxu0 0.0
      %1656 = vmatpush2.msra.mxu0 0.0
      %1657 = vmatprep.subr.mxu0 0.0
      %1658 = vmatpush2.msra.mxu0 0.0
      %1659 = vmatprep.subr.mxu0 0.0
      %1660 = vmatpush2.msra.mxu0 0.0
      %1661 = vmatprep.subr.mxu0 0.0
      %1662 = vmatpush2.msra.mxu0 0.0
      %1663 = vmatprep.subr.mxu0 0.0
      %1664 = vmatpush2.msra.mxu0 0.0
      %1665 = vmatprep.subr.mxu0 0.0
      %1666 = vmatpush2.msra.mxu0 %v1482
      %1667 = vmatprep.subr.mxu0 0.0
      %1668 = vmatpush2.msra.mxu0 %v1479
      %1669 = vmatprep.subr.mxu0 0.0
      %1670 = vmatpush2.msra.mxu0 %v1476
      %1671 = vmatprep.mubr.f32.mxu0 %v1510
      %1672 = vmatmul.mubr.f32.gmra.mxu0 %v1490
      %v1673 = vpop.f32.mrf.mxu0
      %v1674 = vadd.f32 0.0, %v1673
      %v1675 = vpop.f32.mrf.mxu0
      %1676 = vmatprep.mubr.f32.mxu0 %v1512
      %1677 = vmatmul.mubr.f32.gmra.mxu0 %v1495
      %v1678 = vpop.f32.mrf.mxu0
      %v1679 = vadd.f32 0.0, %v1678
      %v1680 = vpop.f32.mrf.mxu0
      %1681 = vmatprep.mubr.f32.mxu0 %v1514
      %1682 = vmatmul.mubr.f32.gmra.mxu0 %v1499
      %v1683 = vpop.f32.mrf.mxu0
      %v1684 = vadd.f32 0.0, %v1683
      %v1685 = vpop.f32.mrf.mxu0
      %1686 = vmatprep.mubr.f32.mxu0 %v1516
      %1687 = vmatmul.mubr.f32.gmra.mxu0 %v1503
      %v1688 = vpop.f32.mrf.mxu0
      %v1689 = vadd.f32 0.0, %v1688
      %v1690 = vpop.f32.mrf.mxu0
      %1691 = vdwg.mxu0
      %v1692 = vadd.f32 %v1409, %v1585
      %v1693 = vadd.f32 %v1410, %v1587
      %v1694 = vadd.f32 %v1411, %v1674
      %v1695 = vadd.f32 %v1412, %v1591
      %v1696 = vadd.f32 %v1413, %v1593
      %v1697 = vadd.f32 %v1414, %v1679
      %v1698 = vadd.f32 %v1415, %v1597
      %v1699 = vadd.f32 %v1416, %v1599
      %v1700 = vadd.f32 %v1417, %v1684
      %v1701 = vadd.f32 %v1418, %v1603
      %v1702 = vadd.f32 %v1419, %v1605
      %v1703 = vadd.f32 %v1420, %v1689
      %v1704 = vld [vmem:[%s325] sm:$0xe0]
      %v1705 = vld [vmem:[%s325 + $0x8] sm:$0xe0]
      %v1706 = vld [vmem:[%s325 + $0x40] sm:$0x1f]
      %v1707 = vld [vmem:[%s325 + $0x48] sm:$0x1f]
      %s1708 = scalar_lea.vmem %s1, 2280
      %v1709 = vld [vmem:[%s1708] sm:$0xff]
      %v1710 = vld [vmem:[%s1708 + $0x8] sm:$0xff]
      %v1711 = vld [vmem:[%s1708 + $0x10] sm:$0xff]
      %v1712 = vld [vmem:[%s1708 + $0x18] sm:$0xff]
      %v1713 = vld [vmem:[%s1708 + $0x20] sm:$0xff]
      %v1714 = vld [vmem:[%s1708 + $0x28] sm:$0xff]
      %v1715 = vld [vmem:[%s1708 + $0x30] sm:$0xff]
      %v1716 = vld [vmem:[%s1708 + $0x38] sm:$0xff]
      %v1717 = vld [vmem:[%s1708 + $0x40] sm:$0xff]
      %v1718 = vld [vmem:[%s1708 + $0x48] sm:$0xff]
      %v1719 = vld [vmem:[%s1708 + $0x50] sm:$0xff]
      %v1720 = vld [vmem:[%s1708 + $0x58] sm:$0xff]
      %v1721 = vld [vmem:[%s1708 + $0x60] sm:$0xff]
      %v1722 = vld [vmem:[%s1708 + $0x68] sm:$0xff]
      %v1723 = vld [vmem:[%s1708 + $0x70] sm:$0xff]
      %v1724 = vld [vmem:[%s1708 + $0x78] sm:$0xff]
      %v1725 = vld [vmem:[%s1708 + $0x80] sm:$0xff]
      %v1726 = vld [vmem:[%s1708 + $0x88] sm:$0xff]
      %v1727 = vld [vmem:[%s1708 + $0x90] sm:$0xff]
      %v1728 = vld [vmem:[%s1708 + $0x98] sm:$0xff]
      %v1729 = vld [vmem:[%s1708 + $0xa0] sm:$0xff]
      %v1730 = vld [vmem:[%s1708 + $0xa8] sm:$0xff]
      %v1731 = vld [vmem:[%s1708 + $0xb0] sm:$0xff]
      %v1732 = vld [vmem:[%s1708 + $0xb8] sm:$0xff]
      %v1733 = vld [vmem:[%s1708 + $0xc0] sm:$0xff]
      %v1734 = vld [vmem:[%s1708 + $0xc8] sm:$0xff]
      %v1735 = vld [vmem:[%s1708 + $0xd0] sm:$0xff]
      %v1736 = vld [vmem:[%s1708 + $0xd8] sm:$0xff]
      %v1737 = vld [vmem:[%s1708 + $0xe0] sm:$0xff]
      %v1738 = vld [vmem:[%s1708 + $0xe8] sm:$0xff]
      %v1739 = vld [vmem:[%s1708 + $0xf0] sm:$0xff]
      %v1740 = vld [vmem:[%s1708 + $0xf8] sm:$0xff]
      %v1741 = vld [vmem:[%s1708 + $0x100] sm:$0xff]
      %v1742 = vld [vmem:[%s1708 + $0x108] sm:$0xff]
      %v1743 = vld [vmem:[%s1708 + $0x110] sm:$0xff]
      %v1744 = vld [vmem:[%s1708 + $0x118] sm:$0xff]
      %v1745 = vld [vmem:[%s1708 + $0x120] sm:$0xff]
      %v1746 = vld [vmem:[%s1708 + $0x128] sm:$0xff]
      %v1747 = vld [vmem:[%s1708 + $0x130] sm:$0xff]
      %v1748 = vld [vmem:[%s1708 + $0x138] sm:$0xff]
      %v1749 = vld [vmem:[%s1708 + $0x140] sm:$0xff]
      %v1750 = vld [vmem:[%s1708 + $0x148] sm:$0xff]
      %v1751 = vld [vmem:[%s1708 + $0x150] sm:$0xff]
      %v1752 = vld [vmem:[%s1708 + $0x158] sm:$0xff]
      %v1753 = vld [vmem:[%s1708 + $0x160] sm:$0xff]
      %v1754 = vld [vmem:[%s1708 + $0x168] sm:$0xff]
      %v1755 = vld [vmem:[%s1708 + $0x170] sm:$0xff]
      %v1756 = vld [vmem:[%s1708 + $0x178] sm:$0xff]
      %v1757 = vld [vmem:[%s1708 + $0x180] sm:$0xff]
      %v1758 = vld [vmem:[%s1708 + $0x188] sm:$0xff]
      %v1759 = vld [vmem:[%s1708 + $0x190] sm:$0xff]
      %v1760 = vld [vmem:[%s1708 + $0x198] sm:$0xff]
      %v1761 = vld [vmem:[%s1708 + $0x1a0] sm:$0xff]
      %v1762 = vld [vmem:[%s1708 + $0x1a8] sm:$0xff]
      %v1763 = vld [vmem:[%s1708 + $0x1b0] sm:$0xff]
      %v1764 = vld [vmem:[%s1708 + $0x1b8] sm:$0xff]
      %v1765 = vld [vmem:[%s1708 + $0x1c0] sm:$0xff]
      %vm1770 = vcmask 1042432
      %v1771 = vrot.slane %v1704, 5
      %v1772 = vrot.slane %v331, 5
      %v1773 = vsel %vm1770, %v1771, %v1772
      %v1774 = vrot.slane %v1705, 5
      %v1775 = vrot.slane %v332, 5
      %v1776 = vsel %vm1770, %v1774, %v1775
      %v1777 = vrot.slane %v333, 5
      %v1778 = vsel %vm1770, %v1772, %v1777
      %v1779 = vrot.slane %v334, 5
      %v1780 = vsel %vm1770, %v1775, %v1779
      %v1781 = vrot.slane %v335, 5
      %v1782 = vsel %vm1770, %v1777, %v1781
      %v1783 = vrot.slane %v336, 5
      %v1784 = vsel %vm1770, %v1779, %v1783
      %v1785 = vrot.slane %v1706, 5
      %v1786 = vsel %vm1770, %v1781, %v1785
      %v1787 = vrot.slane %v1707, 5
      %v1788 = vsel %vm1770, %v1783, %v1787
      %v1793 = vsel %vm489, %v1776, 0
      %v1795 = vsel %vm489, %v1780, 0
      %v1797 = vsel %vm489, %v1784, 0
      %v1799 = vsel %vm489, %v1788, 0
      %1801 = vmatprep.subr.mxu0 %v1755
      %1802 = vmatpush1.msra.mxu0 %v1754
      %1803 = vmatprep.subr.mxu0 %v1752
      %1804 = vmatpush1.msra.mxu0 %v1751
      %1805 = vmatprep.subr.mxu0 %v1749
      %1806 = vmatpush1.msra.mxu0 %v1748
      %1807 = vmatprep.subr.mxu0 %v1746
      %1808 = vmatpush1.msra.mxu0 %v1745
      %1809 = vmatprep.subr.mxu0 %v1743
      %1810 = vmatpush1.msra.mxu0 %v1742
      %1811 = vmatprep.subr.mxu0 %v1740
      %1812 = vmatpush1.msra.mxu0 %v1739
      %1813 = vmatprep.subr.mxu0 %v1737
      %1814 = vmatpush1.msra.mxu0 %v1736
      %1815 = vmatprep.subr.mxu0 %v1734
      %1816 = vmatpush1.msra.mxu0 %v1733
      %1817 = vmatprep.subr.mxu0 %v1731
      %1818 = vmatpush1.msra.mxu0 %v1730
      %1819 = vmatprep.subr.mxu0 %v1728
      %1820 = vmatpush1.msra.mxu0 %v1727
      %1821 = vmatprep.subr.mxu0 %v1725
      %1822 = vmatpush1.msra.mxu0 %v1724
      %1823 = vmatprep.subr.mxu0 %v1722
      %1824 = vmatpush1.msra.mxu0 %v1721
      %1825 = vmatprep.subr.mxu0 %v1719
      %1826 = vmatpush1.msra.mxu0 %v1718
      %1827 = vmatprep.subr.mxu0 %v1716
      %1828 = vmatpush1.msra.mxu0 %v1715
      %1829 = vmatprep.subr.mxu0 %v1713
      %1830 = vmatpush1.msra.mxu0 %v1712
      %1831 = vmatprep.subr.mxu0 %v1710
      %1832 = vmatpush1.msra.mxu0 %v1709
      %1833 = vmatprep.subr.mxu0 0.0
      %1834 = vmatpush2.msra.mxu0 0.0
      %1835 = vmatprep.subr.mxu0 0.0
      %1836 = vmatpush2.msra.mxu0 0.0
      %1837 = vmatprep.subr.mxu0 0.0
      %1838 = vmatpush2.msra.mxu0 0.0
      %1839 = vmatprep.subr.mxu0 0.0
      %1840 = vmatpush2.msra.mxu0 0.0
      %1841 = vmatprep.subr.mxu0 0.0
      %1842 = vmatpush2.msra.mxu0 0.0
      %1843 = vmatprep.subr.mxu0 0.0
      %1844 = vmatpush2.msra.mxu0 0.0
      %1845 = vmatprep.subr.mxu0 0.0
      %1846 = vmatpush2.msra.mxu0 0.0
      %1847 = vmatprep.subr.mxu0 0.0
      %1848 = vmatpush2.msra.mxu0 0.0
      %1849 = vmatprep.subr.mxu0 0.0
      %1850 = vmatpush2.msra.mxu0 0.0
      %1851 = vmatprep.subr.mxu0 0.0
      %1852 = vmatpush2.msra.mxu0 0.0
      %1853 = vmatprep.subr.mxu0 0.0
      %1854 = vmatpush2.msra.mxu0 0.0
      %1855 = vmatprep.subr.mxu0 0.0
      %1856 = vmatpush2.msra.mxu0 0.0
      %1857 = vmatprep.subr.mxu0 0.0
      %1858 = vmatpush2.msra.mxu0 0.0
      %1859 = vmatprep.subr.mxu0 %v1764
      %1860 = vmatpush2.msra.mxu0 %v1763
      %1861 = vmatprep.subr.mxu0 %v1761
      %1862 = vmatpush2.msra.mxu0 %v1760
      %1863 = vmatprep.subr.mxu0 %v1758
      %1864 = vmatpush2.msra.mxu0 %v1757
      %1865 = vmatprep.mubr.f32.mxu0 %v1793
      %1866 = vmatmul.mubr.f32.gmra.mxu0 %v1773
      %v1867 = vpop.f32.mrf.mxu0
      %v1868 = vadd.f32 0.0, %v1867
      %v1869 = vpop.f32.mrf.mxu0
      %v1870 = vadd.f32 0.0, %v1869
      %1871 = vmatprep.mubr.f32.mxu0 %v1795
      %1872 = vmatmul.mubr.f32.gmra.mxu0 %v1778
      %v1873 = vpop.f32.mrf.mxu0
      %v1874 = vadd.f32 0.0, %v1873
      %v1875 = vpop.f32.mrf.mxu0
      %v1876 = vadd.f32 0.0, %v1875
      %1877 = vmatprep.mubr.f32.mxu0 %v1797
      %1878 = vmatmul.mubr.f32.gmra.mxu0 %v1782
      %v1879 = vpop.f32.mrf.mxu0
      %v1880 = vadd.f32 0.0, %v1879
      %v1881 = vpop.f32.mrf.mxu0
      %v1882 = vadd.f32 0.0, %v1881
      %1883 = vmatprep.mubr.f32.mxu0 %v1799
      %1884 = vmatmul.mubr.f32.gmra.mxu0 %v1786
      %v1885 = vpop.f32.mrf.mxu0
      %v1886 = vadd.f32 0.0, %v1885
      %v1887 = vpop.f32.mrf.mxu0
      %v1888 = vadd.f32 0.0, %v1887
      %1889 = vdwg.mxu0
      %1890 = vmatprep.subr.mxu0 0.0
      %1891 = vmatpush1.msra.mxu0 %v1756
      %1892 = vmatprep.subr.mxu0 0.0
      %1893 = vmatpush1.msra.mxu0 %v1753
      %1894 = vmatprep.subr.mxu0 0.0
      %1895 = vmatpush1.msra.mxu0 %v1750
      %1896 = vmatprep.subr.mxu0 0.0
      %1897 = vmatpush1.msra.mxu0 %v1747
      %1898 = vmatprep.subr.mxu0 0.0
      %1899 = vmatpush1.msra.mxu0 %v1744
      %1900 = vmatprep.subr.mxu0 0.0
      %1901 = vmatpush1.msra.mxu0 %v1741
      %1902 = vmatprep.subr.mxu0 0.0
      %1903 = vmatpush1.msra.mxu0 %v1738
      %1904 = vmatprep.subr.mxu0 0.0
      %1905 = vmatpush1.msra.mxu0 %v1735
      %1906 = vmatprep.subr.mxu0 0.0
      %1907 = vmatpush1.msra.mxu0 %v1732
      %1908 = vmatprep.subr.mxu0 0.0
      %1909 = vmatpush1.msra.mxu0 %v1729
      %1910 = vmatprep.subr.mxu0 0.0
      %1911 = vmatpush1.msra.mxu0 %v1726
      %1912 = vmatprep.subr.mxu0 0.0
      %1913 = vmatpush1.msra.mxu0 %v1723
      %1914 = vmatprep.subr.mxu0 0.0
      %1915 = vmatpush1.msra.mxu0 %v1720
      %1916 = vmatprep.subr.mxu0 0.0
      %1917 = vmatpush1.msra.mxu0 %v1717
      %1918 = vmatprep.subr.mxu0 0.0
      %1919 = vmatpush1.msra.mxu0 %v1714
      %1920 = vmatprep.subr.mxu0 0.0
      %1921 = vmatpush1.msra.mxu0 %v1711
      %1922 = vmatprep.subr.mxu0 0.0
      %1923 = vmatpush2.msra.mxu0 0.0
      %1924 = vmatprep.subr.mxu0 0.0
      %1925 = vmatpush2.msra.mxu0 0.0
      %1926 = vmatprep.subr.mxu0 0.0
      %1927 = vmatpush2.msra.mxu0 0.0
      %1928 = vmatprep.subr.mxu0 0.0
      %1929 = vmatpush2.msra.mxu0 0.0
      %1930 = vmatprep.subr.mxu0 0.0
      %1931 = vmatpush2.msra.mxu0 0.0
      %1932 = vmatprep.subr.mxu0 0.0
      %1933 = vmatpush2.msra.mxu0 0.0
      %1934 = vmatprep.subr.mxu0 0.0
      %1935 = vmatpush2.msra.mxu0 0.0
      %1936 = vmatprep.subr.mxu0 0.0
      %1937 = vmatpush2.msra.mxu0 0.0
      %1938 = vmatprep.subr.mxu0 0.0
      %1939 = vmatpush2.msra.mxu0 0.0
      %1940 = vmatprep.subr.mxu0 0.0
      %1941 = vmatpush2.msra.mxu0 0.0
      %1942 = vmatprep.subr.mxu0 0.0
      %1943 = vmatpush2.msra.mxu0 0.0
      %1944 = vmatprep.subr.mxu0 0.0
      %1945 = vmatpush2.msra.mxu0 0.0
      %1946 = vmatprep.subr.mxu0 0.0
      %1947 = vmatpush2.msra.mxu0 0.0
      %1948 = vmatprep.subr.mxu0 0.0
      %1949 = vmatpush2.msra.mxu0 %v1765
      %1950 = vmatprep.subr.mxu0 0.0
      %1951 = vmatpush2.msra.mxu0 %v1762
      %1952 = vmatprep.subr.mxu0 0.0
      %1953 = vmatpush2.msra.mxu0 %v1759
      %1954 = vmatprep.mubr.f32.mxu0 %v1793
      %1955 = vmatmul.mubr.f32.gmra.mxu0 %v1773
      %v1956 = vpop.f32.mrf.mxu0
      %v1957 = vadd.f32 0.0, %v1956
      %v1958 = vpop.f32.mrf.mxu0
      %1959 = vmatprep.mubr.f32.mxu0 %v1795
      %1960 = vmatmul.mubr.f32.gmra.mxu0 %v1778
      %v1961 = vpop.f32.mrf.mxu0
      %v1962 = vadd.f32 0.0, %v1961
      %v1963 = vpop.f32.mrf.mxu0
      %1964 = vmatprep.mubr.f32.mxu0 %v1797
      %1965 = vmatmul.mubr.f32.gmra.mxu0 %v1782
      %v1966 = vpop.f32.mrf.mxu0
      %v1967 = vadd.f32 0.0, %v1966
      %v1968 = vpop.f32.mrf.mxu0
      %1969 = vmatprep.mubr.f32.mxu0 %v1799
      %1970 = vmatmul.mubr.f32.gmra.mxu0 %v1786
      %v1971 = vpop.f32.mrf.mxu0
      %v1972 = vadd.f32 0.0, %v1971
      %v1973 = vpop.f32.mrf.mxu0
      %1974 = vdwg.mxu0
      %v1975 = vadd.f32 %v1692, %v1868
      %v1976 = vadd.f32 %v1693, %v1870
      %v1977 = vadd.f32 %v1694, %v1957
      %v1978 = vadd.f32 %v1695, %v1874
      %v1979 = vadd.f32 %v1696, %v1876
      %v1980 = vadd.f32 %v1697, %v1962
      %v1981 = vadd.f32 %v1698, %v1880
      %v1982 = vadd.f32 %v1699, %v1882
      %v1983 = vadd.f32 %v1700, %v1967
      %v1984 = vadd.f32 %v1701, %v1886
      %v1985 = vadd.f32 %v1702, %v1888
      %v1986 = vadd.f32 %v1703, %v1972
      %v1987 = vld [vmem:[%s325] sm:$0xc0]
      %v1988 = vld [vmem:[%s325 + $0x8] sm:$0xc0]
      %v1989 = vld [vmem:[%s325 + $0x40] sm:$0x3f]
      %v1990 = vld [vmem:[%s325 + $0x48] sm:$0x3f]
      %s1991 = scalar_lea.vmem %s1, 2736
      %v1992 = vld [vmem:[%s1991] sm:$0xff]
      %v1993 = vld [vmem:[%s1991 + $0x8] sm:$0xff]
      %v1994 = vld [vmem:[%s1991 + $0x10] sm:$0xff]
      %v1995 = vld [vmem:[%s1991 + $0x18] sm:$0xff]
      %v1996 = vld [vmem:[%s1991 + $0x20] sm:$0xff]
      %v1997 = vld [vmem:[%s1991 + $0x28] sm:$0xff]
      %v1998 = vld [vmem:[%s1991 + $0x30] sm:$0xff]
      %v1999 = vld [vmem:[%s1991 + $0x38] sm:$0xff]
      %v2000 = vld [vmem:[%s1991 + $0x40] sm:$0xff]
      %v2001 = vld [vmem:[%s1991 + $0x48] sm:$0xff]
      %v2002 = vld [vmem:[%s1991 + $0x50] sm:$0xff]
      %v2003 = vld [vmem:[%s1991 + $0x58] sm:$0xff]
      %v2004 = vld [vmem:[%s1991 + $0x60] sm:$0xff]
      %v2005 = vld [vmem:[%s1991 + $0x68] sm:$0xff]
      %v2006 = vld [vmem:[%s1991 + $0x70] sm:$0xff]
      %v2007 = vld [vmem:[%s1991 + $0x78] sm:$0xff]
      %v2008 = vld [vmem:[%s1991 + $0x80] sm:$0xff]
      %v2009 = vld [vmem:[%s1991 + $0x88] sm:$0xff]
      %v2010 = vld [vmem:[%s1991 + $0x90] sm:$0xff]
      %v2011 = vld [vmem:[%s1991 + $0x98] sm:$0xff]
      %v2012 = vld [vmem:[%s1991 + $0xa0] sm:$0xff]
      %v2013 = vld [vmem:[%s1991 + $0xa8] sm:$0xff]
      %v2014 = vld [vmem:[%s1991 + $0xb0] sm:$0xff]
      %v2015 = vld [vmem:[%s1991 + $0xb8] sm:$0xff]
      %v2016 = vld [vmem:[%s1991 + $0xc0] sm:$0xff]
      %v2017 = vld [vmem:[%s1991 + $0xc8] sm:$0xff]
      %v2018 = vld [vmem:[%s1991 + $0xd0] sm:$0xff]
      %v2019 = vld [vmem:[%s1991 + $0xd8] sm:$0xff]
      %v2020 = vld [vmem:[%s1991 + $0xe0] sm:$0xff]
      %v2021 = vld [vmem:[%s1991 + $0xe8] sm:$0xff]
      %v2022 = vld [vmem:[%s1991 + $0xf0] sm:$0xff]
      %v2023 = vld [vmem:[%s1991 + $0xf8] sm:$0xff]
      %v2024 = vld [vmem:[%s1991 + $0x100] sm:$0xff]
      %v2025 = vld [vmem:[%s1991 + $0x108] sm:$0xff]
      %v2026 = vld [vmem:[%s1991 + $0x110] sm:$0xff]
      %v2027 = vld [vmem:[%s1991 + $0x118] sm:$0xff]
      %v2028 = vld [vmem:[%s1991 + $0x120] sm:$0xff]
      %v2029 = vld [vmem:[%s1991 + $0x128] sm:$0xff]
      %v2030 = vld [vmem:[%s1991 + $0x130] sm:$0xff]
      %v2031 = vld [vmem:[%s1991 + $0x138] sm:$0xff]
      %v2032 = vld [vmem:[%s1991 + $0x140] sm:$0xff]
      %v2033 = vld [vmem:[%s1991 + $0x148] sm:$0xff]
      %v2034 = vld [vmem:[%s1991 + $0x150] sm:$0xff]
      %v2035 = vld [vmem:[%s1991 + $0x158] sm:$0xff]
      %v2036 = vld [vmem:[%s1991 + $0x160] sm:$0xff]
      %v2037 = vld [vmem:[%s1991 + $0x168] sm:$0xff]
      %v2038 = vld [vmem:[%s1991 + $0x170] sm:$0xff]
      %v2039 = vld [vmem:[%s1991 + $0x178] sm:$0xff]
      %v2040 = vld [vmem:[%s1991 + $0x180] sm:$0xff]
      %v2041 = vld [vmem:[%s1991 + $0x188] sm:$0xff]
      %v2042 = vld [vmem:[%s1991 + $0x190] sm:$0xff]
      %v2043 = vld [vmem:[%s1991 + $0x198] sm:$0xff]
      %v2044 = vld [vmem:[%s1991 + $0x1a0] sm:$0xff]
      %v2045 = vld [vmem:[%s1991 + $0x1a8] sm:$0xff]
      %v2046 = vld [vmem:[%s1991 + $0x1b0] sm:$0xff]
      %v2047 = vld [vmem:[%s1991 + $0x1b8] sm:$0xff]
      %v2048 = vld [vmem:[%s1991 + $0x1c0] sm:$0xff]
      %vm2053 = vcmask 1041408
      %v2054 = vrot.slane %v1987, 6
      %v2055 = vrot.slane %v331, 6
      %v2056 = vsel %vm2053, %v2054, %v2055
      %v2057 = vrot.slane %v1988, 6
      %v2058 = vrot.slane %v332, 6
      %v2059 = vsel %vm2053, %v2057, %v2058
      %v2060 = vrot.slane %v333, 6
      %v2061 = vsel %vm2053, %v2055, %v2060
      %v2062 = vrot.slane %v334, 6
      %v2063 = vsel %vm2053, %v2058, %v2062
      %v2064 = vrot.slane %v335, 6
      %v2065 = vsel %vm2053, %v2060, %v2064
      %v2066 = vrot.slane %v336, 6
      %v2067 = vsel %vm2053, %v2062, %v2066
      %v2068 = vrot.slane %v1989, 6
      %v2069 = vsel %vm2053, %v2064, %v2068
      %v2070 = vrot.slane %v1990, 6
      %v2071 = vsel %vm2053, %v2066, %v2070
      %v2076 = vsel %vm489, %v2059, 0
      %v2078 = vsel %vm489, %v2063, 0
      %v2080 = vsel %vm489, %v2067, 0
      %v2082 = vsel %vm489, %v2071, 0
      %2084 = vmatprep.subr.mxu0 %v2038
      %2085 = vmatpush1.msra.mxu0 %v2037
      %2086 = vmatprep.subr.mxu0 %v2035
      %2087 = vmatpush1.msra.mxu0 %v2034
      %2088 = vmatprep.subr.mxu0 %v2032
      %2089 = vmatpush1.msra.mxu0 %v2031
      %2090 = vmatprep.subr.mxu0 %v2029
      %2091 = vmatpush1.msra.mxu0 %v2028
      %2092 = vmatprep.subr.mxu0 %v2026
      %2093 = vmatpush1.msra.mxu0 %v2025
      %2094 = vmatprep.subr.mxu0 %v2023
      %2095 = vmatpush1.msra.mxu0 %v2022
      %2096 = vmatprep.subr.mxu0 %v2020
      %2097 = vmatpush1.msra.mxu0 %v2019
      %2098 = vmatprep.subr.mxu0 %v2017
      %2099 = vmatpush1.msra.mxu0 %v2016
      %2100 = vmatprep.subr.mxu0 %v2014
      %2101 = vmatpush1.msra.mxu0 %v2013
      %2102 = vmatprep.subr.mxu0 %v2011
      %2103 = vmatpush1.msra.mxu0 %v2010
      %2104 = vmatprep.subr.mxu0 %v2008
      %2105 = vmatpush1.msra.mxu0 %v2007
      %2106 = vmatprep.subr.mxu0 %v2005
      %2107 = vmatpush1.msra.mxu0 %v2004
      %2108 = vmatprep.subr.mxu0 %v2002
      %2109 = vmatpush1.msra.mxu0 %v2001
      %2110 = vmatprep.subr.mxu0 %v1999
      %2111 = vmatpush1.msra.mxu0 %v1998
      %2112 = vmatprep.subr.mxu0 %v1996
      %2113 = vmatpush1.msra.mxu0 %v1995
      %2114 = vmatprep.subr.mxu0 %v1993
      %2115 = vmatpush1.msra.mxu0 %v1992
      %2116 = vmatprep.subr.mxu0 0.0
      %2117 = vmatpush2.msra.mxu0 0.0
      %2118 = vmatprep.subr.mxu0 0.0
      %2119 = vmatpush2.msra.mxu0 0.0
      %2120 = vmatprep.subr.mxu0 0.0
      %2121 = vmatpush2.msra.mxu0 0.0
      %2122 = vmatprep.subr.mxu0 0.0
      %2123 = vmatpush2.msra.mxu0 0.0
      %2124 = vmatprep.subr.mxu0 0.0
      %2125 = vmatpush2.msra.mxu0 0.0
      %2126 = vmatprep.subr.mxu0 0.0
      %2127 = vmatpush2.msra.mxu0 0.0
      %2128 = vmatprep.subr.mxu0 0.0
      %2129 = vmatpush2.msra.mxu0 0.0
      %2130 = vmatprep.subr.mxu0 0.0
      %2131 = vmatpush2.msra.mxu0 0.0
      %2132 = vmatprep.subr.mxu0 0.0
      %2133 = vmatpush2.msra.mxu0 0.0
      %2134 = vmatprep.subr.mxu0 0.0
      %2135 = vmatpush2.msra.mxu0 0.0
      %2136 = vmatprep.subr.mxu0 0.0
      %2137 = vmatpush2.msra.mxu0 0.0
      %2138 = vmatprep.subr.mxu0 0.0
      %2139 = vmatpush2.msra.mxu0 0.0
      %2140 = vmatprep.subr.mxu0 0.0
      %2141 = vmatpush2.msra.mxu0 0.0
      %2142 = vmatprep.subr.mxu0 %v2047
      %2143 = vmatpush2.msra.mxu0 %v2046
      %2144 = vmatprep.subr.mxu0 %v2044
      %2145 = vmatpush2.msra.mxu0 %v2043
      %2146 = vmatprep.subr.mxu0 %v2041
      %2147 = vmatpush2.msra.mxu0 %v2040
      %2148 = vmatprep.mubr.f32.mxu0 %v2076
      %2149 = vmatmul.mubr.f32.gmra.mxu0 %v2056
      %v2150 = vpop.f32.mrf.mxu0
      %v2151 = vadd.f32 0.0, %v2150
      %v2152 = vpop.f32.mrf.mxu0
      %v2153 = vadd.f32 0.0, %v2152
      %2154 = vmatprep.mubr.f32.mxu0 %v2078
      %2155 = vmatmul.mubr.f32.gmra.mxu0 %v2061
      %v2156 = vpop.f32.mrf.mxu0
      %v2157 = vadd.f32 0.0, %v2156
      %v2158 = vpop.f32.mrf.mxu0
      %v2159 = vadd.f32 0.0, %v2158
      %2160 = vmatprep.mubr.f32.mxu0 %v2080
      %2161 = vmatmul.mubr.f32.gmra.mxu0 %v2065
      %v2162 = vpop.f32.mrf.mxu0
      %v2163 = vadd.f32 0.0, %v2162
      %v2164 = vpop.f32.mrf.mxu0
      %v2165 = vadd.f32 0.0, %v2164
      %2166 = vmatprep.mubr.f32.mxu0 %v2082
      %2167 = vmatmul.mubr.f32.gmra.mxu0 %v2069
      %v2168 = vpop.f32.mrf.mxu0
      %v2169 = vadd.f32 0.0, %v2168
      %v2170 = vpop.f32.mrf.mxu0
      %v2171 = vadd.f32 0.0, %v2170
      %2172 = vdwg.mxu0
      %2173 = vmatprep.subr.mxu0 0.0
      %2174 = vmatpush1.msra.mxu0 %v2039
      %2175 = vmatprep.subr.mxu0 0.0
      %2176 = vmatpush1.msra.mxu0 %v2036
      %2177 = vmatprep.subr.mxu0 0.0
      %2178 = vmatpush1.msra.mxu0 %v2033
      %2179 = vmatprep.subr.mxu0 0.0
      %2180 = vmatpush1.msra.mxu0 %v2030
      %2181 = vmatprep.subr.mxu0 0.0
      %2182 = vmatpush1.msra.mxu0 %v2027
      %2183 = vmatprep.subr.mxu0 0.0
      %2184 = vmatpush1.msra.mxu0 %v2024
      %2185 = vmatprep.subr.mxu0 0.0
      %2186 = vmatpush1.msra.mxu0 %v2021
      %2187 = vmatprep.subr.mxu0 0.0
      %2188 = vmatpush1.msra.mxu0 %v2018
      %2189 = vmatprep.subr.mxu0 0.0
      %2190 = vmatpush1.msra.mxu0 %v2015
      %2191 = vmatprep.subr.mxu0 0.0
      %2192 = vmatpush1.msra.mxu0 %v2012
      %2193 = vmatprep.subr.mxu0 0.0
      %2194 = vmatpush1.msra.mxu0 %v2009
      %2195 = vmatprep.subr.mxu0 0.0
      %2196 = vmatpush1.msra.mxu0 %v2006
      %2197 = vmatprep.subr.mxu0 0.0
      %2198 = vmatpush1.msra.mxu0 %v2003
      %2199 = vmatprep.subr.mxu0 0.0
      %2200 = vmatpush1.msra.mxu0 %v2000
      %2201 = vmatprep.subr.mxu0 0.0
      %2202 = vmatpush1.msra.mxu0 %v1997
      %2203 = vmatprep.subr.mxu0 0.0
      %2204 = vmatpush1.msra.mxu0 %v1994
      %2205 = vmatprep.subr.mxu0 0.0
      %2206 = vmatpush2.msra.mxu0 0.0
      %2207 = vmatprep.subr.mxu0 0.0
      %2208 = vmatpush2.msra.mxu0 0.0
      %2209 = vmatprep.subr.mxu0 0.0
      %2210 = vmatpush2.msra.mxu0 0.0
      %2211 = vmatprep.subr.mxu0 0.0
      %2212 = vmatpush2.msra.mxu0 0.0
      %2213 = vmatprep.subr.mxu0 0.0
      %2214 = vmatpush2.msra.mxu0 0.0
      %2215 = vmatprep.subr.mxu0 0.0
      %2216 = vmatpush2.msra.mxu0 0.0
      %2217 = vmatprep.subr.mxu0 0.0
      %2218 = vmatpush2.msra.mxu0 0.0
      %2219 = vmatprep.subr.mxu0 0.0
      %2220 = vmatpush2.msra.mxu0 0.0
      %2221 = vmatprep.subr.mxu0 0.0
      %2222 = vmatpush2.msra.mxu0 0.0
      %2223 = vmatprep.subr.mxu0 0.0
      %2224 = vmatpush2.msra.mxu0 0.0
      %2225 = vmatprep.subr.mxu0 0.0
      %2226 = vmatpush2.msra.mxu0 0.0
      %2227 = vmatprep.subr.mxu0 0.0
      %2228 = vmatpush2.msra.mxu0 0.0
      %2229 = vmatprep.subr.mxu0 0.0
      %2230 = vmatpush2.msra.mxu0 0.0
      %2231 = vmatprep.subr.mxu0 0.0
      %2232 = vmatpush2.msra.mxu0 %v2048
      %2233 = vmatprep.subr.mxu0 0.0
      %2234 = vmatpush2.msra.mxu0 %v2045
      %2235 = vmatprep.subr.mxu0 0.0
      %2236 = vmatpush2.msra.mxu0 %v2042
      %2237 = vmatprep.mubr.f32.mxu0 %v2076
      %2238 = vmatmul.mubr.f32.gmra.mxu0 %v2056
      %v2239 = vpop.f32.mrf.mxu0
      %v2240 = vadd.f32 0.0, %v2239
      %v2241 = vpop.f32.mrf.mxu0
      %2242 = vmatprep.mubr.f32.mxu0 %v2078
      %2243 = vmatmul.mubr.f32.gmra.mxu0 %v2061
      %v2244 = vpop.f32.mrf.mxu0
      %v2245 = vadd.f32 0.0, %v2244
      %v2246 = vpop.f32.mrf.mxu0
      %2247 = vmatprep.mubr.f32.mxu0 %v2080
      %2248 = vmatmul.mubr.f32.gmra.mxu0 %v2065
      %v2249 = vpop.f32.mrf.mxu0
      %v2250 = vadd.f32 0.0, %v2249
      %v2251 = vpop.f32.mrf.mxu0
      %2252 = vmatprep.mubr.f32.mxu0 %v2082
      %2253 = vmatmul.mubr.f32.gmra.mxu0 %v2069
      %v2254 = vpop.f32.mrf.mxu0
      %v2255 = vadd.f32 0.0, %v2254
      %v2256 = vpop.f32.mrf.mxu0
      %2257 = vdwg.mxu0
      %v2258 = vadd.f32 %v1975, %v2151
      %v2259 = vadd.f32 %v1976, %v2153
      %v2260 = vadd.f32 %v1977, %v2240
      %v2261 = vadd.f32 %v1978, %v2157
      %v2262 = vadd.f32 %v1979, %v2159
      %v2263 = vadd.f32 %v1980, %v2245
      %v2264 = vadd.f32 %v1981, %v2163
      %v2265 = vadd.f32 %v1982, %v2165
      %v2266 = vadd.f32 %v1983, %v2250
      %v2267 = vadd.f32 %v1984, %v2169
      %v2268 = vadd.f32 %v1985, %v2171
      %v2269 = vadd.f32 %v1986, %v2255
      %v2270 = vld [vmem:[%s2] sm:$0x7]
      %v2272 = vlaneseq
      %v2273 = vshrl.u32 %v2272, 7
      %v2274 = vsub.s32 0, %v2273
      %v2275 = vrot.slane %v2270, %v2274
      %v2276 = vlaneseq
      %v2277 = vshrl.u32 %v2276, 7
      %v2278 = vsub.s32 1, %v2277
      %v2279 = vrot.slane %v2270, %v2278
      %v2280 = vlaneseq
      %v2281 = vshrl.u32 %v2280, 7
      %v2282 = vsub.s32 2, %v2281
      %v2283 = vrot.slane %v2270, %v2282
      %v2287 = vadd.f32 %v2258, %v2275
      %v2288 = vadd.f32 %v2259, %v2279
      %v2289 = vadd.f32 %v2260, %v2283
      %v2290 = vadd.f32 %v2261, %v2275
      %v2291 = vadd.f32 %v2262, %v2279
      %v2292 = vadd.f32 %v2263, %v2283
      %v2293 = vadd.f32 %v2264, %v2275
      %v2294 = vadd.f32 %v2265, %v2279
      %v2295 = vadd.f32 %v2266, %v2283
      %v2296 = vadd.f32 %v2267, %v2275
      %v2297 = vadd.f32 %v2268, %v2279
      %v2298 = vadd.f32 %v2269, %v2283
      %v2299 = vmax.f32 %v2287, 0.0
      %v2300 = vmax.f32 %v2288, 0.0
      %v2301 = vmax.f32 %v2289, 0.0
      %v2302 = vmax.f32 %v2290, 0.0
      %v2303 = vmax.f32 %v2291, 0.0
      %v2304 = vmax.f32 %v2292, 0.0
      %v2305 = vmax.f32 %v2293, 0.0
      %v2306 = vmax.f32 %v2294, 0.0
      %v2307 = vmax.f32 %v2295, 0.0
      %v2308 = vmax.f32 %v2296, 0.0
      %v2309 = vmax.f32 %v2297, 0.0
      %v2310 = vmax.f32 %v2298, 0.0
      %v2311 = vld [vmem:[%s3] sm:$0xff]
      %v2312 = vld [vmem:[%s3 + $0x8] sm:$0xff]
      %v2313 = vld [vmem:[%s3 + $0x10] sm:$0xff]
      %v2314 = vld [vmem:[%s3 + $0x18] sm:$0xff]
      %v2315 = vld [vmem:[%s3 + $0x20] sm:$0xff]
      %v2316 = vld [vmem:[%s3 + $0x28] sm:$0xff]
      %v2317 = vld [vmem:[%s3 + $0x30] sm:$0xff]
      %v2318 = vld [vmem:[%s3 + $0x38] sm:$0xff]
      %v2319 = vld [vmem:[%s3 + $0x40] sm:$0xff]
      %v2320 = vld [vmem:[%s3 + $0x48] sm:$0xff]
      %v2321 = vld [vmem:[%s3 + $0x50] sm:$0xff]
      %v2322 = vld [vmem:[%s3 + $0x58] sm:$0xff]
      %v2323 = vld [vmem:[%s3 + $0x60] sm:$0xff]
      %v2324 = vld [vmem:[%s3 + $0x68] sm:$0xff]
      %v2325 = vld [vmem:[%s3 + $0x70] sm:$0xff]
      %v2326 = vld [vmem:[%s3 + $0x78] sm:$0xff]
      %v2327 = vld [vmem:[%s3 + $0x80] sm:$0xff]
      %v2328 = vld [vmem:[%s3 + $0x88] sm:$0xff]
      %v2329 = vld [vmem:[%s3 + $0x90] sm:$0xff]
      %v2330 = vld [vmem:[%s3 + $0x98] sm:$0xff]
      %v2331 = vld [vmem:[%s3 + $0xa0] sm:$0xff]
      %v2332 = vld [vmem:[%s3 + $0xa8] sm:$0xff]
      %v2333 = vld [vmem:[%s3 + $0xb0] sm:$0xff]
      %v2334 = vld [vmem:[%s3 + $0xb8] sm:$0xff]
      %v2335 = vld [vmem:[%s3 + $0xc0] sm:$0xff]
      %v2336 = vld [vmem:[%s3 + $0xc8] sm:$0xff]
      %v2337 = vld [vmem:[%s3 + $0xd0] sm:$0xff]
      %v2338 = vld [vmem:[%s3 + $0xd8] sm:$0xff]
      %v2339 = vld [vmem:[%s3 + $0xe0] sm:$0xff]
      %v2340 = vld [vmem:[%s3 + $0xe8] sm:$0xff]
      %v2341 = vld [vmem:[%s3 + $0xf0] sm:$0xff]
      %v2342 = vld [vmem:[%s3 + $0xf8] sm:$0xff]
      %v2343 = vld [vmem:[%s3 + $0x100] sm:$0xff]
      %v2344 = vld [vmem:[%s3 + $0x108] sm:$0xff]
      %v2345 = vld [vmem:[%s3 + $0x110] sm:$0xff]
      %v2346 = vld [vmem:[%s3 + $0x118] sm:$0xff]
      %v2347 = vld [vmem:[%s3 + $0x120] sm:$0xff]
      %v2348 = vld [vmem:[%s3 + $0x128] sm:$0xff]
      %v2349 = vld [vmem:[%s3 + $0x130] sm:$0xff]
      %v2350 = vld [vmem:[%s3 + $0x138] sm:$0xff]
      %v2351 = vld [vmem:[%s3 + $0x140] sm:$0xff]
      %v2352 = vld [vmem:[%s3 + $0x148] sm:$0xff]
      %v2353 = vld [vmem:[%s3 + $0x150] sm:$0xff]
      %v2354 = vld [vmem:[%s3 + $0x158] sm:$0xff]
      %v2355 = vld [vmem:[%s3 + $0x160] sm:$0xff]
      %v2356 = vld [vmem:[%s3 + $0x168] sm:$0xff]
      %v2357 = vld [vmem:[%s3 + $0x170] sm:$0xff]
      %v2358 = vld [vmem:[%s3 + $0x178] sm:$0xff]
      %v2359 = vld [vmem:[%s3 + $0x180] sm:$0xff]
      %v2360 = vld [vmem:[%s3 + $0x188] sm:$0xff]
      %v2361 = vld [vmem:[%s3 + $0x190] sm:$0xff]
      %v2362 = vld [vmem:[%s3 + $0x198] sm:$0xff]
      %v2363 = vld [vmem:[%s3 + $0x1a0] sm:$0xff]
      %v2364 = vld [vmem:[%s3 + $0x1a8] sm:$0xff]
      %v2365 = vld [vmem:[%s3 + $0x1b0] sm:$0xff]
      %v2366 = vld [vmem:[%s3 + $0x1b8] sm:$0xff]
      %v2367 = vld [vmem:[%s3 + $0x1c0] sm:$0xff]
      %v2368 = vld [vmem:[%s3 + $0x1c8] sm:$0xff]
      %v2369 = vld [vmem:[%s3 + $0x1d0] sm:$0xff]
      %v2370 = vld [vmem:[%s3 + $0x1d8] sm:$0xff]
      %v2371 = vld [vmem:[%s3 + $0x1e0] sm:$0xff]
      %v2372 = vld [vmem:[%s3 + $0x1e8] sm:$0xff]
      %v2373 = vld [vmem:[%s3 + $0x1f0] sm:$0xff]
      %v2374 = vld [vmem:[%s3 + $0x1f8] sm:$0xff]
      %v2375 = vld [vmem:[%s3 + $0x200] sm:$0xff]
      %v2376 = vld [vmem:[%s3 + $0x208] sm:$0xff]
      %v2377 = vld [vmem:[%s3 + $0x210] sm:$0xff]
      %v2378 = vld [vmem:[%s3 + $0x218] sm:$0xff]
      %v2379 = vld [vmem:[%s3 + $0x220] sm:$0xff]
      %v2380 = vld [vmem:[%s3 + $0x228] sm:$0xff]
      %v2381 = vld [vmem:[%s3 + $0x230] sm:$0xff]
      %v2382 = vld [vmem:[%s3 + $0x238] sm:$0xff]
      %v2383 = vld [vmem:[%s3 + $0x240] sm:$0xff]
      %v2384 = vld [vmem:[%s3 + $0x248] sm:$0xff]
      %v2385 = vld [vmem:[%s3 + $0x250] sm:$0xff]
      %v2386 = vld [vmem:[%s3 + $0x258] sm:$0xff]
      %v2387 = vld [vmem:[%s3 + $0x260] sm:$0xff]
      %v2388 = vld [vmem:[%s3 + $0x268] sm:$0xff]
      %v2389 = vld [vmem:[%s3 + $0x270] sm:$0xff]
      %v2390 = vld [vmem:[%s3 + $0x278] sm:$0xff]
      %s2391 = scalar_lea.vmem %s3, 640
      %v2392 = vld [vmem:[%s2391] sm:$0xff]
      %v2393 = vld [vmem:[%s2391 + $0x8] sm:$0xff]
      %v2394 = vld [vmem:[%s2391 + $0x10] sm:$0xff]
      %v2395 = vld [vmem:[%s2391 + $0x18] sm:$0xff]
      %v2396 = vld [vmem:[%s2391 + $0x20] sm:$0xff]
      %v2397 = vld [vmem:[%s2391 + $0x28] sm:$0xff]
      %v2398 = vld [vmem:[%s2391 + $0x30] sm:$0xff]
      %v2399 = vld [vmem:[%s2391 + $0x38] sm:$0xff]
      %v2400 = vld [vmem:[%s2391 + $0x40] sm:$0xff]
      %v2401 = vld [vmem:[%s2391 + $0x48] sm:$0xff]
      %v2402 = vld [vmem:[%s2391 + $0x50] sm:$0xff]
      %v2403 = vld [vmem:[%s2391 + $0x58] sm:$0xff]
      %v2404 = vld [vmem:[%s2391 + $0x60] sm:$0xff]
      %v2405 = vld [vmem:[%s2391 + $0x68] sm:$0xff]
      %v2406 = vld [vmem:[%s2391 + $0x70] sm:$0xff]
      %v2407 = vld [vmem:[%s2391 + $0x78] sm:$0xff]
      %v2408 = vld [vmem:[%s2391 + $0x80] sm:$0xff]
      %v2409 = vld [vmem:[%s2391 + $0x88] sm:$0xff]
      %v2410 = vld [vmem:[%s2391 + $0x90] sm:$0xff]
      %v2411 = vld [vmem:[%s2391 + $0x98] sm:$0xff]
      %v2412 = vld [vmem:[%s2391 + $0xa0] sm:$0xff]
      %v2413 = vld [vmem:[%s2391 + $0xa8] sm:$0xff]
      %v2414 = vld [vmem:[%s2391 + $0xb0] sm:$0xff]
      %v2415 = vld [vmem:[%s2391 + $0xb8] sm:$0xff]
      %v2416 = vld [vmem:[%s2391 + $0xc0] sm:$0xff]
      %v2417 = vld [vmem:[%s2391 + $0xc8] sm:$0xff]
      %v2418 = vld [vmem:[%s2391 + $0xd0] sm:$0xff]
      %v2419 = vld [vmem:[%s2391 + $0xd8] sm:$0xff]
      %v2420 = vld [vmem:[%s2391 + $0xe0] sm:$0xff]
      %v2421 = vld [vmem:[%s2391 + $0xe8] sm:$0xff]
      %v2422 = vld [vmem:[%s2391 + $0xf0] sm:$0xff]
      %v2423 = vld [vmem:[%s2391 + $0xf8] sm:$0xff]
      %v2424 = vld [vmem:[%s2391 + $0x100] sm:$0xff]
      %v2425 = vld [vmem:[%s2391 + $0x108] sm:$0xff]
      %v2426 = vld [vmem:[%s2391 + $0x110] sm:$0xff]
      %v2427 = vld [vmem:[%s2391 + $0x118] sm:$0xff]
      %v2428 = vld [vmem:[%s2391 + $0x120] sm:$0xff]
      %v2429 = vld [vmem:[%s2391 + $0x128] sm:$0xff]
      %v2430 = vld [vmem:[%s2391 + $0x130] sm:$0xff]
      %v2431 = vld [vmem:[%s2391 + $0x138] sm:$0xff]
      %v2432 = vld [vmem:[%s2391 + $0x140] sm:$0xff]
      %v2433 = vld [vmem:[%s2391 + $0x148] sm:$0xff]
      %v2434 = vld [vmem:[%s2391 + $0x150] sm:$0xff]
      %v2435 = vld [vmem:[%s2391 + $0x158] sm:$0xff]
      %v2436 = vld [vmem:[%s2391 + $0x160] sm:$0xff]
      %v2437 = vld [vmem:[%s2391 + $0x168] sm:$0xff]
      %v2438 = vld [vmem:[%s2391 + $0x170] sm:$0xff]
      %v2439 = vld [vmem:[%s2391 + $0x178] sm:$0xff]
      %v2440 = vld [vmem:[%s2391 + $0x180] sm:$0xff]
      %v2441 = vld [vmem:[%s2391 + $0x188] sm:$0xff]
      %v2442 = vld [vmem:[%s2391 + $0x190] sm:$0xff]
      %v2443 = vld [vmem:[%s2391 + $0x198] sm:$0xff]
      %v2444 = vld [vmem:[%s2391 + $0x1a0] sm:$0xff]
      %v2445 = vld [vmem:[%s2391 + $0x1a8] sm:$0xff]
      %v2446 = vld [vmem:[%s2391 + $0x1b0] sm:$0xff]
      %v2447 = vld [vmem:[%s2391 + $0x1b8] sm:$0xff]
      %v2448 = vld [vmem:[%s2391 + $0x1c0] sm:$0xff]
      %v2449 = vld [vmem:[%s2391 + $0x1c8] sm:$0xff]
      %v2450 = vld [vmem:[%s2391 + $0x1d0] sm:$0xff]
      %v2451 = vld [vmem:[%s2391 + $0x1d8] sm:$0xff]
      %v2452 = vld [vmem:[%s2391 + $0x1e0] sm:$0xff]
      %v2453 = vld [vmem:[%s2391 + $0x1e8] sm:$0xff]
      %v2454 = vld [vmem:[%s2391 + $0x1f0] sm:$0xff]
      %v2455 = vld [vmem:[%s2391 + $0x1f8] sm:$0xff]
      %v2456 = vld [vmem:[%s2391 + $0x200] sm:$0xff]
      %v2457 = vld [vmem:[%s2391 + $0x208] sm:$0xff]
      %v2458 = vld [vmem:[%s2391 + $0x210] sm:$0xff]
      %v2459 = vld [vmem:[%s2391 + $0x218] sm:$0xff]
      %v2460 = vld [vmem:[%s2391 + $0x220] sm:$0xff]
      %v2461 = vld [vmem:[%s2391 + $0x228] sm:$0xff]
      %v2462 = vld [vmem:[%s2391 + $0x230] sm:$0xff]
      %v2463 = vld [vmem:[%s2391 + $0x238] sm:$0xff]
      %v2464 = vld [vmem:[%s2391 + $0x240] sm:$0xff]
      %v2465 = vld [vmem:[%s2391 + $0x248] sm:$0xff]
      %v2466 = vld [vmem:[%s2391 + $0x250] sm:$0xff]
      %v2467 = vld [vmem:[%s2391 + $0x258] sm:$0xff]
      %v2468 = vld [vmem:[%s2391 + $0x260] sm:$0xff]
      %v2469 = vld [vmem:[%s2391 + $0x268] sm:$0xff]
      %v2470 = vld [vmem:[%s2391 + $0x270] sm:$0xff]
      %v2471 = vld [vmem:[%s2391 + $0x278] sm:$0xff]
      %v2484 = vrot.slane %v2299, 1
      %v2485 = vrot.slane %v2302, 1
      %v2486 = vsel %vm466, %v2484, %v2485
      %v2487 = vrot.slane %v2300, 1
      %v2488 = vrot.slane %v2303, 1
      %v2489 = vsel %vm466, %v2487, %v2488
      %v2490 = vrot.slane %v2301, 1
      %v2491 = vrot.slane %v2304, 1
      %v2492 = vsel %vm466, %v2490, %v2491
      %v2493 = vrot.slane %v2305, 1
      %v2494 = vsel %vm466, %v2485, %v2493
      %v2495 = vrot.slane %v2306, 1
      %v2496 = vsel %vm466, %v2488, %v2495
      %v2497 = vrot.slane %v2307, 1
      %v2498 = vsel %vm466, %v2491, %v2497
      %v2499 = vrot.slane %v2308, 1
      %v2500 = vsel %vm466, %v2493, %v2499
      %v2501 = vrot.slane %v2309, 1
      %v2502 = vsel %vm466, %v2495, %v2501
      %v2503 = vrot.slane %v2310, 1
      %v2504 = vsel %vm466, %v2497, %v2503
      %vm2513 = vcmask 523264
      %v2514 = vsel %vm2513, %v2492, 0
      %v2516 = vsel %vm2513, %v2498, 0
      %v2518 = vsel %vm2513, %v2504, 0
      %v2520 = vsel %vm2513, %v2503, 0
      %2522 = vmatprep.subr.mxu0 %v2423
      %2523 = vmatpush1.msra.mxu0 %v2422
      %2524 = vmatprep.subr.mxu0 %v2421
      %2525 = vmatpush1.msra.mxu0 %v2420
      %2526 = vmatprep.subr.mxu0 %v2419
      %2527 = vmatpush1.msra.mxu0 %v2418
      %2528 = vmatprep.subr.mxu0 %v2417
      %2529 = vmatpush1.msra.mxu0 %v2416
      %2530 = vmatprep.subr.mxu0 %v2415
      %2531 = vmatpush1.msra.mxu0 %v2414
      %2532 = vmatprep.subr.mxu0 %v2413
      %2533 = vmatpush1.msra.mxu0 %v2412
      %2534 = vmatprep.subr.mxu0 %v2411
      %2535 = vmatpush1.msra.mxu0 %v2410
      %2536 = vmatprep.subr.mxu0 %v2409
      %2537 = vmatpush1.msra.mxu0 %v2408
      %2538 = vmatprep.subr.mxu0 %v2407
      %2539 = vmatpush1.msra.mxu0 %v2406
      %2540 = vmatprep.subr.mxu0 %v2405
      %2541 = vmatpush1.msra.mxu0 %v2404
      %2542 = vmatprep.subr.mxu0 %v2403
      %2543 = vmatpush1.msra.mxu0 %v2402
      %2544 = vmatprep.subr.mxu0 %v2401
      %2545 = vmatpush1.msra.mxu0 %v2400
      %2546 = vmatprep.subr.mxu0 %v2399
      %2547 = vmatpush1.msra.mxu0 %v2398
      %2548 = vmatprep.subr.mxu0 %v2397
      %2549 = vmatpush1.msra.mxu0 %v2396
      %2550 = vmatprep.subr.mxu0 %v2395
      %2551 = vmatpush1.msra.mxu0 %v2394
      %2552 = vmatprep.subr.mxu0 %v2393
      %2553 = vmatpush1.msra.mxu0 %v2392
      %2554 = vmatprep.subr.mxu0 %v2455
      %2555 = vmatpush2.msra.mxu0 %v2454
      %2556 = vmatprep.subr.mxu0 %v2453
      %2557 = vmatpush2.msra.mxu0 %v2452
      %2558 = vmatprep.subr.mxu0 %v2451
      %2559 = vmatpush2.msra.mxu0 %v2450
      %2560 = vmatprep.subr.mxu0 %v2449
      %2561 = vmatpush2.msra.mxu0 %v2448
      %2562 = vmatprep.subr.mxu0 %v2447
      %2563 = vmatpush2.msra.mxu0 %v2446
      %2564 = vmatprep.subr.mxu0 %v2445
      %2565 = vmatpush2.msra.mxu0 %v2444
      %2566 = vmatprep.subr.mxu0 %v2443
      %2567 = vmatpush2.msra.mxu0 %v2442
      %2568 = vmatprep.subr.mxu0 %v2441
      %2569 = vmatpush2.msra.mxu0 %v2440
      %2570 = vmatprep.subr.mxu0 %v2439
      %2571 = vmatpush2.msra.mxu0 %v2438
      %2572 = vmatprep.subr.mxu0 %v2437
      %2573 = vmatpush2.msra.mxu0 %v2436
      %2574 = vmatprep.subr.mxu0 %v2435
      %2575 = vmatpush2.msra.mxu0 %v2434
      %2576 = vmatprep.subr.mxu0 %v2433
      %2577 = vmatpush2.msra.mxu0 %v2432
      %2578 = vmatprep.subr.mxu0 %v2431
      %2579 = vmatpush2.msra.mxu0 %v2430
      %2580 = vmatprep.subr.mxu0 %v2429
      %2581 = vmatpush2.msra.mxu0 %v2428
      %2582 = vmatprep.subr.mxu0 %v2427
      %2583 = vmatpush2.msra.mxu0 %v2426
      %2584 = vmatprep.subr.mxu0 %v2425
      %2585 = vmatpush2.msra.mxu0 %v2424
      %2586 = vmatprep.mubr.f32.mxu0 %v2489
      %2587 = vmatmul.mubr.f32.gmra.mxu0 %v2486
      %v2588 = vpop.f32.mrf.mxu0
      %v2589 = vadd.f32 0.0, %v2588
      %v2590 = vpop.f32.mrf.mxu0
      %v2591 = vadd.f32 0.0, %v2590
      %2592 = vmatprep.mubr.f32.mxu0 %v2496
      %2593 = vmatmul.mubr.f32.gmra.mxu0 %v2494
      %v2594 = vpop.f32.mrf.mxu0
      %v2595 = vadd.f32 0.0, %v2594
      %v2596 = vpop.f32.mrf.mxu0
      %v2597 = vadd.f32 0.0, %v2596
      %2598 = vmatprep.mubr.f32.mxu0 %v2502
      %2599 = vmatmul.mubr.f32.gmra.mxu0 %v2500
      %v2600 = vpop.f32.mrf.mxu0
      %v2601 = vadd.f32 0.0, %v2600
      %v2602 = vpop.f32.mrf.mxu0
      %v2603 = vadd.f32 0.0, %v2602
      %2604 = vmatprep.mubr.f32.mxu0 %v2501
      %2605 = vmatmul.mubr.f32.gmra.mxu0 %v2499
      %v2606 = vpop.f32.mrf.mxu0
      %v2607 = vadd.f32 0.0, %v2606
      %v2608 = vpop.f32.mrf.mxu0
      %v2609 = vadd.f32 0.0, %v2608
      %2610 = vdwg.mxu0
      %2611 = vmatprep.subr.mxu0 0.0
      %2612 = vmatpush1.msra.mxu0 0.0
      %2613 = vmatprep.subr.mxu0 0.0
      %2614 = vmatpush1.msra.mxu0 0.0
      %2615 = vmatprep.subr.mxu0 0.0
      %2616 = vmatpush1.msra.mxu0 0.0
      %2617 = vmatprep.subr.mxu0 0.0
      %2618 = vmatpush1.msra.mxu0 0.0
      %2619 = vmatprep.subr.mxu0 0.0
      %2620 = vmatpush1.msra.mxu0 0.0
      %2621 = vmatprep.subr.mxu0 0.0
      %2622 = vmatpush1.msra.mxu0 0.0
      %2623 = vmatprep.subr.mxu0 0.0
      %2624 = vmatpush1.msra.mxu0 0.0
      %2625 = vmatprep.subr.mxu0 0.0
      %2626 = vmatpush1.msra.mxu0 0.0
      %2627 = vmatprep.subr.mxu0 %v2471
      %2628 = vmatpush1.msra.mxu0 %v2470
      %2629 = vmatprep.subr.mxu0 %v2469
      %2630 = vmatpush1.msra.mxu0 %v2468
      %2631 = vmatprep.subr.mxu0 %v2467
      %2632 = vmatpush1.msra.mxu0 %v2466
      %2633 = vmatprep.subr.mxu0 %v2465
      %2634 = vmatpush1.msra.mxu0 %v2464
      %2635 = vmatprep.subr.mxu0 %v2463
      %2636 = vmatpush1.msra.mxu0 %v2462
      %2637 = vmatprep.subr.mxu0 %v2461
      %2638 = vmatpush1.msra.mxu0 %v2460
      %2639 = vmatprep.subr.mxu0 %v2459
      %2640 = vmatpush1.msra.mxu0 %v2458
      %2641 = vmatprep.subr.mxu0 %v2457
      %2642 = vmatpush1.msra.mxu0 %v2456
      %2643 = vmatprep.subr.mxu0 0.0
      %2644 = vmatpush2.msra.mxu0 0.0
      %2645 = vmatprep.subr.mxu0 0.0
      %2646 = vmatpush2.msra.mxu0 0.0
      %2647 = vmatprep.subr.mxu0 0.0
      %2648 = vmatpush2.msra.mxu0 0.0
      %2649 = vmatprep.subr.mxu0 0.0
      %2650 = vmatpush2.msra.mxu0 0.0
      %2651 = vmatprep.subr.mxu0 0.0
      %2652 = vmatpush2.msra.mxu0 0.0
      %2653 = vmatprep.subr.mxu0 0.0
      %2654 = vmatpush2.msra.mxu0 0.0
      %2655 = vmatprep.subr.mxu0 0.0
      %2656 = vmatpush2.msra.mxu0 0.0
      %2657 = vmatprep.subr.mxu0 0.0
      %2658 = vmatpush2.msra.mxu0 0.0
      %2659 = vmatprep.subr.mxu0 0.0
      %2660 = vmatpush2.msra.mxu0 0.0
      %2661 = vmatprep.subr.mxu0 0.0
      %2662 = vmatpush2.msra.mxu0 0.0
      %2663 = vmatprep.subr.mxu0 0.0
      %2664 = vmatpush2.msra.mxu0 0.0
      %2665 = vmatprep.subr.mxu0 0.0
      %2666 = vmatpush2.msra.mxu0 0.0
      %2667 = vmatprep.subr.mxu0 0.0
      %2668 = vmatpush2.msra.mxu0 0.0
      %2669 = vmatprep.subr.mxu0 0.0
      %2670 = vmatpush2.msra.mxu0 0.0
      %2671 = vmatprep.subr.mxu0 0.0
      %2672 = vmatpush2.msra.mxu0 0.0
      %2673 = vmatprep.subr.mxu0 0.0
      %2674 = vmatpush2.msra.mxu0 0.0
      %2675 = vmatprep.mubr.f32.mxu0 0.0
      %2676 = vmatmul.mubr.f32.gmra.mxu0 %v2514
      %v2677 = vpop.f32.mrf.mxu0
      %v2678 = vadd.f32 %v2589, %v2677
      %v2679 = vpop.f32.mrf.mxu0
      %v2680 = vadd.f32 %v2591, %v2679
      %2681 = vmatprep.mubr.f32.mxu0 0.0
      %2682 = vmatmul.mubr.f32.gmra.mxu0 %v2516
      %v2683 = vpop.f32.mrf.mxu0
      %v2684 = vadd.f32 %v2595, %v2683
      %v2685 = vpop.f32.mrf.mxu0
      %v2686 = vadd.f32 %v2597, %v2685
      %2687 = vmatprep.mubr.f32.mxu0 0.0
      %2688 = vmatmul.mubr.f32.gmra.mxu0 %v2518
      %v2689 = vpop.f32.mrf.mxu0
      %v2690 = vadd.f32 %v2601, %v2689
      %v2691 = vpop.f32.mrf.mxu0
      %v2692 = vadd.f32 %v2603, %v2691
      %2693 = vmatprep.mubr.f32.mxu0 0.0
      %2694 = vmatmul.mubr.f32.gmra.mxu0 %v2520
      %v2695 = vpop.f32.mrf.mxu0
      %v2696 = vadd.f32 %v2607, %v2695
      %v2697 = vpop.f32.mrf.mxu0
      %v2698 = vadd.f32 %v2609, %v2697
      %2699 = vdwg.mxu0
      %v2700 = vsel %vm2513, %v2301, 0
      %v2702 = vsel %vm2513, %v2304, 0
      %v2704 = vsel %vm2513, %v2307, 0
      %v2706 = vsel %vm2513, %v2310, 0
      %2708 = vmatprep.subr.mxu0 %v2342
      %2709 = vmatpush1.msra.mxu0 %v2341
      %2710 = vmatprep.subr.mxu0 %v2340
      %2711 = vmatpush1.msra.mxu0 %v2339
      %2712 = vmatprep.subr.mxu0 %v2338
      %2713 = vmatpush1.msra.mxu0 %v2337
      %2714 = vmatprep.subr.mxu0 %v2336
      %2715 = vmatpush1.msra.mxu0 %v2335
      %2716 = vmatprep.subr.mxu0 %v2334
      %2717 = vmatpush1.msra.mxu0 %v2333
      %2718 = vmatprep.subr.mxu0 %v2332
      %2719 = vmatpush1.msra.mxu0 %v2331
      %2720 = vmatprep.subr.mxu0 %v2330
      %2721 = vmatpush1.msra.mxu0 %v2329
      %2722 = vmatprep.subr.mxu0 %v2328
      %2723 = vmatpush1.msra.mxu0 %v2327
      %2724 = vmatprep.subr.mxu0 %v2326
      %2725 = vmatpush1.msra.mxu0 %v2325
      %2726 = vmatprep.subr.mxu0 %v2324
      %2727 = vmatpush1.msra.mxu0 %v2323
      %2728 = vmatprep.subr.mxu0 %v2322
      %2729 = vmatpush1.msra.mxu0 %v2321
      %2730 = vmatprep.subr.mxu0 %v2320
      %2731 = vmatpush1.msra.mxu0 %v2319
      %2732 = vmatprep.subr.mxu0 %v2318
      %2733 = vmatpush1.msra.mxu0 %v2317
      %2734 = vmatprep.subr.mxu0 %v2316
      %2735 = vmatpush1.msra.mxu0 %v2315
      %2736 = vmatprep.subr.mxu0 %v2314
      %2737 = vmatpush1.msra.mxu0 %v2313
      %2738 = vmatprep.subr.mxu0 %v2312
      %2739 = vmatpush1.msra.mxu0 %v2311
      %2740 = vmatprep.subr.mxu0 %v2374
      %2741 = vmatpush2.msra.mxu0 %v2373
      %2742 = vmatprep.subr.mxu0 %v2372
      %2743 = vmatpush2.msra.mxu0 %v2371
      %2744 = vmatprep.subr.mxu0 %v2370
      %2745 = vmatpush2.msra.mxu0 %v2369
      %2746 = vmatprep.subr.mxu0 %v2368
      %2747 = vmatpush2.msra.mxu0 %v2367
      %2748 = vmatprep.subr.mxu0 %v2366
      %2749 = vmatpush2.msra.mxu0 %v2365
      %2750 = vmatprep.subr.mxu0 %v2364
      %2751 = vmatpush2.msra.mxu0 %v2363
      %2752 = vmatprep.subr.mxu0 %v2362
      %2753 = vmatpush2.msra.mxu0 %v2361
      %2754 = vmatprep.subr.mxu0 %v2360
      %2755 = vmatpush2.msra.mxu0 %v2359
      %2756 = vmatprep.subr.mxu0 %v2358
      %2757 = vmatpush2.msra.mxu0 %v2357
      %2758 = vmatprep.subr.mxu0 %v2356
      %2759 = vmatpush2.msra.mxu0 %v2355
      %2760 = vmatprep.subr.mxu0 %v2354
      %2761 = vmatpush2.msra.mxu0 %v2353
      %2762 = vmatprep.subr.mxu0 %v2352
      %2763 = vmatpush2.msra.mxu0 %v2351
      %2764 = vmatprep.subr.mxu0 %v2350
      %2765 = vmatpush2.msra.mxu0 %v2349
      %2766 = vmatprep.subr.mxu0 %v2348
      %2767 = vmatpush2.msra.mxu0 %v2347
      %2768 = vmatprep.subr.mxu0 %v2346
      %2769 = vmatpush2.msra.mxu0 %v2345
      %2770 = vmatprep.subr.mxu0 %v2344
      %2771 = vmatpush2.msra.mxu0 %v2343
      %2772 = vmatprep.mubr.f32.mxu0 %v2300
      %2773 = vmatmul.mubr.f32.gmra.mxu0 %v2299
      %v2774 = vpop.f32.mrf.mxu0
      %v2775 = vadd.f32 %v2678, %v2774
      %v2776 = vpop.f32.mrf.mxu0
      %v2777 = vadd.f32 %v2680, %v2776
      %2778 = vmatprep.mubr.f32.mxu0 %v2303
      %2779 = vmatmul.mubr.f32.gmra.mxu0 %v2302
      %v2780 = vpop.f32.mrf.mxu0
      %v2781 = vadd.f32 %v2684, %v2780
      %v2782 = vpop.f32.mrf.mxu0
      %v2783 = vadd.f32 %v2686, %v2782
      %2784 = vmatprep.mubr.f32.mxu0 %v2306
      %2785 = vmatmul.mubr.f32.gmra.mxu0 %v2305
      %v2786 = vpop.f32.mrf.mxu0
      %v2787 = vadd.f32 %v2690, %v2786
      %v2788 = vpop.f32.mrf.mxu0
      %v2789 = vadd.f32 %v2692, %v2788
      %2790 = vmatprep.mubr.f32.mxu0 %v2309
      %2791 = vmatmul.mubr.f32.gmra.mxu0 %v2308
      %v2792 = vpop.f32.mrf.mxu0
      %v2793 = vadd.f32 %v2696, %v2792
      %v2794 = vpop.f32.mrf.mxu0
      %v2795 = vadd.f32 %v2698, %v2794
      %2796 = vdwg.mxu0
      %2797 = vmatprep.subr.mxu0 0.0
      %2798 = vmatpush1.msra.mxu0 0.0
      %2799 = vmatprep.subr.mxu0 0.0
      %2800 = vmatpush1.msra.mxu0 0.0
      %2801 = vmatprep.subr.mxu0 0.0
      %2802 = vmatpush1.msra.mxu0 0.0
      %2803 = vmatprep.subr.mxu0 0.0
      %2804 = vmatpush1.msra.mxu0 0.0
      %2805 = vmatprep.subr.mxu0 0.0
      %2806 = vmatpush1.msra.mxu0 0.0
      %2807 = vmatprep.subr.mxu0 0.0
      %2808 = vmatpush1.msra.mxu0 0.0
      %2809 = vmatprep.subr.mxu0 0.0
      %2810 = vmatpush1.msra.mxu0 0.0
      %2811 = vmatprep.subr.mxu0 0.0
      %2812 = vmatpush1.msra.mxu0 0.0
      %2813 = vmatprep.subr.mxu0 %v2390
      %2814 = vmatpush1.msra.mxu0 %v2389
      %2815 = vmatprep.subr.mxu0 %v2388
      %2816 = vmatpush1.msra.mxu0 %v2387
      %2817 = vmatprep.subr.mxu0 %v2386
      %2818 = vmatpush1.msra.mxu0 %v2385
      %2819 = vmatprep.subr.mxu0 %v2384
      %2820 = vmatpush1.msra.mxu0 %v2383
      %2821 = vmatprep.subr.mxu0 %v2382
      %2822 = vmatpush1.msra.mxu0 %v2381
      %2823 = vmatprep.subr.mxu0 %v2380
      %2824 = vmatpush1.msra.mxu0 %v2379
      %2825 = vmatprep.subr.mxu0 %v2378
      %2826 = vmatpush1.msra.mxu0 %v2377
      %2827 = vmatprep.subr.mxu0 %v2376
      %2828 = vmatpush1.msra.mxu0 %v2375
      %2829 = vmatprep.subr.mxu0 0.0
      %2830 = vmatpush2.msra.mxu0 0.0
      %2831 = vmatprep.subr.mxu0 0.0
      %2832 = vmatpush2.msra.mxu0 0.0
      %2833 = vmatprep.subr.mxu0 0.0
      %2834 = vmatpush2.msra.mxu0 0.0
      %2835 = vmatprep.subr.mxu0 0.0
      %2836 = vmatpush2.msra.mxu0 0.0
      %2837 = vmatprep.subr.mxu0 0.0
      %2838 = vmatpush2.msra.mxu0 0.0
      %2839 = vmatprep.subr.mxu0 0.0
      %2840 = vmatpush2.msra.mxu0 0.0
      %2841 = vmatprep.subr.mxu0 0.0
      %2842 = vmatpush2.msra.mxu0 0.0
      %2843 = vmatprep.subr.mxu0 0.0
      %2844 = vmatpush2.msra.mxu0 0.0
      %2845 = vmatprep.subr.mxu0 0.0
      %2846 = vmatpush2.msra.mxu0 0.0
      %2847 = vmatprep.subr.mxu0 0.0
      %2848 = vmatpush2.msra.mxu0 0.0
      %2849 = vmatprep.subr.mxu0 0.0
      %2850 = vmatpush2.msra.mxu0 0.0
      %2851 = vmatprep.subr.mxu0 0.0
      %2852 = vmatpush2.msra.mxu0 0.0
      %2853 = vmatprep.subr.mxu0 0.0
      %2854 = vmatpush2.msra.mxu0 0.0
      %2855 = vmatprep.subr.mxu0 0.0
      %2856 = vmatpush2.msra.mxu0 0.0
      %2857 = vmatprep.subr.mxu0 0.0
      %2858 = vmatpush2.msra.mxu0 0.0
      %2859 = vmatprep.subr.mxu0 0.0
      %2860 = vmatpush2.msra.mxu0 0.0
      %2861 = vmatprep.mubr.f32.mxu0 0.0
      %2862 = vmatmul.mubr.f32.gmra.mxu0 %v2700
      %v2863 = vpop.f32.mrf.mxu0
      %v2864 = vadd.f32 %v2775, %v2863
      %v2865 = vpop.f32.mrf.mxu0
      %v2866 = vadd.f32 %v2777, %v2865
      %2867 = vmatprep.mubr.f32.mxu0 0.0
      %2868 = vmatmul.mubr.f32.gmra.mxu0 %v2702
      %v2869 = vpop.f32.mrf.mxu0
      %v2870 = vadd.f32 %v2781, %v2869
      %v2871 = vpop.f32.mrf.mxu0
      %v2872 = vadd.f32 %v2783, %v2871
      %2873 = vmatprep.mubr.f32.mxu0 0.0
      %2874 = vmatmul.mubr.f32.gmra.mxu0 %v2704
      %v2875 = vpop.f32.mrf.mxu0
      %v2876 = vadd.f32 %v2787, %v2875
      %v2877 = vpop.f32.mrf.mxu0
      %v2878 = vadd.f32 %v2789, %v2877
      %2879 = vmatprep.mubr.f32.mxu0 0.0
      %2880 = vmatmul.mubr.f32.gmra.mxu0 %v2706
      %v2881 = vpop.f32.mrf.mxu0
      %v2882 = vadd.f32 %v2793, %v2881
      %v2883 = vpop.f32.mrf.mxu0
      %v2884 = vadd.f32 %v2795, %v2883
      %2885 = vdwg.mxu0
      %s2886 = scalar_lea.vmem %s3, 1280
      %v2887 = vld [vmem:[%s2886] sm:$0xff]
      %v2888 = vld [vmem:[%s2886 + $0x8] sm:$0xff]
      %v2889 = vld [vmem:[%s2886 + $0x10] sm:$0xff]
      %v2890 = vld [vmem:[%s2886 + $0x18] sm:$0xff]
      %v2891 = vld [vmem:[%s2886 + $0x20] sm:$0xff]
      %v2892 = vld [vmem:[%s2886 + $0x28] sm:$0xff]
      %v2893 = vld [vmem:[%s2886 + $0x30] sm:$0xff]
      %v2894 = vld [vmem:[%s2886 + $0x38] sm:$0xff]
      %v2895 = vld [vmem:[%s2886 + $0x40] sm:$0xff]
      %v2896 = vld [vmem:[%s2886 + $0x48] sm:$0xff]
      %v2897 = vld [vmem:[%s2886 + $0x50] sm:$0xff]
      %v2898 = vld [vmem:[%s2886 + $0x58] sm:$0xff]
      %v2899 = vld [vmem:[%s2886 + $0x60] sm:$0xff]
      %v2900 = vld [vmem:[%s2886 + $0x68] sm:$0xff]
      %v2901 = vld [vmem:[%s2886 + $0x70] sm:$0xff]
      %v2902 = vld [vmem:[%s2886 + $0x78] sm:$0xff]
      %v2903 = vld [vmem:[%s2886 + $0x80] sm:$0xff]
      %v2904 = vld [vmem:[%s2886 + $0x88] sm:$0xff]
      %v2905 = vld [vmem:[%s2886 + $0x90] sm:$0xff]
      %v2906 = vld [vmem:[%s2886 + $0x98] sm:$0xff]
      %v2907 = vld [vmem:[%s2886 + $0xa0] sm:$0xff]
      %v2908 = vld [vmem:[%s2886 + $0xa8] sm:$0xff]
      %v2909 = vld [vmem:[%s2886 + $0xb0] sm:$0xff]
      %v2910 = vld [vmem:[%s2886 + $0xb8] sm:$0xff]
      %v2911 = vld [vmem:[%s2886 + $0xc0] sm:$0xff]
      %v2912 = vld [vmem:[%s2886 + $0xc8] sm:$0xff]
      %v2913 = vld [vmem:[%s2886 + $0xd0] sm:$0xff]
      %v2914 = vld [vmem:[%s2886 + $0xd8] sm:$0xff]
      %v2915 = vld [vmem:[%s2886 + $0xe0] sm:$0xff]
      %v2916 = vld [vmem:[%s2886 + $0xe8] sm:$0xff]
      %v2917 = vld [vmem:[%s2886 + $0xf0] sm:$0xff]
      %v2918 = vld [vmem:[%s2886 + $0xf8] sm:$0xff]
      %v2919 = vld [vmem:[%s2886 + $0x100] sm:$0xff]
      %v2920 = vld [vmem:[%s2886 + $0x108] sm:$0xff]
      %v2921 = vld [vmem:[%s2886 + $0x110] sm:$0xff]
      %v2922 = vld [vmem:[%s2886 + $0x118] sm:$0xff]
      %v2923 = vld [vmem:[%s2886 + $0x120] sm:$0xff]
      %v2924 = vld [vmem:[%s2886 + $0x128] sm:$0xff]
      %v2925 = vld [vmem:[%s2886 + $0x130] sm:$0xff]
      %v2926 = vld [vmem:[%s2886 + $0x138] sm:$0xff]
      %v2927 = vld [vmem:[%s2886 + $0x140] sm:$0xff]
      %v2928 = vld [vmem:[%s2886 + $0x148] sm:$0xff]
      %v2929 = vld [vmem:[%s2886 + $0x150] sm:$0xff]
      %v2930 = vld [vmem:[%s2886 + $0x158] sm:$0xff]
      %v2931 = vld [vmem:[%s2886 + $0x160] sm:$0xff]
      %v2932 = vld [vmem:[%s2886 + $0x168] sm:$0xff]
      %v2933 = vld [vmem:[%s2886 + $0x170] sm:$0xff]
      %v2934 = vld [vmem:[%s2886 + $0x178] sm:$0xff]
      %v2935 = vld [vmem:[%s2886 + $0x180] sm:$0xff]
      %v2936 = vld [vmem:[%s2886 + $0x188] sm:$0xff]
      %v2937 = vld [vmem:[%s2886 + $0x190] sm:$0xff]
      %v2938 = vld [vmem:[%s2886 + $0x198] sm:$0xff]
      %v2939 = vld [vmem:[%s2886 + $0x1a0] sm:$0xff]
      %v2940 = vld [vmem:[%s2886 + $0x1a8] sm:$0xff]
      %v2941 = vld [vmem:[%s2886 + $0x1b0] sm:$0xff]
      %v2942 = vld [vmem:[%s2886 + $0x1b8] sm:$0xff]
      %v2943 = vld [vmem:[%s2886 + $0x1c0] sm:$0xff]
      %v2944 = vld [vmem:[%s2886 + $0x1c8] sm:$0xff]
      %v2945 = vld [vmem:[%s2886 + $0x1d0] sm:$0xff]
      %v2946 = vld [vmem:[%s2886 + $0x1d8] sm:$0xff]
      %v2947 = vld [vmem:[%s2886 + $0x1e0] sm:$0xff]
      %v2948 = vld [vmem:[%s2886 + $0x1e8] sm:$0xff]
      %v2949 = vld [vmem:[%s2886 + $0x1f0] sm:$0xff]
      %v2950 = vld [vmem:[%s2886 + $0x1f8] sm:$0xff]
      %v2951 = vld [vmem:[%s2886 + $0x200] sm:$0xff]
      %v2952 = vld [vmem:[%s2886 + $0x208] sm:$0xff]
      %v2953 = vld [vmem:[%s2886 + $0x210] sm:$0xff]
      %v2954 = vld [vmem:[%s2886 + $0x218] sm:$0xff]
      %v2955 = vld [vmem:[%s2886 + $0x220] sm:$0xff]
      %v2956 = vld [vmem:[%s2886 + $0x228] sm:$0xff]
      %v2957 = vld [vmem:[%s2886 + $0x230] sm:$0xff]
      %v2958 = vld [vmem:[%s2886 + $0x238] sm:$0xff]
      %v2959 = vld [vmem:[%s2886 + $0x240] sm:$0xff]
      %v2960 = vld [vmem:[%s2886 + $0x248] sm:$0xff]
      %v2961 = vld [vmem:[%s2886 + $0x250] sm:$0xff]
      %v2962 = vld [vmem:[%s2886 + $0x258] sm:$0xff]
      %v2963 = vld [vmem:[%s2886 + $0x260] sm:$0xff]
      %v2964 = vld [vmem:[%s2886 + $0x268] sm:$0xff]
      %v2965 = vld [vmem:[%s2886 + $0x270] sm:$0xff]
      %v2966 = vld [vmem:[%s2886 + $0x278] sm:$0xff]
      %v2967 = vrot.slane %v2299, 2
      %v2968 = vrot.slane %v2302, 2
      %v2969 = vsel %vm921, %v2967, %v2968
      %v2970 = vrot.slane %v2300, 2
      %v2971 = vrot.slane %v2303, 2
      %v2972 = vsel %vm921, %v2970, %v2971
      %v2973 = vrot.slane %v2301, 2
      %v2974 = vrot.slane %v2304, 2
      %v2975 = vsel %vm921, %v2973, %v2974
      %v2976 = vrot.slane %v2305, 2
      %v2977 = vsel %vm921, %v2968, %v2976
      %v2978 = vrot.slane %v2306, 2
      %v2979 = vsel %vm921, %v2971, %v2978
      %v2980 = vrot.slane %v2307, 2
      %v2981 = vsel %vm921, %v2974, %v2980
      %v2982 = vrot.slane %v2308, 2
      %v2983 = vsel %vm921, %v2976, %v2982
      %v2984 = vrot.slane %v2309, 2
      %v2985 = vsel %vm921, %v2978, %v2984
      %v2986 = vrot.slane %v2310, 2
      %v2987 = vsel %vm921, %v2980, %v2986
      %v2996 = vsel %vm2513, %v2975, 0
      %v2998 = vsel %vm2513, %v2981, 0
      %v3000 = vsel %vm2513, %v2987, 0
      %v3002 = vsel %vm2513, %v2986, 0
      %3004 = vmatprep.subr.mxu0 %v2918
      %3005 = vmatpush1.msra.mxu0 %v2917
      %3006 = vmatprep.subr.mxu0 %v2916
      %3007 = vmatpush1.msra.mxu0 %v2915
      %3008 = vmatprep.subr.mxu0 %v2914
      %3009 = vmatpush1.msra.mxu0 %v2913
      %3010 = vmatprep.subr.mxu0 %v2912
      %3011 = vmatpush1.msra.mxu0 %v2911
      %3012 = vmatprep.subr.mxu0 %v2910
      %3013 = vmatpush1.msra.mxu0 %v2909
      %3014 = vmatprep.subr.mxu0 %v2908
      %3015 = vmatpush1.msra.mxu0 %v2907
      %3016 = vmatprep.subr.mxu0 %v2906
      %3017 = vmatpush1.msra.mxu0 %v2905
      %3018 = vmatprep.subr.mxu0 %v2904
      %3019 = vmatpush1.msra.mxu0 %v2903
      %3020 = vmatprep.subr.mxu0 %v2902
      %3021 = vmatpush1.msra.mxu0 %v2901
      %3022 = vmatprep.subr.mxu0 %v2900
      %3023 = vmatpush1.msra.mxu0 %v2899
      %3024 = vmatprep.subr.mxu0 %v2898
      %3025 = vmatpush1.msra.mxu0 %v2897
      %3026 = vmatprep.subr.mxu0 %v2896
      %3027 = vmatpush1.msra.mxu0 %v2895
      %3028 = vmatprep.subr.mxu0 %v2894
      %3029 = vmatpush1.msra.mxu0 %v2893
      %3030 = vmatprep.subr.mxu0 %v2892
      %3031 = vmatpush1.msra.mxu0 %v2891
      %3032 = vmatprep.subr.mxu0 %v2890
      %3033 = vmatpush1.msra.mxu0 %v2889
      %3034 = vmatprep.subr.mxu0 %v2888
      %3035 = vmatpush1.msra.mxu0 %v2887
      %3036 = vmatprep.subr.mxu0 %v2950
      %3037 = vmatpush2.msra.mxu0 %v2949
      %3038 = vmatprep.subr.mxu0 %v2948
      %3039 = vmatpush2.msra.mxu0 %v2947
      %3040 = vmatprep.subr.mxu0 %v2946
      %3041 = vmatpush2.msra.mxu0 %v2945
      %3042 = vmatprep.subr.mxu0 %v2944
      %3043 = vmatpush2.msra.mxu0 %v2943
      %3044 = vmatprep.subr.mxu0 %v2942
      %3045 = vmatpush2.msra.mxu0 %v2941
      %3046 = vmatprep.subr.mxu0 %v2940
      %3047 = vmatpush2.msra.mxu0 %v2939
      %3048 = vmatprep.subr.mxu0 %v2938
      %3049 = vmatpush2.msra.mxu0 %v2937
      %3050 = vmatprep.subr.mxu0 %v2936
      %3051 = vmatpush2.msra.mxu0 %v2935
      %3052 = vmatprep.subr.mxu0 %v2934
      %3053 = vmatpush2.msra.mxu0 %v2933
      %3054 = vmatprep.subr.mxu0 %v2932
      %3055 = vmatpush2.msra.mxu0 %v2931
      %3056 = vmatprep.subr.mxu0 %v2930
      %3057 = vmatpush2.msra.mxu0 %v2929
      %3058 = vmatprep.subr.mxu0 %v2928
      %3059 = vmatpush2.msra.mxu0 %v2927
      %3060 = vmatprep.subr.mxu0 %v2926
      %3061 = vmatpush2.msra.mxu0 %v2925
      %3062 = vmatprep.subr.mxu0 %v2924
      %3063 = vmatpush2.msra.mxu0 %v2923
      %3064 = vmatprep.subr.mxu0 %v2922
      %3065 = vmatpush2.msra.mxu0 %v2921
      %3066 = vmatprep.subr.mxu0 %v2920
      %3067 = vmatpush2.msra.mxu0 %v2919
      %3068 = vmatprep.mubr.f32.mxu0 %v2972
      %3069 = vmatmul.mubr.f32.gmra.mxu0 %v2969
      %v3070 = vpop.f32.mrf.mxu0
      %v3071 = vadd.f32 0.0, %v3070
      %v3072 = vpop.f32.mrf.mxu0
      %v3073 = vadd.f32 0.0, %v3072
      %3074 = vmatprep.mubr.f32.mxu0 %v2979
      %3075 = vmatmul.mubr.f32.gmra.mxu0 %v2977
      %v3076 = vpop.f32.mrf.mxu0
      %v3077 = vadd.f32 0.0, %v3076
      %v3078 = vpop.f32.mrf.mxu0
      %v3079 = vadd.f32 0.0, %v3078
      %3080 = vmatprep.mubr.f32.mxu0 %v2985
      %3081 = vmatmul.mubr.f32.gmra.mxu0 %v2983
      %v3082 = vpop.f32.mrf.mxu0
      %v3083 = vadd.f32 0.0, %v3082
      %v3084 = vpop.f32.mrf.mxu0
      %v3085 = vadd.f32 0.0, %v3084
      %3086 = vmatprep.mubr.f32.mxu0 %v2984
      %3087 = vmatmul.mubr.f32.gmra.mxu0 %v2982
      %v3088 = vpop.f32.mrf.mxu0
      %v3089 = vadd.f32 0.0, %v3088
      %v3090 = vpop.f32.mrf.mxu0
      %v3091 = vadd.f32 0.0, %v3090
      %3092 = vdwg.mxu0
      %3093 = vmatprep.subr.mxu0 0.0
      %3094 = vmatpush1.msra.mxu0 0.0
      %3095 = vmatprep.subr.mxu0 0.0
      %3096 = vmatpush1.msra.mxu0 0.0
      %3097 = vmatprep.subr.mxu0 0.0
      %3098 = vmatpush1.msra.mxu0 0.0
      %3099 = vmatprep.subr.mxu0 0.0
      %3100 = vmatpush1.msra.mxu0 0.0
      %3101 = vmatprep.subr.mxu0 0.0
      %3102 = vmatpush1.msra.mxu0 0.0
      %3103 = vmatprep.subr.mxu0 0.0
      %3104 = vmatpush1.msra.mxu0 0.0
      %3105 = vmatprep.subr.mxu0 0.0
      %3106 = vmatpush1.msra.mxu0 0.0
      %3107 = vmatprep.subr.mxu0 0.0
      %3108 = vmatpush1.msra.mxu0 0.0
      %3109 = vmatprep.subr.mxu0 %v2966
      %3110 = vmatpush1.msra.mxu0 %v2965
      %3111 = vmatprep.subr.mxu0 %v2964
      %3112 = vmatpush1.msra.mxu0 %v2963
      %3113 = vmatprep.subr.mxu0 %v2962
      %3114 = vmatpush1.msra.mxu0 %v2961
      %3115 = vmatprep.subr.mxu0 %v2960
      %3116 = vmatpush1.msra.mxu0 %v2959
      %3117 = vmatprep.subr.mxu0 %v2958
      %3118 = vmatpush1.msra.mxu0 %v2957
      %3119 = vmatprep.subr.mxu0 %v2956
      %3120 = vmatpush1.msra.mxu0 %v2955
      %3121 = vmatprep.subr.mxu0 %v2954
      %3122 = vmatpush1.msra.mxu0 %v2953
      %3123 = vmatprep.subr.mxu0 %v2952
      %3124 = vmatpush1.msra.mxu0 %v2951
      %3125 = vmatprep.subr.mxu0 0.0
      %3126 = vmatpush2.msra.mxu0 0.0
      %3127 = vmatprep.subr.mxu0 0.0
      %3128 = vmatpush2.msra.mxu0 0.0
      %3129 = vmatprep.subr.mxu0 0.0
      %3130 = vmatpush2.msra.mxu0 0.0
      %3131 = vmatprep.subr.mxu0 0.0
      %3132 = vmatpush2.msra.mxu0 0.0
      %3133 = vmatprep.subr.mxu0 0.0
      %3134 = vmatpush2.msra.mxu0 0.0
      %3135 = vmatprep.subr.mxu0 0.0
      %3136 = vmatpush2.msra.mxu0 0.0
      %3137 = vmatprep.subr.mxu0 0.0
      %3138 = vmatpush2.msra.mxu0 0.0
      %3139 = vmatprep.subr.mxu0 0.0
      %3140 = vmatpush2.msra.mxu0 0.0
      %3141 = vmatprep.subr.mxu0 0.0
      %3142 = vmatpush2.msra.mxu0 0.0
      %3143 = vmatprep.subr.mxu0 0.0
      %3144 = vmatpush2.msra.mxu0 0.0
      %3145 = vmatprep.subr.mxu0 0.0
      %3146 = vmatpush2.msra.mxu0 0.0
      %3147 = vmatprep.subr.mxu0 0.0
      %3148 = vmatpush2.msra.mxu0 0.0
      %3149 = vmatprep.subr.mxu0 0.0
      %3150 = vmatpush2.msra.mxu0 0.0
      %3151 = vmatprep.subr.mxu0 0.0
      %3152 = vmatpush2.msra.mxu0 0.0
      %3153 = vmatprep.subr.mxu0 0.0
      %3154 = vmatpush2.msra.mxu0 0.0
      %3155 = vmatprep.subr.mxu0 0.0
      %3156 = vmatpush2.msra.mxu0 0.0
      %3157 = vmatprep.mubr.f32.mxu0 0.0
      %3158 = vmatmul.mubr.f32.gmra.mxu0 %v2996
      %v3159 = vpop.f32.mrf.mxu0
      %v3160 = vadd.f32 %v3071, %v3159
      %v3161 = vpop.f32.mrf.mxu0
      %v3162 = vadd.f32 %v3073, %v3161
      %3163 = vmatprep.mubr.f32.mxu0 0.0
      %3164 = vmatmul.mubr.f32.gmra.mxu0 %v2998
      %v3165 = vpop.f32.mrf.mxu0
      %v3166 = vadd.f32 %v3077, %v3165
      %v3167 = vpop.f32.mrf.mxu0
      %v3168 = vadd.f32 %v3079, %v3167
      %3169 = vmatprep.mubr.f32.mxu0 0.0
      %3170 = vmatmul.mubr.f32.gmra.mxu0 %v3000
      %v3171 = vpop.f32.mrf.mxu0
      %v3172 = vadd.f32 %v3083, %v3171
      %v3173 = vpop.f32.mrf.mxu0
      %v3174 = vadd.f32 %v3085, %v3173
      %3175 = vmatprep.mubr.f32.mxu0 0.0
      %3176 = vmatmul.mubr.f32.gmra.mxu0 %v3002
      %v3177 = vpop.f32.mrf.mxu0
      %v3178 = vadd.f32 %v3089, %v3177
      %v3179 = vpop.f32.mrf.mxu0
      %v3180 = vadd.f32 %v3091, %v3179
      %3181 = vdwg.mxu0
      %v3182 = vadd.f32 %v2864, %v3160
      %v3183 = vadd.f32 %v2866, %v3162
      %v3184 = vadd.f32 %v2870, %v3166
      %v3185 = vadd.f32 %v2872, %v3168
      %v3186 = vadd.f32 %v2876, %v3172
      %v3187 = vadd.f32 %v2878, %v3174
      %v3188 = vadd.f32 %v2882, %v3178
      %v3189 = vadd.f32 %v2884, %v3180
      %s3190 = scalar_lea.vmem %s3, 1920
      %v3191 = vld [vmem:[%s3190] sm:$0xff]
      %v3192 = vld [vmem:[%s3190 + $0x8] sm:$0xff]
      %v3193 = vld [vmem:[%s3190 + $0x10] sm:$0xff]
      %v3194 = vld [vmem:[%s3190 + $0x18] sm:$0xff]
      %v3195 = vld [vmem:[%s3190 + $0x20] sm:$0xff]
      %v3196 = vld [vmem:[%s3190 + $0x28] sm:$0xff]
      %v3197 = vld [vmem:[%s3190 + $0x30] sm:$0xff]
      %v3198 = vld [vmem:[%s3190 + $0x38] sm:$0xff]
      %v3199 = vld [vmem:[%s3190 + $0x40] sm:$0xff]
      %v3200 = vld [vmem:[%s3190 + $0x48] sm:$0xff]
      %v3201 = vld [vmem:[%s3190 + $0x50] sm:$0xff]
      %v3202 = vld [vmem:[%s3190 + $0x58] sm:$0xff]
      %v3203 = vld [vmem:[%s3190 + $0x60] sm:$0xff]
      %v3204 = vld [vmem:[%s3190 + $0x68] sm:$0xff]
      %v3205 = vld [vmem:[%s3190 + $0x70] sm:$0xff]
      %v3206 = vld [vmem:[%s3190 + $0x78] sm:$0xff]
      %v3207 = vld [vmem:[%s3190 + $0x80] sm:$0xff]
      %v3208 = vld [vmem:[%s3190 + $0x88] sm:$0xff]
      %v3209 = vld [vmem:[%s3190 + $0x90] sm:$0xff]
      %v3210 = vld [vmem:[%s3190 + $0x98] sm:$0xff]
      %v3211 = vld [vmem:[%s3190 + $0xa0] sm:$0xff]
      %v3212 = vld [vmem:[%s3190 + $0xa8] sm:$0xff]
      %v3213 = vld [vmem:[%s3190 + $0xb0] sm:$0xff]
      %v3214 = vld [vmem:[%s3190 + $0xb8] sm:$0xff]
      %v3215 = vld [vmem:[%s3190 + $0xc0] sm:$0xff]
      %v3216 = vld [vmem:[%s3190 + $0xc8] sm:$0xff]
      %v3217 = vld [vmem:[%s3190 + $0xd0] sm:$0xff]
      %v3218 = vld [vmem:[%s3190 + $0xd8] sm:$0xff]
      %v3219 = vld [vmem:[%s3190 + $0xe0] sm:$0xff]
      %v3220 = vld [vmem:[%s3190 + $0xe8] sm:$0xff]
      %v3221 = vld [vmem:[%s3190 + $0xf0] sm:$0xff]
      %v3222 = vld [vmem:[%s3190 + $0xf8] sm:$0xff]
      %v3223 = vld [vmem:[%s3190 + $0x100] sm:$0xff]
      %v3224 = vld [vmem:[%s3190 + $0x108] sm:$0xff]
      %v3225 = vld [vmem:[%s3190 + $0x110] sm:$0xff]
      %v3226 = vld [vmem:[%s3190 + $0x118] sm:$0xff]
      %v3227 = vld [vmem:[%s3190 + $0x120] sm:$0xff]
      %v3228 = vld [vmem:[%s3190 + $0x128] sm:$0xff]
      %v3229 = vld [vmem:[%s3190 + $0x130] sm:$0xff]
      %v3230 = vld [vmem:[%s3190 + $0x138] sm:$0xff]
      %v3231 = vld [vmem:[%s3190 + $0x140] sm:$0xff]
      %v3232 = vld [vmem:[%s3190 + $0x148] sm:$0xff]
      %v3233 = vld [vmem:[%s3190 + $0x150] sm:$0xff]
      %v3234 = vld [vmem:[%s3190 + $0x158] sm:$0xff]
      %v3235 = vld [vmem:[%s3190 + $0x160] sm:$0xff]
      %v3236 = vld [vmem:[%s3190 + $0x168] sm:$0xff]
      %v3237 = vld [vmem:[%s3190 + $0x170] sm:$0xff]
      %v3238 = vld [vmem:[%s3190 + $0x178] sm:$0xff]
      %v3239 = vld [vmem:[%s3190 + $0x180] sm:$0xff]
      %v3240 = vld [vmem:[%s3190 + $0x188] sm:$0xff]
      %v3241 = vld [vmem:[%s3190 + $0x190] sm:$0xff]
      %v3242 = vld [vmem:[%s3190 + $0x198] sm:$0xff]
      %v3243 = vld [vmem:[%s3190 + $0x1a0] sm:$0xff]
      %v3244 = vld [vmem:[%s3190 + $0x1a8] sm:$0xff]
      %v3245 = vld [vmem:[%s3190 + $0x1b0] sm:$0xff]
      %v3246 = vld [vmem:[%s3190 + $0x1b8] sm:$0xff]
      %v3247 = vld [vmem:[%s3190 + $0x1c0] sm:$0xff]
      %v3248 = vld [vmem:[%s3190 + $0x1c8] sm:$0xff]
      %v3249 = vld [vmem:[%s3190 + $0x1d0] sm:$0xff]
      %v3250 = vld [vmem:[%s3190 + $0x1d8] sm:$0xff]
      %v3251 = vld [vmem:[%s3190 + $0x1e0] sm:$0xff]
      %v3252 = vld [vmem:[%s3190 + $0x1e8] sm:$0xff]
      %v3253 = vld [vmem:[%s3190 + $0x1f0] sm:$0xff]
      %v3254 = vld [vmem:[%s3190 + $0x1f8] sm:$0xff]
      %v3255 = vld [vmem:[%s3190 + $0x200] sm:$0xff]
      %v3256 = vld [vmem:[%s3190 + $0x208] sm:$0xff]
      %v3257 = vld [vmem:[%s3190 + $0x210] sm:$0xff]
      %v3258 = vld [vmem:[%s3190 + $0x218] sm:$0xff]
      %v3259 = vld [vmem:[%s3190 + $0x220] sm:$0xff]
      %v3260 = vld [vmem:[%s3190 + $0x228] sm:$0xff]
      %v3261 = vld [vmem:[%s3190 + $0x230] sm:$0xff]
      %v3262 = vld [vmem:[%s3190 + $0x238] sm:$0xff]
      %v3263 = vld [vmem:[%s3190 + $0x240] sm:$0xff]
      %v3264 = vld [vmem:[%s3190 + $0x248] sm:$0xff]
      %v3265 = vld [vmem:[%s3190 + $0x250] sm:$0xff]
      %v3266 = vld [vmem:[%s3190 + $0x258] sm:$0xff]
      %v3267 = vld [vmem:[%s3190 + $0x260] sm:$0xff]
      %v3268 = vld [vmem:[%s3190 + $0x268] sm:$0xff]
      %v3269 = vld [vmem:[%s3190 + $0x270] sm:$0xff]
      %v3270 = vld [vmem:[%s3190 + $0x278] sm:$0xff]
      %v3271 = vrot.slane %v2299, 3
      %v3272 = vrot.slane %v2302, 3
      %v3273 = vsel %vm1204, %v3271, %v3272
      %v3274 = vrot.slane %v2300, 3
      %v3275 = vrot.slane %v2303, 3
      %v3276 = vsel %vm1204, %v3274, %v3275
      %v3277 = vrot.slane %v2301, 3
      %v3278 = vrot.slane %v2304, 3
      %v3279 = vsel %vm1204, %v3277, %v3278
      %v3280 = vrot.slane %v2305, 3
      %v3281 = vsel %vm1204, %v3272, %v3280
      %v3282 = vrot.slane %v2306, 3
      %v3283 = vsel %vm1204, %v3275, %v3282
      %v3284 = vrot.slane %v2307, 3
      %v3285 = vsel %vm1204, %v3278, %v3284
      %v3286 = vrot.slane %v2308, 3
      %v3287 = vsel %vm1204, %v3280, %v3286
      %v3288 = vrot.slane %v2309, 3
      %v3289 = vsel %vm1204, %v3282, %v3288
      %v3290 = vrot.slane %v2310, 3
      %v3291 = vsel %vm1204, %v3284, %v3290
      %v3300 = vsel %vm2513, %v3279, 0
      %v3302 = vsel %vm2513, %v3285, 0
      %v3304 = vsel %vm2513, %v3291, 0
      %v3306 = vsel %vm2513, %v3290, 0
      %3308 = vmatprep.subr.mxu0 %v3222
      %3309 = vmatpush1.msra.mxu0 %v3221
      %3310 = vmatprep.subr.mxu0 %v3220
      %3311 = vmatpush1.msra.mxu0 %v3219
      %3312 = vmatprep.subr.mxu0 %v3218
      %3313 = vmatpush1.msra.mxu0 %v3217
      %3314 = vmatprep.subr.mxu0 %v3216
      %3315 = vmatpush1.msra.mxu0 %v3215
      %3316 = vmatprep.subr.mxu0 %v3214
      %3317 = vmatpush1.msra.mxu0 %v3213
      %3318 = vmatprep.subr.mxu0 %v3212
      %3319 = vmatpush1.msra.mxu0 %v3211
      %3320 = vmatprep.subr.mxu0 %v3210
      %3321 = vmatpush1.msra.mxu0 %v3209
      %3322 = vmatprep.subr.mxu0 %v3208
      %3323 = vmatpush1.msra.mxu0 %v3207
      %3324 = vmatprep.subr.mxu0 %v3206
      %3325 = vmatpush1.msra.mxu0 %v3205
      %3326 = vmatprep.subr.mxu0 %v3204
      %3327 = vmatpush1.msra.mxu0 %v3203
      %3328 = vmatprep.subr.mxu0 %v3202
      %3329 = vmatpush1.msra.mxu0 %v3201
      %3330 = vmatprep.subr.mxu0 %v3200
      %3331 = vmatpush1.msra.mxu0 %v3199
      %3332 = vmatprep.subr.mxu0 %v3198
      %3333 = vmatpush1.msra.mxu0 %v3197
      %3334 = vmatprep.subr.mxu0 %v3196
      %3335 = vmatpush1.msra.mxu0 %v3195
      %3336 = vmatprep.subr.mxu0 %v3194
      %3337 = vmatpush1.msra.mxu0 %v3193
      %3338 = vmatprep.subr.mxu0 %v3192
      %3339 = vmatpush1.msra.mxu0 %v3191
      %3340 = vmatprep.subr.mxu0 %v3254
      %3341 = vmatpush2.msra.mxu0 %v3253
      %3342 = vmatprep.subr.mxu0 %v3252
      %3343 = vmatpush2.msra.mxu0 %v3251
      %3344 = vmatprep.subr.mxu0 %v3250
      %3345 = vmatpush2.msra.mxu0 %v3249
      %3346 = vmatprep.subr.mxu0 %v3248
      %3347 = vmatpush2.msra.mxu0 %v3247
      %3348 = vmatprep.subr.mxu0 %v3246
      %3349 = vmatpush2.msra.mxu0 %v3245
      %3350 = vmatprep.subr.mxu0 %v3244
      %3351 = vmatpush2.msra.mxu0 %v3243
      %3352 = vmatprep.subr.mxu0 %v3242
      %3353 = vmatpush2.msra.mxu0 %v3241
      %3354 = vmatprep.subr.mxu0 %v3240
      %3355 = vmatpush2.msra.mxu0 %v3239
      %3356 = vmatprep.subr.mxu0 %v3238
      %3357 = vmatpush2.msra.mxu0 %v3237
      %3358 = vmatprep.subr.mxu0 %v3236
      %3359 = vmatpush2.msra.mxu0 %v3235
      %3360 = vmatprep.subr.mxu0 %v3234
      %3361 = vmatpush2.msra.mxu0 %v3233
      %3362 = vmatprep.subr.mxu0 %v3232
      %3363 = vmatpush2.msra.mxu0 %v3231
      %3364 = vmatprep.subr.mxu0 %v3230
      %3365 = vmatpush2.msra.mxu0 %v3229
      %3366 = vmatprep.subr.mxu0 %v3228
      %3367 = vmatpush2.msra.mxu0 %v3227
      %3368 = vmatprep.subr.mxu0 %v3226
      %3369 = vmatpush2.msra.mxu0 %v3225
      %3370 = vmatprep.subr.mxu0 %v3224
      %3371 = vmatpush2.msra.mxu0 %v3223
      %3372 = vmatprep.mubr.f32.mxu0 %v3276
      %3373 = vmatmul.mubr.f32.gmra.mxu0 %v3273
      %v3374 = vpop.f32.mrf.mxu0
      %v3375 = vadd.f32 0.0, %v3374
      %v3376 = vpop.f32.mrf.mxu0
      %v3377 = vadd.f32 0.0, %v3376
      %3378 = vmatprep.mubr.f32.mxu0 %v3283
      %3379 = vmatmul.mubr.f32.gmra.mxu0 %v3281
      %v3380 = vpop.f32.mrf.mxu0
      %v3381 = vadd.f32 0.0, %v3380
      %v3382 = vpop.f32.mrf.mxu0
      %v3383 = vadd.f32 0.0, %v3382
      %3384 = vmatprep.mubr.f32.mxu0 %v3289
      %3385 = vmatmul.mubr.f32.gmra.mxu0 %v3287
      %v3386 = vpop.f32.mrf.mxu0
      %v3387 = vadd.f32 0.0, %v3386
      %v3388 = vpop.f32.mrf.mxu0
      %v3389 = vadd.f32 0.0, %v3388
      %3390 = vmatprep.mubr.f32.mxu0 %v3288
      %3391 = vmatmul.mubr.f32.gmra.mxu0 %v3286
      %v3392 = vpop.f32.mrf.mxu0
      %v3393 = vadd.f32 0.0, %v3392
      %v3394 = vpop.f32.mrf.mxu0
      %v3395 = vadd.f32 0.0, %v3394
      %3396 = vdwg.mxu0
      %3397 = vmatprep.subr.mxu0 0.0
      %3398 = vmatpush1.msra.mxu0 0.0
      %3399 = vmatprep.subr.mxu0 0.0
      %3400 = vmatpush1.msra.mxu0 0.0
      %3401 = vmatprep.subr.mxu0 0.0
      %3402 = vmatpush1.msra.mxu0 0.0
      %3403 = vmatprep.subr.mxu0 0.0
      %3404 = vmatpush1.msra.mxu0 0.0
      %3405 = vmatprep.subr.mxu0 0.0
      %3406 = vmatpush1.msra.mxu0 0.0
      %3407 = vmatprep.subr.mxu0 0.0
      %3408 = vmatpush1.msra.mxu0 0.0
      %3409 = vmatprep.subr.mxu0 0.0
      %3410 = vmatpush1.msra.mxu0 0.0
      %3411 = vmatprep.subr.mxu0 0.0
      %3412 = vmatpush1.msra.mxu0 0.0
      %3413 = vmatprep.subr.mxu0 %v3270
      %3414 = vmatpush1.msra.mxu0 %v3269
      %3415 = vmatprep.subr.mxu0 %v3268
      %3416 = vmatpush1.msra.mxu0 %v3267
      %3417 = vmatprep.subr.mxu0 %v3266
      %3418 = vmatpush1.msra.mxu0 %v3265
      %3419 = vmatprep.subr.mxu0 %v3264
      %3420 = vmatpush1.msra.mxu0 %v3263
      %3421 = vmatprep.subr.mxu0 %v3262
      %3422 = vmatpush1.msra.mxu0 %v3261
      %3423 = vmatprep.subr.mxu0 %v3260
      %3424 = vmatpush1.msra.mxu0 %v3259
      %3425 = vmatprep.subr.mxu0 %v3258
      %3426 = vmatpush1.msra.mxu0 %v3257
      %3427 = vmatprep.subr.mxu0 %v3256
      %3428 = vmatpush1.msra.mxu0 %v3255
      %3429 = vmatprep.subr.mxu0 0.0
      %3430 = vmatpush2.msra.mxu0 0.0
      %3431 = vmatprep.subr.mxu0 0.0
      %3432 = vmatpush2.msra.mxu0 0.0
      %3433 = vmatprep.subr.mxu0 0.0
      %3434 = vmatpush2.msra.mxu0 0.0
      %3435 = vmatprep.subr.mxu0 0.0
      %3436 = vmatpush2.msra.mxu0 0.0
      %3437 = vmatprep.subr.mxu0 0.0
      %3438 = vmatpush2.msra.mxu0 0.0
      %3439 = vmatprep.subr.mxu0 0.0
      %3440 = vmatpush2.msra.mxu0 0.0
      %3441 = vmatprep.subr.mxu0 0.0
      %3442 = vmatpush2.msra.mxu0 0.0
      %3443 = vmatprep.subr.mxu0 0.0
      %3444 = vmatpush2.msra.mxu0 0.0
      %3445 = vmatprep.subr.mxu0 0.0
      %3446 = vmatpush2.msra.mxu0 0.0
      %3447 = vmatprep.subr.mxu0 0.0
      %3448 = vmatpush2.msra.mxu0 0.0
      %3449 = vmatprep.subr.mxu0 0.0
      %3450 = vmatpush2.msra.mxu0 0.0
      %3451 = vmatprep.subr.mxu0 0.0
      %3452 = vmatpush2.msra.mxu0 0.0
      %3453 = vmatprep.subr.mxu0 0.0
      %3454 = vmatpush2.msra.mxu0 0.0
      %3455 = vmatprep.subr.mxu0 0.0
      %3456 = vmatpush2.msra.mxu0 0.0
      %3457 = vmatprep.subr.mxu0 0.0
      %3458 = vmatpush2.msra.mxu0 0.0
      %3459 = vmatprep.subr.mxu0 0.0
      %3460 = vmatpush2.msra.mxu0 0.0
      %3461 = vmatprep.mubr.f32.mxu0 0.0
      %3462 = vmatmul.mubr.f32.gmra.mxu0 %v3300
      %v3463 = vpop.f32.mrf.mxu0
      %v3464 = vadd.f32 %v3375, %v3463
      %v3465 = vpop.f32.mrf.mxu0
      %v3466 = vadd.f32 %v3377, %v3465
      %3467 = vmatprep.mubr.f32.mxu0 0.0
      %3468 = vmatmul.mubr.f32.gmra.mxu0 %v3302
      %v3469 = vpop.f32.mrf.mxu0
      %v3470 = vadd.f32 %v3381, %v3469
      %v3471 = vpop.f32.mrf.mxu0
      %v3472 = vadd.f32 %v3383, %v3471
      %3473 = vmatprep.mubr.f32.mxu0 0.0
      %3474 = vmatmul.mubr.f32.gmra.mxu0 %v3304
      %v3475 = vpop.f32.mrf.mxu0
      %v3476 = vadd.f32 %v3387, %v3475
      %v3477 = vpop.f32.mrf.mxu0
      %v3478 = vadd.f32 %v3389, %v3477
      %3479 = vmatprep.mubr.f32.mxu0 0.0
      %3480 = vmatmul.mubr.f32.gmra.mxu0 %v3306
      %v3481 = vpop.f32.mrf.mxu0
      %v3482 = vadd.f32 %v3393, %v3481
      %v3483 = vpop.f32.mrf.mxu0
      %v3484 = vadd.f32 %v3395, %v3483
      %3485 = vdwg.mxu0
      %v3486 = vadd.f32 %v3182, %v3464
      %v3487 = vadd.f32 %v3183, %v3466
      %v3488 = vadd.f32 %v3184, %v3470
      %v3489 = vadd.f32 %v3185, %v3472
      %v3490 = vadd.f32 %v3186, %v3476
      %v3491 = vadd.f32 %v3187, %v3478
      %v3492 = vadd.f32 %v3188, %v3482
      %v3493 = vadd.f32 %v3189, %v3484
      %s3494 = scalar_lea.vmem %s3, 2560
      %v3495 = vld [vmem:[%s3494] sm:$0xff]
      %v3496 = vld [vmem:[%s3494 + $0x8] sm:$0xff]
      %v3497 = vld [vmem:[%s3494 + $0x10] sm:$0xff]
      %v3498 = vld [vmem:[%s3494 + $0x18] sm:$0xff]
      %v3499 = vld [vmem:[%s3494 + $0x20] sm:$0xff]
      %v3500 = vld [vmem:[%s3494 + $0x28] sm:$0xff]
      %v3501 = vld [vmem:[%s3494 + $0x30] sm:$0xff]
      %v3502 = vld [vmem:[%s3494 + $0x38] sm:$0xff]
      %v3503 = vld [vmem:[%s3494 + $0x40] sm:$0xff]
      %v3504 = vld [vmem:[%s3494 + $0x48] sm:$0xff]
      %v3505 = vld [vmem:[%s3494 + $0x50] sm:$0xff]
      %v3506 = vld [vmem:[%s3494 + $0x58] sm:$0xff]
      %v3507 = vld [vmem:[%s3494 + $0x60] sm:$0xff]
      %v3508 = vld [vmem:[%s3494 + $0x68] sm:$0xff]
      %v3509 = vld [vmem:[%s3494 + $0x70] sm:$0xff]
      %v3510 = vld [vmem:[%s3494 + $0x78] sm:$0xff]
      %v3511 = vld [vmem:[%s3494 + $0x80] sm:$0xff]
      %v3512 = vld [vmem:[%s3494 + $0x88] sm:$0xff]
      %v3513 = vld [vmem:[%s3494 + $0x90] sm:$0xff]
      %v3514 = vld [vmem:[%s3494 + $0x98] sm:$0xff]
      %v3515 = vld [vmem:[%s3494 + $0xa0] sm:$0xff]
      %v3516 = vld [vmem:[%s3494 + $0xa8] sm:$0xff]
      %v3517 = vld [vmem:[%s3494 + $0xb0] sm:$0xff]
      %v3518 = vld [vmem:[%s3494 + $0xb8] sm:$0xff]
      %v3519 = vld [vmem:[%s3494 + $0xc0] sm:$0xff]
      %v3520 = vld [vmem:[%s3494 + $0xc8] sm:$0xff]
      %v3521 = vld [vmem:[%s3494 + $0xd0] sm:$0xff]
      %v3522 = vld [vmem:[%s3494 + $0xd8] sm:$0xff]
      %v3523 = vld [vmem:[%s3494 + $0xe0] sm:$0xff]
      %v3524 = vld [vmem:[%s3494 + $0xe8] sm:$0xff]
      %v3525 = vld [vmem:[%s3494 + $0xf0] sm:$0xff]
      %v3526 = vld [vmem:[%s3494 + $0xf8] sm:$0xff]
      %v3527 = vld [vmem:[%s3494 + $0x100] sm:$0xff]
      %v3528 = vld [vmem:[%s3494 + $0x108] sm:$0xff]
      %v3529 = vld [vmem:[%s3494 + $0x110] sm:$0xff]
      %v3530 = vld [vmem:[%s3494 + $0x118] sm:$0xff]
      %v3531 = vld [vmem:[%s3494 + $0x120] sm:$0xff]
      %v3532 = vld [vmem:[%s3494 + $0x128] sm:$0xff]
      %v3533 = vld [vmem:[%s3494 + $0x130] sm:$0xff]
      %v3534 = vld [vmem:[%s3494 + $0x138] sm:$0xff]
      %v3535 = vld [vmem:[%s3494 + $0x140] sm:$0xff]
      %v3536 = vld [vmem:[%s3494 + $0x148] sm:$0xff]
      %v3537 = vld [vmem:[%s3494 + $0x150] sm:$0xff]
      %v3538 = vld [vmem:[%s3494 + $0x158] sm:$0xff]
      %v3539 = vld [vmem:[%s3494 + $0x160] sm:$0xff]
      %v3540 = vld [vmem:[%s3494 + $0x168] sm:$0xff]
      %v3541 = vld [vmem:[%s3494 + $0x170] sm:$0xff]
      %v3542 = vld [vmem:[%s3494 + $0x178] sm:$0xff]
      %v3543 = vld [vmem:[%s3494 + $0x180] sm:$0xff]
      %v3544 = vld [vmem:[%s3494 + $0x188] sm:$0xff]
      %v3545 = vld [vmem:[%s3494 + $0x190] sm:$0xff]
      %v3546 = vld [vmem:[%s3494 + $0x198] sm:$0xff]
      %v3547 = vld [vmem:[%s3494 + $0x1a0] sm:$0xff]
      %v3548 = vld [vmem:[%s3494 + $0x1a8] sm:$0xff]
      %v3549 = vld [vmem:[%s3494 + $0x1b0] sm:$0xff]
      %v3550 = vld [vmem:[%s3494 + $0x1b8] sm:$0xff]
      %v3551 = vld [vmem:[%s3494 + $0x1c0] sm:$0xff]
      %v3552 = vld [vmem:[%s3494 + $0x1c8] sm:$0xff]
      %v3553 = vld [vmem:[%s3494 + $0x1d0] sm:$0xff]
      %v3554 = vld [vmem:[%s3494 + $0x1d8] sm:$0xff]
      %v3555 = vld [vmem:[%s3494 + $0x1e0] sm:$0xff]
      %v3556 = vld [vmem:[%s3494 + $0x1e8] sm:$0xff]
      %v3557 = vld [vmem:[%s3494 + $0x1f0] sm:$0xff]
      %v3558 = vld [vmem:[%s3494 + $0x1f8] sm:$0xff]
      %v3559 = vld [vmem:[%s3494 + $0x200] sm:$0xff]
      %v3560 = vld [vmem:[%s3494 + $0x208] sm:$0xff]
      %v3561 = vld [vmem:[%s3494 + $0x210] sm:$0xff]
      %v3562 = vld [vmem:[%s3494 + $0x218] sm:$0xff]
      %v3563 = vld [vmem:[%s3494 + $0x220] sm:$0xff]
      %v3564 = vld [vmem:[%s3494 + $0x228] sm:$0xff]
      %v3565 = vld [vmem:[%s3494 + $0x230] sm:$0xff]
      %v3566 = vld [vmem:[%s3494 + $0x238] sm:$0xff]
      %v3567 = vld [vmem:[%s3494 + $0x240] sm:$0xff]
      %v3568 = vld [vmem:[%s3494 + $0x248] sm:$0xff]
      %v3569 = vld [vmem:[%s3494 + $0x250] sm:$0xff]
      %v3570 = vld [vmem:[%s3494 + $0x258] sm:$0xff]
      %v3571 = vld [vmem:[%s3494 + $0x260] sm:$0xff]
      %v3572 = vld [vmem:[%s3494 + $0x268] sm:$0xff]
      %v3573 = vld [vmem:[%s3494 + $0x270] sm:$0xff]
      %v3574 = vld [vmem:[%s3494 + $0x278] sm:$0xff]
      %v3575 = vrot.slane %v2299, 4
      %v3576 = vrot.slane %v2302, 4
      %v3577 = vsel %vm1487, %v3575, %v3576
      %v3578 = vrot.slane %v2300, 4
      %v3579 = vrot.slane %v2303, 4
      %v3580 = vsel %vm1487, %v3578, %v3579
      %v3581 = vrot.slane %v2301, 4
      %v3582 = vrot.slane %v2304, 4
      %v3583 = vsel %vm1487, %v3581, %v3582
      %v3584 = vrot.slane %v2305, 4
      %v3585 = vsel %vm1487, %v3576, %v3584
      %v3586 = vrot.slane %v2306, 4
      %v3587 = vsel %vm1487, %v3579, %v3586
      %v3588 = vrot.slane %v2307, 4
      %v3589 = vsel %vm1487, %v3582, %v3588
      %v3590 = vrot.slane %v2308, 4
      %v3591 = vsel %vm1487, %v3584, %v3590
      %v3592 = vrot.slane %v2309, 4
      %v3593 = vsel %vm1487, %v3586, %v3592
      %v3594 = vrot.slane %v2310, 4
      %v3595 = vsel %vm1487, %v3588, %v3594
      %v3604 = vsel %vm2513, %v3583, 0
      %v3606 = vsel %vm2513, %v3589, 0
      %v3608 = vsel %vm2513, %v3595, 0
      %v3610 = vsel %vm2513, %v3594, 0
      %3612 = vmatprep.subr.mxu0 %v3526
      %3613 = vmatpush1.msra.mxu0 %v3525
      %3614 = vmatprep.subr.mxu0 %v3524
      %3615 = vmatpush1.msra.mxu0 %v3523
      %3616 = vmatprep.subr.mxu0 %v3522
      %3617 = vmatpush1.msra.mxu0 %v3521
      %3618 = vmatprep.subr.mxu0 %v3520
      %3619 = vmatpush1.msra.mxu0 %v3519
      %3620 = vmatprep.subr.mxu0 %v3518
      %3621 = vmatpush1.msra.mxu0 %v3517
      %3622 = vmatprep.subr.mxu0 %v3516
      %3623 = vmatpush1.msra.mxu0 %v3515
      %3624 = vmatprep.subr.mxu0 %v3514
      %3625 = vmatpush1.msra.mxu0 %v3513
      %3626 = vmatprep.subr.mxu0 %v3512
      %3627 = vmatpush1.msra.mxu0 %v3511
      %3628 = vmatprep.subr.mxu0 %v3510
      %3629 = vmatpush1.msra.mxu0 %v3509
      %3630 = vmatprep.subr.mxu0 %v3508
      %3631 = vmatpush1.msra.mxu0 %v3507
      %3632 = vmatprep.subr.mxu0 %v3506
      %3633 = vmatpush1.msra.mxu0 %v3505
      %3634 = vmatprep.subr.mxu0 %v3504
      %3635 = vmatpush1.msra.mxu0 %v3503
      %3636 = vmatprep.subr.mxu0 %v3502
      %3637 = vmatpush1.msra.mxu0 %v3501
      %3638 = vmatprep.subr.mxu0 %v3500
      %3639 = vmatpush1.msra.mxu0 %v3499
      %3640 = vmatprep.subr.mxu0 %v3498
      %3641 = vmatpush1.msra.mxu0 %v3497
      %3642 = vmatprep.subr.mxu0 %v3496
      %3643 = vmatpush1.msra.mxu0 %v3495
      %3644 = vmatprep.subr.mxu0 %v3558
      %3645 = vmatpush2.msra.mxu0 %v3557
      %3646 = vmatprep.subr.mxu0 %v3556
      %3647 = vmatpush2.msra.mxu0 %v3555
      %3648 = vmatprep.subr.mxu0 %v3554
      %3649 = vmatpush2.msra.mxu0 %v3553
      %3650 = vmatprep.subr.mxu0 %v3552
      %3651 = vmatpush2.msra.mxu0 %v3551
      %3652 = vmatprep.subr.mxu0 %v3550
      %3653 = vmatpush2.msra.mxu0 %v3549
      %3654 = vmatprep.subr.mxu0 %v3548
      %3655 = vmatpush2.msra.mxu0 %v3547
      %3656 = vmatprep.subr.mxu0 %v3546
      %3657 = vmatpush2.msra.mxu0 %v3545
      %3658 = vmatprep.subr.mxu0 %v3544
      %3659 = vmatpush2.msra.mxu0 %v3543
      %3660 = vmatprep.subr.mxu0 %v3542
      %3661 = vmatpush2.msra.mxu0 %v3541
      %3662 = vmatprep.subr.mxu0 %v3540
      %3663 = vmatpush2.msra.mxu0 %v3539
      %3664 = vmatprep.subr.mxu0 %v3538
      %3665 = vmatpush2.msra.mxu0 %v3537
      %3666 = vmatprep.subr.mxu0 %v3536
      %3667 = vmatpush2.msra.mxu0 %v3535
      %3668 = vmatprep.subr.mxu0 %v3534
      %3669 = vmatpush2.msra.mxu0 %v3533
      %3670 = vmatprep.subr.mxu0 %v3532
      %3671 = vmatpush2.msra.mxu0 %v3531
      %3672 = vmatprep.subr.mxu0 %v3530
      %3673 = vmatpush2.msra.mxu0 %v3529
      %3674 = vmatprep.subr.mxu0 %v3528
      %3675 = vmatpush2.msra.mxu0 %v3527
      %3676 = vmatprep.mubr.f32.mxu0 %v3580
      %3677 = vmatmul.mubr.f32.gmra.mxu0 %v3577
      %v3678 = vpop.f32.mrf.mxu0
      %v3679 = vadd.f32 0.0, %v3678
      %v3680 = vpop.f32.mrf.mxu0
      %v3681 = vadd.f32 0.0, %v3680
      %3682 = vmatprep.mubr.f32.mxu0 %v3587
      %3683 = vmatmul.mubr.f32.gmra.mxu0 %v3585
      %v3684 = vpop.f32.mrf.mxu0
      %v3685 = vadd.f32 0.0, %v3684
      %v3686 = vpop.f32.mrf.mxu0
      %v3687 = vadd.f32 0.0, %v3686
      %3688 = vmatprep.mubr.f32.mxu0 %v3593
      %3689 = vmatmul.mubr.f32.gmra.mxu0 %v3591
      %v3690 = vpop.f32.mrf.mxu0
      %v3691 = vadd.f32 0.0, %v3690
      %v3692 = vpop.f32.mrf.mxu0
      %v3693 = vadd.f32 0.0, %v3692
      %3694 = vmatprep.mubr.f32.mxu0 %v3592
      %3695 = vmatmul.mubr.f32.gmra.mxu0 %v3590
      %v3696 = vpop.f32.mrf.mxu0
      %v3697 = vadd.f32 0.0, %v3696
      %v3698 = vpop.f32.mrf.mxu0
      %v3699 = vadd.f32 0.0, %v3698
      %3700 = vdwg.mxu0
      %3701 = vmatprep.subr.mxu0 0.0
      %3702 = vmatpush1.msra.mxu0 0.0
      %3703 = vmatprep.subr.mxu0 0.0
      %3704 = vmatpush1.msra.mxu0 0.0
      %3705 = vmatprep.subr.mxu0 0.0
      %3706 = vmatpush1.msra.mxu0 0.0
      %3707 = vmatprep.subr.mxu0 0.0
      %3708 = vmatpush1.msra.mxu0 0.0
      %3709 = vmatprep.subr.mxu0 0.0
      %3710 = vmatpush1.msra.mxu0 0.0
      %3711 = vmatprep.subr.mxu0 0.0
      %3712 = vmatpush1.msra.mxu0 0.0
      %3713 = vmatprep.subr.mxu0 0.0
      %3714 = vmatpush1.msra.mxu0 0.0
      %3715 = vmatprep.subr.mxu0 0.0
      %3716 = vmatpush1.msra.mxu0 0.0
      %3717 = vmatprep.subr.mxu0 %v3574
      %3718 = vmatpush1.msra.mxu0 %v3573
      %3719 = vmatprep.subr.mxu0 %v3572
      %3720 = vmatpush1.msra.mxu0 %v3571
      %3721 = vmatprep.subr.mxu0 %v3570
      %3722 = vmatpush1.msra.mxu0 %v3569
      %3723 = vmatprep.subr.mxu0 %v3568
      %3724 = vmatpush1.msra.mxu0 %v3567
      %3725 = vmatprep.subr.mxu0 %v3566
      %3726 = vmatpush1.msra.mxu0 %v3565
      %3727 = vmatprep.subr.mxu0 %v3564
      %3728 = vmatpush1.msra.mxu0 %v3563
      %3729 = vmatprep.subr.mxu0 %v3562
      %3730 = vmatpush1.msra.mxu0 %v3561
      %3731 = vmatprep.subr.mxu0 %v3560
      %3732 = vmatpush1.msra.mxu0 %v3559
      %3733 = vmatprep.subr.mxu0 0.0
      %3734 = vmatpush2.msra.mxu0 0.0
      %3735 = vmatprep.subr.mxu0 0.0
      %3736 = vmatpush2.msra.mxu0 0.0
      %3737 = vmatprep.subr.mxu0 0.0
      %3738 = vmatpush2.msra.mxu0 0.0
      %3739 = vmatprep.subr.mxu0 0.0
      %3740 = vmatpush2.msra.mxu0 0.0
      %3741 = vmatprep.subr.mxu0 0.0
      %3742 = vmatpush2.msra.mxu0 0.0
      %3743 = vmatprep.subr.mxu0 0.0
      %3744 = vmatpush2.msra.mxu0 0.0
      %3745 = vmatprep.subr.mxu0 0.0
      %3746 = vmatpush2.msra.mxu0 0.0
      %3747 = vmatprep.subr.mxu0 0.0
      %3748 = vmatpush2.msra.mxu0 0.0
      %3749 = vmatprep.subr.mxu0 0.0
      %3750 = vmatpush2.msra.mxu0 0.0
      %3751 = vmatprep.subr.mxu0 0.0
      %3752 = vmatpush2.msra.mxu0 0.0
      %3753 = vmatprep.subr.mxu0 0.0
      %3754 = vmatpush2.msra.mxu0 0.0
      %3755 = vmatprep.subr.mxu0 0.0
      %3756 = vmatpush2.msra.mxu0 0.0
      %3757 = vmatprep.subr.mxu0 0.0
      %3758 = vmatpush2.msra.mxu0 0.0
      %3759 = vmatprep.subr.mxu0 0.0
      %3760 = vmatpush2.msra.mxu0 0.0
      %3761 = vmatprep.subr.mxu0 0.0
      %3762 = vmatpush2.msra.mxu0 0.0
      %3763 = vmatprep.subr.mxu0 0.0
      %3764 = vmatpush2.msra.mxu0 0.0
      %3765 = vmatprep.mubr.f32.mxu0 0.0
      %3766 = vmatmul.mubr.f32.gmra.mxu0 %v3604
      %v3767 = vpop.f32.mrf.mxu0
      %v3768 = vadd.f32 %v3679, %v3767
      %v3769 = vpop.f32.mrf.mxu0
      %v3770 = vadd.f32 %v3681, %v3769
      %3771 = vmatprep.mubr.f32.mxu0 0.0
      %3772 = vmatmul.mubr.f32.gmra.mxu0 %v3606
      %v3773 = vpop.f32.mrf.mxu0
      %v3774 = vadd.f32 %v3685, %v3773
      %v3775 = vpop.f32.mrf.mxu0
      %v3776 = vadd.f32 %v3687, %v3775
      %3777 = vmatprep.mubr.f32.mxu0 0.0
      %3778 = vmatmul.mubr.f32.gmra.mxu0 %v3608
      %v3779 = vpop.f32.mrf.mxu0
      %v3780 = vadd.f32 %v3691, %v3779
      %v3781 = vpop.f32.mrf.mxu0
      %v3782 = vadd.f32 %v3693, %v3781
      %3783 = vmatprep.mubr.f32.mxu0 0.0
      %3784 = vmatmul.mubr.f32.gmra.mxu0 %v3610
      %v3785 = vpop.f32.mrf.mxu0
      %v3786 = vadd.f32 %v3697, %v3785
      %v3787 = vpop.f32.mrf.mxu0
      %v3788 = vadd.f32 %v3699, %v3787
      %3789 = vdwg.mxu0
      %v3790 = vadd.f32 %v3486, %v3768
      %v3791 = vadd.f32 %v3487, %v3770
      %v3792 = vadd.f32 %v3488, %v3774
      %v3793 = vadd.f32 %v3489, %v3776
      %v3794 = vadd.f32 %v3490, %v3780
      %v3795 = vadd.f32 %v3491, %v3782
      %v3796 = vadd.f32 %v3492, %v3786
      %v3797 = vadd.f32 %v3493, %v3788
      %v3798 = vld [vmem:[%s4] sm:$0x3]
      %v3800 = vlaneseq
      %v3801 = vshrl.u32 %v3800, 7
      %v3802 = vsub.s32 0, %v3801
      %v3803 = vrot.slane %v3798, %v3802
      %v3804 = vlaneseq
      %v3805 = vshrl.u32 %v3804, 7
      %v3806 = vsub.s32 1, %v3805
      %v3807 = vrot.slane %v3798, %v3806
      %v3810 = vadd.f32 %v3790, %v3803
      %v3811 = vadd.f32 %v3791, %v3807
      %v3812 = vadd.f32 %v3792, %v3803
      %v3813 = vadd.f32 %v3793, %v3807
      %v3814 = vadd.f32 %v3794, %v3803
      %v3815 = vadd.f32 %v3795, %v3807
      %v3816 = vadd.f32 %v3796, %v3803
      %v3817 = vadd.f32 %v3797, %v3807
      %v3818 = vmax.f32 %v3810, 0.0
      %v3819 = vmax.f32 %v3811, 0.0
      %v3820 = vmax.f32 %v3812, 0.0
      %v3821 = vmax.f32 %v3813, 0.0
      %v3822 = vmax.f32 %v3814, 0.0
      %v3823 = vmax.f32 %v3815, 0.0
      %v3824 = vmax.f32 %v3816, 0.0
      %v3825 = vmax.f32 %v3817, 0.0
      %3830 = vrot.lane.b32.xlu0 %v3818, 123
      %v3831 = vpop.permute.xlu0 %3830
      %3832 = vrot.lane.b32.xlu0 %v3820, 123
      %v3833 = vpop.permute.xlu0 %3832
      %3834 = vrot.lane.b32.xlu0 %v3822, 123
      %v3835 = vpop.permute.xlu0 %3834
      %3836 = vrot.lane.b32.xlu0 %v3824, 123
      %v3837 = vpop.permute.xlu0 %3836
      %v3842 = vmax.f32 %v3818, %v3831
      %v3843 = vmax.f32 %v3820, %v3833
      %v3844 = vmax.f32 %v3822, %v3835
      %v3845 = vmax.f32 %v3824, %v3837
      %3846 = vrot.lane.b32.xlu0 %v3818, 118
      %v3847 = vpop.permute.xlu0 %3846
      %3848 = vrot.lane.b32.xlu0 %v3820, 118
      %v3849 = vpop.permute.xlu0 %3848
      %3850 = vrot.lane.b32.xlu0 %v3822, 118
      %v3851 = vpop.permute.xlu0 %3850
      %3852 = vrot.lane.b32.xlu0 %v3824, 118
      %v3853 = vpop.permute.xlu0 %3852
      %v3858 = vmax.f32 %v3842, %v3847
      %v3859 = vmax.f32 %v3843, %v3849
      %v3860 = vmax.f32 %v3844, %v3851
      %v3861 = vmax.f32 %v3845, %v3853
      %3862 = vrot.lane.b32.xlu0 %v3818, 113
      %v3863 = vpop.permute.xlu0 %3862
      %3864 = vrot.lane.b32.xlu0 %v3820, 113
      %v3865 = vpop.permute.xlu0 %3864
      %3866 = vrot.lane.b32.xlu0 %v3822, 113
      %v3867 = vpop.permute.xlu0 %3866
      %3868 = vrot.lane.b32.xlu0 %v3824, 113
      %v3869 = vpop.permute.xlu0 %3868
      %v3874 = vmax.f32 %v3858, %v3863
      %v3875 = vmax.f32 %v3859, %v3865
      %v3876 = vmax.f32 %v3860, %v3867
      %v3877 = vmax.f32 %v3861, %v3869
      %v3879 = vrot.slane %v3874, 1
      %v3881 = vmax.f32 %v3874, %v3879
      %v3882 = vrot.slane %v3874, 2
      %v3884 = vmax.f32 %v3881, %v3882
      %v3885 = vrot.slane %v3874, 3
      %v3887 = vmax.f32 %v3884, %v3885
      %vm3888 = vcmask 32768
      %3889 = vst.msk [vmem:[#allocation2] sm:$0x1] %vm3888, %v3887
      %vm3890 = vcmask 35843
      %3891 = vst.msk [vmem:[#allocation2 - $0x2] sm:$0x8] %vm3890, %v3887
      %v3893 = vrot.slane %v3875, 1
      %v3895 = vmax.f32 %v3874, %v3893
      %v3896 = vrot.slane %v3875, 2
      %v3898 = vmax.f32 %v3895, %v3896
      %v3899 = vrot.slane %v3875, 3
      %v3901 = vmax.f32 %v3898, %v3899
      %vm3902 = vcmask 39943
      %3903 = vst.msk [vmem:[#allocation2 - $0x5] sm:$0x80] %vm3902, %v3901
      %v3904 = vmax.f32 %v3875, %v3893
      %v3905 = vmax.f32 %v3904, %v3896
      %v3906 = vmax.f32 %v3905, %v3899
      %vm3907 = vcmask 34818
      %3908 = vst.msk [vmem:[#allocation2 + $0x1] sm:$0x4] %vm3907, %v3906
      %v3910 = vrot.slane %v3876, 2
      %v3912 = vmax.f32 %v3904, %v3910
      %v3913 = vrot.slane %v3876, 3
      %v3915 = vmax.f32 %v3912, %v3913
      %vm3916 = vcmask 38918
      %3917 = vst.msk [vmem:[#allocation2 - $0x2] sm:$0x40] %vm3916, %v3915
      %v3918 = vrot.slane %v3876, 1
      %v3920 = vmax.f32 %v3876, %v3918
      %v3921 = vmax.f32 %v3920, %v3910
      %v3922 = vmax.f32 %v3921, %v3913
      %vm3923 = vcmask 33793
      %3924 = vst.msk [vmem:[#allocation2 + $0x4] sm:$0x2] %vm3923, %v3922
      %v3926 = vrot.slane %v3877, 3
      %v3928 = vmax.f32 %v3921, %v3926
      %vm3929 = vcmask 37893
      %3930 = vst.msk [vmem:[#allocation2 + $0x1] sm:$0x20] %vm3929, %v3928
      %v3931 = vrot.slane %v3877, 1
      %v3933 = vmax.f32 %v3877, %v3931
      %v3934 = vrot.slane %v3877, 2
      %v3936 = vmax.f32 %v3933, %v3934
      %v3937 = vmax.f32 %v3936, %v3926
      %3938 = vst.msk [vmem:[#allocation2 + $0x7] sm:$0x1] %vm3888, %v3937
      %3940 = vrot.lane.b32.xlu0 %v3887, 118
      %v3941 = vpop.permute.xlu0 %3940
      %vm3943 = vcmask 73768
      %3944 = vst.msk [vmem:[#allocation2] sm:$0x1] %vm3943, %v3941
      %vm3945 = vcmask 76843
      %3946 = vst.msk [vmem:[#allocation2 - $0x2] sm:$0x8] %vm3945, %v3941
      %3948 = vrot.lane.b32.xlu0 %v3901, 118
      %v3949 = vpop.permute.xlu0 %3948
      %vm3951 = vcmask 80943
      %3952 = vst.msk [vmem:[#allocation2 - $0x5] sm:$0x80] %vm3951, %v3949
      %3954 = vrot.lane.b32.xlu0 %v3906, 118
      %v3955 = vpop.permute.xlu0 %3954
      %vm3957 = vcmask 75818
      %3958 = vst.msk [vmem:[#allocation2 + $0x1] sm:$0x4] %vm3957, %v3955
      %3960 = vrot.lane.b32.xlu0 %v3915, 118
      %v3961 = vpop.permute.xlu0 %3960
      %vm3963 = vcmask 79918
      %3964 = vst.msk [vmem:[#allocation2 - $0x2] sm:$0x40] %vm3963, %v3961
      %3966 = vrot.lane.b32.xlu0 %v3922, 118
      %v3967 = vpop.permute.xlu0 %3966
      %vm3969 = vcmask 74793
      %3970 = vst.msk [vmem:[#allocation2 + $0x4] sm:$0x2] %vm3969, %v3967
      %3972 = vrot.lane.b32.xlu0 %v3928, 118
      %v3973 = vpop.permute.xlu0 %3972
      %vm3975 = vcmask 78893
      %3976 = vst.msk [vmem:[#allocation2 + $0x1] sm:$0x20] %vm3975, %v3973
      %3978 = vrot.lane.b32.xlu0 %v3937, 118
      %v3979 = vpop.permute.xlu0 %3978
      %3981 = vst.msk [vmem:[#allocation2 + $0x7] sm:$0x1] %vm3943, %v3979
      %3982 = vrot.lane.b32.xlu0 %v3887, 103
      %v3983 = vpop.permute.xlu0 %3982
      %vm3985 = vcmask 114768
      %3986 = vst.msk [vmem:[#allocation2] sm:$0x1] %vm3985, %v3983
      %vm3987 = vcmask 117843
      %3988 = vst.msk [vmem:[#allocation2 - $0x2] sm:$0x8] %vm3987, %v3983
      %3989 = vrot.lane.b32.xlu0 %v3901, 103
      %v3990 = vpop.permute.xlu0 %3989
      %vm3992 = vcmask 121943
      %3993 = vst.msk [vmem:[#allocation2 - $0x5] sm:$0x80] %vm3992, %v3990
      %3994 = vrot.lane.b32.xlu0 %v3906, 103
      %v3995 = vpop.permute.xlu0 %3994
      %vm3997 = vcmask 116818
      %3998 = vst.msk [vmem:[#allocation2 + $0x1] sm:$0x4] %vm3997, %v3995
      %3999 = vrot.lane.b32.xlu0 %v3915, 103
      %v4000 = vpop.permute.xlu0 %3999
      %vm4002 = vcmask 120918
      %4003 = vst.msk [vmem:[#allocation2 - $0x2] sm:$0x40] %vm4002, %v4000
      %4004 = vrot.lane.b32.xlu0 %v3922, 103
      %v4005 = vpop.permute.xlu0 %4004
      %vm4007 = vcmask 115793
      %4008 = vst.msk [vmem:[#allocation2 + $0x4] sm:$0x2] %vm4007, %v4005
      %4009 = vrot.lane.b32.xlu0 %v3928, 103
      %v4010 = vpop.permute.xlu0 %4009
      %vm4012 = vcmask 119893
      %4013 = vst.msk [vmem:[#allocation2 + $0x1] sm:$0x20] %vm4012, %v4010
      %4014 = vrot.lane.b32.xlu0 %v3937, 103
      %v4015 = vpop.permute.xlu0 %4014
      %4017 = vst.msk [vmem:[#allocation2 + $0x7] sm:$0x1] %vm3985, %v4015
      %4018 = vrot.lane.b32.xlu0 %v3887, 93
      %v4019 = vpop.permute.xlu0 %4018
      %vm4021 = vcmask 155768
      %4022 = vst.msk [vmem:[#allocation2] sm:$0x1] %vm4021, %v4019
      %vm4023 = vcmask 158843
      %4024 = vst.msk [vmem:[#allocation2 - $0x2] sm:$0x8] %vm4023, %v4019
      %4025 = vrot.lane.b32.xlu0 %v3901, 93
      %v4026 = vpop.permute.xlu0 %4025
      %vm4028 = vcmask 162943
      %4029 = vst.msk [vmem:[#allocation2 - $0x5] sm:$0x80] %vm4028, %v4026
      %4030 = vrot.lane.b32.xlu0 %v3906, 93
      %v4031 = vpop.permute.xlu0 %4030
      %vm4033 = vcmask 157818
      %4034 = vst.msk [vmem:[#allocation2 + $0x1] sm:$0x4] %vm4033, %v4031
      %4035 = vrot.lane.b32.xlu0 %v3915, 93
      %v4036 = vpop.permute.xlu0 %4035
      %vm4038 = vcmask 161918
      %4039 = vst.msk [vmem:[#allocation2 - $0x2] sm:$0x40] %vm4038, %v4036
      %4040 = vrot.lane.b32.xlu0 %v3922, 93
      %v4041 = vpop.permute.xlu0 %4040
      %vm4043 = vcmask 156793
      %4044 = vst.msk [vmem:[#allocation2 + $0x4] sm:$0x2] %vm4043, %v4041
      %4045 = vrot.lane.b32.xlu0 %v3928, 93
      %v4046 = vpop.permute.xlu0 %4045
      %vm4048 = vcmask 160893
      %4049 = vst.msk [vmem:[#allocation2 + $0x1] sm:$0x20] %vm4048, %v4046
      %4050 = vrot.lane.b32.xlu0 %v3937, 93
      %v4051 = vpop.permute.xlu0 %4050
      %4053 = vst.msk [vmem:[#allocation2 + $0x7] sm:$0x1] %vm4021, %v4051
      %4054 = vrot.lane.b32.xlu0 %v3887, 78
      %v4055 = vpop.permute.xlu0 %4054
      %vm4057 = vcmask 196768
      %4058 = vst.msk [vmem:[#allocation2] sm:$0x1] %vm4057, %v4055
      %vm4059 = vcmask 199843
      %4060 = vst.msk [vmem:[#allocation2 - $0x2] sm:$0x8] %vm4059, %v4055
      %4061 = vrot.lane.b32.xlu0 %v3901, 78
      %v4062 = vpop.permute.xlu0 %4061
      %vm4064 = vcmask 203943
      %4065 = vst.msk [vmem:[#allocation2 - $0x5] sm:$0x80] %vm4064, %v4062
      %4066 = vrot.lane.b32.xlu0 %v3906, 78
      %v4067 = vpop.permute.xlu0 %4066
      %vm4069 = vcmask 198818
      %4070 = vst.msk [vmem:[#allocation2 + $0x1] sm:$0x4] %vm4069, %v4067
      %4071 = vrot.lane.b32.xlu0 %v3915, 78
      %v4072 = vpop.permute.xlu0 %4071
      %vm4074 = vcmask 202918
      %4075 = vst.msk [vmem:[#allocation2 - $0x2] sm:$0x40] %vm4074, %v4072
      %4076 = vrot.lane.b32.xlu0 %v3922, 78
      %v4077 = vpop.permute.xlu0 %4076
      %vm4079 = vcmask 197793
      %4080 = vst.msk [vmem:[#allocation2 + $0x4] sm:$0x2] %vm4079, %v4077
      %4081 = vrot.lane.b32.xlu0 %v3928, 78
      %v4082 = vpop.permute.xlu0 %4081
      %vm4084 = vcmask 201893
      %4085 = vst.msk [vmem:[#allocation2 + $0x1] sm:$0x20] %vm4084, %v4082
      %4086 = vrot.lane.b32.xlu0 %v3937, 78
      %v4087 = vpop.permute.xlu0 %4086
      %4089 = vst.msk [vmem:[#allocation2 + $0x7] sm:$0x1] %vm4057, %v4087
      %4090 = vrot.lane.b32.xlu0 %v3887, 68
      %v4091 = vpop.permute.xlu0 %4090
      %vm4093 = vcmask 237768
      %4094 = vst.msk [vmem:[#allocation2] sm:$0x1] %vm4093, %v4091
      %vm4095 = vcmask 240843
      %4096 = vst.msk [vmem:[#allocation2 - $0x2] sm:$0x8] %vm4095, %v4091
      %4097 = vrot.lane.b32.xlu0 %v3901, 68
      %v4098 = vpop.permute.xlu0 %4097
      %vm4100 = vcmask 244943
      %4101 = vst.msk [vmem:[#allocation2 - $0x5] sm:$0x80] %vm4100, %v4098
      %4102 = vrot.lane.b32.xlu0 %v3906, 68
      %v4103 = vpop.permute.xlu0 %4102
      %vm4105 = vcmask 239818
      %4106 = vst.msk [vmem:[#allocation2 + $0x1] sm:$0x4] %vm4105, %v4103
      %4107 = vrot.lane.b32.xlu0 %v3915, 68
      %v4108 = vpop.permute.xlu0 %4107
      %vm4110 = vcmask 243918
      %4111 = vst.msk [vmem:[#allocation2 - $0x2] sm:$0x40] %vm4110, %v4108
      %4112 = vrot.lane.b32.xlu0 %v3922, 68
      %v4113 = vpop.permute.xlu0 %4112
      %vm4115 = vcmask 238793
      %4116 = vst.msk [vmem:[#allocation2 + $0x4] sm:$0x2] %vm4115, %v4113
      %4117 = vrot.lane.b32.xlu0 %v3928, 68
      %v4118 = vpop.permute.xlu0 %4117
      %vm4120 = vcmask 242893
      %4121 = vst.msk [vmem:[#allocation2 + $0x1] sm:$0x20] %vm4120, %v4118
      %4122 = vrot.lane.b32.xlu0 %v3937, 68
      %v4123 = vpop.permute.xlu0 %4122
      %4125 = vst.msk [vmem:[#allocation2 + $0x7] sm:$0x1] %vm4093, %v4123
      %4126 = vrot.lane.b32.xlu0 %v3887, 53
      %v4127 = vpop.permute.xlu0 %4126
      %vm4129 = vcmask 278768
      %4130 = vst.msk [vmem:[#allocation2] sm:$0x1] %vm4129, %v4127
      %vm4131 = vcmask 281843
      %4132 = vst.msk [vmem:[#allocation2 - $0x2] sm:$0x8] %vm4131, %v4127
      %4133 = vrot.lane.b32.xlu0 %v3901, 53
      %v4134 = vpop.permute.xlu0 %4133
      %vm4136 = vcmask 285943
      %4137 = vst.msk [vmem:[#allocation2 - $0x5] sm:$0x80] %vm4136, %v4134
      %4138 = vrot.lane.b32.xlu0 %v3906, 53
      %v4139 = vpop.permute.xlu0 %4138
      %vm4141 = vcmask 280818
      %4142 = vst.msk [vmem:[#allocation2 + $0x1] sm:$0x4] %vm4141, %v4139
      %4143 = vrot.lane.b32.xlu0 %v3915, 53
      %v4144 = vpop.permute.xlu0 %4143
      %vm4146 = vcmask 284918
      %4147 = vst.msk [vmem:[#allocation2 - $0x2] sm:$0x40] %vm4146, %v4144
      %4148 = vrot.lane.b32.xlu0 %v3922, 53
      %v4149 = vpop.permute.xlu0 %4148
      %vm4151 = vcmask 279793
      %4152 = vst.msk [vmem:[#allocation2 + $0x4] sm:$0x2] %vm4151, %v4149
      %4153 = vrot.lane.b32.xlu0 %v3928, 53
      %v4154 = vpop.permute.xlu0 %4153
      %vm4156 = vcmask 283893
      %4157 = vst.msk [vmem:[#allocation2 + $0x1] sm:$0x20] %vm4156, %v4154
      %4158 = vrot.lane.b32.xlu0 %v3937, 53
      %v4159 = vpop.permute.xlu0 %4158
      %4161 = vst.msk [vmem:[#allocation2 + $0x7] sm:$0x1] %vm4129, %v4159
      %4166 = vrot.lane.b32.xlu0 %v3819, 123
      %v4167 = vpop.permute.xlu0 %4166
      %4168 = vrot.lane.b32.xlu0 %v3821, 123
      %v4169 = vpop.permute.xlu0 %4168
      %4170 = vrot.lane.b32.xlu0 %v3823, 123
      %v4171 = vpop.permute.xlu0 %4170
      %4172 = vrot.lane.b32.xlu0 %v3825, 123
      %v4173 = vpop.permute.xlu0 %4172
      %vm4174 = vcmask 1006592
      %v4175 = vsel %vm4174, %v3831, %v4167
      %v4176 = vsel %vm4174, %v3833, %v4169
      %v4177 = vsel %vm4174, %v3835, %v4171
      %v4178 = vsel %vm4174, %v3837, %v4173
      %v4183 = vmax.f32 %v3818, %v4175
      %v4184 = vmax.f32 %v3820, %v4176
      %v4185 = vmax.f32 %v3822, %v4177
      %v4186 = vmax.f32 %v3824, %v4178
      %4187 = vrot.lane.b32.xlu0 %v3819, 118
      %v4188 = vpop.permute.xlu0 %4187
      %4189 = vrot.lane.b32.xlu0 %v3821, 118
      %v4190 = vpop.permute.xlu0 %4189
      %4191 = vrot.lane.b32.xlu0 %v3823, 118
      %v4192 = vpop.permute.xlu0 %4191
      %4193 = vrot.lane.b32.xlu0 %v3825, 118
      %v4194 = vpop.permute.xlu0 %4193
      %v4199 = vmax.f32 %v4183, %v4188
      %v4200 = vmax.f32 %v4184, %v4190
      %v4201 = vmax.f32 %v4185, %v4192
      %v4202 = vmax.f32 %v4186, %v4194
      %4203 = vrot.lane.b32.xlu0 %v3819, 113
      %v4204 = vpop.permute.xlu0 %4203
      %4205 = vrot.lane.b32.xlu0 %v3821, 113
      %v4206 = vpop.permute.xlu0 %4205
      %4207 = vrot.lane.b32.xlu0 %v3823, 113
      %v4208 = vpop.permute.xlu0 %4207
      %4209 = vrot.lane.b32.xlu0 %v3825, 113
      %v4210 = vpop.permute.xlu0 %4209
      %v4215 = vmax.f32 %v4199, %v4204
      %v4216 = vmax.f32 %v4200, %v4206
      %v4217 = vmax.f32 %v4201, %v4208
      %v4218 = vmax.f32 %v4202, %v4210
      %v4220 = vrot.slane %v4215, 1
      %v4222 = vmax.f32 %v4215, %v4220
      %v4223 = vrot.slane %v4215, 2
      %v4225 = vmax.f32 %v4222, %v4223
      %v4226 = vrot.slane %v4215, 3
      %v4228 = vmax.f32 %v4225, %v4226
      %4230 = vrot.lane.b32.xlu0 %v4228, 43
      %v4231 = vpop.permute.xlu0 %4230
      %vm4233 = vcmask 319768
      %4234 = vst.msk [vmem:[#allocation2] sm:$0x1] %vm4233, %v4231
      %vm4235 = vcmask 322843
      %4236 = vst.msk [vmem:[#allocation2 - $0x2] sm:$0x8] %vm4235, %v4231
      %v4238 = vrot.slane %v4216, 1
      %v4240 = vmax.f32 %v4215, %v4238
      %v4241 = vrot.slane %v4216, 2
      %v4243 = vmax.f32 %v4240, %v4241
      %v4244 = vrot.slane %v4216, 3
      %v4246 = vmax.f32 %v4243, %v4244
      %4248 = vrot.lane.b32.xlu0 %v4246, 43
      %v4249 = vpop.permute.xlu0 %4248
      %vm4251 = vcmask 326943
      %4252 = vst.msk [vmem:[#allocation2 - $0x5] sm:$0x80] %vm4251, %v4249
      %v4253 = vmax.f32 %v4216, %v4238
      %v4254 = vmax.f32 %v4253, %v4241
      %v4255 = vmax.f32 %v4254, %v4244
      %4257 = vrot.lane.b32.xlu0 %v4255, 43
      %v4258 = vpop.permute.xlu0 %4257
      %vm4260 = vcmask 321818
      %4261 = vst.msk [vmem:[#allocation2 + $0x1] sm:$0x4] %vm4260, %v4258
      %v4263 = vrot.slane %v4217, 2
      %v4265 = vmax.f32 %v4253, %v4263
      %v4266 = vrot.slane %v4217, 3
      %v4268 = vmax.f32 %v4265, %v4266
      %4270 = vrot.lane.b32.xlu0 %v4268, 43
      %v4271 = vpop.permute.xlu0 %4270
      %vm4273 = vcmask 325918
      %4274 = vst.msk [vmem:[#allocation2 - $0x2] sm:$0x40] %vm4273, %v4271
      %v4275 = vrot.slane %v4217, 1
      %v4277 = vmax.f32 %v4217, %v4275
      %v4278 = vmax.f32 %v4277, %v4263
      %v4279 = vmax.f32 %v4278, %v4266
      %4281 = vrot.lane.b32.xlu0 %v4279, 43
      %v4282 = vpop.permute.xlu0 %4281
      %vm4284 = vcmask 320793
      %4285 = vst.msk [vmem:[#allocation2 + $0x4] sm:$0x2] %vm4284, %v4282
      %v4287 = vrot.slane %v4218, 3
      %v4289 = vmax.f32 %v4278, %v4287
      %4291 = vrot.lane.b32.xlu0 %v4289, 43
      %v4292 = vpop.permute.xlu0 %4291
      %vm4294 = vcmask 324893
      %4295 = vst.msk [vmem:[#allocation2 + $0x1] sm:$0x20] %vm4294, %v4292
      %v4296 = vrot.slane %v4218, 1
      %v4298 = vmax.f32 %v4218, %v4296
      %v4299 = vrot.slane %v4218, 2
      %v4301 = vmax.f32 %v4298, %v4299
      %v4302 = vmax.f32 %v4301, %v4287
      %4304 = vrot.lane.b32.xlu0 %v4302, 43
      %v4305 = vpop.permute.xlu0 %4304
      %4307 = vst.msk [vmem:[#allocation2 + $0x7] sm:$0x1] %vm4233, %v4305
      %v4308 = vld [vmem:[#allocation2] sm:$0x1]
      %v4309 = vld [vmem:[%s5] sm:$0xff]
      %v4310 = vld [vmem:[%s5 + $0x8] sm:$0xff]
      %v4311 = vld [vmem:[%s5 + $0x10] sm:$0xff]
      %v4312 = vld [vmem:[%s5 + $0x18] sm:$0xff]
      %v4313 = vld [vmem:[%s5 + $0x20] sm:$0xff]
      %v4314 = vld [vmem:[#allocation2 + $0x1] sm:$0x1]
      %s4315 = scalar_lea.vmem %s5, 40
      %v4316 = vld [vmem:[%s4315] sm:$0xff]
      %v4317 = vld [vmem:[%s4315 + $0x8] sm:$0xff]
      %v4318 = vld [vmem:[%s4315 + $0x10] sm:$0xff]
      %v4319 = vld [vmem:[%s4315 + $0x18] sm:$0xff]
      %v4320 = vld [vmem:[%s4315 + $0x20] sm:$0xff]
      %vm4321 = vcmask 326656
      %v4323 = vsel %vm4321, %v4314, 0
      %4325 = vmatprep.subr.mxu0 0.0
      %4326 = vmatpush1.msra.mxu0 0.0
      %4327 = vmatprep.subr.mxu0 0.0
      %4328 = vmatpush1.msra.mxu0 0.0
      %4329 = vmatprep.subr.mxu0 0.0
      %4330 = vmatpush1.msra.mxu0 0.0
      %4331 = vmatprep.subr.mxu0 0.0
      %4332 = vmatpush1.msra.mxu0 0.0
      %4333 = vmatprep.subr.mxu0 0.0
      %4334 = vmatpush1.msra.mxu0 0.0
      %4335 = vmatprep.subr.mxu0 0.0
      %4336 = vmatpush1.msra.mxu0 0.0
      %4337 = vmatprep.subr.mxu0 0.0
      %4338 = vmatpush1.msra.mxu0 0.0
      %4339 = vmatprep.subr.mxu0 0.0
      %4340 = vmatpush1.msra.mxu0 0.0
      %4341 = vmatprep.subr.mxu0 0.0
      %4342 = vmatpush1.msra.mxu0 0.0
      %4343 = vmatprep.subr.mxu0 0.0
      %4344 = vmatpush1.msra.mxu0 0.0
      %4345 = vmatprep.subr.mxu0 0.0
      %4346 = vmatpush1.msra.mxu0 0.0
      %4347 = vmatprep.subr.mxu0 0.0
      %4348 = vmatpush1.msra.mxu0 %v4320
      %4349 = vmatprep.subr.mxu0 0.0
      %4350 = vmatpush1.msra.mxu0 %v4319
      %4351 = vmatprep.subr.mxu0 0.0
      %4352 = vmatpush1.msra.mxu0 %v4318
      %4353 = vmatprep.subr.mxu0 0.0
      %4354 = vmatpush1.msra.mxu0 %v4317
      %4355 = vmatprep.subr.mxu0 0.0
      %4356 = vmatpush1.msra.mxu0 %v4316
      %4357 = vmatprep.subr.mxu0 0.0
      %4358 = vmatpush2.msra.mxu0 0.0
      %4359 = vmatprep.subr.mxu0 0.0
      %4360 = vmatpush2.msra.mxu0 0.0
      %4361 = vmatprep.subr.mxu0 0.0
      %4362 = vmatpush2.msra.mxu0 0.0
      %4363 = vmatprep.subr.mxu0 0.0
      %4364 = vmatpush2.msra.mxu0 0.0
      %4365 = vmatprep.subr.mxu0 0.0
      %4366 = vmatpush2.msra.mxu0 0.0
      %4367 = vmatprep.subr.mxu0 0.0
      %4368 = vmatpush2.msra.mxu0 0.0
      %4369 = vmatprep.subr.mxu0 0.0
      %4370 = vmatpush2.msra.mxu0 0.0
      %4371 = vmatprep.subr.mxu0 0.0
      %4372 = vmatpush2.msra.mxu0 0.0
      %4373 = vmatprep.subr.mxu0 0.0
      %4374 = vmatpush2.msra.mxu0 0.0
      %4375 = vmatprep.subr.mxu0 0.0
      %4376 = vmatpush2.msra.mxu0 0.0
      %4377 = vmatprep.subr.mxu0 0.0
      %4378 = vmatpush2.msra.mxu0 0.0
      %4379 = vmatprep.subr.mxu0 0.0
      %4380 = vmatpush2.msra.mxu0 0.0
      %4381 = vmatprep.subr.mxu0 0.0
      %4382 = vmatpush2.msra.mxu0 0.0
      %4383 = vmatprep.subr.mxu0 0.0
      %4384 = vmatpush2.msra.mxu0 0.0
      %4385 = vmatprep.subr.mxu0 0.0
      %4386 = vmatpush2.msra.mxu0 0.0
      %4387 = vmatprep.subr.mxu0 0.0
      %4388 = vmatpush2.msra.mxu0 0.0
      %4389 = vmatprep.mubr.f32.mxu0 0.0
      %4390 = vmatmul.mubr.f32.gmra.mxu0 %v4323
      %v4391 = vpop.f32.mrf.mxu0
      %v4392 = vadd.f32 0.0, %v4391
      %v4393 = vpop.f32.mrf.mxu0
      %4394 = vdwg.mxu0
      %v4396 = vsel %vm4321, %v4308, 0
      %4398 = vmatprep.subr.mxu0 0.0
      %4399 = vmatpush1.msra.mxu0 0.0
      %4400 = vmatprep.subr.mxu0 0.0
      %4401 = vmatpush1.msra.mxu0 0.0
      %4402 = vmatprep.subr.mxu0 0.0
      %4403 = vmatpush1.msra.mxu0 0.0
      %4404 = vmatprep.subr.mxu0 0.0
      %4405 = vmatpush1.msra.mxu0 0.0
      %4406 = vmatprep.subr.mxu0 0.0
      %4407 = vmatpush1.msra.mxu0 0.0
      %4408 = vmatprep.subr.mxu0 0.0
      %4409 = vmatpush1.msra.mxu0 0.0
      %4410 = vmatprep.subr.mxu0 0.0
      %4411 = vmatpush1.msra.mxu0 0.0
      %4412 = vmatprep.subr.mxu0 0.0
      %4413 = vmatpush1.msra.mxu0 0.0
      %4414 = vmatprep.subr.mxu0 0.0
      %4415 = vmatpush1.msra.mxu0 0.0
      %4416 = vmatprep.subr.mxu0 0.0
      %4417 = vmatpush1.msra.mxu0 0.0
      %4418 = vmatprep.subr.mxu0 0.0
      %4419 = vmatpush1.msra.mxu0 0.0
      %4420 = vmatprep.subr.mxu0 0.0
      %4421 = vmatpush1.msra.mxu0 %v4313
      %4422 = vmatprep.subr.mxu0 0.0
      %4423 = vmatpush1.msra.mxu0 %v4312
      %4424 = vmatprep.subr.mxu0 0.0
      %4425 = vmatpush1.msra.mxu0 %v4311
      %4426 = vmatprep.subr.mxu0 0.0
      %4427 = vmatpush1.msra.mxu0 %v4310
      %4428 = vmatprep.subr.mxu0 0.0
      %4429 = vmatpush1.msra.mxu0 %v4309
      %4430 = vmatprep.subr.mxu0 0.0
      %4431 = vmatpush2.msra.mxu0 0.0
      %4432 = vmatprep.subr.mxu0 0.0
      %4433 = vmatpush2.msra.mxu0 0.0
      %4434 = vmatprep.subr.mxu0 0.0
      %4435 = vmatpush2.msra.mxu0 0.0
      %4436 = vmatprep.subr.mxu0 0.0
      %4437 = vmatpush2.msra.mxu0 0.0
      %4438 = vmatprep.subr.mxu0 0.0
      %4439 = vmatpush2.msra.mxu0 0.0
      %4440 = vmatprep.subr.mxu0 0.0
      %4441 = vmatpush2.msra.mxu0 0.0
      %4442 = vmatprep.subr.mxu0 0.0
      %4443 = vmatpush2.msra.mxu0 0.0
      %4444 = vmatprep.subr.mxu0 0.0
      %4445 = vmatpush2.msra.mxu0 0.0
      %4446 = vmatprep.subr.mxu0 0.0
      %4447 = vmatpush2.msra.mxu0 0.0
      %4448 = vmatprep.subr.mxu0 0.0
      %4449 = vmatpush2.msra.mxu0 0.0
      %4450 = vmatprep.subr.mxu0 0.0
      %4451 = vmatpush2.msra.mxu0 0.0
      %4452 = vmatprep.subr.mxu0 0.0
      %4453 = vmatpush2.msra.mxu0 0.0
      %4454 = vmatprep.subr.mxu0 0.0
      %4455 = vmatpush2.msra.mxu0 0.0
      %4456 = vmatprep.subr.mxu0 0.0
      %4457 = vmatpush2.msra.mxu0 0.0
      %4458 = vmatprep.subr.mxu0 0.0
      %4459 = vmatpush2.msra.mxu0 0.0
      %4460 = vmatprep.subr.mxu0 0.0
      %4461 = vmatpush2.msra.mxu0 0.0
      %4462 = vmatprep.mubr.f32.mxu0 0.0
      %4463 = vmatmul.mubr.f32.gmra.mxu0 %v4396
      %v4464 = vpop.f32.mrf.mxu0
      %v4465 = vadd.f32 %v4392, %v4464
      %v4466 = vpop.f32.mrf.mxu0
      %4467 = vdwg.mxu0
      %v4468 = vld [vmem:[#allocation2 + $0x2] sm:$0x1]
      %s4469 = scalar_lea.vmem %s5, 80
      %v4470 = vld [vmem:[%s4469] sm:$0xff]
      %v4471 = vld [vmem:[%s4469 + $0x8] sm:$0xff]
      %v4472 = vld [vmem:[%s4469 + $0x10] sm:$0xff]
      %v4473 = vld [vmem:[%s4469 + $0x18] sm:$0xff]
      %v4474 = vld [vmem:[%s4469 + $0x20] sm:$0xff]
      %v4476 = vsel %vm4321, %v4468, 0
      %4478 = vmatprep.subr.mxu0 0.0
      %4479 = vmatpush1.msra.mxu0 0.0
      %4480 = vmatprep.subr.mxu0 0.0
      %4481 = vmatpush1.msra.mxu0 0.0
      %4482 = vmatprep.subr.mxu0 0.0
      %4483 = vmatpush1.msra.mxu0 0.0
      %4484 = vmatprep.subr.mxu0 0.0
      %4485 = vmatpush1.msra.mxu0 0.0
      %4486 = vmatprep.subr.mxu0 0.0
      %4487 = vmatpush1.msra.mxu0 0.0
      %4488 = vmatprep.subr.mxu0 0.0
      %4489 = vmatpush1.msra.mxu0 0.0
      %4490 = vmatprep.subr.mxu0 0.0
      %4491 = vmatpush1.msra.mxu0 0.0
      %4492 = vmatprep.subr.mxu0 0.0
      %4493 = vmatpush1.msra.mxu0 0.0
      %4494 = vmatprep.subr.mxu0 0.0
      %4495 = vmatpush1.msra.mxu0 0.0
      %4496 = vmatprep.subr.mxu0 0.0
      %4497 = vmatpush1.msra.mxu0 0.0
      %4498 = vmatprep.subr.mxu0 0.0
      %4499 = vmatpush1.msra.mxu0 0.0
      %4500 = vmatprep.subr.mxu0 0.0
      %4501 = vmatpush1.msra.mxu0 %v4474
      %4502 = vmatprep.subr.mxu0 0.0
      %4503 = vmatpush1.msra.mxu0 %v4473
      %4504 = vmatprep.subr.mxu0 0.0
      %4505 = vmatpush1.msra.mxu0 %v4472
      %4506 = vmatprep.subr.mxu0 0.0
      %4507 = vmatpush1.msra.mxu0 %v4471
      %4508 = vmatprep.subr.mxu0 0.0
      %4509 = vmatpush1.msra.mxu0 %v4470
      %4510 = vmatprep.subr.mxu0 0.0
      %4511 = vmatpush2.msra.mxu0 0.0
      %4512 = vmatprep.subr.mxu0 0.0
      %4513 = vmatpush2.msra.mxu0 0.0
      %4514 = vmatprep.subr.mxu0 0.0
      %4515 = vmatpush2.msra.mxu0 0.0
      %4516 = vmatprep.subr.mxu0 0.0
      %4517 = vmatpush2.msra.mxu0 0.0
      %4518 = vmatprep.subr.mxu0 0.0
      %4519 = vmatpush2.msra.mxu0 0.0
      %4520 = vmatprep.subr.mxu0 0.0
      %4521 = vmatpush2.msra.mxu0 0.0
      %4522 = vmatprep.subr.mxu0 0.0
      %4523 = vmatpush2.msra.mxu0 0.0
      %4524 = vmatprep.subr.mxu0 0.0
      %4525 = vmatpush2.msra.mxu0 0.0
      %4526 = vmatprep.subr.mxu0 0.0
      %4527 = vmatpush2.msra.mxu0 0.0
      %4528 = vmatprep.subr.mxu0 0.0
      %4529 = vmatpush2.msra.mxu0 0.0
      %4530 = vmatprep.subr.mxu0 0.0
      %4531 = vmatpush2.msra.mxu0 0.0
      %4532 = vmatprep.subr.mxu0 0.0
      %4533 = vmatpush2.msra.mxu0 0.0
      %4534 = vmatprep.subr.mxu0 0.0
      %4535 = vmatpush2.msra.mxu0 0.0
      %4536 = vmatprep.subr.mxu0 0.0
      %4537 = vmatpush2.msra.mxu0 0.0
      %4538 = vmatprep.subr.mxu0 0.0
      %4539 = vmatpush2.msra.mxu0 0.0
      %4540 = vmatprep.subr.mxu0 0.0
      %4541 = vmatpush2.msra.mxu0 0.0
      %4542 = vmatprep.mubr.f32.mxu0 0.0
      %4543 = vmatmul.mubr.f32.gmra.mxu0 %v4476
      %v4544 = vpop.f32.mrf.mxu0
      %v4545 = vadd.f32 0.0, %v4544
      %v4546 = vpop.f32.mrf.mxu0
      %4547 = vdwg.mxu0
      %v4548 = vadd.f32 %v4465, %v4545
      %v4549 = vld [vmem:[#allocation2 + $0x3] sm:$0x1]
      %s4550 = scalar_lea.vmem %s5, 120
      %v4551 = vld [vmem:[%s4550] sm:$0xff]
      %v4552 = vld [vmem:[%s4550 + $0x8] sm:$0xff]
      %v4553 = vld [vmem:[%s4550 + $0x10] sm:$0xff]
      %v4554 = vld [vmem:[%s4550 + $0x18] sm:$0xff]
      %v4555 = vld [vmem:[%s4550 + $0x20] sm:$0xff]
      %v4557 = vsel %vm4321, %v4549, 0
      %4559 = vmatprep.subr.mxu0 0.0
      %4560 = vmatpush1.msra.mxu0 0.0
      %4561 = vmatprep.subr.mxu0 0.0
      %4562 = vmatpush1.msra.mxu0 0.0
      %4563 = vmatprep.subr.mxu0 0.0
      %4564 = vmatpush1.msra.mxu0 0.0
      %4565 = vmatprep.subr.mxu0 0.0
      %4566 = vmatpush1.msra.mxu0 0.0
      %4567 = vmatprep.subr.mxu0 0.0
      %4568 = vmatpush1.msra.mxu0 0.0
      %4569 = vmatprep.subr.mxu0 0.0
      %4570 = vmatpush1.msra.mxu0 0.0
      %4571 = vmatprep.subr.mxu0 0.0
      %4572 = vmatpush1.msra.mxu0 0.0
      %4573 = vmatprep.subr.mxu0 0.0
      %4574 = vmatpush1.msra.mxu0 0.0
      %4575 = vmatprep.subr.mxu0 0.0
      %4576 = vmatpush1.msra.mxu0 0.0
      %4577 = vmatprep.subr.mxu0 0.0
      %4578 = vmatpush1.msra.mxu0 0.0
      %4579 = vmatprep.subr.mxu0 0.0
      %4580 = vmatpush1.msra.mxu0 0.0
      %4581 = vmatprep.subr.mxu0 0.0
      %4582 = vmatpush1.msra.mxu0 %v4555
      %4583 = vmatprep.subr.mxu0 0.0
      %4584 = vmatpush1.msra.mxu0 %v4554
      %4585 = vmatprep.subr.mxu0 0.0
      %4586 = vmatpush1.msra.mxu0 %v4553
      %4587 = vmatprep.subr.mxu0 0.0
      %4588 = vmatpush1.msra.mxu0 %v4552
      %4589 = vmatprep.subr.mxu0 0.0
      %4590 = vmatpush1.msra.mxu0 %v4551
      %4591 = vmatprep.subr.mxu0 0.0
      %4592 = vmatpush2.msra.mxu0 0.0
      %4593 = vmatprep.subr.mxu0 0.0
      %4594 = vmatpush2.msra.mxu0 0.0
      %4595 = vmatprep.subr.mxu0 0.0
      %4596 = vmatpush2.msra.mxu0 0.0
      %4597 = vmatprep.subr.mxu0 0.0
      %4598 = vmatpush2.msra.mxu0 0.0
      %4599 = vmatprep.subr.mxu0 0.0
      %4600 = vmatpush2.msra.mxu0 0.0
      %4601 = vmatprep.subr.mxu0 0.0
      %4602 = vmatpush2.msra.mxu0 0.0
      %4603 = vmatprep.subr.mxu0 0.0
      %4604 = vmatpush2.msra.mxu0 0.0
      %4605 = vmatprep.subr.mxu0 0.0
      %4606 = vmatpush2.msra.mxu0 0.0
      %4607 = vmatprep.subr.mxu0 0.0
      %4608 = vmatpush2.msra.mxu0 0.0
      %4609 = vmatprep.subr.mxu0 0.0
      %4610 = vmatpush2.msra.mxu0 0.0
      %4611 = vmatprep.subr.mxu0 0.0
      %4612 = vmatpush2.msra.mxu0 0.0
      %4613 = vmatprep.subr.mxu0 0.0
      %4614 = vmatpush2.msra.mxu0 0.0
      %4615 = vmatprep.subr.mxu0 0.0
      %4616 = vmatpush2.msra.mxu0 0.0
      %4617 = vmatprep.subr.mxu0 0.0
      %4618 = vmatpush2.msra.mxu0 0.0
      %4619 = vmatprep.subr.mxu0 0.0
      %4620 = vmatpush2.msra.mxu0 0.0
      %4621 = vmatprep.subr.mxu0 0.0
      %4622 = vmatpush2.msra.mxu0 0.0
      %4623 = vmatprep.mubr.f32.mxu0 0.0
      %4624 = vmatmul.mubr.f32.gmra.mxu0 %v4557
      %v4625 = vpop.f32.mrf.mxu0
      %v4626 = vadd.f32 0.0, %v4625
      %v4627 = vpop.f32.mrf.mxu0
      %4628 = vdwg.mxu0
      %v4629 = vadd.f32 %v4548, %v4626
      %v4630 = vld [vmem:[#allocation2 + $0x4] sm:$0x1]
      %s4631 = scalar_lea.vmem %s5, 160
      %v4632 = vld [vmem:[%s4631] sm:$0xff]
      %v4633 = vld [vmem:[%s4631 + $0x8] sm:$0xff]
      %v4634 = vld [vmem:[%s4631 + $0x10] sm:$0xff]
      %v4635 = vld [vmem:[%s4631 + $0x18] sm:$0xff]
      %v4636 = vld [vmem:[%s4631 + $0x20] sm:$0xff]
      %v4638 = vsel %vm4321, %v4630, 0
      %4640 = vmatprep.subr.mxu0 0.0
      %4641 = vmatpush1.msra.mxu0 0.0
      %4642 = vmatprep.subr.mxu0 0.0
      %4643 = vmatpush1.msra.mxu0 0.0
      %4644 = vmatprep.subr.mxu0 0.0
      %4645 = vmatpush1.msra.mxu0 0.0
      %4646 = vmatprep.subr.mxu0 0.0
      %4647 = vmatpush1.msra.mxu0 0.0
      %4648 = vmatprep.subr.mxu0 0.0
      %4649 = vmatpush1.msra.mxu0 0.0
      %4650 = vmatprep.subr.mxu0 0.0
      %4651 = vmatpush1.msra.mxu0 0.0
      %4652 = vmatprep.subr.mxu0 0.0
      %4653 = vmatpush1.msra.mxu0 0.0
      %4654 = vmatprep.subr.mxu0 0.0
      %4655 = vmatpush1.msra.mxu0 0.0
      %4656 = vmatprep.subr.mxu0 0.0
      %4657 = vmatpush1.msra.mxu0 0.0
      %4658 = vmatprep.subr.mxu0 0.0
      %4659 = vmatpush1.msra.mxu0 0.0
      %4660 = vmatprep.subr.mxu0 0.0
      %4661 = vmatpush1.msra.mxu0 0.0
      %4662 = vmatprep.subr.mxu0 0.0
      %4663 = vmatpush1.msra.mxu0 %v4636
      %4664 = vmatprep.subr.mxu0 0.0
      %4665 = vmatpush1.msra.mxu0 %v4635
      %4666 = vmatprep.subr.mxu0 0.0
      %4667 = vmatpush1.msra.mxu0 %v4634
      %4668 = vmatprep.subr.mxu0 0.0
      %4669 = vmatpush1.msra.mxu0 %v4633
      %4670 = vmatprep.subr.mxu0 0.0
      %4671 = vmatpush1.msra.mxu0 %v4632
      %4672 = vmatprep.subr.mxu0 0.0
      %4673 = vmatpush2.msra.mxu0 0.0
      %4674 = vmatprep.subr.mxu0 0.0
      %4675 = vmatpush2.msra.mxu0 0.0
      %4676 = vmatprep.subr.mxu0 0.0
      %4677 = vmatpush2.msra.mxu0 0.0
      %4678 = vmatprep.subr.mxu0 0.0
      %4679 = vmatpush2.msra.mxu0 0.0
      %4680 = vmatprep.subr.mxu0 0.0
      %4681 = vmatpush2.msra.mxu0 0.0
      %4682 = vmatprep.subr.mxu0 0.0
      %4683 = vmatpush2.msra.mxu0 0.0
      %4684 = vmatprep.subr.mxu0 0.0
      %4685 = vmatpush2.msra.mxu0 0.0
      %4686 = vmatprep.subr.mxu0 0.0
      %4687 = vmatpush2.msra.mxu0 0.0
      %4688 = vmatprep.subr.mxu0 0.0
      %4689 = vmatpush2.msra.mxu0 0.0
      %4690 = vmatprep.subr.mxu0 0.0
      %4691 = vmatpush2.msra.mxu0 0.0
      %4692 = vmatprep.subr.mxu0 0.0
      %4693 = vmatpush2.msra.mxu0 0.0
      %4694 = vmatprep.subr.mxu0 0.0
      %4695 = vmatpush2.msra.mxu0 0.0
      %4696 = vmatprep.subr.mxu0 0.0
      %4697 = vmatpush2.msra.mxu0 0.0
      %4698 = vmatprep.subr.mxu0 0.0
      %4699 = vmatpush2.msra.mxu0 0.0
      %4700 = vmatprep.subr.mxu0 0.0
      %4701 = vmatpush2.msra.mxu0 0.0
      %4702 = vmatprep.subr.mxu0 0.0
      %4703 = vmatpush2.msra.mxu0 0.0
      %4704 = vmatprep.mubr.f32.mxu0 0.0
      %4705 = vmatmul.mubr.f32.gmra.mxu0 %v4638
      %v4706 = vpop.f32.mrf.mxu0
      %v4707 = vadd.f32 0.0, %v4706
      %v4708 = vpop.f32.mrf.mxu0
      %4709 = vdwg.mxu0
      %v4710 = vadd.f32 %v4629, %v4707
      %v4711 = vld [vmem:[#allocation2 + $0x5] sm:$0x1]
      %s4712 = scalar_lea.vmem %s5, 200
      %v4713 = vld [vmem:[%s4712] sm:$0xff]
      %v4714 = vld [vmem:[%s4712 + $0x8] sm:$0xff]
      %v4715 = vld [vmem:[%s4712 + $0x10] sm:$0xff]
      %v4716 = vld [vmem:[%s4712 + $0x18] sm:$0xff]
      %v4717 = vld [vmem:[%s4712 + $0x20] sm:$0xff]
      %v4719 = vsel %vm4321, %v4711, 0
      %4721 = vmatprep.subr.mxu0 0.0
      %4722 = vmatpush1.msra.mxu0 0.0
      %4723 = vmatprep.subr.mxu0 0.0
      %4724 = vmatpush1.msra.mxu0 0.0
      %4725 = vmatprep.subr.mxu0 0.0
      %4726 = vmatpush1.msra.mxu0 0.0
      %4727 = vmatprep.subr.mxu0 0.0
      %4728 = vmatpush1.msra.mxu0 0.0
      %4729 = vmatprep.subr.mxu0 0.0
      %4730 = vmatpush1.msra.mxu0 0.0
      %4731 = vmatprep.subr.mxu0 0.0
      %4732 = vmatpush1.msra.mxu0 0.0
      %4733 = vmatprep.subr.mxu0 0.0
      %4734 = vmatpush1.msra.mxu0 0.0
      %4735 = vmatprep.subr.mxu0 0.0
      %4736 = vmatpush1.msra.mxu0 0.0
      %4737 = vmatprep.subr.mxu0 0.0
      %4738 = vmatpush1.msra.mxu0 0.0
      %4739 = vmatprep.subr.mxu0 0.0
      %4740 = vmatpush1.msra.mxu0 0.0
      %4741 = vmatprep.subr.mxu0 0.0
      %4742 = vmatpush1.msra.mxu0 0.0
      %4743 = vmatprep.subr.mxu0 0.0
      %4744 = vmatpush1.msra.mxu0 %v4717
      %4745 = vmatprep.subr.mxu0 0.0
      %4746 = vmatpush1.msra.mxu0 %v4716
      %4747 = vmatprep.subr.mxu0 0.0
      %4748 = vmatpush1.msra.mxu0 %v4715
      %4749 = vmatprep.subr.mxu0 0.0
      %4750 = vmatpush1.msra.mxu0 %v4714
      %4751 = vmatprep.subr.mxu0 0.0
      %4752 = vmatpush1.msra.mxu0 %v4713
      %4753 = vmatprep.subr.mxu0 0.0
      %4754 = vmatpush2.msra.mxu0 0.0
      %4755 = vmatprep.subr.mxu0 0.0
      %4756 = vmatpush2.msra.mxu0 0.0
      %4757 = vmatprep.subr.mxu0 0.0
      %4758 = vmatpush2.msra.mxu0 0.0
      %4759 = vmatprep.subr.mxu0 0.0
      %4760 = vmatpush2.msra.mxu0 0.0
      %4761 = vmatprep.subr.mxu0 0.0
      %4762 = vmatpush2.msra.mxu0 0.0
      %4763 = vmatprep.subr.mxu0 0.0
      %4764 = vmatpush2.msra.mxu0 0.0
      %4765 = vmatprep.subr.mxu0 0.0
      %4766 = vmatpush2.msra.mxu0 0.0
      %4767 = vmatprep.subr.mxu0 0.0
      %4768 = vmatpush2.msra.mxu0 0.0
      %4769 = vmatprep.subr.mxu0 0.0
      %4770 = vmatpush2.msra.mxu0 0.0
      %4771 = vmatprep.subr.mxu0 0.0
      %4772 = vmatpush2.msra.mxu0 0.0
      %4773 = vmatprep.subr.mxu0 0.0
      %4774 = vmatpush2.msra.mxu0 0.0
      %4775 = vmatprep.subr.mxu0 0.0
      %4776 = vmatpush2.msra.mxu0 0.0
      %4777 = vmatprep.subr.mxu0 0.0
      %4778 = vmatpush2.msra.mxu0 0.0
      %4779 = vmatprep.subr.mxu0 0.0
      %4780 = vmatpush2.msra.mxu0 0.0
      %4781 = vmatprep.subr.mxu0 0.0
      %4782 = vmatpush2.msra.mxu0 0.0
      %4783 = vmatprep.subr.mxu0 0.0
      %4784 = vmatpush2.msra.mxu0 0.0
      %4785 = vmatprep.mubr.f32.mxu0 0.0
      %4786 = vmatmul.mubr.f32.gmra.mxu0 %v4719
      %v4787 = vpop.f32.mrf.mxu0
      %v4788 = vadd.f32 0.0, %v4787
      %v4789 = vpop.f32.mrf.mxu0
      %4790 = vdwg.mxu0
      %v4791 = vadd.f32 %v4710, %v4788
      %v4792 = vld [vmem:[#allocation2 + $0x6] sm:$0x1]
      %s4793 = scalar_lea.vmem %s5, 240
      %v4794 = vld [vmem:[%s4793] sm:$0xff]
      %v4795 = vld [vmem:[%s4793 + $0x8] sm:$0xff]
      %v4796 = vld [vmem:[%s4793 + $0x10] sm:$0xff]
      %v4797 = vld [vmem:[%s4793 + $0x18] sm:$0xff]
      %v4798 = vld [vmem:[%s4793 + $0x20] sm:$0xff]
      %v4800 = vsel %vm4321, %v4792, 0
      %4802 = vmatprep.subr.mxu0 0.0
      %4803 = vmatpush1.msra.mxu0 0.0
      %4804 = vmatprep.subr.mxu0 0.0
      %4805 = vmatpush1.msra.mxu0 0.0
      %4806 = vmatprep.subr.mxu0 0.0
      %4807 = vmatpush1.msra.mxu0 0.0
      %4808 = vmatprep.subr.mxu0 0.0
      %4809 = vmatpush1.msra.mxu0 0.0
      %4810 = vmatprep.subr.mxu0 0.0
      %4811 = vmatpush1.msra.mxu0 0.0
      %4812 = vmatprep.subr.mxu0 0.0
      %4813 = vmatpush1.msra.mxu0 0.0
      %4814 = vmatprep.subr.mxu0 0.0
      %4815 = vmatpush1.msra.mxu0 0.0
      %4816 = vmatprep.subr.mxu0 0.0
      %4817 = vmatpush1.msra.mxu0 0.0
      %4818 = vmatprep.subr.mxu0 0.0
      %4819 = vmatpush1.msra.mxu0 0.0
      %4820 = vmatprep.subr.mxu0 0.0
      %4821 = vmatpush1.msra.mxu0 0.0
      %4822 = vmatprep.subr.mxu0 0.0
      %4823 = vmatpush1.msra.mxu0 0.0
      %4824 = vmatprep.subr.mxu0 0.0
      %4825 = vmatpush1.msra.mxu0 %v4798
      %4826 = vmatprep.subr.mxu0 0.0
      %4827 = vmatpush1.msra.mxu0 %v4797
      %4828 = vmatprep.subr.mxu0 0.0
      %4829 = vmatpush1.msra.mxu0 %v4796
      %4830 = vmatprep.subr.mxu0 0.0
      %4831 = vmatpush1.msra.mxu0 %v4795
      %4832 = vmatprep.subr.mxu0 0.0
      %4833 = vmatpush1.msra.mxu0 %v4794
      %4834 = vmatprep.subr.mxu0 0.0
      %4835 = vmatpush2.msra.mxu0 0.0
      %4836 = vmatprep.subr.mxu0 0.0
      %4837 = vmatpush2.msra.mxu0 0.0
      %4838 = vmatprep.subr.mxu0 0.0
      %4839 = vmatpush2.msra.mxu0 0.0
      %4840 = vmatprep.subr.mxu0 0.0
      %4841 = vmatpush2.msra.mxu0 0.0
      %4842 = vmatprep.subr.mxu0 0.0
      %4843 = vmatpush2.msra.mxu0 0.0
      %4844 = vmatprep.subr.mxu0 0.0
      %4845 = vmatpush2.msra.mxu0 0.0
      %4846 = vmatprep.subr.mxu0 0.0
      %4847 = vmatpush2.msra.mxu0 0.0
      %4848 = vmatprep.subr.mxu0 0.0
      %4849 = vmatpush2.msra.mxu0 0.0
      %4850 = vmatprep.subr.mxu0 0.0
      %4851 = vmatpush2.msra.mxu0 0.0
      %4852 = vmatprep.subr.mxu0 0.0
      %4853 = vmatpush2.msra.mxu0 0.0
      %4854 = vmatprep.subr.mxu0 0.0
      %4855 = vmatpush2.msra.mxu0 0.0
      %4856 = vmatprep.subr.mxu0 0.0
      %4857 = vmatpush2.msra.mxu0 0.0
      %4858 = vmatprep.subr.mxu0 0.0
      %4859 = vmatpush2.msra.mxu0 0.0
      %4860 = vmatprep.subr.mxu0 0.0
      %4861 = vmatpush2.msra.mxu0 0.0
      %4862 = vmatprep.subr.mxu0 0.0
      %4863 = vmatpush2.msra.mxu0 0.0
      %4864 = vmatprep.subr.mxu0 0.0
      %4865 = vmatpush2.msra.mxu0 0.0
      %4866 = vmatprep.mubr.f32.mxu0 0.0
      %4867 = vmatmul.mubr.f32.gmra.mxu0 %v4800
      %v4868 = vpop.f32.mrf.mxu0
      %v4869 = vadd.f32 0.0, %v4868
      %v4870 = vpop.f32.mrf.mxu0
      %4871 = vdwg.mxu0
      %v4872 = vadd.f32 %v4791, %v4869
      %v4873 = vld [vmem:[#allocation2 + $0x7] sm:$0x1]
      %s4874 = scalar_lea.vmem %s5, 280
      %v4875 = vld [vmem:[%s4874] sm:$0xff]
      %v4876 = vld [vmem:[%s4874 + $0x8] sm:$0xff]
      %v4877 = vld [vmem:[%s4874 + $0x10] sm:$0xff]
      %v4878 = vld [vmem:[%s4874 + $0x18] sm:$0xff]
      %v4879 = vld [vmem:[%s4874 + $0x20] sm:$0xff]
      %v4881 = vsel %vm4321, %v4873, 0
      %4883 = vmatprep.subr.mxu0 0.0
      %4884 = vmatpush1.msra.mxu0 0.0
      %4885 = vmatprep.subr.mxu0 0.0
      %4886 = vmatpush1.msra.mxu0 0.0
      %4887 = vmatprep.subr.mxu0 0.0
      %4888 = vmatpush1.msra.mxu0 0.0
      %4889 = vmatprep.subr.mxu0 0.0
      %4890 = vmatpush1.msra.mxu0 0.0
      %4891 = vmatprep.subr.mxu0 0.0
      %4892 = vmatpush1.msra.mxu0 0.0
      %4893 = vmatprep.subr.mxu0 0.0
      %4894 = vmatpush1.msra.mxu0 0.0
      %4895 = vmatprep.subr.mxu0 0.0
      %4896 = vmatpush1.msra.mxu0 0.0
      %4897 = vmatprep.subr.mxu0 0.0
      %4898 = vmatpush1.msra.mxu0 0.0
      %4899 = vmatprep.subr.mxu0 0.0
      %4900 = vmatpush1.msra.mxu0 0.0
      %4901 = vmatprep.subr.mxu0 0.0
      %4902 = vmatpush1.msra.mxu0 0.0
      %4903 = vmatprep.subr.mxu0 0.0
      %4904 = vmatpush1.msra.mxu0 0.0
      %4905 = vmatprep.subr.mxu0 0.0
      %4906 = vmatpush1.msra.mxu0 %v4879
      %4907 = vmatprep.subr.mxu0 0.0
      %4908 = vmatpush1.msra.mxu0 %v4878
      %4909 = vmatprep.subr.mxu0 0.0
      %4910 = vmatpush1.msra.mxu0 %v4877
      %4911 = vmatprep.subr.mxu0 0.0
      %4912 = vmatpush1.msra.mxu0 %v4876
      %4913 = vmatprep.subr.mxu0 0.0
      %4914 = vmatpush1.msra.mxu0 %v4875
      %4915 = vmatprep.subr.mxu0 0.0
      %4916 = vmatpush2.msra.mxu0 0.0
      %4917 = vmatprep.subr.mxu0 0.0
      %4918 = vmatpush2.msra.mxu0 0.0
      %4919 = vmatprep.subr.mxu0 0.0
      %4920 = vmatpush2.msra.mxu0 0.0
      %4921 = vmatprep.subr.mxu0 0.0
      %4922 = vmatpush2.msra.mxu0 0.0
      %4923 = vmatprep.subr.mxu0 0.0
      %4924 = vmatpush2.msra.mxu0 0.0
      %4925 = vmatprep.subr.mxu0 0.0
      %4926 = vmatpush2.msra.mxu0 0.0
      %4927 = vmatprep.subr.mxu0 0.0
      %4928 = vmatpush2.msra.mxu0 0.0
      %4929 = vmatprep.subr.mxu0 0.0
      %4930 = vmatpush2.msra.mxu0 0.0
      %4931 = vmatprep.subr.mxu0 0.0
      %4932 = vmatpush2.msra.mxu0 0.0
      %4933 = vmatprep.subr.mxu0 0.0
      %4934 = vmatpush2.msra.mxu0 0.0
      %4935 = vmatprep.subr.mxu0 0.0
      %4936 = vmatpush2.msra.mxu0 0.0
      %4937 = vmatprep.subr.mxu0 0.0
      %4938 = vmatpush2.msra.mxu0 0.0
      %4939 = vmatprep.subr.mxu0 0.0
      %4940 = vmatpush2.msra.mxu0 0.0
      %4941 = vmatprep.subr.mxu0 0.0
      %4942 = vmatpush2.msra.mxu0 0.0
      %4943 = vmatprep.subr.mxu0 0.0
      %4944 = vmatpush2.msra.mxu0 0.0
      %4945 = vmatprep.subr.mxu0 0.0
      %4946 = vmatpush2.msra.mxu0 0.0
      %4947 = vmatprep.mubr.f32.mxu0 0.0
      %4948 = vmatmul.mubr.f32.gmra.mxu0 %v4881
      %v4949 = vpop.f32.mrf.mxu0
      %v4950 = vadd.f32 0.0, %v4949
      %v4951 = vpop.f32.mrf.mxu0
      %4952 = vdwg.mxu0
      %v4953 = vadd.f32 %v4872, %v4950
      %v4954 = vld [vmem:[%s6] sm:$0x1]
      %v4955 = vadd.f32 %v4953, %v4954
      %v4956 = vmax.f32 %v4955, 0.0
      %v4957 = vld [vmem:[%s7] sm:$0xff]
      %v4958 = vld [vmem:[%s7 + $0x8] sm:$0xff]
      %v4959 = vld [vmem:[%s7 + $0x10] sm:$0xff]
      %v4960 = vld [vmem:[%s7 + $0x18] sm:$0xff]
      %v4961 = vld [vmem:[%s8] sm:$0x1]
      %vm4962 = vcmask 261120
      %v4964 = vsel %vm4962, %v4956, 0
      %4966 = vmatprep.subr.mxu0 0.0
      %4967 = vmatpush1.msra.mxu0 0.0
      %4968 = vmatprep.subr.mxu0 0.0
      %4969 = vmatpush1.msra.mxu0 0.0
      %4970 = vmatprep.subr.mxu0 0.0
      %4971 = vmatpush1.msra.mxu0 0.0
      %4972 = vmatprep.subr.mxu0 0.0
      %4973 = vmatpush1.msra.mxu0 0.0
      %4974 = vmatprep.subr.mxu0 0.0
      %4975 = vmatpush1.msra.mxu0 0.0
      %4976 = vmatprep.subr.mxu0 0.0
      %4977 = vmatpush1.msra.mxu0 0.0
      %4978 = vmatprep.subr.mxu0 0.0
      %4979 = vmatpush1.msra.mxu0 0.0
      %4980 = vmatprep.subr.mxu0 0.0
      %4981 = vmatpush1.msra.mxu0 0.0
      %4982 = vmatprep.subr.mxu0 0.0
      %4983 = vmatpush1.msra.mxu0 0.0
      %4984 = vmatprep.subr.mxu0 0.0
      %4985 = vmatpush1.msra.mxu0 0.0
      %4986 = vmatprep.subr.mxu0 0.0
      %4987 = vmatpush1.msra.mxu0 0.0
      %4988 = vmatprep.subr.mxu0 0.0
      %4989 = vmatpush1.msra.mxu0 0.0
      %4990 = vmatprep.subr.mxu0 0.0
      %4991 = vmatpush1.msra.mxu0 %v4960
      %4992 = vmatprep.subr.mxu0 0.0
      %4993 = vmatpush1.msra.mxu0 %v4959
      %4994 = vmatprep.subr.mxu0 0.0
      %4995 = vmatpush1.msra.mxu0 %v4958
      %4996 = vmatprep.subr.mxu0 0.0
      %4997 = vmatpush1.msra.mxu0 %v4957
      %4998 = vmatprep.subr.mxu0 0.0
      %4999 = vmatpush2.msra.mxu0 0.0
      %5000 = vmatprep.subr.mxu0 0.0
      %5001 = vmatpush2.msra.mxu0 0.0
      %5002 = vmatprep.subr.mxu0 0.0
      %5003 = vmatpush2.msra.mxu0 0.0
      %5004 = vmatprep.subr.mxu0 0.0
      %5005 = vmatpush2.msra.mxu0 0.0
      %5006 = vmatprep.subr.mxu0 0.0
      %5007 = vmatpush2.msra.mxu0 0.0
      %5008 = vmatprep.subr.mxu0 0.0
      %5009 = vmatpush2.msra.mxu0 0.0
      %5010 = vmatprep.subr.mxu0 0.0
      %5011 = vmatpush2.msra.mxu0 0.0
      %5012 = vmatprep.subr.mxu0 0.0
      %5013 = vmatpush2.msra.mxu0 0.0
      %5014 = vmatprep.subr.mxu0 0.0
      %5015 = vmatpush2.msra.mxu0 0.0
      %5016 = vmatprep.subr.mxu0 0.0
      %5017 = vmatpush2.msra.mxu0 0.0
      %5018 = vmatprep.subr.mxu0 0.0
      %5019 = vmatpush2.msra.mxu0 0.0
      %5020 = vmatprep.subr.mxu0 0.0
      %5021 = vmatpush2.msra.mxu0 0.0
      %5022 = vmatprep.subr.mxu0 0.0
      %5023 = vmatpush2.msra.mxu0 0.0
      %5024 = vmatprep.subr.mxu0 0.0
      %5025 = vmatpush2.msra.mxu0 0.0
      %5026 = vmatprep.subr.mxu0 0.0
      %5027 = vmatpush2.msra.mxu0 0.0
      %5028 = vmatprep.subr.mxu0 0.0
      %5029 = vmatpush2.msra.mxu0 0.0
      %5030 = vmatprep.mubr.f32.mxu0 0.0
      %5031 = vmatmul.mubr.f32.gmra.mxu0 %v4964
      %v5032 = vpop.f32.mrf.mxu0
      %v5033 = vadd.f32 %v4961, %v5032
      %v5034 = vpop.f32.mrf.mxu0
      %5035 = vdwg.mxu0
      %v5036 = vlaneseq
      %v5037 = vand.u32 %v5036, 127
      %vm5038 = vcmp.eq.s32.totalorder %v5037, 8
      %5040 = vrot.lane.b32.xlu0 %v5033, 124
      %v5041 = vpop.permute.xlu0 %5040
      %v5043 = vadd.f32 %v5033, %v5041
      %v5044 = vsub.f32 0.0, %v5043
      %5046 = vset.pattern.permute.xlu0 0
      %5047 = vperm.xlu0 %5046, %v5044
      %v5048 = vpop.permute.xlu0 %5047
      %v5050 = vsel %vm5038, %v5048, %v5033
      %vm5051 = vcmask 65536
      %5052 = vst.msk [vmem:[%s328] sm:$0x1] %vm5051, %v5050
      %p5053 = scmp.lt.s32.totalorder %s20, 1
      %s5054 = scalar_select %p5053, %s20, 1
      %s5055 = scalar_lea.vmem %s9, %s5054
      // Predicated region
      $region57: #{_lambda_.1} parent=55 // pred_check
        %p5056 = pneg %p232
      $region58: #{_lambda_.1} parent=55 // pred_check_branch
        %5058 = sbr.rel (%p5056) target = $region60
      $region59: #{_lambda_.1} parent=55 // pred_region
        _
      $region60: #{_lambda_.1} parent=55 // pred_fallthru
        _
    $region56: #{_lambda_.1} parent=5 // pred_fallthru
      _
    %p5059 = scmp.le.s32.totalorder 2, %s15
    // Predicated region
    $region61: #{_lambda_.1} parent=5 // pred_check
      %p5060 = pneg %p5059
    $region62: #{_lambda_.1} parent=5 // pred_check_branch
      %5062 = sbr.rel (%p5060) target = $region64
    $region63: #{_lambda_.1} parent=5 // pred_region
      %s5063 = ssub.s32 %s15, 2
      // Predicated region
      $region65: #{_lambda_.1} parent=63 // pred_check
        %p5064 = pneg %p238
      $region66: #{_lambda_.1} parent=63 // pred_check_branch
        %5066 = sbr.rel (%p5064) target = $region68
      $region67: #{_lambda_.1} parent=63 // pred_region
        %p5067 = scmp.lt.s32.totalorder %s21, 1
        %s5068 = scalar_select %p5067, %s21, 1
        %s5069 = scalar_lea.vmem %s9, %s5068
      $region68: #{_lambda_.1} parent=63 // pred_fallthru
        _
    $region64: #{_lambda_.1} parent=5 // pred_fallthru
      _
  $region6: #{_lambda_.1} parent=0 // loop_footer
    %s19 = sadd.s32 1, %s15
  $region7: #{_lambda_.1} parent=0 // loop_footer_branch
    %14 = sbr.rel target = $region3
  $region8: #{_lambda_.1} parent=0 // loop_exit
    _

</llo_original>
